<compile_context>
chip_gen: v7x
topology: tpu7x:2x2x1
jax: 0.10.0
libtpu: 0.0.40
codegen_flags: <defaults>
</compile_context>

<pallas_src>
import functools

import jax
import jax.numpy as jnp
from jax.experimental import pallas as pl
from jax.experimental.pallas import tpu as pltpu


_LANE = 128
_SMALL_INPUT_BYTES = 1 << 20        # below this, XLA's native concat wins
_MAX_BLOCK_ROWS = 8192              # ample to amortize ~0.35us per-grid-step cost


def _pad_lanes(d):
    """Width each segment actually occupies in VMEM (padded to 128 lanes)."""
    return ((d + _LANE - 1) // _LANE) * _LANE


def _round_down_32(n):
    return max(32, (n // 32) * 32)


def _round_up_32(n):
    return ((n + 31) // 32) * 32


@functools.lru_cache(maxsize=None)
def _vmem_budget_bytes():
    """Per-chip VMEM budget: ~40% of physical VMEM, capped at 64 MiB.

    ~25 MiB on v7x (64 MiB physical), ~51 MiB on v5e/v6e (128 MiB physical).
    """
    phys = 64 * 1024 * 1024
    try:
        info = pltpu.get_tpu_info()
        phys = int(getattr(info, "vmem_capacity_bytes", phys))
    except Exception:
        # Introspection unavailable (e.g. not on a TPU backend) -> conservative.
        pass
    return min(64 * 1024 * 1024, int(phys * 0.4))


def _pick_block_rows(rows, seg_widths_itemsizes, out_width, out_itemsize,
                     vmem_budget_bytes):
    """Largest 32-multiple row tile whose double-buffered, lane-padded working
    set fits the VMEM budget. When tiling, guarantee >= 2 grid steps so the row
    axis can shard across v7x's two TensorCores."""
    # Each input segment and the output occupy ceil(d/128)*128 lanes in VMEM;
    # BlockSpec double-buffers every operand.
    bytes_per_row = 2 * (
        sum(_pad_lanes(d) * isz for d, isz in seg_widths_itemsizes)
        + _pad_lanes(out_width) * out_itemsize
    )
    budget_rows = max(32, vmem_budget_bytes // bytes_per_row)
    block_rows = min(_round_down_32(budget_rows), _MAX_BLOCK_ROWS)
    if rows <= 32:
        return rows                     # single full-extent block (always legal)
    # >= 2 balanced steps (v7x megacore); otherwise as large as the budget allows.
    return min(block_rows, _round_up_32(pl.cdiv(rows, 2)))


def _segment_rows_kernel(text_ref, video_ref, audio_ref, out_ref, *,
                         d_text, d_video, d_audio):
    """Three static segment writes into the output tile (promotes dtype in VMEM)."""
    dt = out_ref.dtype
    out_ref[:, 0:d_text] = text_ref[...].astype(dt)
    out_ref[:, d_text:d_text + d_video] = video_ref[...].astype(dt)
    out_ref[:, d_text + d_video:d_text + d_video + d_audio] = audio_ref[...].astype(dt)


@functools.lru_cache(maxsize=None)
def _build_tri_concat_call(rows, d_text, d_video, d_audio,
                           dt_text, dt_video, dt_audio, dt_out,
                           block_rows, vmem_limit_bytes):
    """Builds and caches a jitted pallas_call for a given shape/dtype/tile config."""
    d_out = d_text + d_video + d_audio
    out_dtype = jnp.dtype(dt_out)

    def isz(name):
        return jnp.dtype(name).itemsize

    # Pure bandwidth op: read all three inputs once, write the output once.
    bytes_accessed = rows * (d_text * isz(dt_text)
                             + d_video * isz(dt_video)
                             + d_audio * isz(dt_audio)
                             + d_out * out_dtype.itemsize)

    kernel = functools.partial(_segment_rows_kernel,
                               d_text=d_text, d_video=d_video, d_audio=d_audio)

    call = pl.pallas_call(
        kernel,
        out_shape=jax.ShapeDtypeStruct((rows, d_out), out_dtype),
        grid_spec=pltpu.PrefetchScalarGridSpec(
            num_scalar_prefetch=0,
            grid=(pl.cdiv(rows, block_rows),),
            in_specs=[
                pl.BlockSpec((block_rows, d_text), lambda r: (r, 0)),
                pl.BlockSpec((block_rows, d_video), lambda r: (r, 0)),
                pl.BlockSpec((block_rows, d_audio), lambda r: (r, 0)),
            ],
            out_specs=pl.BlockSpec((block_rows, d_out), lambda r: (r, 0)),
        ),
        compiler_params=pltpu.CompilerParams(
            dimension_semantics=("parallel",),
            vmem_limit_bytes=int(vmem_limit_bytes),
        ),
        cost_estimate=pl.CostEstimate(
            flops=0, transcendentals=0, bytes_accessed=int(bytes_accessed)),
    )
    return jax.jit(call)


def tri_concat_forward(text_x, audio_x, video_x):
    """Pallas equivalent of TriConcat.forward.

    Args (TriConcat's own parameter order):
        text_x:  (seq_len, batch, d_text)
        audio_x: (seq_len, batch, d_audio)
        video_x: (seq_len, batch, d_video)
    Returns:
        concat([text_x, video_x, audio_x], axis=2)
    """
    seq_len, batch, d_text = text_x.shape
    s_a, b_a, d_audio = audio_x.shape
    s_v, b_v, d_video = video_x.shape
    assert (s_a, b_a) == (seq_len, batch)
    assert (s_v, b_v) == (seq_len, batch)
    d_out = d_text + d_video + d_audio
    out_dtype = jnp.result_type(text_x.dtype, video_x.dtype, audio_x.dtype)
    out_itemsize = jnp.dtype(out_dtype).itemsize

    # Small-input fast path: kernel-launch + DMA-setup overhead dominates below
    # ~1 MiB of output; XLA's native concat is already at roofline there.
    if seq_len * batch * d_out * out_itemsize < _SMALL_INPUT_BYTES:
        return jnp.concatenate(
            [text_x.astype(out_dtype),
             video_x.astype(out_dtype),
             audio_x.astype(out_dtype)],
            axis=2)

    # Free row-major collapse of (seq_len, batch) -> rows; no data movement.
    rows = seq_len * batch
    text2 = text_x.reshape(rows, d_text)
    video2 = video_x.reshape(rows, d_video)
    audio2 = audio_x.reshape(rows, d_audio)

    vmem_budget = _vmem_budget_bytes()
    block_rows = _pick_block_rows(
        rows,
        ((d_text, jnp.dtype(text_x.dtype).itemsize),
         (d_video, jnp.dtype(video_x.dtype).itemsize),
         (d_audio, jnp.dtype(audio_x.dtype).itemsize)),
        d_out, out_itemsize,
        vmem_budget)

    call = _build_tri_concat_call(
        rows, d_text, d_video, d_audio,
        jnp.dtype(text_x.dtype).name, jnp.dtype(video_x.dtype).name,
        jnp.dtype(audio_x.dtype).name, jnp.dtype(out_dtype).name,
        block_rows, vmem_budget)

    out2 = call(text2, video2, audio2)
    return out2.reshape(seq_len, batch, d_out)


def fusion_plugin_forward(text, video, audio):
    """Pallas equivalent of fusionPlugin.forward with lateFusionModule='concat'.

    Positional pass-through into TriConcat.forward(text_x, audio_x, video_x);
    because of the original code's parameter-order mismatch, the effective
    result is concat([text, audio, video], axis=2).
    """
    return tri_concat_forward(text, video, audio)


if __name__ == "__main__":
    # args.input_features = (text_in, video_in, audio_in)
    text_in, video_in, audio_in = 32, 16, 24
    d_out = text_in + video_in + audio_in

    key = jax.random.PRNGKey(0)
    k_t, k_v, k_a = jax.random.split(key, 3)

    # 1) Small demo shape from the module docstring -> XLA-native fast path.
    seq_len, batch = 8, 2
    text = jax.random.normal(k_t, (seq_len, batch, text_in), dtype=jnp.float32)
    video = jax.random.normal(k_v, (seq_len, batch, video_in), dtype=jnp.float32)
    audio = jax.random.normal(k_a, (seq_len, batch, audio_in), dtype=jnp.float32)

    out_small = jax.block_until_ready(fusion_plugin_forward(text, video, audio))
    ref_small = jnp.concatenate([text, audio, video], axis=2)
    assert out_small.shape == (seq_len, batch, d_out)
    assert out_small.dtype == ref_small.dtype
    assert jnp.array_equal(out_small, ref_small)

    # 2) Larger shape (>= 1 MiB of output) -> exercises the Pallas kernel path
    #    with a multi-step, TensorCore-parallel grid.
    seq_len2, batch2 = 512, 16
    text_l = jax.random.normal(k_t, (seq_len2, batch2, text_in), dtype=jnp.float32)
    video_l = jax.random.normal(k_v, (seq_len2, batch2, video_in), dtype=jnp.float32)
    audio_l = jax.random.normal(k_a, (seq_len2, batch2, audio_in), dtype=jnp.float32)

    out_big = jax.block_until_ready(fusion_plugin_forward(text_l, video_l, audio_l))
    ref_big = jnp.concatenate([text_l, audio_l, video_l], axis=2)
    assert out_big.shape == (seq_len2, batch2, d_out)
    assert out_big.dtype == ref_big.dtype
    assert jnp.array_equal(out_big, ref_big)

    print("KERNEL_OK")
</pallas_src>

<mosaic_0001>
module attributes {stable_mosaic.version = 11 : i64} {
  func.func @_segment_rows_kernel(%arg0: i32, %arg1: memref<4096x32xf32, #tpu.memory_space<vmem>>, %arg2: memref<4096x24xf32, #tpu.memory_space<vmem>>, %arg3: memref<4096x16xf32, #tpu.memory_space<vmem>>, %arg4: memref<4096x72xf32, #tpu.memory_space<vmem>>) attributes {dimension_semantics = [#tpu.dimension_semantics<parallel>], iteration_bounds = array<i64: 2>, scalar_prefetch = 0 : i64, scratch_operands = 0 : i64, tpu.core_type = #tpu.core_type<tc>, window_params = [{transform_indices = @transform_0, window_bounds = array<i64: 4096, 32>}, {transform_indices = @transform_1, window_bounds = array<i64: 4096, 24>}, {transform_indices = @transform_2, window_bounds = array<i64: 4096, 16>}, {transform_indices = @transform_3, window_bounds = array<i64: 4096, 72>}]} {
    %c0 = arith.constant 0 : index
    %c0_0 = arith.constant 0 : index
    %0 = vector.load %arg1[%c0, %c0_0] : memref<4096x32xf32, #tpu.memory_space<vmem>>, vector<4096x32xf32>
    %c0_1 = arith.constant 0 : index
    %c0_2 = arith.constant 0 : index
    %1 = vector.load %arg4[%c0_1, %c0_2] : memref<4096x72xf32, #tpu.memory_space<vmem>>, vector<4096x32xf32>
    tpu.vector_store %arg4[%c0_1, %c0_2], %0 {strides = array<i32>} : memref<4096x72xf32, #tpu.memory_space<vmem>>, vector<4096x32xf32>,
    %c0_3 = arith.constant 0 : index
    %c0_4 = arith.constant 0 : index
    %2 = vector.load %arg2[%c0_3, %c0_4] : memref<4096x24xf32, #tpu.memory_space<vmem>>, vector<4096x24xf32>
    %c0_5 = arith.constant 0 : index
    %c32 = arith.constant 32 : index
    %3 = vector.load %arg4[%c0_5, %c32] : memref<4096x72xf32, #tpu.memory_space<vmem>>, vector<4096x24xf32>
    tpu.vector_store %arg4[%c0_5, %c32], %2 {strides = array<i32>} : memref<4096x72xf32, #tpu.memory_space<vmem>>, vector<4096x24xf32>,
    %c0_6 = arith.constant 0 : index
    %c0_7 = arith.constant 0 : index
    %4 = vector.load %arg3[%c0_6, %c0_7] : memref<4096x16xf32, #tpu.memory_space<vmem>>, vector<4096x16xf32>
    %c0_8 = arith.constant 0 : index
    %c56 = arith.constant 56 : index
    %5 = vector.load %arg4[%c0_8, %c56] : memref<4096x72xf32, #tpu.memory_space<vmem>>, vector<4096x16xf32>
    tpu.vector_store %arg4[%c0_8, %c56], %4 {strides = array<i32>} : memref<4096x72xf32, #tpu.memory_space<vmem>>, vector<4096x16xf32>,
    return
  }
  func.func @transform_0(%arg0: i32) -> (i32, i32) {
    %c0_i32 = arith.constant 0 : i32
    %c0_i32_0 = arith.constant 0 : i32
    return %arg0, %c0_i32 : i32, i32
  }
  func.func @transform_1(%arg0: i32) -> (i32, i32) {
    %c0_i32 = arith.constant 0 : i32
    %c0_i32_0 = arith.constant 0 : i32
    return %arg0, %c0_i32 : i32, i32
  }
  func.func @transform_2(%arg0: i32) -> (i32, i32) {
    %c0_i32 = arith.constant 0 : i32
    %c0_i32_0 = arith.constant 0 : i32
    return %arg0, %c0_i32 : i32, i32
  }
  func.func @transform_3(%arg0: i32) -> (i32, i32) {
    %c0_i32 = arith.constant 0 : i32
    %c0_i32_0 = arith.constant 0 : i32
    return %arg0, %c0_i32 : i32, i32
  }
}

</mosaic_0001>

<llo_original>
// kernel: tpu_custom_call.1
$region0: #{tpu_custom_call.1}
  #allocation0 [shape = 'u32[]', space=smem, size = 0x4, offset = 0x4, fixed_abs, tag = 'smem constant byte address 0x4 - core index']
  #allocation1 [shape = 'u32[144,128]{1,0:T(1,128)}', space=vmem, size = 0x12000, scoped, tag = 'internal scratch']
  %s0 = inlined_call_operand.vmem [shape: f32[8192,32], index: 0, kind: input, shape index: {}]
  %s1 = inlined_call_operand.vmem [shape: f32[8192,24], index: 1, kind: input, shape index: {}]
  %s2 = inlined_call_operand.vmem [shape: f32[8192,16], index: 2, kind: input, shape index: {}]
  %s3 = inlined_call_operand.vmem [shape: f32[8192,72], index: 3, kind: output, shape index: {}]
  %s4 = sld [smem:[#allocation0]]
  $region45: #{tpu_custom_call.1} parent=0
    _
  %s6 = ssub.s32 1, %s4
  %s7 = scalar_select 0, %s6, %s4
  loop: start=0, step=1, limit=4
  $region2: #{tpu_custom_call.1} parent=0 // loop_pre_header
    _
  $region3: #{tpu_custom_call.1} parent=0 // loop_header
    %s9 = sphi 0, %s13
    %p10 = scmp.ge.s32.totalorder %s9, 4
    %s19 = sphi 0, %s21
    %s22 = sphi 0, %s19
    %s23 = sphi 0, %s22
    %s39 = sphi 0, %s23
    %s45 = sphi 0, %s47
    %s48 = sphi 0, %s45
    %s49 = sphi 0, %s48
    %s65 = sphi 0, %s49
    %s71 = sphi 0, %s73
    %s74 = sphi 0, %s71
    %s75 = sphi 0, %s74
    %s91 = sphi 0, %s75
    %s97 = sphi 0, %s99
    %s100 = sphi 0, %s97
    %s101 = sphi 0, %s100
    %s117 = sphi 0, %s101
  $region4: #{tpu_custom_call.1} parent=0 // loop_header_branch
    %12 = sbr.rel (%p10) target = $region8
  $region5: #{tpu_custom_call.1} parent=0 // loop_body
    %s14 = ssub.s32 %s9, 1
    %s15 = ssub.s32 %s9, 2
    %s16 = sadd.s32 %s9, 1
    %s17 = ssub.s32 %s9, %s16
    %p18 = scmp.eq.s32.totalorder %s17, 0
    %s20 = sadd.s32 %s19, 1
    %s21 = scalar_select %p18, %s19, %s20
    %p24 = pneg %p18
    %p25 = scmp.eq.s32.totalorder %s9, 1
    %p26 = por %p24, %p25
    %p27 = scmp.ne.s32.totalorder %s19, %s22
    %p28 = scmp.eq.s32.totalorder %s9, 0
    %p29 = por %p27, %p28
    %p30 = scmp.ne.s32.totalorder %s19, %s22
    %p31 = scmp.eq.s32.totalorder %s14, 1
    %p32 = por %p30, %p31
    %p33 = scmp.ne.s32.totalorder %s22, %s23
    %p34 = scmp.eq.s32.totalorder %s14, 0
    %p35 = por %p33, %p34
    %p36 = scmp.ne.s32.totalorder %s22, %s23
    %p37 = scmp.eq.s32.totalorder %s15, 1
    %p38 = por %p36, %p37
    %p40 = scmp.ne.s32.totalorder %s23, %s39
    %p41 = scmp.eq.s32.totalorder %s15, 0
    %p42 = por %p40, %p41
    %s43 = ssub.s32 %s9, %s16
    %p44 = scmp.eq.s32.totalorder %s43, 0
    %s46 = sadd.s32 %s45, 1
    %s47 = scalar_select %p44, %s45, %s46
    %p50 = pneg %p44
    %p51 = scmp.eq.s32.totalorder %s9, 1
    %p52 = por %p50, %p51
    %p53 = scmp.ne.s32.totalorder %s45, %s48
    %p54 = scmp.eq.s32.totalorder %s9, 0
    %p55 = por %p53, %p54
    %p56 = scmp.ne.s32.totalorder %s45, %s48
    %p57 = scmp.eq.s32.totalorder %s14, 1
    %p58 = por %p56, %p57
    %p59 = scmp.ne.s32.totalorder %s48, %s49
    %p60 = scmp.eq.s32.totalorder %s14, 0
    %p61 = por %p59, %p60
    %p62 = scmp.ne.s32.totalorder %s48, %s49
    %p63 = scmp.eq.s32.totalorder %s15, 1
    %p64 = por %p62, %p63
    %p66 = scmp.ne.s32.totalorder %s49, %s65
    %p67 = scmp.eq.s32.totalorder %s15, 0
    %p68 = por %p66, %p67
    %s69 = ssub.s32 %s9, %s16
    %p70 = scmp.eq.s32.totalorder %s69, 0
    %s72 = sadd.s32 %s71, 1
    %s73 = scalar_select %p70, %s71, %s72
    %p76 = pneg %p70
    %p77 = scmp.eq.s32.totalorder %s9, 1
    %p78 = por %p76, %p77
    %p79 = scmp.ne.s32.totalorder %s71, %s74
    %p80 = scmp.eq.s32.totalorder %s9, 0
    %p81 = por %p79, %p80
    %p82 = scmp.ne.s32.totalorder %s71, %s74
    %p83 = scmp.eq.s32.totalorder %s14, 1
    %p84 = por %p82, %p83
    %p85 = scmp.ne.s32.totalorder %s74, %s75
    %p86 = scmp.eq.s32.totalorder %s14, 0
    %p87 = por %p85, %p86
    %p88 = scmp.ne.s32.totalorder %s74, %s75
    %p89 = scmp.eq.s32.totalorder %s15, 1
    %p90 = por %p88, %p89
    %p92 = scmp.ne.s32.totalorder %s75, %s91
    %p93 = scmp.eq.s32.totalorder %s15, 0
    %p94 = por %p92, %p93
    %s95 = ssub.s32 %s9, %s16
    %p96 = scmp.eq.s32.totalorder %s95, 0
    %s98 = sadd.s32 %s97, 1
    %s99 = scalar_select %p96, %s97, %s98
    %p102 = pneg %p96
    %p103 = scmp.eq.s32.totalorder %s9, 1
    %p104 = por %p102, %p103
    %p105 = scmp.ne.s32.totalorder %s97, %s100
    %p106 = scmp.eq.s32.totalorder %s9, 0
    %p107 = por %p105, %p106
    %p108 = scmp.ne.s32.totalorder %s97, %s100
    %p109 = scmp.eq.s32.totalorder %s14, 1
    %p110 = por %p108, %p109
    %p111 = scmp.ne.s32.totalorder %s100, %s101
    %p112 = scmp.eq.s32.totalorder %s14, 0
    %p113 = por %p111, %p112
    %p114 = scmp.ne.s32.totalorder %s100, %s101
    %p115 = scmp.eq.s32.totalorder %s15, 1
    %p116 = por %p114, %p115
    %p118 = scmp.ne.s32.totalorder %s101, %s117
    %p119 = scmp.eq.s32.totalorder %s15, 0
    %p120 = por %p118, %p119
    %p121 = scmp.le.s32.totalorder 1, %s9
    %p122 = scmp.lt.s32.totalorder %s9, 3
    %p123 = pnand %p121, %p122
    %p124 = pneg %p123
    // Predicated region
    $region9: #{tpu_custom_call.1} parent=5 // pred_check
      _
    $region10: #{tpu_custom_call.1} parent=5 // pred_check_branch
      %126 = sbr.rel (%p123) target = $region12
    $region11: #{tpu_custom_call.1} parent=5 // pred_region
      %s127 = ssub.s32 %s9, 1
    $region12: #{tpu_custom_call.1} parent=5 // pred_fallthru
      _
    %p128 = scmp.lt.s32.totalorder %s9, 2
    // Predicated region
    $region13: #{tpu_custom_call.1} parent=5 // pred_check
      %p129 = pneg %p128
    $region14: #{tpu_custom_call.1} parent=5 // pred_check_branch
      %131 = sbr.rel (%p129) target = $region16
    $region15: #{tpu_custom_call.1} parent=5 // pred_region
      // Predicated region
      $region17: #{tpu_custom_call.1} parent=15 // pred_check
        %p132 = pneg %p29
      $region18: #{tpu_custom_call.1} parent=15 // pred_check_branch
        %134 = sbr.rel (%p132) target = $region20
      $region19: #{tpu_custom_call.1} parent=15 // pred_region
        %s135 = smul.u32 512, %s9
        %p136 = scmp.lt.s32.totalorder %s135, 1023
        %s137 = scalar_select %p136, %s135, 1023
        %s138 = smul.addr %s137, 8
        %s139 = scalar_lea.vmem %s0, %s138
        %s140 = smul.u32 512, %s9
      $region20: #{tpu_custom_call.1} parent=15 // pred_fallthru
        _
      // Predicated region
      $region21: #{tpu_custom_call.1} parent=15 // pred_check
        %p141 = pneg %p55
      $region22: #{tpu_custom_call.1} parent=15 // pred_check_branch
        %143 = sbr.rel (%p141) target = $region24
      $region23: #{tpu_custom_call.1} parent=15 // pred_region
        %s144 = smul.u32 512, %s9
        %p145 = scmp.lt.s32.totalorder %s144, 1023
        %s146 = scalar_select %p145, %s144, 1023
        %s147 = smul.addr %s146, 8
        %s148 = scalar_lea.vmem %s1, %s147
        %s149 = smul.u32 512, %s9
      $region24: #{tpu_custom_call.1} parent=15 // pred_fallthru
        _
      // Predicated region
      $region25: #{tpu_custom_call.1} parent=15 // pred_check
        %p150 = pneg %p81
      $region26: #{tpu_custom_call.1} parent=15 // pred_check_branch
        %152 = sbr.rel (%p150) target = $region28
      $region27: #{tpu_custom_call.1} parent=15 // pred_region
        %s153 = smul.u32 512, %s9
        %p154 = scmp.lt.s32.totalorder %s153, 1023
        %s155 = scalar_select %p154, %s153, 1023
        %s156 = smul.addr %s155, 8
        %s157 = scalar_lea.vmem %s2, %s156
        %s158 = smul.u32 512, %s9
      $region28: #{tpu_custom_call.1} parent=15 // pred_fallthru
        _
    $region16: #{tpu_custom_call.1} parent=5 // pred_fallthru
      _
    %p159 = scmp.le.s32.totalorder 1, %s9
    %p160 = scmp.lt.s32.totalorder %s9, 3
    %p161 = pnand %p159, %p160
    %p162 = pneg %p161
    // Predicated region
    $region29: #{tpu_custom_call.1} parent=5 // pred_check
      _
    $region30: #{tpu_custom_call.1} parent=5 // pred_check_branch
      %164 = sbr.rel (%p161) target = $region32
    $region31: #{tpu_custom_call.1} parent=5 // pred_region
      %s165 = ssub.s32 %s9, 1
      %s166 = smul.u32 512, %s14
      %p167 = scmp.lt.s32.totalorder %s166, 1023
      %s168 = scalar_select %p167, %s166, 1023
      %s169 = smul.addr %s168, 8
      %s170 = scalar_lea.vmem %s0, %s169
      %p171 = pneg %p35
      %p172 = pneg %p32
      %s173 = smul.u32 512, %s14
      %p174 = scmp.lt.s32.totalorder %s173, 1023
      %s175 = scalar_select %p174, %s173, 1023
      %s176 = smul.addr %s175, 8
      %s177 = scalar_lea.vmem %s1, %s176
      %p178 = pneg %p61
      %p179 = pneg %p58
      %s180 = smul.u32 512, %s14
      %p181 = scmp.lt.s32.totalorder %s180, 1023
      %s182 = scalar_select %p181, %s180, 1023
      %s183 = smul.addr %s182, 8
      %s184 = scalar_lea.vmem %s2, %s183
      %p185 = pneg %p87
      %p186 = pneg %p84
      %p187 = pneg %p113
      %p188 = pneg %p110
      %s189 = smul.u32 512, %s14
      %p190 = scmp.lt.s32.totalorder %s189, 1023
      %s191 = scalar_select %p190, %s189, 1023
      %s192 = smul.addr %s191, 8
      %s193 = scalar_lea.vmem %s3, %s192
      %s194 = smul.u32 512, %s14
      %p195 = scmp.lt.s32.totalorder %s194, 1023
      %s196 = scalar_select %p195, %s194, 1023
      %s197 = smul.addr %s196, 8
      %s198 = scalar_lea.vmem %s0, %s197
      %s199 = smul.u32 512, %s14
      %s200 = smul.u32 512, %s14
      %p201 = scmp.lt.s32.totalorder %s200, 1023
      %s202 = scalar_select %p201, %s200, 1023
      %s203 = smul.addr %s202, 8
      %s204 = scalar_lea.vmem %s1, %s203
      %s205 = smul.u32 512, %s14
      %s206 = smul.u32 512, %s14
      %p207 = scmp.lt.s32.totalorder %s206, 1023
      %s208 = scalar_select %p207, %s206, 1023
      %s209 = smul.addr %s208, 8
      %s210 = scalar_lea.vmem %s2, %s209
      %s211 = smul.u32 512, %s14
      %s212 = smul.u32 512, %s14
      %p213 = scmp.lt.s32.totalorder %s212, 1023
      %s214 = scalar_select %p213, %s212, 1023
      %s215 = smul.addr %s214, 8
      %s216 = scalar_lea.vmem %s3, %s215
      %s217 = smul.u32 512, %s14
      %v218 = vld [vmem:[%s198] sm:$0xff]
      %v219 = vld [vmem:[%s198 + $0x8] sm:$0xff]
      %v220 = vld [vmem:[%s198 + $0x10] sm:$0xff]
      %v221 = vld [vmem:[%s198 + $0x18] sm:$0xff]
      %v222 = vld [vmem:[%s198 + $0x20] sm:$0xff]
      %v223 = vld [vmem:[%s198 + $0x28] sm:$0xff]
      %v224 = vld [vmem:[%s198 + $0x30] sm:$0xff]
      %v225 = vld [vmem:[%s198 + $0x38] sm:$0xff]
      %v226 = vld [vmem:[%s198 + $0x40] sm:$0xff]
      %v227 = vld [vmem:[%s198 + $0x48] sm:$0xff]
      %v228 = vld [vmem:[%s198 + $0x50] sm:$0xff]
      %v229 = vld [vmem:[%s198 + $0x58] sm:$0xff]
      %v230 = vld [vmem:[%s198 + $0x60] sm:$0xff]
      %v231 = vld [vmem:[%s198 + $0x68] sm:$0xff]
      %v232 = vld [vmem:[%s198 + $0x70] sm:$0xff]
      %v233 = vld [vmem:[%s198 + $0x78] sm:$0xff]
      %v234 = vld [vmem:[%s198 + $0x80] sm:$0xff]
      %v235 = vld [vmem:[%s198 + $0x88] sm:$0xff]
      %v236 = vld [vmem:[%s198 + $0x90] sm:$0xff]
      %v237 = vld [vmem:[%s198 + $0x98] sm:$0xff]
      %v238 = vld [vmem:[%s198 + $0xa0] sm:$0xff]
      %v239 = vld [vmem:[%s198 + $0xa8] sm:$0xff]
      %v240 = vld [vmem:[%s198 + $0xb0] sm:$0xff]
      %v241 = vld [vmem:[%s198 + $0xb8] sm:$0xff]
      %v242 = vld [vmem:[%s198 + $0xc0] sm:$0xff]
      %v243 = vld [vmem:[%s198 + $0xc8] sm:$0xff]
      %v244 = vld [vmem:[%s198 + $0xd0] sm:$0xff]
      %v245 = vld [vmem:[%s198 + $0xd8] sm:$0xff]
      %v246 = vld [vmem:[%s198 + $0xe0] sm:$0xff]
      %v247 = vld [vmem:[%s198 + $0xe8] sm:$0xff]
      %v248 = vld [vmem:[%s198 + $0xf0] sm:$0xff]
      %v249 = vld [vmem:[%s198 + $0xf8] sm:$0xff]
      %v250 = vld [vmem:[%s198 + $0x100] sm:$0xff]
      %v251 = vld [vmem:[%s198 + $0x108] sm:$0xff]
      %v252 = vld [vmem:[%s198 + $0x110] sm:$0xff]
      %v253 = vld [vmem:[%s198 + $0x118] sm:$0xff]
      %v254 = vld [vmem:[%s198 + $0x120] sm:$0xff]
      %v255 = vld [vmem:[%s198 + $0x128] sm:$0xff]
      %v256 = vld [vmem:[%s198 + $0x130] sm:$0xff]
      %v257 = vld [vmem:[%s198 + $0x138] sm:$0xff]
      %v258 = vld [vmem:[%s198 + $0x140] sm:$0xff]
      %v259 = vld [vmem:[%s198 + $0x148] sm:$0xff]
      %v260 = vld [vmem:[%s198 + $0x150] sm:$0xff]
      %v261 = vld [vmem:[%s198 + $0x158] sm:$0xff]
      %v262 = vld [vmem:[%s198 + $0x160] sm:$0xff]
      %v263 = vld [vmem:[%s198 + $0x168] sm:$0xff]
      %v264 = vld [vmem:[%s198 + $0x170] sm:$0xff]
      %v265 = vld [vmem:[%s198 + $0x178] sm:$0xff]
      %v266 = vld [vmem:[%s198 + $0x180] sm:$0xff]
      %v267 = vld [vmem:[%s198 + $0x188] sm:$0xff]
      %v268 = vld [vmem:[%s198 + $0x190] sm:$0xff]
      %v269 = vld [vmem:[%s198 + $0x198] sm:$0xff]
      %v270 = vld [vmem:[%s198 + $0x1a0] sm:$0xff]
      %v271 = vld [vmem:[%s198 + $0x1a8] sm:$0xff]
      %v272 = vld [vmem:[%s198 + $0x1b0] sm:$0xff]
      %v273 = vld [vmem:[%s198 + $0x1b8] sm:$0xff]
      %v274 = vld [vmem:[%s198 + $0x1c0] sm:$0xff]
      %v275 = vld [vmem:[%s198 + $0x1c8] sm:$0xff]
      %v276 = vld [vmem:[%s198 + $0x1d0] sm:$0xff]
      %v277 = vld [vmem:[%s198 + $0x1d8] sm:$0xff]
      %v278 = vld [vmem:[%s198 + $0x1e0] sm:$0xff]
      %v279 = vld [vmem:[%s198 + $0x1e8] sm:$0xff]
      %v280 = vld [vmem:[%s198 + $0x1f0] sm:$0xff]
      %v281 = vld [vmem:[%s198 + $0x1f8] sm:$0xff]
      %v282 = vld [vmem:[%s198 + $0x200] sm:$0xff]
      %v283 = vld [vmem:[%s198 + $0x208] sm:$0xff]
      %v284 = vld [vmem:[%s198 + $0x210] sm:$0xff]
      %v285 = vld [vmem:[%s198 + $0x218] sm:$0xff]
      %v286 = vld [vmem:[%s198 + $0x220] sm:$0xff]
      %v287 = vld [vmem:[%s198 + $0x228] sm:$0xff]
      %v288 = vld [vmem:[%s198 + $0x230] sm:$0xff]
      %v289 = vld [vmem:[%s198 + $0x238] sm:$0xff]
      %v290 = vld [vmem:[%s198 + $0x240] sm:$0xff]
      %v291 = vld [vmem:[%s198 + $0x248] sm:$0xff]
      %v292 = vld [vmem:[%s198 + $0x250] sm:$0xff]
      %v293 = vld [vmem:[%s198 + $0x258] sm:$0xff]
      %v294 = vld [vmem:[%s198 + $0x260] sm:$0xff]
      %v295 = vld [vmem:[%s198 + $0x268] sm:$0xff]
      %v296 = vld [vmem:[%s198 + $0x270] sm:$0xff]
      %v297 = vld [vmem:[%s198 + $0x278] sm:$0xff]
      %v298 = vld [vmem:[%s198 + $0x280] sm:$0xff]
      %v299 = vld [vmem:[%s198 + $0x288] sm:$0xff]
      %v300 = vld [vmem:[%s198 + $0x290] sm:$0xff]
      %v301 = vld [vmem:[%s198 + $0x298] sm:$0xff]
      %v302 = vld [vmem:[%s198 + $0x2a0] sm:$0xff]
      %v303 = vld [vmem:[%s198 + $0x2a8] sm:$0xff]
      %v304 = vld [vmem:[%s198 + $0x2b0] sm:$0xff]
      %v305 = vld [vmem:[%s198 + $0x2b8] sm:$0xff]
      %v306 = vld [vmem:[%s198 + $0x2c0] sm:$0xff]
      %v307 = vld [vmem:[%s198 + $0x2c8] sm:$0xff]
      %v308 = vld [vmem:[%s198 + $0x2d0] sm:$0xff]
      %v309 = vld [vmem:[%s198 + $0x2d8] sm:$0xff]
      %v310 = vld [vmem:[%s198 + $0x2e0] sm:$0xff]
      %v311 = vld [vmem:[%s198 + $0x2e8] sm:$0xff]
      %v312 = vld [vmem:[%s198 + $0x2f0] sm:$0xff]
      %v313 = vld [vmem:[%s198 + $0x2f8] sm:$0xff]
      %v314 = vld [vmem:[%s198 + $0x300] sm:$0xff]
      %v315 = vld [vmem:[%s198 + $0x308] sm:$0xff]
      %v316 = vld [vmem:[%s198 + $0x310] sm:$0xff]
      %v317 = vld [vmem:[%s198 + $0x318] sm:$0xff]
      %v318 = vld [vmem:[%s198 + $0x320] sm:$0xff]
      %v319 = vld [vmem:[%s198 + $0x328] sm:$0xff]
      %v320 = vld [vmem:[%s198 + $0x330] sm:$0xff]
      %v321 = vld [vmem:[%s198 + $0x338] sm:$0xff]
      %v322 = vld [vmem:[%s198 + $0x340] sm:$0xff]
      %v323 = vld [vmem:[%s198 + $0x348] sm:$0xff]
      %v324 = vld [vmem:[%s198 + $0x350] sm:$0xff]
      %v325 = vld [vmem:[%s198 + $0x358] sm:$0xff]
      %v326 = vld [vmem:[%s198 + $0x360] sm:$0xff]
      %v327 = vld [vmem:[%s198 + $0x368] sm:$0xff]
      %v328 = vld [vmem:[%s198 + $0x370] sm:$0xff]
      %v329 = vld [vmem:[%s198 + $0x378] sm:$0xff]
      %v330 = vld [vmem:[%s198 + $0x380] sm:$0xff]
      %v331 = vld [vmem:[%s198 + $0x388] sm:$0xff]
      %v332 = vld [vmem:[%s198 + $0x390] sm:$0xff]
      %v333 = vld [vmem:[%s198 + $0x398] sm:$0xff]
      %v334 = vld [vmem:[%s198 + $0x3a0] sm:$0xff]
      %v335 = vld [vmem:[%s198 + $0x3a8] sm:$0xff]
      %v336 = vld [vmem:[%s198 + $0x3b0] sm:$0xff]
      %v337 = vld [vmem:[%s198 + $0x3b8] sm:$0xff]
      %v338 = vld [vmem:[%s198 + $0x3c0] sm:$0xff]
      %v339 = vld [vmem:[%s198 + $0x3c8] sm:$0xff]
      %v340 = vld [vmem:[%s198 + $0x3d0] sm:$0xff]
      %v341 = vld [vmem:[%s198 + $0x3d8] sm:$0xff]
      %v342 = vld [vmem:[%s198 + $0x3e0] sm:$0xff]
      %v343 = vld [vmem:[%s198 + $0x3e8] sm:$0xff]
      %v344 = vld [vmem:[%s198 + $0x3f0] sm:$0xff]
      %v345 = vld [vmem:[%s198 + $0x3f8] sm:$0xff]
      %v346 = vld [vmem:[%s198 + $0x400] sm:$0xff]
      %v347 = vld [vmem:[%s198 + $0x408] sm:$0xff]
      %v348 = vld [vmem:[%s198 + $0x410] sm:$0xff]
      %v349 = vld [vmem:[%s198 + $0x418] sm:$0xff]
      %v350 = vld [vmem:[%s198 + $0x420] sm:$0xff]
      %v351 = vld [vmem:[%s198 + $0x428] sm:$0xff]
      %v352 = vld [vmem:[%s198 + $0x430] sm:$0xff]
      %v353 = vld [vmem:[%s198 + $0x438] sm:$0xff]
      %v354 = vld [vmem:[%s198 + $0x440] sm:$0xff]
      %v355 = vld [vmem:[%s198 + $0x448] sm:$0xff]
      %v356 = vld [vmem:[%s198 + $0x450] sm:$0xff]
      %v357 = vld [vmem:[%s198 + $0x458] sm:$0xff]
      %v358 = vld [vmem:[%s198 + $0x460] sm:$0xff]
      %v359 = vld [vmem:[%s198 + $0x468] sm:$0xff]
      %v360 = vld [vmem:[%s198 + $0x470] sm:$0xff]
      %v361 = vld [vmem:[%s198 + $0x478] sm:$0xff]
      %v362 = vld [vmem:[%s198 + $0x480] sm:$0xff]
      %v363 = vld [vmem:[%s198 + $0x488] sm:$0xff]
      %v364 = vld [vmem:[%s198 + $0x490] sm:$0xff]
      %v365 = vld [vmem:[%s198 + $0x498] sm:$0xff]
      %v366 = vld [vmem:[%s198 + $0x4a0] sm:$0xff]
      %v367 = vld [vmem:[%s198 + $0x4a8] sm:$0xff]
      %v368 = vld [vmem:[%s198 + $0x4b0] sm:$0xff]
      %v369 = vld [vmem:[%s198 + $0x4b8] sm:$0xff]
      %v370 = vld [vmem:[%s198 + $0x4c0] sm:$0xff]
      %v371 = vld [vmem:[%s198 + $0x4c8] sm:$0xff]
      %v372 = vld [vmem:[%s198 + $0x4d0] sm:$0xff]
      %v373 = vld [vmem:[%s198 + $0x4d8] sm:$0xff]
      %v374 = vld [vmem:[%s198 + $0x4e0] sm:$0xff]
      %v375 = vld [vmem:[%s198 + $0x4e8] sm:$0xff]
      %v376 = vld [vmem:[%s198 + $0x4f0] sm:$0xff]
      %v377 = vld [vmem:[%s198 + $0x4f8] sm:$0xff]
      %v378 = vld [vmem:[%s198 + $0x500] sm:$0xff]
      %v379 = vld [vmem:[%s198 + $0x508] sm:$0xff]
      %v380 = vld [vmem:[%s198 + $0x510] sm:$0xff]
      %v381 = vld [vmem:[%s198 + $0x518] sm:$0xff]
      %v382 = vld [vmem:[%s198 + $0x520] sm:$0xff]
      %v383 = vld [vmem:[%s198 + $0x528] sm:$0xff]
      %v384 = vld [vmem:[%s198 + $0x530] sm:$0xff]
      %v385 = vld [vmem:[%s198 + $0x538] sm:$0xff]
      %v386 = vld [vmem:[%s198 + $0x540] sm:$0xff]
      %v387 = vld [vmem:[%s198 + $0x548] sm:$0xff]
      %v388 = vld [vmem:[%s198 + $0x550] sm:$0xff]
      %v389 = vld [vmem:[%s198 + $0x558] sm:$0xff]
      %v390 = vld [vmem:[%s198 + $0x560] sm:$0xff]
      %v391 = vld [vmem:[%s198 + $0x568] sm:$0xff]
      %v392 = vld [vmem:[%s198 + $0x570] sm:$0xff]
      %v393 = vld [vmem:[%s198 + $0x578] sm:$0xff]
      %v394 = vld [vmem:[%s198 + $0x580] sm:$0xff]
      %v395 = vld [vmem:[%s198 + $0x588] sm:$0xff]
      %v396 = vld [vmem:[%s198 + $0x590] sm:$0xff]
      %v397 = vld [vmem:[%s198 + $0x598] sm:$0xff]
      %v398 = vld [vmem:[%s198 + $0x5a0] sm:$0xff]
      %v399 = vld [vmem:[%s198 + $0x5a8] sm:$0xff]
      %v400 = vld [vmem:[%s198 + $0x5b0] sm:$0xff]
      %v401 = vld [vmem:[%s198 + $0x5b8] sm:$0xff]
      %v402 = vld [vmem:[%s198 + $0x5c0] sm:$0xff]
      %v403 = vld [vmem:[%s198 + $0x5c8] sm:$0xff]
      %v404 = vld [vmem:[%s198 + $0x5d0] sm:$0xff]
      %v405 = vld [vmem:[%s198 + $0x5d8] sm:$0xff]
      %v406 = vld [vmem:[%s198 + $0x5e0] sm:$0xff]
      %v407 = vld [vmem:[%s198 + $0x5e8] sm:$0xff]
      %v408 = vld [vmem:[%s198 + $0x5f0] sm:$0xff]
      %v409 = vld [vmem:[%s198 + $0x5f8] sm:$0xff]
      %v410 = vld [vmem:[%s198 + $0x600] sm:$0xff]
      %v411 = vld [vmem:[%s198 + $0x608] sm:$0xff]
      %v412 = vld [vmem:[%s198 + $0x610] sm:$0xff]
      %v413 = vld [vmem:[%s198 + $0x618] sm:$0xff]
      %v414 = vld [vmem:[%s198 + $0x620] sm:$0xff]
      %v415 = vld [vmem:[%s198 + $0x628] sm:$0xff]
      %v416 = vld [vmem:[%s198 + $0x630] sm:$0xff]
      %v417 = vld [vmem:[%s198 + $0x638] sm:$0xff]
      %v418 = vld [vmem:[%s198 + $0x640] sm:$0xff]
      %v419 = vld [vmem:[%s198 + $0x648] sm:$0xff]
      %v420 = vld [vmem:[%s198 + $0x650] sm:$0xff]
      %v421 = vld [vmem:[%s198 + $0x658] sm:$0xff]
      %v422 = vld [vmem:[%s198 + $0x660] sm:$0xff]
      %v423 = vld [vmem:[%s198 + $0x668] sm:$0xff]
      %v424 = vld [vmem:[%s198 + $0x670] sm:$0xff]
      %v425 = vld [vmem:[%s198 + $0x678] sm:$0xff]
      %v426 = vld [vmem:[%s198 + $0x680] sm:$0xff]
      %v427 = vld [vmem:[%s198 + $0x688] sm:$0xff]
      %v428 = vld [vmem:[%s198 + $0x690] sm:$0xff]
      %v429 = vld [vmem:[%s198 + $0x698] sm:$0xff]
      %v430 = vld [vmem:[%s198 + $0x6a0] sm:$0xff]
      %v431 = vld [vmem:[%s198 + $0x6a8] sm:$0xff]
      %v432 = vld [vmem:[%s198 + $0x6b0] sm:$0xff]
      %v433 = vld [vmem:[%s198 + $0x6b8] sm:$0xff]
      %v434 = vld [vmem:[%s198 + $0x6c0] sm:$0xff]
      %v435 = vld [vmem:[%s198 + $0x6c8] sm:$0xff]
      %v436 = vld [vmem:[%s198 + $0x6d0] sm:$0xff]
      %v437 = vld [vmem:[%s198 + $0x6d8] sm:$0xff]
      %v438 = vld [vmem:[%s198 + $0x6e0] sm:$0xff]
      %v439 = vld [vmem:[%s198 + $0x6e8] sm:$0xff]
      %v440 = vld [vmem:[%s198 + $0x6f0] sm:$0xff]
      %v441 = vld [vmem:[%s198 + $0x6f8] sm:$0xff]
      %v442 = vld [vmem:[%s198 + $0x700] sm:$0xff]
      %v443 = vld [vmem:[%s198 + $0x708] sm:$0xff]
      %v444 = vld [vmem:[%s198 + $0x710] sm:$0xff]
      %v445 = vld [vmem:[%s198 + $0x718] sm:$0xff]
      %v446 = vld [vmem:[%s198 + $0x720] sm:$0xff]
      %v447 = vld [vmem:[%s198 + $0x728] sm:$0xff]
      %v448 = vld [vmem:[%s198 + $0x730] sm:$0xff]
      %v449 = vld [vmem:[%s198 + $0x738] sm:$0xff]
      %v450 = vld [vmem:[%s198 + $0x740] sm:$0xff]
      %v451 = vld [vmem:[%s198 + $0x748] sm:$0xff]
      %v452 = vld [vmem:[%s198 + $0x750] sm:$0xff]
      %v453 = vld [vmem:[%s198 + $0x758] sm:$0xff]
      %v454 = vld [vmem:[%s198 + $0x760] sm:$0xff]
      %v455 = vld [vmem:[%s198 + $0x768] sm:$0xff]
      %v456 = vld [vmem:[%s198 + $0x770] sm:$0xff]
      %v457 = vld [vmem:[%s198 + $0x778] sm:$0xff]
      %v458 = vld [vmem:[%s198 + $0x780] sm:$0xff]
      %v459 = vld [vmem:[%s198 + $0x788] sm:$0xff]
      %v460 = vld [vmem:[%s198 + $0x790] sm:$0xff]
      %v461 = vld [vmem:[%s198 + $0x798] sm:$0xff]
      %v462 = vld [vmem:[%s198 + $0x7a0] sm:$0xff]
      %v463 = vld [vmem:[%s198 + $0x7a8] sm:$0xff]
      %v464 = vld [vmem:[%s198 + $0x7b0] sm:$0xff]
      %v465 = vld [vmem:[%s198 + $0x7b8] sm:$0xff]
      %v466 = vld [vmem:[%s198 + $0x7c0] sm:$0xff]
      %v467 = vld [vmem:[%s198 + $0x7c8] sm:$0xff]
      %v468 = vld [vmem:[%s198 + $0x7d0] sm:$0xff]
      %v469 = vld [vmem:[%s198 + $0x7d8] sm:$0xff]
      %v470 = vld [vmem:[%s198 + $0x7e0] sm:$0xff]
      %v471 = vld [vmem:[%s198 + $0x7e8] sm:$0xff]
      %v472 = vld [vmem:[%s198 + $0x7f0] sm:$0xff]
      %v473 = vld [vmem:[%s198 + $0x7f8] sm:$0xff]
      %v474 = vld [vmem:[%s198 + $0x800] sm:$0xff]
      %v475 = vld [vmem:[%s198 + $0x808] sm:$0xff]
      %v476 = vld [vmem:[%s198 + $0x810] sm:$0xff]
      %v477 = vld [vmem:[%s198 + $0x818] sm:$0xff]
      %v478 = vld [vmem:[%s198 + $0x820] sm:$0xff]
      %v479 = vld [vmem:[%s198 + $0x828] sm:$0xff]
      %v480 = vld [vmem:[%s198 + $0x830] sm:$0xff]
      %v481 = vld [vmem:[%s198 + $0x838] sm:$0xff]
      %v482 = vld [vmem:[%s198 + $0x840] sm:$0xff]
      %v483 = vld [vmem:[%s198 + $0x848] sm:$0xff]
      %v484 = vld [vmem:[%s198 + $0x850] sm:$0xff]
      %v485 = vld [vmem:[%s198 + $0x858] sm:$0xff]
      %v486 = vld [vmem:[%s198 + $0x860] sm:$0xff]
      %v487 = vld [vmem:[%s198 + $0x868] sm:$0xff]
      %v488 = vld [vmem:[%s198 + $0x870] sm:$0xff]
      %v489 = vld [vmem:[%s198 + $0x878] sm:$0xff]
      %v490 = vld [vmem:[%s198 + $0x880] sm:$0xff]
      %v491 = vld [vmem:[%s198 + $0x888] sm:$0xff]
      %v492 = vld [vmem:[%s198 + $0x890] sm:$0xff]
      %v493 = vld [vmem:[%s198 + $0x898] sm:$0xff]
      %v494 = vld [vmem:[%s198 + $0x8a0] sm:$0xff]
      %v495 = vld [vmem:[%s198 + $0x8a8] sm:$0xff]
      %v496 = vld [vmem:[%s198 + $0x8b0] sm:$0xff]
      %v497 = vld [vmem:[%s198 + $0x8b8] sm:$0xff]
      %v498 = vld [vmem:[%s198 + $0x8c0] sm:$0xff]
      %v499 = vld [vmem:[%s198 + $0x8c8] sm:$0xff]
      %v500 = vld [vmem:[%s198 + $0x8d0] sm:$0xff]
      %v501 = vld [vmem:[%s198 + $0x8d8] sm:$0xff]
      %v502 = vld [vmem:[%s198 + $0x8e0] sm:$0xff]
      %v503 = vld [vmem:[%s198 + $0x8e8] sm:$0xff]
      %v504 = vld [vmem:[%s198 + $0x8f0] sm:$0xff]
      %v505 = vld [vmem:[%s198 + $0x8f8] sm:$0xff]
      %v506 = vld [vmem:[%s198 + $0x900] sm:$0xff]
      %v507 = vld [vmem:[%s198 + $0x908] sm:$0xff]
      %v508 = vld [vmem:[%s198 + $0x910] sm:$0xff]
      %v509 = vld [vmem:[%s198 + $0x918] sm:$0xff]
      %v510 = vld [vmem:[%s198 + $0x920] sm:$0xff]
      %v511 = vld [vmem:[%s198 + $0x928] sm:$0xff]
      %v512 = vld [vmem:[%s198 + $0x930] sm:$0xff]
      %v513 = vld [vmem:[%s198 + $0x938] sm:$0xff]
      %v514 = vld [vmem:[%s198 + $0x940] sm:$0xff]
      %v515 = vld [vmem:[%s198 + $0x948] sm:$0xff]
      %v516 = vld [vmem:[%s198 + $0x950] sm:$0xff]
      %v517 = vld [vmem:[%s198 + $0x958] sm:$0xff]
      %v518 = vld [vmem:[%s198 + $0x960] sm:$0xff]
      %v519 = vld [vmem:[%s198 + $0x968] sm:$0xff]
      %v520 = vld [vmem:[%s198 + $0x970] sm:$0xff]
      %v521 = vld [vmem:[%s198 + $0x978] sm:$0xff]
      %v522 = vld [vmem:[%s198 + $0x980] sm:$0xff]
      %v523 = vld [vmem:[%s198 + $0x988] sm:$0xff]
      %v524 = vld [vmem:[%s198 + $0x990] sm:$0xff]
      %v525 = vld [vmem:[%s198 + $0x998] sm:$0xff]
      %v526 = vld [vmem:[%s198 + $0x9a0] sm:$0xff]
      %v527 = vld [vmem:[%s198 + $0x9a8] sm:$0xff]
      %v528 = vld [vmem:[%s198 + $0x9b0] sm:$0xff]
      %v529 = vld [vmem:[%s198 + $0x9b8] sm:$0xff]
      %v530 = vld [vmem:[%s198 + $0x9c0] sm:$0xff]
      %v531 = vld [vmem:[%s198 + $0x9c8] sm:$0xff]
      %v532 = vld [vmem:[%s198 + $0x9d0] sm:$0xff]
      %v533 = vld [vmem:[%s198 + $0x9d8] sm:$0xff]
      %v534 = vld [vmem:[%s198 + $0x9e0] sm:$0xff]
      %v535 = vld [vmem:[%s198 + $0x9e8] sm:$0xff]
      %v536 = vld [vmem:[%s198 + $0x9f0] sm:$0xff]
      %v537 = vld [vmem:[%s198 + $0x9f8] sm:$0xff]
      %v538 = vld [vmem:[%s198 + $0xa00] sm:$0xff]
      %v539 = vld [vmem:[%s198 + $0xa08] sm:$0xff]
      %v540 = vld [vmem:[%s198 + $0xa10] sm:$0xff]
      %v541 = vld [vmem:[%s198 + $0xa18] sm:$0xff]
      %v542 = vld [vmem:[%s198 + $0xa20] sm:$0xff]
      %v543 = vld [vmem:[%s198 + $0xa28] sm:$0xff]
      %v544 = vld [vmem:[%s198 + $0xa30] sm:$0xff]
      %v545 = vld [vmem:[%s198 + $0xa38] sm:$0xff]
      %v546 = vld [vmem:[%s198 + $0xa40] sm:$0xff]
      %v547 = vld [vmem:[%s198 + $0xa48] sm:$0xff]
      %v548 = vld [vmem:[%s198 + $0xa50] sm:$0xff]
      %v549 = vld [vmem:[%s198 + $0xa58] sm:$0xff]
      %v550 = vld [vmem:[%s198 + $0xa60] sm:$0xff]
      %v551 = vld [vmem:[%s198 + $0xa68] sm:$0xff]
      %v552 = vld [vmem:[%s198 + $0xa70] sm:$0xff]
      %v553 = vld [vmem:[%s198 + $0xa78] sm:$0xff]
      %v554 = vld [vmem:[%s198 + $0xa80] sm:$0xff]
      %v555 = vld [vmem:[%s198 + $0xa88] sm:$0xff]
      %v556 = vld [vmem:[%s198 + $0xa90] sm:$0xff]
      %v557 = vld [vmem:[%s198 + $0xa98] sm:$0xff]
      %v558 = vld [vmem:[%s198 + $0xaa0] sm:$0xff]
      %v559 = vld [vmem:[%s198 + $0xaa8] sm:$0xff]
      %v560 = vld [vmem:[%s198 + $0xab0] sm:$0xff]
      %v561 = vld [vmem:[%s198 + $0xab8] sm:$0xff]
      %v562 = vld [vmem:[%s198 + $0xac0] sm:$0xff]
      %v563 = vld [vmem:[%s198 + $0xac8] sm:$0xff]
      %v564 = vld [vmem:[%s198 + $0xad0] sm:$0xff]
      %v565 = vld [vmem:[%s198 + $0xad8] sm:$0xff]
      %v566 = vld [vmem:[%s198 + $0xae0] sm:$0xff]
      %v567 = vld [vmem:[%s198 + $0xae8] sm:$0xff]
      %v568 = vld [vmem:[%s198 + $0xaf0] sm:$0xff]
      %v569 = vld [vmem:[%s198 + $0xaf8] sm:$0xff]
      %v570 = vld [vmem:[%s198 + $0xb00] sm:$0xff]
      %v571 = vld [vmem:[%s198 + $0xb08] sm:$0xff]
      %v572 = vld [vmem:[%s198 + $0xb10] sm:$0xff]
      %v573 = vld [vmem:[%s198 + $0xb18] sm:$0xff]
      %v574 = vld [vmem:[%s198 + $0xb20] sm:$0xff]
      %v575 = vld [vmem:[%s198 + $0xb28] sm:$0xff]
      %v576 = vld [vmem:[%s198 + $0xb30] sm:$0xff]
      %v577 = vld [vmem:[%s198 + $0xb38] sm:$0xff]
      %v578 = vld [vmem:[%s198 + $0xb40] sm:$0xff]
      %v579 = vld [vmem:[%s198 + $0xb48] sm:$0xff]
      %v580 = vld [vmem:[%s198 + $0xb50] sm:$0xff]
      %v581 = vld [vmem:[%s198 + $0xb58] sm:$0xff]
      %v582 = vld [vmem:[%s198 + $0xb60] sm:$0xff]
      %v583 = vld [vmem:[%s198 + $0xb68] sm:$0xff]
      %v584 = vld [vmem:[%s198 + $0xb70] sm:$0xff]
      %v585 = vld [vmem:[%s198 + $0xb78] sm:$0xff]
      %v586 = vld [vmem:[%s198 + $0xb80] sm:$0xff]
      %v587 = vld [vmem:[%s198 + $0xb88] sm:$0xff]
      %v588 = vld [vmem:[%s198 + $0xb90] sm:$0xff]
      %v589 = vld [vmem:[%s198 + $0xb98] sm:$0xff]
      %v590 = vld [vmem:[%s198 + $0xba0] sm:$0xff]
      %v591 = vld [vmem:[%s198 + $0xba8] sm:$0xff]
      %v592 = vld [vmem:[%s198 + $0xbb0] sm:$0xff]
      %v593 = vld [vmem:[%s198 + $0xbb8] sm:$0xff]
      %v594 = vld [vmem:[%s198 + $0xbc0] sm:$0xff]
      %v595 = vld [vmem:[%s198 + $0xbc8] sm:$0xff]
      %v596 = vld [vmem:[%s198 + $0xbd0] sm:$0xff]
      %v597 = vld [vmem:[%s198 + $0xbd8] sm:$0xff]
      %v598 = vld [vmem:[%s198 + $0xbe0] sm:$0xff]
      %v599 = vld [vmem:[%s198 + $0xbe8] sm:$0xff]
      %v600 = vld [vmem:[%s198 + $0xbf0] sm:$0xff]
      %v601 = vld [vmem:[%s198 + $0xbf8] sm:$0xff]
      %v602 = vld [vmem:[%s198 + $0xc00] sm:$0xff]
      %v603 = vld [vmem:[%s198 + $0xc08] sm:$0xff]
      %v604 = vld [vmem:[%s198 + $0xc10] sm:$0xff]
      %v605 = vld [vmem:[%s198 + $0xc18] sm:$0xff]
      %v606 = vld [vmem:[%s198 + $0xc20] sm:$0xff]
      %v607 = vld [vmem:[%s198 + $0xc28] sm:$0xff]
      %v608 = vld [vmem:[%s198 + $0xc30] sm:$0xff]
      %v609 = vld [vmem:[%s198 + $0xc38] sm:$0xff]
      %v610 = vld [vmem:[%s198 + $0xc40] sm:$0xff]
      %v611 = vld [vmem:[%s198 + $0xc48] sm:$0xff]
      %v612 = vld [vmem:[%s198 + $0xc50] sm:$0xff]
      %v613 = vld [vmem:[%s198 + $0xc58] sm:$0xff]
      %v614 = vld [vmem:[%s198 + $0xc60] sm:$0xff]
      %v615 = vld [vmem:[%s198 + $0xc68] sm:$0xff]
      %v616 = vld [vmem:[%s198 + $0xc70] sm:$0xff]
      %v617 = vld [vmem:[%s198 + $0xc78] sm:$0xff]
      %v618 = vld [vmem:[%s198 + $0xc80] sm:$0xff]
      %v619 = vld [vmem:[%s198 + $0xc88] sm:$0xff]
      %v620 = vld [vmem:[%s198 + $0xc90] sm:$0xff]
      %v621 = vld [vmem:[%s198 + $0xc98] sm:$0xff]
      %v622 = vld [vmem:[%s198 + $0xca0] sm:$0xff]
      %v623 = vld [vmem:[%s198 + $0xca8] sm:$0xff]
      %v624 = vld [vmem:[%s198 + $0xcb0] sm:$0xff]
      %v625 = vld [vmem:[%s198 + $0xcb8] sm:$0xff]
      %v626 = vld [vmem:[%s198 + $0xcc0] sm:$0xff]
      %v627 = vld [vmem:[%s198 + $0xcc8] sm:$0xff]
      %v628 = vld [vmem:[%s198 + $0xcd0] sm:$0xff]
      %v629 = vld [vmem:[%s198 + $0xcd8] sm:$0xff]
      %v630 = vld [vmem:[%s198 + $0xce0] sm:$0xff]
      %v631 = vld [vmem:[%s198 + $0xce8] sm:$0xff]
      %v632 = vld [vmem:[%s198 + $0xcf0] sm:$0xff]
      %v633 = vld [vmem:[%s198 + $0xcf8] sm:$0xff]
      %v634 = vld [vmem:[%s198 + $0xd00] sm:$0xff]
      %v635 = vld [vmem:[%s198 + $0xd08] sm:$0xff]
      %v636 = vld [vmem:[%s198 + $0xd10] sm:$0xff]
      %v637 = vld [vmem:[%s198 + $0xd18] sm:$0xff]
      %v638 = vld [vmem:[%s198 + $0xd20] sm:$0xff]
      %v639 = vld [vmem:[%s198 + $0xd28] sm:$0xff]
      %v640 = vld [vmem:[%s198 + $0xd30] sm:$0xff]
      %v641 = vld [vmem:[%s198 + $0xd38] sm:$0xff]
      %v642 = vld [vmem:[%s198 + $0xd40] sm:$0xff]
      %v643 = vld [vmem:[%s198 + $0xd48] sm:$0xff]
      %v644 = vld [vmem:[%s198 + $0xd50] sm:$0xff]
      %v645 = vld [vmem:[%s198 + $0xd58] sm:$0xff]
      %v646 = vld [vmem:[%s198 + $0xd60] sm:$0xff]
      %v647 = vld [vmem:[%s198 + $0xd68] sm:$0xff]
      %v648 = vld [vmem:[%s198 + $0xd70] sm:$0xff]
      %v649 = vld [vmem:[%s198 + $0xd78] sm:$0xff]
      %v650 = vld [vmem:[%s198 + $0xd80] sm:$0xff]
      %v651 = vld [vmem:[%s198 + $0xd88] sm:$0xff]
      %v652 = vld [vmem:[%s198 + $0xd90] sm:$0xff]
      %v653 = vld [vmem:[%s198 + $0xd98] sm:$0xff]
      %v654 = vld [vmem:[%s198 + $0xda0] sm:$0xff]
      %v655 = vld [vmem:[%s198 + $0xda8] sm:$0xff]
      %v656 = vld [vmem:[%s198 + $0xdb0] sm:$0xff]
      %v657 = vld [vmem:[%s198 + $0xdb8] sm:$0xff]
      %v658 = vld [vmem:[%s198 + $0xdc0] sm:$0xff]
      %v659 = vld [vmem:[%s198 + $0xdc8] sm:$0xff]
      %v660 = vld [vmem:[%s198 + $0xdd0] sm:$0xff]
      %v661 = vld [vmem:[%s198 + $0xdd8] sm:$0xff]
      %v662 = vld [vmem:[%s198 + $0xde0] sm:$0xff]
      %v663 = vld [vmem:[%s198 + $0xde8] sm:$0xff]
      %v664 = vld [vmem:[%s198 + $0xdf0] sm:$0xff]
      %v665 = vld [vmem:[%s198 + $0xdf8] sm:$0xff]
      %v666 = vld [vmem:[%s198 + $0xe00] sm:$0xff]
      %v667 = vld [vmem:[%s198 + $0xe08] sm:$0xff]
      %v668 = vld [vmem:[%s198 + $0xe10] sm:$0xff]
      %v669 = vld [vmem:[%s198 + $0xe18] sm:$0xff]
      %v670 = vld [vmem:[%s198 + $0xe20] sm:$0xff]
      %v671 = vld [vmem:[%s198 + $0xe28] sm:$0xff]
      %v672 = vld [vmem:[%s198 + $0xe30] sm:$0xff]
      %v673 = vld [vmem:[%s198 + $0xe38] sm:$0xff]
      %v674 = vld [vmem:[%s198 + $0xe40] sm:$0xff]
      %v675 = vld [vmem:[%s198 + $0xe48] sm:$0xff]
      %v676 = vld [vmem:[%s198 + $0xe50] sm:$0xff]
      %v677 = vld [vmem:[%s198 + $0xe58] sm:$0xff]
      %v678 = vld [vmem:[%s198 + $0xe60] sm:$0xff]
      %v679 = vld [vmem:[%s198 + $0xe68] sm:$0xff]
      %v680 = vld [vmem:[%s198 + $0xe70] sm:$0xff]
      %v681 = vld [vmem:[%s198 + $0xe78] sm:$0xff]
      %v682 = vld [vmem:[%s198 + $0xe80] sm:$0xff]
      %v683 = vld [vmem:[%s198 + $0xe88] sm:$0xff]
      %v684 = vld [vmem:[%s198 + $0xe90] sm:$0xff]
      %v685 = vld [vmem:[%s198 + $0xe98] sm:$0xff]
      %v686 = vld [vmem:[%s198 + $0xea0] sm:$0xff]
      %v687 = vld [vmem:[%s198 + $0xea8] sm:$0xff]
      %v688 = vld [vmem:[%s198 + $0xeb0] sm:$0xff]
      %v689 = vld [vmem:[%s198 + $0xeb8] sm:$0xff]
      %v690 = vld [vmem:[%s198 + $0xec0] sm:$0xff]
      %v691 = vld [vmem:[%s198 + $0xec8] sm:$0xff]
      %v692 = vld [vmem:[%s198 + $0xed0] sm:$0xff]
      %v693 = vld [vmem:[%s198 + $0xed8] sm:$0xff]
      %v694 = vld [vmem:[%s198 + $0xee0] sm:$0xff]
      %v695 = vld [vmem:[%s198 + $0xee8] sm:$0xff]
      %v696 = vld [vmem:[%s198 + $0xef0] sm:$0xff]
      %v697 = vld [vmem:[%s198 + $0xef8] sm:$0xff]
      %v698 = vld [vmem:[%s198 + $0xf00] sm:$0xff]
      %v699 = vld [vmem:[%s198 + $0xf08] sm:$0xff]
      %v700 = vld [vmem:[%s198 + $0xf10] sm:$0xff]
      %v701 = vld [vmem:[%s198 + $0xf18] sm:$0xff]
      %v702 = vld [vmem:[%s198 + $0xf20] sm:$0xff]
      %v703 = vld [vmem:[%s198 + $0xf28] sm:$0xff]
      %v704 = vld [vmem:[%s198 + $0xf30] sm:$0xff]
      %v705 = vld [vmem:[%s198 + $0xf38] sm:$0xff]
      %v706 = vld [vmem:[%s198 + $0xf40] sm:$0xff]
      %v707 = vld [vmem:[%s198 + $0xf48] sm:$0xff]
      %v708 = vld [vmem:[%s198 + $0xf50] sm:$0xff]
      %v709 = vld [vmem:[%s198 + $0xf58] sm:$0xff]
      %v710 = vld [vmem:[%s198 + $0xf60] sm:$0xff]
      %v711 = vld [vmem:[%s198 + $0xf68] sm:$0xff]
      %v712 = vld [vmem:[%s198 + $0xf70] sm:$0xff]
      %v713 = vld [vmem:[%s198 + $0xf78] sm:$0xff]
      %v714 = vld [vmem:[%s198 + $0xf80] sm:$0xff]
      %v715 = vld [vmem:[%s198 + $0xf88] sm:$0xff]
      %v716 = vld [vmem:[%s198 + $0xf90] sm:$0xff]
      %v717 = vld [vmem:[%s198 + $0xf98] sm:$0xff]
      %v718 = vld [vmem:[%s198 + $0xfa0] sm:$0xff]
      %v719 = vld [vmem:[%s198 + $0xfa8] sm:$0xff]
      %v720 = vld [vmem:[%s198 + $0xfb0] sm:$0xff]
      %v721 = vld [vmem:[%s198 + $0xfb8] sm:$0xff]
      %v722 = vld [vmem:[%s198 + $0xfc0] sm:$0xff]
      %v723 = vld [vmem:[%s198 + $0xfc8] sm:$0xff]
      %v724 = vld [vmem:[%s198 + $0xfd0] sm:$0xff]
      %v725 = vld [vmem:[%s198 + $0xfd8] sm:$0xff]
      %v726 = vld [vmem:[%s198 + $0xfe0] sm:$0xff]
      %v727 = vld [vmem:[%s198 + $0xfe8] sm:$0xff]
      %v728 = vld [vmem:[%s198 + $0xff0] sm:$0xff]
      %v729 = vld [vmem:[%s198 + $0xff8] sm:$0xff]
      %vm730 = vcmask 261120
      %731 = vst.msk [vmem:[%s216] sm:$0xff] %vm730, %v218
      %732 = vst.msk [vmem:[%s216 + $0x8] sm:$0xff] %vm730, %v219
      %733 = vst.msk [vmem:[%s216 + $0x10] sm:$0xff] %vm730, %v220
      %734 = vst.msk [vmem:[%s216 + $0x18] sm:$0xff] %vm730, %v221
      %735 = vst.msk [vmem:[%s216 + $0x20] sm:$0xff] %vm730, %v222
      %736 = vst.msk [vmem:[%s216 + $0x28] sm:$0xff] %vm730, %v223
      %737 = vst.msk [vmem:[%s216 + $0x30] sm:$0xff] %vm730, %v224
      %738 = vst.msk [vmem:[%s216 + $0x38] sm:$0xff] %vm730, %v225
      %739 = vst.msk [vmem:[%s216 + $0x40] sm:$0xff] %vm730, %v226
      %740 = vst.msk [vmem:[%s216 + $0x48] sm:$0xff] %vm730, %v227
      %741 = vst.msk [vmem:[%s216 + $0x50] sm:$0xff] %vm730, %v228
      %742 = vst.msk [vmem:[%s216 + $0x58] sm:$0xff] %vm730, %v229
      %743 = vst.msk [vmem:[%s216 + $0x60] sm:$0xff] %vm730, %v230
      %744 = vst.msk [vmem:[%s216 + $0x68] sm:$0xff] %vm730, %v231
      %745 = vst.msk [vmem:[%s216 + $0x70] sm:$0xff] %vm730, %v232
      %746 = vst.msk [vmem:[%s216 + $0x78] sm:$0xff] %vm730, %v233
      %747 = vst.msk [vmem:[%s216 + $0x80] sm:$0xff] %vm730, %v234
      %748 = vst.msk [vmem:[%s216 + $0x88] sm:$0xff] %vm730, %v235
      %749 = vst.msk [vmem:[%s216 + $0x90] sm:$0xff] %vm730, %v236
      %750 = vst.msk [vmem:[%s216 + $0x98] sm:$0xff] %vm730, %v237
      %751 = vst.msk [vmem:[%s216 + $0xa0] sm:$0xff] %vm730, %v238
      %752 = vst.msk [vmem:[%s216 + $0xa8] sm:$0xff] %vm730, %v239
      %753 = vst.msk [vmem:[%s216 + $0xb0] sm:$0xff] %vm730, %v240
      %754 = vst.msk [vmem:[%s216 + $0xb8] sm:$0xff] %vm730, %v241
      %755 = vst.msk [vmem:[%s216 + $0xc0] sm:$0xff] %vm730, %v242
      %756 = vst.msk [vmem:[%s216 + $0xc8] sm:$0xff] %vm730, %v243
      %757 = vst.msk [vmem:[%s216 + $0xd0] sm:$0xff] %vm730, %v244
      %758 = vst.msk [vmem:[%s216 + $0xd8] sm:$0xff] %vm730, %v245
      %759 = vst.msk [vmem:[%s216 + $0xe0] sm:$0xff] %vm730, %v246
      %760 = vst.msk [vmem:[%s216 + $0xe8] sm:$0xff] %vm730, %v247
      %761 = vst.msk [vmem:[%s216 + $0xf0] sm:$0xff] %vm730, %v248
      %762 = vst.msk [vmem:[%s216 + $0xf8] sm:$0xff] %vm730, %v249
      %763 = vst.msk [vmem:[%s216 + $0x100] sm:$0xff] %vm730, %v250
      %764 = vst.msk [vmem:[%s216 + $0x108] sm:$0xff] %vm730, %v251
      %765 = vst.msk [vmem:[%s216 + $0x110] sm:$0xff] %vm730, %v252
      %766 = vst.msk [vmem:[%s216 + $0x118] sm:$0xff] %vm730, %v253
      %767 = vst.msk [vmem:[%s216 + $0x120] sm:$0xff] %vm730, %v254
      %768 = vst.msk [vmem:[%s216 + $0x128] sm:$0xff] %vm730, %v255
      %769 = vst.msk [vmem:[%s216 + $0x130] sm:$0xff] %vm730, %v256
      %770 = vst.msk [vmem:[%s216 + $0x138] sm:$0xff] %vm730, %v257
      %771 = vst.msk [vmem:[%s216 + $0x140] sm:$0xff] %vm730, %v258
      %772 = vst.msk [vmem:[%s216 + $0x148] sm:$0xff] %vm730, %v259
      %773 = vst.msk [vmem:[%s216 + $0x150] sm:$0xff] %vm730, %v260
      %774 = vst.msk [vmem:[%s216 + $0x158] sm:$0xff] %vm730, %v261
      %775 = vst.msk [vmem:[%s216 + $0x160] sm:$0xff] %vm730, %v262
      %776 = vst.msk [vmem:[%s216 + $0x168] sm:$0xff] %vm730, %v263
      %777 = vst.msk [vmem:[%s216 + $0x170] sm:$0xff] %vm730, %v264
      %778 = vst.msk [vmem:[%s216 + $0x178] sm:$0xff] %vm730, %v265
      %779 = vst.msk [vmem:[%s216 + $0x180] sm:$0xff] %vm730, %v266
      %780 = vst.msk [vmem:[%s216 + $0x188] sm:$0xff] %vm730, %v267
      %781 = vst.msk [vmem:[%s216 + $0x190] sm:$0xff] %vm730, %v268
      %782 = vst.msk [vmem:[%s216 + $0x198] sm:$0xff] %vm730, %v269
      %783 = vst.msk [vmem:[%s216 + $0x1a0] sm:$0xff] %vm730, %v270
      %784 = vst.msk [vmem:[%s216 + $0x1a8] sm:$0xff] %vm730, %v271
      %785 = vst.msk [vmem:[%s216 + $0x1b0] sm:$0xff] %vm730, %v272
      %786 = vst.msk [vmem:[%s216 + $0x1b8] sm:$0xff] %vm730, %v273
      %787 = vst.msk [vmem:[%s216 + $0x1c0] sm:$0xff] %vm730, %v274
      %788 = vst.msk [vmem:[%s216 + $0x1c8] sm:$0xff] %vm730, %v275
      %789 = vst.msk [vmem:[%s216 + $0x1d0] sm:$0xff] %vm730, %v276
      %790 = vst.msk [vmem:[%s216 + $0x1d8] sm:$0xff] %vm730, %v277
      %791 = vst.msk [vmem:[%s216 + $0x1e0] sm:$0xff] %vm730, %v278
      %792 = vst.msk [vmem:[%s216 + $0x1e8] sm:$0xff] %vm730, %v279
      %793 = vst.msk [vmem:[%s216 + $0x1f0] sm:$0xff] %vm730, %v280
      %794 = vst.msk [vmem:[%s216 + $0x1f8] sm:$0xff] %vm730, %v281
      %795 = vst.msk [vmem:[%s216 + $0x200] sm:$0xff] %vm730, %v282
      %796 = vst.msk [vmem:[%s216 + $0x208] sm:$0xff] %vm730, %v283
      %797 = vst.msk [vmem:[%s216 + $0x210] sm:$0xff] %vm730, %v284
      %798 = vst.msk [vmem:[%s216 + $0x218] sm:$0xff] %vm730, %v285
      %799 = vst.msk [vmem:[%s216 + $0x220] sm:$0xff] %vm730, %v286
      %800 = vst.msk [vmem:[%s216 + $0x228] sm:$0xff] %vm730, %v287
      %801 = vst.msk [vmem:[%s216 + $0x230] sm:$0xff] %vm730, %v288
      %802 = vst.msk [vmem:[%s216 + $0x238] sm:$0xff] %vm730, %v289
      %803 = vst.msk [vmem:[%s216 + $0x240] sm:$0xff] %vm730, %v290
      %804 = vst.msk [vmem:[%s216 + $0x248] sm:$0xff] %vm730, %v291
      %805 = vst.msk [vmem:[%s216 + $0x250] sm:$0xff] %vm730, %v292
      %806 = vst.msk [vmem:[%s216 + $0x258] sm:$0xff] %vm730, %v293
      %807 = vst.msk [vmem:[%s216 + $0x260] sm:$0xff] %vm730, %v294
      %808 = vst.msk [vmem:[%s216 + $0x268] sm:$0xff] %vm730, %v295
      %809 = vst.msk [vmem:[%s216 + $0x270] sm:$0xff] %vm730, %v296
      %810 = vst.msk [vmem:[%s216 + $0x278] sm:$0xff] %vm730, %v297
      %811 = vst.msk [vmem:[%s216 + $0x280] sm:$0xff] %vm730, %v298
      %812 = vst.msk [vmem:[%s216 + $0x288] sm:$0xff] %vm730, %v299
      %813 = vst.msk [vmem:[%s216 + $0x290] sm:$0xff] %vm730, %v300
      %814 = vst.msk [vmem:[%s216 + $0x298] sm:$0xff] %vm730, %v301
      %815 = vst.msk [vmem:[%s216 + $0x2a0] sm:$0xff] %vm730, %v302
      %816 = vst.msk [vmem:[%s216 + $0x2a8] sm:$0xff] %vm730, %v303
      %817 = vst.msk [vmem:[%s216 + $0x2b0] sm:$0xff] %vm730, %v304
      %818 = vst.msk [vmem:[%s216 + $0x2b8] sm:$0xff] %vm730, %v305
      %819 = vst.msk [vmem:[%s216 + $0x2c0] sm:$0xff] %vm730, %v306
      %820 = vst.msk [vmem:[%s216 + $0x2c8] sm:$0xff] %vm730, %v307
      %821 = vst.msk [vmem:[%s216 + $0x2d0] sm:$0xff] %vm730, %v308
      %822 = vst.msk [vmem:[%s216 + $0x2d8] sm:$0xff] %vm730, %v309
      %823 = vst.msk [vmem:[%s216 + $0x2e0] sm:$0xff] %vm730, %v310
      %824 = vst.msk [vmem:[%s216 + $0x2e8] sm:$0xff] %vm730, %v311
      %825 = vst.msk [vmem:[%s216 + $0x2f0] sm:$0xff] %vm730, %v312
      %826 = vst.msk [vmem:[%s216 + $0x2f8] sm:$0xff] %vm730, %v313
      %827 = vst.msk [vmem:[%s216 + $0x300] sm:$0xff] %vm730, %v314
      %828 = vst.msk [vmem:[%s216 + $0x308] sm:$0xff] %vm730, %v315
      %829 = vst.msk [vmem:[%s216 + $0x310] sm:$0xff] %vm730, %v316
      %830 = vst.msk [vmem:[%s216 + $0x318] sm:$0xff] %vm730, %v317
      %831 = vst.msk [vmem:[%s216 + $0x320] sm:$0xff] %vm730, %v318
      %832 = vst.msk [vmem:[%s216 + $0x328] sm:$0xff] %vm730, %v319
      %833 = vst.msk [vmem:[%s216 + $0x330] sm:$0xff] %vm730, %v320
      %834 = vst.msk [vmem:[%s216 + $0x338] sm:$0xff] %vm730, %v321
      %835 = vst.msk [vmem:[%s216 + $0x340] sm:$0xff] %vm730, %v322
      %836 = vst.msk [vmem:[%s216 + $0x348] sm:$0xff] %vm730, %v323
      %837 = vst.msk [vmem:[%s216 + $0x350] sm:$0xff] %vm730, %v324
      %838 = vst.msk [vmem:[%s216 + $0x358] sm:$0xff] %vm730, %v325
      %839 = vst.msk [vmem:[%s216 + $0x360] sm:$0xff] %vm730, %v326
      %840 = vst.msk [vmem:[%s216 + $0x368] sm:$0xff] %vm730, %v327
      %841 = vst.msk [vmem:[%s216 + $0x370] sm:$0xff] %vm730, %v328
      %842 = vst.msk [vmem:[%s216 + $0x378] sm:$0xff] %vm730, %v329
      %843 = vst.msk [vmem:[%s216 + $0x380] sm:$0xff] %vm730, %v330
      %844 = vst.msk [vmem:[%s216 + $0x388] sm:$0xff] %vm730, %v331
      %845 = vst.msk [vmem:[%s216 + $0x390] sm:$0xff] %vm730, %v332
      %846 = vst.msk [vmem:[%s216 + $0x398] sm:$0xff] %vm730, %v333
      %847 = vst.msk [vmem:[%s216 + $0x3a0] sm:$0xff] %vm730, %v334
      %848 = vst.msk [vmem:[%s216 + $0x3a8] sm:$0xff] %vm730, %v335
      %849 = vst.msk [vmem:[%s216 + $0x3b0] sm:$0xff] %vm730, %v336
      %850 = vst.msk [vmem:[%s216 + $0x3b8] sm:$0xff] %vm730, %v337
      %851 = vst.msk [vmem:[%s216 + $0x3c0] sm:$0xff] %vm730, %v338
      %852 = vst.msk [vmem:[%s216 + $0x3c8] sm:$0xff] %vm730, %v339
      %853 = vst.msk [vmem:[%s216 + $0x3d0] sm:$0xff] %vm730, %v340
      %854 = vst.msk [vmem:[%s216 + $0x3d8] sm:$0xff] %vm730, %v341
      %855 = vst.msk [vmem:[%s216 + $0x3e0] sm:$0xff] %vm730, %v342
      %856 = vst.msk [vmem:[%s216 + $0x3e8] sm:$0xff] %vm730, %v343
      %857 = vst.msk [vmem:[%s216 + $0x3f0] sm:$0xff] %vm730, %v344
      %858 = vst.msk [vmem:[%s216 + $0x3f8] sm:$0xff] %vm730, %v345
      %859 = vst.msk [vmem:[%s216 + $0x400] sm:$0xff] %vm730, %v346
      %860 = vst.msk [vmem:[%s216 + $0x408] sm:$0xff] %vm730, %v347
      %861 = vst.msk [vmem:[%s216 + $0x410] sm:$0xff] %vm730, %v348
      %862 = vst.msk [vmem:[%s216 + $0x418] sm:$0xff] %vm730, %v349
      %863 = vst.msk [vmem:[%s216 + $0x420] sm:$0xff] %vm730, %v350
      %864 = vst.msk [vmem:[%s216 + $0x428] sm:$0xff] %vm730, %v351
      %865 = vst.msk [vmem:[%s216 + $0x430] sm:$0xff] %vm730, %v352
      %866 = vst.msk [vmem:[%s216 + $0x438] sm:$0xff] %vm730, %v353
      %867 = vst.msk [vmem:[%s216 + $0x440] sm:$0xff] %vm730, %v354
      %868 = vst.msk [vmem:[%s216 + $0x448] sm:$0xff] %vm730, %v355
      %869 = vst.msk [vmem:[%s216 + $0x450] sm:$0xff] %vm730, %v356
      %870 = vst.msk [vmem:[%s216 + $0x458] sm:$0xff] %vm730, %v357
      %871 = vst.msk [vmem:[%s216 + $0x460] sm:$0xff] %vm730, %v358
      %872 = vst.msk [vmem:[%s216 + $0x468] sm:$0xff] %vm730, %v359
      %873 = vst.msk [vmem:[%s216 + $0x470] sm:$0xff] %vm730, %v360
      %874 = vst.msk [vmem:[%s216 + $0x478] sm:$0xff] %vm730, %v361
      %875 = vst.msk [vmem:[%s216 + $0x480] sm:$0xff] %vm730, %v362
      %876 = vst.msk [vmem:[%s216 + $0x488] sm:$0xff] %vm730, %v363
      %877 = vst.msk [vmem:[%s216 + $0x490] sm:$0xff] %vm730, %v364
      %878 = vst.msk [vmem:[%s216 + $0x498] sm:$0xff] %vm730, %v365
      %879 = vst.msk [vmem:[%s216 + $0x4a0] sm:$0xff] %vm730, %v366
      %880 = vst.msk [vmem:[%s216 + $0x4a8] sm:$0xff] %vm730, %v367
      %881 = vst.msk [vmem:[%s216 + $0x4b0] sm:$0xff] %vm730, %v368
      %882 = vst.msk [vmem:[%s216 + $0x4b8] sm:$0xff] %vm730, %v369
      %883 = vst.msk [vmem:[%s216 + $0x4c0] sm:$0xff] %vm730, %v370
      %884 = vst.msk [vmem:[%s216 + $0x4c8] sm:$0xff] %vm730, %v371
      %885 = vst.msk [vmem:[%s216 + $0x4d0] sm:$0xff] %vm730, %v372
      %886 = vst.msk [vmem:[%s216 + $0x4d8] sm:$0xff] %vm730, %v373
      %887 = vst.msk [vmem:[%s216 + $0x4e0] sm:$0xff] %vm730, %v374
      %888 = vst.msk [vmem:[%s216 + $0x4e8] sm:$0xff] %vm730, %v375
      %889 = vst.msk [vmem:[%s216 + $0x4f0] sm:$0xff] %vm730, %v376
      %890 = vst.msk [vmem:[%s216 + $0x4f8] sm:$0xff] %vm730, %v377
      %891 = vst.msk [vmem:[%s216 + $0x500] sm:$0xff] %vm730, %v378
      %892 = vst.msk [vmem:[%s216 + $0x508] sm:$0xff] %vm730, %v379
      %893 = vst.msk [vmem:[%s216 + $0x510] sm:$0xff] %vm730, %v380
      %894 = vst.msk [vmem:[%s216 + $0x518] sm:$0xff] %vm730, %v381
      %895 = vst.msk [vmem:[%s216 + $0x520] sm:$0xff] %vm730, %v382
      %896 = vst.msk [vmem:[%s216 + $0x528] sm:$0xff] %vm730, %v383
      %897 = vst.msk [vmem:[%s216 + $0x530] sm:$0xff] %vm730, %v384
      %898 = vst.msk [vmem:[%s216 + $0x538] sm:$0xff] %vm730, %v385
      %899 = vst.msk [vmem:[%s216 + $0x540] sm:$0xff] %vm730, %v386
      %900 = vst.msk [vmem:[%s216 + $0x548] sm:$0xff] %vm730, %v387
      %901 = vst.msk [vmem:[%s216 + $0x550] sm:$0xff] %vm730, %v388
      %902 = vst.msk [vmem:[%s216 + $0x558] sm:$0xff] %vm730, %v389
      %903 = vst.msk [vmem:[%s216 + $0x560] sm:$0xff] %vm730, %v390
      %904 = vst.msk [vmem:[%s216 + $0x568] sm:$0xff] %vm730, %v391
      %905 = vst.msk [vmem:[%s216 + $0x570] sm:$0xff] %vm730, %v392
      %906 = vst.msk [vmem:[%s216 + $0x578] sm:$0xff] %vm730, %v393
      %907 = vst.msk [vmem:[%s216 + $0x580] sm:$0xff] %vm730, %v394
      %908 = vst.msk [vmem:[%s216 + $0x588] sm:$0xff] %vm730, %v395
      %909 = vst.msk [vmem:[%s216 + $0x590] sm:$0xff] %vm730, %v396
      %910 = vst.msk [vmem:[%s216 + $0x598] sm:$0xff] %vm730, %v397
      %911 = vst.msk [vmem:[%s216 + $0x5a0] sm:$0xff] %vm730, %v398
      %912 = vst.msk [vmem:[%s216 + $0x5a8] sm:$0xff] %vm730, %v399
      %913 = vst.msk [vmem:[%s216 + $0x5b0] sm:$0xff] %vm730, %v400
      %914 = vst.msk [vmem:[%s216 + $0x5b8] sm:$0xff] %vm730, %v401
      %915 = vst.msk [vmem:[%s216 + $0x5c0] sm:$0xff] %vm730, %v402
      %916 = vst.msk [vmem:[%s216 + $0x5c8] sm:$0xff] %vm730, %v403
      %917 = vst.msk [vmem:[%s216 + $0x5d0] sm:$0xff] %vm730, %v404
      %918 = vst.msk [vmem:[%s216 + $0x5d8] sm:$0xff] %vm730, %v405
      %919 = vst.msk [vmem:[%s216 + $0x5e0] sm:$0xff] %vm730, %v406
      %920 = vst.msk [vmem:[%s216 + $0x5e8] sm:$0xff] %vm730, %v407
      %921 = vst.msk [vmem:[%s216 + $0x5f0] sm:$0xff] %vm730, %v408
      %922 = vst.msk [vmem:[%s216 + $0x5f8] sm:$0xff] %vm730, %v409
      %923 = vst.msk [vmem:[%s216 + $0x600] sm:$0xff] %vm730, %v410
      %924 = vst.msk [vmem:[%s216 + $0x608] sm:$0xff] %vm730, %v411
      %925 = vst.msk [vmem:[%s216 + $0x610] sm:$0xff] %vm730, %v412
      %926 = vst.msk [vmem:[%s216 + $0x618] sm:$0xff] %vm730, %v413
      %927 = vst.msk [vmem:[%s216 + $0x620] sm:$0xff] %vm730, %v414
      %928 = vst.msk [vmem:[%s216 + $0x628] sm:$0xff] %vm730, %v415
      %929 = vst.msk [vmem:[%s216 + $0x630] sm:$0xff] %vm730, %v416
      %930 = vst.msk [vmem:[%s216 + $0x638] sm:$0xff] %vm730, %v417
      %931 = vst.msk [vmem:[%s216 + $0x640] sm:$0xff] %vm730, %v418
      %932 = vst.msk [vmem:[%s216 + $0x648] sm:$0xff] %vm730, %v419
      %933 = vst.msk [vmem:[%s216 + $0x650] sm:$0xff] %vm730, %v420
      %934 = vst.msk [vmem:[%s216 + $0x658] sm:$0xff] %vm730, %v421
      %935 = vst.msk [vmem:[%s216 + $0x660] sm:$0xff] %vm730, %v422
      %936 = vst.msk [vmem:[%s216 + $0x668] sm:$0xff] %vm730, %v423
      %937 = vst.msk [vmem:[%s216 + $0x670] sm:$0xff] %vm730, %v424
      %938 = vst.msk [vmem:[%s216 + $0x678] sm:$0xff] %vm730, %v425
      %939 = vst.msk [vmem:[%s216 + $0x680] sm:$0xff] %vm730, %v426
      %940 = vst.msk [vmem:[%s216 + $0x688] sm:$0xff] %vm730, %v427
      %941 = vst.msk [vmem:[%s216 + $0x690] sm:$0xff] %vm730, %v428
      %942 = vst.msk [vmem:[%s216 + $0x698] sm:$0xff] %vm730, %v429
      %943 = vst.msk [vmem:[%s216 + $0x6a0] sm:$0xff] %vm730, %v430
      %944 = vst.msk [vmem:[%s216 + $0x6a8] sm:$0xff] %vm730, %v431
      %945 = vst.msk [vmem:[%s216 + $0x6b0] sm:$0xff] %vm730, %v432
      %946 = vst.msk [vmem:[%s216 + $0x6b8] sm:$0xff] %vm730, %v433
      %947 = vst.msk [vmem:[%s216 + $0x6c0] sm:$0xff] %vm730, %v434
      %948 = vst.msk [vmem:[%s216 + $0x6c8] sm:$0xff] %vm730, %v435
      %949 = vst.msk [vmem:[%s216 + $0x6d0] sm:$0xff] %vm730, %v436
      %950 = vst.msk [vmem:[%s216 + $0x6d8] sm:$0xff] %vm730, %v437
      %951 = vst.msk [vmem:[%s216 + $0x6e0] sm:$0xff] %vm730, %v438
      %952 = vst.msk [vmem:[%s216 + $0x6e8] sm:$0xff] %vm730, %v439
      %953 = vst.msk [vmem:[%s216 + $0x6f0] sm:$0xff] %vm730, %v440
      %954 = vst.msk [vmem:[%s216 + $0x6f8] sm:$0xff] %vm730, %v441
      %955 = vst.msk [vmem:[%s216 + $0x700] sm:$0xff] %vm730, %v442
      %956 = vst.msk [vmem:[%s216 + $0x708] sm:$0xff] %vm730, %v443
      %957 = vst.msk [vmem:[%s216 + $0x710] sm:$0xff] %vm730, %v444
      %958 = vst.msk [vmem:[%s216 + $0x718] sm:$0xff] %vm730, %v445
      %959 = vst.msk [vmem:[%s216 + $0x720] sm:$0xff] %vm730, %v446
      %960 = vst.msk [vmem:[%s216 + $0x728] sm:$0xff] %vm730, %v447
      %961 = vst.msk [vmem:[%s216 + $0x730] sm:$0xff] %vm730, %v448
      %962 = vst.msk [vmem:[%s216 + $0x738] sm:$0xff] %vm730, %v449
      %963 = vst.msk [vmem:[%s216 + $0x740] sm:$0xff] %vm730, %v450
      %964 = vst.msk [vmem:[%s216 + $0x748] sm:$0xff] %vm730, %v451
      %965 = vst.msk [vmem:[%s216 + $0x750] sm:$0xff] %vm730, %v452
      %966 = vst.msk [vmem:[%s216 + $0x758] sm:$0xff] %vm730, %v453
      %967 = vst.msk [vmem:[%s216 + $0x760] sm:$0xff] %vm730, %v454
      %968 = vst.msk [vmem:[%s216 + $0x768] sm:$0xff] %vm730, %v455
      %969 = vst.msk [vmem:[%s216 + $0x770] sm:$0xff] %vm730, %v456
      %970 = vst.msk [vmem:[%s216 + $0x778] sm:$0xff] %vm730, %v457
      %971 = vst.msk [vmem:[%s216 + $0x780] sm:$0xff] %vm730, %v458
      %972 = vst.msk [vmem:[%s216 + $0x788] sm:$0xff] %vm730, %v459
      %973 = vst.msk [vmem:[%s216 + $0x790] sm:$0xff] %vm730, %v460
      %974 = vst.msk [vmem:[%s216 + $0x798] sm:$0xff] %vm730, %v461
      %975 = vst.msk [vmem:[%s216 + $0x7a0] sm:$0xff] %vm730, %v462
      %976 = vst.msk [vmem:[%s216 + $0x7a8] sm:$0xff] %vm730, %v463
      %977 = vst.msk [vmem:[%s216 + $0x7b0] sm:$0xff] %vm730, %v464
      %978 = vst.msk [vmem:[%s216 + $0x7b8] sm:$0xff] %vm730, %v465
      %979 = vst.msk [vmem:[%s216 + $0x7c0] sm:$0xff] %vm730, %v466
      %980 = vst.msk [vmem:[%s216 + $0x7c8] sm:$0xff] %vm730, %v467
      %981 = vst.msk [vmem:[%s216 + $0x7d0] sm:$0xff] %vm730, %v468
      %982 = vst.msk [vmem:[%s216 + $0x7d8] sm:$0xff] %vm730, %v469
      %983 = vst.msk [vmem:[%s216 + $0x7e0] sm:$0xff] %vm730, %v470
      %984 = vst.msk [vmem:[%s216 + $0x7e8] sm:$0xff] %vm730, %v471
      %985 = vst.msk [vmem:[%s216 + $0x7f0] sm:$0xff] %vm730, %v472
      %986 = vst.msk [vmem:[%s216 + $0x7f8] sm:$0xff] %vm730, %v473
      %987 = vst.msk [vmem:[%s216 + $0x800] sm:$0xff] %vm730, %v474
      %988 = vst.msk [vmem:[%s216 + $0x808] sm:$0xff] %vm730, %v475
      %989 = vst.msk [vmem:[%s216 + $0x810] sm:$0xff] %vm730, %v476
      %990 = vst.msk [vmem:[%s216 + $0x818] sm:$0xff] %vm730, %v477
      %991 = vst.msk [vmem:[%s216 + $0x820] sm:$0xff] %vm730, %v478
      %992 = vst.msk [vmem:[%s216 + $0x828] sm:$0xff] %vm730, %v479
      %993 = vst.msk [vmem:[%s216 + $0x830] sm:$0xff] %vm730, %v480
      %994 = vst.msk [vmem:[%s216 + $0x838] sm:$0xff] %vm730, %v481
      %995 = vst.msk [vmem:[%s216 + $0x840] sm:$0xff] %vm730, %v482
      %996 = vst.msk [vmem:[%s216 + $0x848] sm:$0xff] %vm730, %v483
      %997 = vst.msk [vmem:[%s216 + $0x850] sm:$0xff] %vm730, %v484
      %998 = vst.msk [vmem:[%s216 + $0x858] sm:$0xff] %vm730, %v485
      %999 = vst.msk [vmem:[%s216 + $0x860] sm:$0xff] %vm730, %v486
      %1000 = vst.msk [vmem:[%s216 + $0x868] sm:$0xff] %vm730, %v487
      %1001 = vst.msk [vmem:[%s216 + $0x870] sm:$0xff] %vm730, %v488
      %1002 = vst.msk [vmem:[%s216 + $0x878] sm:$0xff] %vm730, %v489
      %1003 = vst.msk [vmem:[%s216 + $0x880] sm:$0xff] %vm730, %v490
      %1004 = vst.msk [vmem:[%s216 + $0x888] sm:$0xff] %vm730, %v491
      %1005 = vst.msk [vmem:[%s216 + $0x890] sm:$0xff] %vm730, %v492
      %1006 = vst.msk [vmem:[%s216 + $0x898] sm:$0xff] %vm730, %v493
      %1007 = vst.msk [vmem:[%s216 + $0x8a0] sm:$0xff] %vm730, %v494
      %1008 = vst.msk [vmem:[%s216 + $0x8a8] sm:$0xff] %vm730, %v495
      %1009 = vst.msk [vmem:[%s216 + $0x8b0] sm:$0xff] %vm730, %v496
      %1010 = vst.msk [vmem:[%s216 + $0x8b8] sm:$0xff] %vm730, %v497
      %1011 = vst.msk [vmem:[%s216 + $0x8c0] sm:$0xff] %vm730, %v498
      %1012 = vst.msk [vmem:[%s216 + $0x8c8] sm:$0xff] %vm730, %v499
      %1013 = vst.msk [vmem:[%s216 + $0x8d0] sm:$0xff] %vm730, %v500
      %1014 = vst.msk [vmem:[%s216 + $0x8d8] sm:$0xff] %vm730, %v501
      %1015 = vst.msk [vmem:[%s216 + $0x8e0] sm:$0xff] %vm730, %v502
      %1016 = vst.msk [vmem:[%s216 + $0x8e8] sm:$0xff] %vm730, %v503
      %1017 = vst.msk [vmem:[%s216 + $0x8f0] sm:$0xff] %vm730, %v504
      %1018 = vst.msk [vmem:[%s216 + $0x8f8] sm:$0xff] %vm730, %v505
      %1019 = vst.msk [vmem:[%s216 + $0x900] sm:$0xff] %vm730, %v506
      %1020 = vst.msk [vmem:[%s216 + $0x908] sm:$0xff] %vm730, %v507
      %1021 = vst.msk [vmem:[%s216 + $0x910] sm:$0xff] %vm730, %v508
      %1022 = vst.msk [vmem:[%s216 + $0x918] sm:$0xff] %vm730, %v509
      %1023 = vst.msk [vmem:[%s216 + $0x920] sm:$0xff] %vm730, %v510
      %1024 = vst.msk [vmem:[%s216 + $0x928] sm:$0xff] %vm730, %v511
      %1025 = vst.msk [vmem:[%s216 + $0x930] sm:$0xff] %vm730, %v512
      %1026 = vst.msk [vmem:[%s216 + $0x938] sm:$0xff] %vm730, %v513
      %1027 = vst.msk [vmem:[%s216 + $0x940] sm:$0xff] %vm730, %v514
      %1028 = vst.msk [vmem:[%s216 + $0x948] sm:$0xff] %vm730, %v515
      %1029 = vst.msk [vmem:[%s216 + $0x950] sm:$0xff] %vm730, %v516
      %1030 = vst.msk [vmem:[%s216 + $0x958] sm:$0xff] %vm730, %v517
      %1031 = vst.msk [vmem:[%s216 + $0x960] sm:$0xff] %vm730, %v518
      %1032 = vst.msk [vmem:[%s216 + $0x968] sm:$0xff] %vm730, %v519
      %1033 = vst.msk [vmem:[%s216 + $0x970] sm:$0xff] %vm730, %v520
      %1034 = vst.msk [vmem:[%s216 + $0x978] sm:$0xff] %vm730, %v521
      %1035 = vst.msk [vmem:[%s216 + $0x980] sm:$0xff] %vm730, %v522
      %1036 = vst.msk [vmem:[%s216 + $0x988] sm:$0xff] %vm730, %v523
      %1037 = vst.msk [vmem:[%s216 + $0x990] sm:$0xff] %vm730, %v524
      %1038 = vst.msk [vmem:[%s216 + $0x998] sm:$0xff] %vm730, %v525
      %1039 = vst.msk [vmem:[%s216 + $0x9a0] sm:$0xff] %vm730, %v526
      %1040 = vst.msk [vmem:[%s216 + $0x9a8] sm:$0xff] %vm730, %v527
      %1041 = vst.msk [vmem:[%s216 + $0x9b0] sm:$0xff] %vm730, %v528
      %1042 = vst.msk [vmem:[%s216 + $0x9b8] sm:$0xff] %vm730, %v529
      %1043 = vst.msk [vmem:[%s216 + $0x9c0] sm:$0xff] %vm730, %v530
      %1044 = vst.msk [vmem:[%s216 + $0x9c8] sm:$0xff] %vm730, %v531
      %1045 = vst.msk [vmem:[%s216 + $0x9d0] sm:$0xff] %vm730, %v532
      %1046 = vst.msk [vmem:[%s216 + $0x9d8] sm:$0xff] %vm730, %v533
      %1047 = vst.msk [vmem:[%s216 + $0x9e0] sm:$0xff] %vm730, %v534
      %1048 = vst.msk [vmem:[%s216 + $0x9e8] sm:$0xff] %vm730, %v535
      %1049 = vst.msk [vmem:[%s216 + $0x9f0] sm:$0xff] %vm730, %v536
      %1050 = vst.msk [vmem:[%s216 + $0x9f8] sm:$0xff] %vm730, %v537
      %1051 = vst.msk [vmem:[%s216 + $0xa00] sm:$0xff] %vm730, %v538
      %1052 = vst.msk [vmem:[%s216 + $0xa08] sm:$0xff] %vm730, %v539
      %1053 = vst.msk [vmem:[%s216 + $0xa10] sm:$0xff] %vm730, %v540
      %1054 = vst.msk [vmem:[%s216 + $0xa18] sm:$0xff] %vm730, %v541
      %1055 = vst.msk [vmem:[%s216 + $0xa20] sm:$0xff] %vm730, %v542
      %1056 = vst.msk [vmem:[%s216 + $0xa28] sm:$0xff] %vm730, %v543
      %1057 = vst.msk [vmem:[%s216 + $0xa30] sm:$0xff] %vm730, %v544
      %1058 = vst.msk [vmem:[%s216 + $0xa38] sm:$0xff] %vm730, %v545
      %1059 = vst.msk [vmem:[%s216 + $0xa40] sm:$0xff] %vm730, %v546
      %1060 = vst.msk [vmem:[%s216 + $0xa48] sm:$0xff] %vm730, %v547
      %1061 = vst.msk [vmem:[%s216 + $0xa50] sm:$0xff] %vm730, %v548
      %1062 = vst.msk [vmem:[%s216 + $0xa58] sm:$0xff] %vm730, %v549
      %1063 = vst.msk [vmem:[%s216 + $0xa60] sm:$0xff] %vm730, %v550
      %1064 = vst.msk [vmem:[%s216 + $0xa68] sm:$0xff] %vm730, %v551
      %1065 = vst.msk [vmem:[%s216 + $0xa70] sm:$0xff] %vm730, %v552
      %1066 = vst.msk [vmem:[%s216 + $0xa78] sm:$0xff] %vm730, %v553
      %1067 = vst.msk [vmem:[%s216 + $0xa80] sm:$0xff] %vm730, %v554
      %1068 = vst.msk [vmem:[%s216 + $0xa88] sm:$0xff] %vm730, %v555
      %1069 = vst.msk [vmem:[%s216 + $0xa90] sm:$0xff] %vm730, %v556
      %1070 = vst.msk [vmem:[%s216 + $0xa98] sm:$0xff] %vm730, %v557
      %1071 = vst.msk [vmem:[%s216 + $0xaa0] sm:$0xff] %vm730, %v558
      %1072 = vst.msk [vmem:[%s216 + $0xaa8] sm:$0xff] %vm730, %v559
      %1073 = vst.msk [vmem:[%s216 + $0xab0] sm:$0xff] %vm730, %v560
      %1074 = vst.msk [vmem:[%s216 + $0xab8] sm:$0xff] %vm730, %v561
      %1075 = vst.msk [vmem:[%s216 + $0xac0] sm:$0xff] %vm730, %v562
      %1076 = vst.msk [vmem:[%s216 + $0xac8] sm:$0xff] %vm730, %v563
      %1077 = vst.msk [vmem:[%s216 + $0xad0] sm:$0xff] %vm730, %v564
      %1078 = vst.msk [vmem:[%s216 + $0xad8] sm:$0xff] %vm730, %v565
      %1079 = vst.msk [vmem:[%s216 + $0xae0] sm:$0xff] %vm730, %v566
      %1080 = vst.msk [vmem:[%s216 + $0xae8] sm:$0xff] %vm730, %v567
      %1081 = vst.msk [vmem:[%s216 + $0xaf0] sm:$0xff] %vm730, %v568
      %1082 = vst.msk [vmem:[%s216 + $0xaf8] sm:$0xff] %vm730, %v569
      %1083 = vst.msk [vmem:[%s216 + $0xb00] sm:$0xff] %vm730, %v570
      %1084 = vst.msk [vmem:[%s216 + $0xb08] sm:$0xff] %vm730, %v571
      %1085 = vst.msk [vmem:[%s216 + $0xb10] sm:$0xff] %vm730, %v572
      %1086 = vst.msk [vmem:[%s216 + $0xb18] sm:$0xff] %vm730, %v573
      %1087 = vst.msk [vmem:[%s216 + $0xb20] sm:$0xff] %vm730, %v574
      %1088 = vst.msk [vmem:[%s216 + $0xb28] sm:$0xff] %vm730, %v575
      %1089 = vst.msk [vmem:[%s216 + $0xb30] sm:$0xff] %vm730, %v576
      %1090 = vst.msk [vmem:[%s216 + $0xb38] sm:$0xff] %vm730, %v577
      %1091 = vst.msk [vmem:[%s216 + $0xb40] sm:$0xff] %vm730, %v578
      %1092 = vst.msk [vmem:[%s216 + $0xb48] sm:$0xff] %vm730, %v579
      %1093 = vst.msk [vmem:[%s216 + $0xb50] sm:$0xff] %vm730, %v580
      %1094 = vst.msk [vmem:[%s216 + $0xb58] sm:$0xff] %vm730, %v581
      %1095 = vst.msk [vmem:[%s216 + $0xb60] sm:$0xff] %vm730, %v582
      %1096 = vst.msk [vmem:[%s216 + $0xb68] sm:$0xff] %vm730, %v583
      %1097 = vst.msk [vmem:[%s216 + $0xb70] sm:$0xff] %vm730, %v584
      %1098 = vst.msk [vmem:[%s216 + $0xb78] sm:$0xff] %vm730, %v585
      %1099 = vst.msk [vmem:[%s216 + $0xb80] sm:$0xff] %vm730, %v586
      %1100 = vst.msk [vmem:[%s216 + $0xb88] sm:$0xff] %vm730, %v587
      %1101 = vst.msk [vmem:[%s216 + $0xb90] sm:$0xff] %vm730, %v588
      %1102 = vst.msk [vmem:[%s216 + $0xb98] sm:$0xff] %vm730, %v589
      %1103 = vst.msk [vmem:[%s216 + $0xba0] sm:$0xff] %vm730, %v590
      %1104 = vst.msk [vmem:[%s216 + $0xba8] sm:$0xff] %vm730, %v591
      %1105 = vst.msk [vmem:[%s216 + $0xbb0] sm:$0xff] %vm730, %v592
      %1106 = vst.msk [vmem:[%s216 + $0xbb8] sm:$0xff] %vm730, %v593
      %1107 = vst.msk [vmem:[%s216 + $0xbc0] sm:$0xff] %vm730, %v594
      %1108 = vst.msk [vmem:[%s216 + $0xbc8] sm:$0xff] %vm730, %v595
      %1109 = vst.msk [vmem:[%s216 + $0xbd0] sm:$0xff] %vm730, %v596
      %1110 = vst.msk [vmem:[%s216 + $0xbd8] sm:$0xff] %vm730, %v597
      %1111 = vst.msk [vmem:[%s216 + $0xbe0] sm:$0xff] %vm730, %v598
      %1112 = vst.msk [vmem:[%s216 + $0xbe8] sm:$0xff] %vm730, %v599
      %1113 = vst.msk [vmem:[%s216 + $0xbf0] sm:$0xff] %vm730, %v600
      %1114 = vst.msk [vmem:[%s216 + $0xbf8] sm:$0xff] %vm730, %v601
      %1115 = vst.msk [vmem:[%s216 + $0xc00] sm:$0xff] %vm730, %v602
      %1116 = vst.msk [vmem:[%s216 + $0xc08] sm:$0xff] %vm730, %v603
      %1117 = vst.msk [vmem:[%s216 + $0xc10] sm:$0xff] %vm730, %v604
      %1118 = vst.msk [vmem:[%s216 + $0xc18] sm:$0xff] %vm730, %v605
      %1119 = vst.msk [vmem:[%s216 + $0xc20] sm:$0xff] %vm730, %v606
      %1120 = vst.msk [vmem:[%s216 + $0xc28] sm:$0xff] %vm730, %v607
      %1121 = vst.msk [vmem:[%s216 + $0xc30] sm:$0xff] %vm730, %v608
      %1122 = vst.msk [vmem:[%s216 + $0xc38] sm:$0xff] %vm730, %v609
      %1123 = vst.msk [vmem:[%s216 + $0xc40] sm:$0xff] %vm730, %v610
      %1124 = vst.msk [vmem:[%s216 + $0xc48] sm:$0xff] %vm730, %v611
      %1125 = vst.msk [vmem:[%s216 + $0xc50] sm:$0xff] %vm730, %v612
      %1126 = vst.msk [vmem:[%s216 + $0xc58] sm:$0xff] %vm730, %v613
      %1127 = vst.msk [vmem:[%s216 + $0xc60] sm:$0xff] %vm730, %v614
      %1128 = vst.msk [vmem:[%s216 + $0xc68] sm:$0xff] %vm730, %v615
      %1129 = vst.msk [vmem:[%s216 + $0xc70] sm:$0xff] %vm730, %v616
      %1130 = vst.msk [vmem:[%s216 + $0xc78] sm:$0xff] %vm730, %v617
      %1131 = vst.msk [vmem:[%s216 + $0xc80] sm:$0xff] %vm730, %v618
      %1132 = vst.msk [vmem:[%s216 + $0xc88] sm:$0xff] %vm730, %v619
      %1133 = vst.msk [vmem:[%s216 + $0xc90] sm:$0xff] %vm730, %v620
      %1134 = vst.msk [vmem:[%s216 + $0xc98] sm:$0xff] %vm730, %v621
      %1135 = vst.msk [vmem:[%s216 + $0xca0] sm:$0xff] %vm730, %v622
      %1136 = vst.msk [vmem:[%s216 + $0xca8] sm:$0xff] %vm730, %v623
      %1137 = vst.msk [vmem:[%s216 + $0xcb0] sm:$0xff] %vm730, %v624
      %1138 = vst.msk [vmem:[%s216 + $0xcb8] sm:$0xff] %vm730, %v625
      %1139 = vst.msk [vmem:[%s216 + $0xcc0] sm:$0xff] %vm730, %v626
      %1140 = vst.msk [vmem:[%s216 + $0xcc8] sm:$0xff] %vm730, %v627
      %1141 = vst.msk [vmem:[%s216 + $0xcd0] sm:$0xff] %vm730, %v628
      %1142 = vst.msk [vmem:[%s216 + $0xcd8] sm:$0xff] %vm730, %v629
      %1143 = vst.msk [vmem:[%s216 + $0xce0] sm:$0xff] %vm730, %v630
      %1144 = vst.msk [vmem:[%s216 + $0xce8] sm:$0xff] %vm730, %v631
      %1145 = vst.msk [vmem:[%s216 + $0xcf0] sm:$0xff] %vm730, %v632
      %1146 = vst.msk [vmem:[%s216 + $0xcf8] sm:$0xff] %vm730, %v633
      %1147 = vst.msk [vmem:[%s216 + $0xd00] sm:$0xff] %vm730, %v634
      %1148 = vst.msk [vmem:[%s216 + $0xd08] sm:$0xff] %vm730, %v635
      %1149 = vst.msk [vmem:[%s216 + $0xd10] sm:$0xff] %vm730, %v636
      %1150 = vst.msk [vmem:[%s216 + $0xd18] sm:$0xff] %vm730, %v637
      %1151 = vst.msk [vmem:[%s216 + $0xd20] sm:$0xff] %vm730, %v638
      %1152 = vst.msk [vmem:[%s216 + $0xd28] sm:$0xff] %vm730, %v639
      %1153 = vst.msk [vmem:[%s216 + $0xd30] sm:$0xff] %vm730, %v640
      %1154 = vst.msk [vmem:[%s216 + $0xd38] sm:$0xff] %vm730, %v641
      %1155 = vst.msk [vmem:[%s216 + $0xd40] sm:$0xff] %vm730, %v642
      %1156 = vst.msk [vmem:[%s216 + $0xd48] sm:$0xff] %vm730, %v643
      %1157 = vst.msk [vmem:[%s216 + $0xd50] sm:$0xff] %vm730, %v644
      %1158 = vst.msk [vmem:[%s216 + $0xd58] sm:$0xff] %vm730, %v645
      %1159 = vst.msk [vmem:[%s216 + $0xd60] sm:$0xff] %vm730, %v646
      %1160 = vst.msk [vmem:[%s216 + $0xd68] sm:$0xff] %vm730, %v647
      %1161 = vst.msk [vmem:[%s216 + $0xd70] sm:$0xff] %vm730, %v648
      %1162 = vst.msk [vmem:[%s216 + $0xd78] sm:$0xff] %vm730, %v649
      %1163 = vst.msk [vmem:[%s216 + $0xd80] sm:$0xff] %vm730, %v650
      %1164 = vst.msk [vmem:[%s216 + $0xd88] sm:$0xff] %vm730, %v651
      %1165 = vst.msk [vmem:[%s216 + $0xd90] sm:$0xff] %vm730, %v652
      %1166 = vst.msk [vmem:[%s216 + $0xd98] sm:$0xff] %vm730, %v653
      %1167 = vst.msk [vmem:[%s216 + $0xda0] sm:$0xff] %vm730, %v654
      %1168 = vst.msk [vmem:[%s216 + $0xda8] sm:$0xff] %vm730, %v655
      %1169 = vst.msk [vmem:[%s216 + $0xdb0] sm:$0xff] %vm730, %v656
      %1170 = vst.msk [vmem:[%s216 + $0xdb8] sm:$0xff] %vm730, %v657
      %1171 = vst.msk [vmem:[%s216 + $0xdc0] sm:$0xff] %vm730, %v658
      %1172 = vst.msk [vmem:[%s216 + $0xdc8] sm:$0xff] %vm730, %v659
      %1173 = vst.msk [vmem:[%s216 + $0xdd0] sm:$0xff] %vm730, %v660
      %1174 = vst.msk [vmem:[%s216 + $0xdd8] sm:$0xff] %vm730, %v661
      %1175 = vst.msk [vmem:[%s216 + $0xde0] sm:$0xff] %vm730, %v662
      %1176 = vst.msk [vmem:[%s216 + $0xde8] sm:$0xff] %vm730, %v663
      %1177 = vst.msk [vmem:[%s216 + $0xdf0] sm:$0xff] %vm730, %v664
      %1178 = vst.msk [vmem:[%s216 + $0xdf8] sm:$0xff] %vm730, %v665
      %1179 = vst.msk [vmem:[%s216 + $0xe00] sm:$0xff] %vm730, %v666
      %1180 = vst.msk [vmem:[%s216 + $0xe08] sm:$0xff] %vm730, %v667
      %1181 = vst.msk [vmem:[%s216 + $0xe10] sm:$0xff] %vm730, %v668
      %1182 = vst.msk [vmem:[%s216 + $0xe18] sm:$0xff] %vm730, %v669
      %1183 = vst.msk [vmem:[%s216 + $0xe20] sm:$0xff] %vm730, %v670
      %1184 = vst.msk [vmem:[%s216 + $0xe28] sm:$0xff] %vm730, %v671
      %1185 = vst.msk [vmem:[%s216 + $0xe30] sm:$0xff] %vm730, %v672
      %1186 = vst.msk [vmem:[%s216 + $0xe38] sm:$0xff] %vm730, %v673
      %1187 = vst.msk [vmem:[%s216 + $0xe40] sm:$0xff] %vm730, %v674
      %1188 = vst.msk [vmem:[%s216 + $0xe48] sm:$0xff] %vm730, %v675
      %1189 = vst.msk [vmem:[%s216 + $0xe50] sm:$0xff] %vm730, %v676
      %1190 = vst.msk [vmem:[%s216 + $0xe58] sm:$0xff] %vm730, %v677
      %1191 = vst.msk [vmem:[%s216 + $0xe60] sm:$0xff] %vm730, %v678
      %1192 = vst.msk [vmem:[%s216 + $0xe68] sm:$0xff] %vm730, %v679
      %1193 = vst.msk [vmem:[%s216 + $0xe70] sm:$0xff] %vm730, %v680
      %1194 = vst.msk [vmem:[%s216 + $0xe78] sm:$0xff] %vm730, %v681
      %1195 = vst.msk [vmem:[%s216 + $0xe80] sm:$0xff] %vm730, %v682
      %1196 = vst.msk [vmem:[%s216 + $0xe88] sm:$0xff] %vm730, %v683
      %1197 = vst.msk [vmem:[%s216 + $0xe90] sm:$0xff] %vm730, %v684
      %1198 = vst.msk [vmem:[%s216 + $0xe98] sm:$0xff] %vm730, %v685
      %1199 = vst.msk [vmem:[%s216 + $0xea0] sm:$0xff] %vm730, %v686
      %1200 = vst.msk [vmem:[%s216 + $0xea8] sm:$0xff] %vm730, %v687
      %1201 = vst.msk [vmem:[%s216 + $0xeb0] sm:$0xff] %vm730, %v688
      %1202 = vst.msk [vmem:[%s216 + $0xeb8] sm:$0xff] %vm730, %v689
      %1203 = vst.msk [vmem:[%s216 + $0xec0] sm:$0xff] %vm730, %v690
      %1204 = vst.msk [vmem:[%s216 + $0xec8] sm:$0xff] %vm730, %v691
      %1205 = vst.msk [vmem:[%s216 + $0xed0] sm:$0xff] %vm730, %v692
      %1206 = vst.msk [vmem:[%s216 + $0xed8] sm:$0xff] %vm730, %v693
      %1207 = vst.msk [vmem:[%s216 + $0xee0] sm:$0xff] %vm730, %v694
      %1208 = vst.msk [vmem:[%s216 + $0xee8] sm:$0xff] %vm730, %v695
      %1209 = vst.msk [vmem:[%s216 + $0xef0] sm:$0xff] %vm730, %v696
      %1210 = vst.msk [vmem:[%s216 + $0xef8] sm:$0xff] %vm730, %v697
      %1211 = vst.msk [vmem:[%s216 + $0xf00] sm:$0xff] %vm730, %v698
      %1212 = vst.msk [vmem:[%s216 + $0xf08] sm:$0xff] %vm730, %v699
      %1213 = vst.msk [vmem:[%s216 + $0xf10] sm:$0xff] %vm730, %v700
      %1214 = vst.msk [vmem:[%s216 + $0xf18] sm:$0xff] %vm730, %v701
      %1215 = vst.msk [vmem:[%s216 + $0xf20] sm:$0xff] %vm730, %v702
      %1216 = vst.msk [vmem:[%s216 + $0xf28] sm:$0xff] %vm730, %v703
      %1217 = vst.msk [vmem:[%s216 + $0xf30] sm:$0xff] %vm730, %v704
      %1218 = vst.msk [vmem:[%s216 + $0xf38] sm:$0xff] %vm730, %v705
      %1219 = vst.msk [vmem:[%s216 + $0xf40] sm:$0xff] %vm730, %v706
      %1220 = vst.msk [vmem:[%s216 + $0xf48] sm:$0xff] %vm730, %v707
      %1221 = vst.msk [vmem:[%s216 + $0xf50] sm:$0xff] %vm730, %v708
      %1222 = vst.msk [vmem:[%s216 + $0xf58] sm:$0xff] %vm730, %v709
      %1223 = vst.msk [vmem:[%s216 + $0xf60] sm:$0xff] %vm730, %v710
      %1224 = vst.msk [vmem:[%s216 + $0xf68] sm:$0xff] %vm730, %v711
      %1225 = vst.msk [vmem:[%s216 + $0xf70] sm:$0xff] %vm730, %v712
      %1226 = vst.msk [vmem:[%s216 + $0xf78] sm:$0xff] %vm730, %v713
      %1227 = vst.msk [vmem:[%s216 + $0xf80] sm:$0xff] %vm730, %v714
      %1228 = vst.msk [vmem:[%s216 + $0xf88] sm:$0xff] %vm730, %v715
      %1229 = vst.msk [vmem:[%s216 + $0xf90] sm:$0xff] %vm730, %v716
      %1230 = vst.msk [vmem:[%s216 + $0xf98] sm:$0xff] %vm730, %v717
      %1231 = vst.msk [vmem:[%s216 + $0xfa0] sm:$0xff] %vm730, %v718
      %1232 = vst.msk [vmem:[%s216 + $0xfa8] sm:$0xff] %vm730, %v719
      %1233 = vst.msk [vmem:[%s216 + $0xfb0] sm:$0xff] %vm730, %v720
      %1234 = vst.msk [vmem:[%s216 + $0xfb8] sm:$0xff] %vm730, %v721
      %1235 = vst.msk [vmem:[%s216 + $0xfc0] sm:$0xff] %vm730, %v722
      %1236 = vst.msk [vmem:[%s216 + $0xfc8] sm:$0xff] %vm730, %v723
      %1237 = vst.msk [vmem:[%s216 + $0xfd0] sm:$0xff] %vm730, %v724
      %1238 = vst.msk [vmem:[%s216 + $0xfd8] sm:$0xff] %vm730, %v725
      %1239 = vst.msk [vmem:[%s216 + $0xfe0] sm:$0xff] %vm730, %v726
      %1240 = vst.msk [vmem:[%s216 + $0xfe8] sm:$0xff] %vm730, %v727
      %1241 = vst.msk [vmem:[%s216 + $0xff0] sm:$0xff] %vm730, %v728
      %1242 = vst.msk [vmem:[%s216 + $0xff8] sm:$0xff] %vm730, %v729
      %v1243 = vld [vmem:[%s204] sm:$0xff]
      %v1244 = vld [vmem:[%s204 + $0x8] sm:$0xff]
      %v1245 = vld [vmem:[%s204 + $0x10] sm:$0xff]
      %v1246 = vld [vmem:[%s204 + $0x18] sm:$0xff]
      %v1247 = vld [vmem:[%s204 + $0x20] sm:$0xff]
      %v1248 = vld [vmem:[%s204 + $0x28] sm:$0xff]
      %v1249 = vld [vmem:[%s204 + $0x30] sm:$0xff]
      %v1250 = vld [vmem:[%s204 + $0x38] sm:$0xff]
      %v1251 = vld [vmem:[%s204 + $0x40] sm:$0xff]
      %v1252 = vld [vmem:[%s204 + $0x48] sm:$0xff]
      %v1253 = vld [vmem:[%s204 + $0x50] sm:$0xff]
      %v1254 = vld [vmem:[%s204 + $0x58] sm:$0xff]
      %v1255 = vld [vmem:[%s204 + $0x60] sm:$0xff]
      %v1256 = vld [vmem:[%s204 + $0x68] sm:$0xff]
      %v1257 = vld [vmem:[%s204 + $0x70] sm:$0xff]
      %v1258 = vld [vmem:[%s204 + $0x78] sm:$0xff]
      %v1259 = vld [vmem:[%s204 + $0x80] sm:$0xff]
      %v1260 = vld [vmem:[%s204 + $0x88] sm:$0xff]
      %v1261 = vld [vmem:[%s204 + $0x90] sm:$0xff]
      %v1262 = vld [vmem:[%s204 + $0x98] sm:$0xff]
      %v1263 = vld [vmem:[%s204 + $0xa0] sm:$0xff]
      %v1264 = vld [vmem:[%s204 + $0xa8] sm:$0xff]
      %v1265 = vld [vmem:[%s204 + $0xb0] sm:$0xff]
      %v1266 = vld [vmem:[%s204 + $0xb8] sm:$0xff]
      %v1267 = vld [vmem:[%s204 + $0xc0] sm:$0xff]
      %v1268 = vld [vmem:[%s204 + $0xc8] sm:$0xff]
      %v1269 = vld [vmem:[%s204 + $0xd0] sm:$0xff]
      %v1270 = vld [vmem:[%s204 + $0xd8] sm:$0xff]
      %v1271 = vld [vmem:[%s204 + $0xe0] sm:$0xff]
      %v1272 = vld [vmem:[%s204 + $0xe8] sm:$0xff]
      %v1273 = vld [vmem:[%s204 + $0xf0] sm:$0xff]
      %v1274 = vld [vmem:[%s204 + $0xf8] sm:$0xff]
      %v1275 = vld [vmem:[%s204 + $0x100] sm:$0xff]
      %v1276 = vld [vmem:[%s204 + $0x108] sm:$0xff]
      %v1277 = vld [vmem:[%s204 + $0x110] sm:$0xff]
      %v1278 = vld [vmem:[%s204 + $0x118] sm:$0xff]
      %v1279 = vld [vmem:[%s204 + $0x120] sm:$0xff]
      %v1280 = vld [vmem:[%s204 + $0x128] sm:$0xff]
      %v1281 = vld [vmem:[%s204 + $0x130] sm:$0xff]
      %v1282 = vld [vmem:[%s204 + $0x138] sm:$0xff]
      %v1283 = vld [vmem:[%s204 + $0x140] sm:$0xff]
      %v1284 = vld [vmem:[%s204 + $0x148] sm:$0xff]
      %v1285 = vld [vmem:[%s204 + $0x150] sm:$0xff]
      %v1286 = vld [vmem:[%s204 + $0x158] sm:$0xff]
      %v1287 = vld [vmem:[%s204 + $0x160] sm:$0xff]
      %v1288 = vld [vmem:[%s204 + $0x168] sm:$0xff]
      %v1289 = vld [vmem:[%s204 + $0x170] sm:$0xff]
      %v1290 = vld [vmem:[%s204 + $0x178] sm:$0xff]
      %v1291 = vld [vmem:[%s204 + $0x180] sm:$0xff]
      %v1292 = vld [vmem:[%s204 + $0x188] sm:$0xff]
      %v1293 = vld [vmem:[%s204 + $0x190] sm:$0xff]
      %v1294 = vld [vmem:[%s204 + $0x198] sm:$0xff]
      %v1295 = vld [vmem:[%s204 + $0x1a0] sm:$0xff]
      %v1296 = vld [vmem:[%s204 + $0x1a8] sm:$0xff]
      %v1297 = vld [vmem:[%s204 + $0x1b0] sm:$0xff]
      %v1298 = vld [vmem:[%s204 + $0x1b8] sm:$0xff]
      %v1299 = vld [vmem:[%s204 + $0x1c0] sm:$0xff]
      %v1300 = vld [vmem:[%s204 + $0x1c8] sm:$0xff]
      %v1301 = vld [vmem:[%s204 + $0x1d0] sm:$0xff]
      %v1302 = vld [vmem:[%s204 + $0x1d8] sm:$0xff]
      %v1303 = vld [vmem:[%s204 + $0x1e0] sm:$0xff]
      %v1304 = vld [vmem:[%s204 + $0x1e8] sm:$0xff]
      %v1305 = vld [vmem:[%s204 + $0x1f0] sm:$0xff]
      %v1306 = vld [vmem:[%s204 + $0x1f8] sm:$0xff]
      %v1307 = vld [vmem:[%s204 + $0x200] sm:$0xff]
      %v1308 = vld [vmem:[%s204 + $0x208] sm:$0xff]
      %v1309 = vld [vmem:[%s204 + $0x210] sm:$0xff]
      %v1310 = vld [vmem:[%s204 + $0x218] sm:$0xff]
      %v1311 = vld [vmem:[%s204 + $0x220] sm:$0xff]
      %v1312 = vld [vmem:[%s204 + $0x228] sm:$0xff]
      %v1313 = vld [vmem:[%s204 + $0x230] sm:$0xff]
      %v1314 = vld [vmem:[%s204 + $0x238] sm:$0xff]
      %v1315 = vld [vmem:[%s204 + $0x240] sm:$0xff]
      %v1316 = vld [vmem:[%s204 + $0x248] sm:$0xff]
      %v1317 = vld [vmem:[%s204 + $0x250] sm:$0xff]
      %v1318 = vld [vmem:[%s204 + $0x258] sm:$0xff]
      %v1319 = vld [vmem:[%s204 + $0x260] sm:$0xff]
      %v1320 = vld [vmem:[%s204 + $0x268] sm:$0xff]
      %v1321 = vld [vmem:[%s204 + $0x270] sm:$0xff]
      %v1322 = vld [vmem:[%s204 + $0x278] sm:$0xff]
      %v1323 = vld [vmem:[%s204 + $0x280] sm:$0xff]
      %v1324 = vld [vmem:[%s204 + $0x288] sm:$0xff]
      %v1325 = vld [vmem:[%s204 + $0x290] sm:$0xff]
      %v1326 = vld [vmem:[%s204 + $0x298] sm:$0xff]
      %v1327 = vld [vmem:[%s204 + $0x2a0] sm:$0xff]
      %v1328 = vld [vmem:[%s204 + $0x2a8] sm:$0xff]
      %v1329 = vld [vmem:[%s204 + $0x2b0] sm:$0xff]
      %v1330 = vld [vmem:[%s204 + $0x2b8] sm:$0xff]
      %v1331 = vld [vmem:[%s204 + $0x2c0] sm:$0xff]
      %v1332 = vld [vmem:[%s204 + $0x2c8] sm:$0xff]
      %v1333 = vld [vmem:[%s204 + $0x2d0] sm:$0xff]
      %v1334 = vld [vmem:[%s204 + $0x2d8] sm:$0xff]
      %v1335 = vld [vmem:[%s204 + $0x2e0] sm:$0xff]
      %v1336 = vld [vmem:[%s204 + $0x2e8] sm:$0xff]
      %v1337 = vld [vmem:[%s204 + $0x2f0] sm:$0xff]
      %v1338 = vld [vmem:[%s204 + $0x2f8] sm:$0xff]
      %v1339 = vld [vmem:[%s204 + $0x300] sm:$0xff]
      %v1340 = vld [vmem:[%s204 + $0x308] sm:$0xff]
      %v1341 = vld [vmem:[%s204 + $0x310] sm:$0xff]
      %v1342 = vld [vmem:[%s204 + $0x318] sm:$0xff]
      %v1343 = vld [vmem:[%s204 + $0x320] sm:$0xff]
      %v1344 = vld [vmem:[%s204 + $0x328] sm:$0xff]
      %v1345 = vld [vmem:[%s204 + $0x330] sm:$0xff]
      %v1346 = vld [vmem:[%s204 + $0x338] sm:$0xff]
      %v1347 = vld [vmem:[%s204 + $0x340] sm:$0xff]
      %v1348 = vld [vmem:[%s204 + $0x348] sm:$0xff]
      %v1349 = vld [vmem:[%s204 + $0x350] sm:$0xff]
      %v1350 = vld [vmem:[%s204 + $0x358] sm:$0xff]
      %v1351 = vld [vmem:[%s204 + $0x360] sm:$0xff]
      %v1352 = vld [vmem:[%s204 + $0x368] sm:$0xff]
      %v1353 = vld [vmem:[%s204 + $0x370] sm:$0xff]
      %v1354 = vld [vmem:[%s204 + $0x378] sm:$0xff]
      %v1355 = vld [vmem:[%s204 + $0x380] sm:$0xff]
      %v1356 = vld [vmem:[%s204 + $0x388] sm:$0xff]
      %v1357 = vld [vmem:[%s204 + $0x390] sm:$0xff]
      %v1358 = vld [vmem:[%s204 + $0x398] sm:$0xff]
      %v1359 = vld [vmem:[%s204 + $0x3a0] sm:$0xff]
      %v1360 = vld [vmem:[%s204 + $0x3a8] sm:$0xff]
      %v1361 = vld [vmem:[%s204 + $0x3b0] sm:$0xff]
      %v1362 = vld [vmem:[%s204 + $0x3b8] sm:$0xff]
      %v1363 = vld [vmem:[%s204 + $0x3c0] sm:$0xff]
      %v1364 = vld [vmem:[%s204 + $0x3c8] sm:$0xff]
      %v1365 = vld [vmem:[%s204 + $0x3d0] sm:$0xff]
      %v1366 = vld [vmem:[%s204 + $0x3d8] sm:$0xff]
      %v1367 = vld [vmem:[%s204 + $0x3e0] sm:$0xff]
      %v1368 = vld [vmem:[%s204 + $0x3e8] sm:$0xff]
      %v1369 = vld [vmem:[%s204 + $0x3f0] sm:$0xff]
      %v1370 = vld [vmem:[%s204 + $0x3f8] sm:$0xff]
      %v1371 = vld [vmem:[%s204 + $0x400] sm:$0xff]
      %v1372 = vld [vmem:[%s204 + $0x408] sm:$0xff]
      %v1373 = vld [vmem:[%s204 + $0x410] sm:$0xff]
      %v1374 = vld [vmem:[%s204 + $0x418] sm:$0xff]
      %v1375 = vld [vmem:[%s204 + $0x420] sm:$0xff]
      %v1376 = vld [vmem:[%s204 + $0x428] sm:$0xff]
      %v1377 = vld [vmem:[%s204 + $0x430] sm:$0xff]
      %v1378 = vld [vmem:[%s204 + $0x438] sm:$0xff]
      %v1379 = vld [vmem:[%s204 + $0x440] sm:$0xff]
      %v1380 = vld [vmem:[%s204 + $0x448] sm:$0xff]
      %v1381 = vld [vmem:[%s204 + $0x450] sm:$0xff]
      %v1382 = vld [vmem:[%s204 + $0x458] sm:$0xff]
      %v1383 = vld [vmem:[%s204 + $0x460] sm:$0xff]
      %v1384 = vld [vmem:[%s204 + $0x468] sm:$0xff]
      %v1385 = vld [vmem:[%s204 + $0x470] sm:$0xff]
      %v1386 = vld [vmem:[%s204 + $0x478] sm:$0xff]
      %v1387 = vld [vmem:[%s204 + $0x480] sm:$0xff]
      %v1388 = vld [vmem:[%s204 + $0x488] sm:$0xff]
      %v1389 = vld [vmem:[%s204 + $0x490] sm:$0xff]
      %v1390 = vld [vmem:[%s204 + $0x498] sm:$0xff]
      %v1391 = vld [vmem:[%s204 + $0x4a0] sm:$0xff]
      %v1392 = vld [vmem:[%s204 + $0x4a8] sm:$0xff]
      %v1393 = vld [vmem:[%s204 + $0x4b0] sm:$0xff]
      %v1394 = vld [vmem:[%s204 + $0x4b8] sm:$0xff]
      %v1395 = vld [vmem:[%s204 + $0x4c0] sm:$0xff]
      %v1396 = vld [vmem:[%s204 + $0x4c8] sm:$0xff]
      %v1397 = vld [vmem:[%s204 + $0x4d0] sm:$0xff]
      %v1398 = vld [vmem:[%s204 + $0x4d8] sm:$0xff]
      %v1399 = vld [vmem:[%s204 + $0x4e0] sm:$0xff]
      %v1400 = vld [vmem:[%s204 + $0x4e8] sm:$0xff]
      %v1401 = vld [vmem:[%s204 + $0x4f0] sm:$0xff]
      %v1402 = vld [vmem:[%s204 + $0x4f8] sm:$0xff]
      %v1403 = vld [vmem:[%s204 + $0x500] sm:$0xff]
      %v1404 = vld [vmem:[%s204 + $0x508] sm:$0xff]
      %v1405 = vld [vmem:[%s204 + $0x510] sm:$0xff]
      %v1406 = vld [vmem:[%s204 + $0x518] sm:$0xff]
      %v1407 = vld [vmem:[%s204 + $0x520] sm:$0xff]
      %v1408 = vld [vmem:[%s204 + $0x528] sm:$0xff]
      %v1409 = vld [vmem:[%s204 + $0x530] sm:$0xff]
      %v1410 = vld [vmem:[%s204 + $0x538] sm:$0xff]
      %v1411 = vld [vmem:[%s204 + $0x540] sm:$0xff]
      %v1412 = vld [vmem:[%s204 + $0x548] sm:$0xff]
      %v1413 = vld [vmem:[%s204 + $0x550] sm:$0xff]
      %v1414 = vld [vmem:[%s204 + $0x558] sm:$0xff]
      %v1415 = vld [vmem:[%s204 + $0x560] sm:$0xff]
      %v1416 = vld [vmem:[%s204 + $0x568] sm:$0xff]
      %v1417 = vld [vmem:[%s204 + $0x570] sm:$0xff]
      %v1418 = vld [vmem:[%s204 + $0x578] sm:$0xff]
      %v1419 = vld [vmem:[%s204 + $0x580] sm:$0xff]
      %v1420 = vld [vmem:[%s204 + $0x588] sm:$0xff]
      %v1421 = vld [vmem:[%s204 + $0x590] sm:$0xff]
      %v1422 = vld [vmem:[%s204 + $0x598] sm:$0xff]
      %v1423 = vld [vmem:[%s204 + $0x5a0] sm:$0xff]
      %v1424 = vld [vmem:[%s204 + $0x5a8] sm:$0xff]
      %v1425 = vld [vmem:[%s204 + $0x5b0] sm:$0xff]
      %v1426 = vld [vmem:[%s204 + $0x5b8] sm:$0xff]
      %v1427 = vld [vmem:[%s204 + $0x5c0] sm:$0xff]
      %v1428 = vld [vmem:[%s204 + $0x5c8] sm:$0xff]
      %v1429 = vld [vmem:[%s204 + $0x5d0] sm:$0xff]
      %v1430 = vld [vmem:[%s204 + $0x5d8] sm:$0xff]
      %v1431 = vld [vmem:[%s204 + $0x5e0] sm:$0xff]
      %v1432 = vld [vmem:[%s204 + $0x5e8] sm:$0xff]
      %v1433 = vld [vmem:[%s204 + $0x5f0] sm:$0xff]
      %v1434 = vld [vmem:[%s204 + $0x5f8] sm:$0xff]
      %v1435 = vld [vmem:[%s204 + $0x600] sm:$0xff]
      %v1436 = vld [vmem:[%s204 + $0x608] sm:$0xff]
      %v1437 = vld [vmem:[%s204 + $0x610] sm:$0xff]
      %v1438 = vld [vmem:[%s204 + $0x618] sm:$0xff]
      %v1439 = vld [vmem:[%s204 + $0x620] sm:$0xff]
      %v1440 = vld [vmem:[%s204 + $0x628] sm:$0xff]
      %v1441 = vld [vmem:[%s204 + $0x630] sm:$0xff]
      %v1442 = vld [vmem:[%s204 + $0x638] sm:$0xff]
      %v1443 = vld [vmem:[%s204 + $0x640] sm:$0xff]
      %v1444 = vld [vmem:[%s204 + $0x648] sm:$0xff]
      %v1445 = vld [vmem:[%s204 + $0x650] sm:$0xff]
      %v1446 = vld [vmem:[%s204 + $0x658] sm:$0xff]
      %v1447 = vld [vmem:[%s204 + $0x660] sm:$0xff]
      %v1448 = vld [vmem:[%s204 + $0x668] sm:$0xff]
      %v1449 = vld [vmem:[%s204 + $0x670] sm:$0xff]
      %v1450 = vld [vmem:[%s204 + $0x678] sm:$0xff]
      %v1451 = vld [vmem:[%s204 + $0x680] sm:$0xff]
      %v1452 = vld [vmem:[%s204 + $0x688] sm:$0xff]
      %v1453 = vld [vmem:[%s204 + $0x690] sm:$0xff]
      %v1454 = vld [vmem:[%s204 + $0x698] sm:$0xff]
      %v1455 = vld [vmem:[%s204 + $0x6a0] sm:$0xff]
      %v1456 = vld [vmem:[%s204 + $0x6a8] sm:$0xff]
      %v1457 = vld [vmem:[%s204 + $0x6b0] sm:$0xff]
      %v1458 = vld [vmem:[%s204 + $0x6b8] sm:$0xff]
      %v1459 = vld [vmem:[%s204 + $0x6c0] sm:$0xff]
      %v1460 = vld [vmem:[%s204 + $0x6c8] sm:$0xff]
      %v1461 = vld [vmem:[%s204 + $0x6d0] sm:$0xff]
      %v1462 = vld [vmem:[%s204 + $0x6d8] sm:$0xff]
      %v1463 = vld [vmem:[%s204 + $0x6e0] sm:$0xff]
      %v1464 = vld [vmem:[%s204 + $0x6e8] sm:$0xff]
      %v1465 = vld [vmem:[%s204 + $0x6f0] sm:$0xff]
      %v1466 = vld [vmem:[%s204 + $0x6f8] sm:$0xff]
      %v1467 = vld [vmem:[%s204 + $0x700] sm:$0xff]
      %v1468 = vld [vmem:[%s204 + $0x708] sm:$0xff]
      %v1469 = vld [vmem:[%s204 + $0x710] sm:$0xff]
      %v1470 = vld [vmem:[%s204 + $0x718] sm:$0xff]
      %v1471 = vld [vmem:[%s204 + $0x720] sm:$0xff]
      %v1472 = vld [vmem:[%s204 + $0x728] sm:$0xff]
      %v1473 = vld [vmem:[%s204 + $0x730] sm:$0xff]
      %v1474 = vld [vmem:[%s204 + $0x738] sm:$0xff]
      %v1475 = vld [vmem:[%s204 + $0x740] sm:$0xff]
      %v1476 = vld [vmem:[%s204 + $0x748] sm:$0xff]
      %v1477 = vld [vmem:[%s204 + $0x750] sm:$0xff]
      %v1478 = vld [vmem:[%s204 + $0x758] sm:$0xff]
      %v1479 = vld [vmem:[%s204 + $0x760] sm:$0xff]
      %v1480 = vld [vmem:[%s204 + $0x768] sm:$0xff]
      %v1481 = vld [vmem:[%s204 + $0x770] sm:$0xff]
      %v1482 = vld [vmem:[%s204 + $0x778] sm:$0xff]
      %v1483 = vld [vmem:[%s204 + $0x780] sm:$0xff]
      %v1484 = vld [vmem:[%s204 + $0x788] sm:$0xff]
      %v1485 = vld [vmem:[%s204 + $0x790] sm:$0xff]
      %v1486 = vld [vmem:[%s204 + $0x798] sm:$0xff]
      %v1487 = vld [vmem:[%s204 + $0x7a0] sm:$0xff]
      %v1488 = vld [vmem:[%s204 + $0x7a8] sm:$0xff]
      %v1489 = vld [vmem:[%s204 + $0x7b0] sm:$0xff]
      %v1490 = vld [vmem:[%s204 + $0x7b8] sm:$0xff]
      %v1491 = vld [vmem:[%s204 + $0x7c0] sm:$0xff]
      %v1492 = vld [vmem:[%s204 + $0x7c8] sm:$0xff]
      %v1493 = vld [vmem:[%s204 + $0x7d0] sm:$0xff]
      %v1494 = vld [vmem:[%s204 + $0x7d8] sm:$0xff]
      %v1495 = vld [vmem:[%s204 + $0x7e0] sm:$0xff]
      %v1496 = vld [vmem:[%s204 + $0x7e8] sm:$0xff]
      %v1497 = vld [vmem:[%s204 + $0x7f0] sm:$0xff]
      %v1498 = vld [vmem:[%s204 + $0x7f8] sm:$0xff]
      %v1499 = vld [vmem:[%s204 + $0x800] sm:$0xff]
      %v1500 = vld [vmem:[%s204 + $0x808] sm:$0xff]
      %v1501 = vld [vmem:[%s204 + $0x810] sm:$0xff]
      %v1502 = vld [vmem:[%s204 + $0x818] sm:$0xff]
      %v1503 = vld [vmem:[%s204 + $0x820] sm:$0xff]
      %v1504 = vld [vmem:[%s204 + $0x828] sm:$0xff]
      %v1505 = vld [vmem:[%s204 + $0x830] sm:$0xff]
      %v1506 = vld [vmem:[%s204 + $0x838] sm:$0xff]
      %v1507 = vld [vmem:[%s204 + $0x840] sm:$0xff]
      %v1508 = vld [vmem:[%s204 + $0x848] sm:$0xff]
      %v1509 = vld [vmem:[%s204 + $0x850] sm:$0xff]
      %v1510 = vld [vmem:[%s204 + $0x858] sm:$0xff]
      %v1511 = vld [vmem:[%s204 + $0x860] sm:$0xff]
      %v1512 = vld [vmem:[%s204 + $0x868] sm:$0xff]
      %v1513 = vld [vmem:[%s204 + $0x870] sm:$0xff]
      %v1514 = vld [vmem:[%s204 + $0x878] sm:$0xff]
      %v1515 = vld [vmem:[%s204 + $0x880] sm:$0xff]
      %v1516 = vld [vmem:[%s204 + $0x888] sm:$0xff]
      %v1517 = vld [vmem:[%s204 + $0x890] sm:$0xff]
      %v1518 = vld [vmem:[%s204 + $0x898] sm:$0xff]
      %v1519 = vld [vmem:[%s204 + $0x8a0] sm:$0xff]
      %v1520 = vld [vmem:[%s204 + $0x8a8] sm:$0xff]
      %v1521 = vld [vmem:[%s204 + $0x8b0] sm:$0xff]
      %v1522 = vld [vmem:[%s204 + $0x8b8] sm:$0xff]
      %v1523 = vld [vmem:[%s204 + $0x8c0] sm:$0xff]
      %v1524 = vld [vmem:[%s204 + $0x8c8] sm:$0xff]
      %v1525 = vld [vmem:[%s204 + $0x8d0] sm:$0xff]
      %v1526 = vld [vmem:[%s204 + $0x8d8] sm:$0xff]
      %v1527 = vld [vmem:[%s204 + $0x8e0] sm:$0xff]
      %v1528 = vld [vmem:[%s204 + $0x8e8] sm:$0xff]
      %v1529 = vld [vmem:[%s204 + $0x8f0] sm:$0xff]
      %v1530 = vld [vmem:[%s204 + $0x8f8] sm:$0xff]
      %v1531 = vld [vmem:[%s204 + $0x900] sm:$0xff]
      %v1532 = vld [vmem:[%s204 + $0x908] sm:$0xff]
      %v1533 = vld [vmem:[%s204 + $0x910] sm:$0xff]
      %v1534 = vld [vmem:[%s204 + $0x918] sm:$0xff]
      %v1535 = vld [vmem:[%s204 + $0x920] sm:$0xff]
      %v1536 = vld [vmem:[%s204 + $0x928] sm:$0xff]
      %v1537 = vld [vmem:[%s204 + $0x930] sm:$0xff]
      %v1538 = vld [vmem:[%s204 + $0x938] sm:$0xff]
      %v1539 = vld [vmem:[%s204 + $0x940] sm:$0xff]
      %v1540 = vld [vmem:[%s204 + $0x948] sm:$0xff]
      %v1541 = vld [vmem:[%s204 + $0x950] sm:$0xff]
      %v1542 = vld [vmem:[%s204 + $0x958] sm:$0xff]
      %v1543 = vld [vmem:[%s204 + $0x960] sm:$0xff]
      %v1544 = vld [vmem:[%s204 + $0x968] sm:$0xff]
      %v1545 = vld [vmem:[%s204 + $0x970] sm:$0xff]
      %v1546 = vld [vmem:[%s204 + $0x978] sm:$0xff]
      %v1547 = vld [vmem:[%s204 + $0x980] sm:$0xff]
      %v1548 = vld [vmem:[%s204 + $0x988] sm:$0xff]
      %v1549 = vld [vmem:[%s204 + $0x990] sm:$0xff]
      %v1550 = vld [vmem:[%s204 + $0x998] sm:$0xff]
      %v1551 = vld [vmem:[%s204 + $0x9a0] sm:$0xff]
      %v1552 = vld [vmem:[%s204 + $0x9a8] sm:$0xff]
      %v1553 = vld [vmem:[%s204 + $0x9b0] sm:$0xff]
      %v1554 = vld [vmem:[%s204 + $0x9b8] sm:$0xff]
      %v1555 = vld [vmem:[%s204 + $0x9c0] sm:$0xff]
      %v1556 = vld [vmem:[%s204 + $0x9c8] sm:$0xff]
      %v1557 = vld [vmem:[%s204 + $0x9d0] sm:$0xff]
      %v1558 = vld [vmem:[%s204 + $0x9d8] sm:$0xff]
      %v1559 = vld [vmem:[%s204 + $0x9e0] sm:$0xff]
      %v1560 = vld [vmem:[%s204 + $0x9e8] sm:$0xff]
      %v1561 = vld [vmem:[%s204 + $0x9f0] sm:$0xff]
      %v1562 = vld [vmem:[%s204 + $0x9f8] sm:$0xff]
      %v1563 = vld [vmem:[%s204 + $0xa00] sm:$0xff]
      %v1564 = vld [vmem:[%s204 + $0xa08] sm:$0xff]
      %v1565 = vld [vmem:[%s204 + $0xa10] sm:$0xff]
      %v1566 = vld [vmem:[%s204 + $0xa18] sm:$0xff]
      %v1567 = vld [vmem:[%s204 + $0xa20] sm:$0xff]
      %v1568 = vld [vmem:[%s204 + $0xa28] sm:$0xff]
      %v1569 = vld [vmem:[%s204 + $0xa30] sm:$0xff]
      %v1570 = vld [vmem:[%s204 + $0xa38] sm:$0xff]
      %v1571 = vld [vmem:[%s204 + $0xa40] sm:$0xff]
      %v1572 = vld [vmem:[%s204 + $0xa48] sm:$0xff]
      %v1573 = vld [vmem:[%s204 + $0xa50] sm:$0xff]
      %v1574 = vld [vmem:[%s204 + $0xa58] sm:$0xff]
      %v1575 = vld [vmem:[%s204 + $0xa60] sm:$0xff]
      %v1576 = vld [vmem:[%s204 + $0xa68] sm:$0xff]
      %v1577 = vld [vmem:[%s204 + $0xa70] sm:$0xff]
      %v1578 = vld [vmem:[%s204 + $0xa78] sm:$0xff]
      %v1579 = vld [vmem:[%s204 + $0xa80] sm:$0xff]
      %v1580 = vld [vmem:[%s204 + $0xa88] sm:$0xff]
      %v1581 = vld [vmem:[%s204 + $0xa90] sm:$0xff]
      %v1582 = vld [vmem:[%s204 + $0xa98] sm:$0xff]
      %v1583 = vld [vmem:[%s204 + $0xaa0] sm:$0xff]
      %v1584 = vld [vmem:[%s204 + $0xaa8] sm:$0xff]
      %v1585 = vld [vmem:[%s204 + $0xab0] sm:$0xff]
      %v1586 = vld [vmem:[%s204 + $0xab8] sm:$0xff]
      %v1587 = vld [vmem:[%s204 + $0xac0] sm:$0xff]
      %v1588 = vld [vmem:[%s204 + $0xac8] sm:$0xff]
      %v1589 = vld [vmem:[%s204 + $0xad0] sm:$0xff]
      %v1590 = vld [vmem:[%s204 + $0xad8] sm:$0xff]
      %v1591 = vld [vmem:[%s204 + $0xae0] sm:$0xff]
      %v1592 = vld [vmem:[%s204 + $0xae8] sm:$0xff]
      %v1593 = vld [vmem:[%s204 + $0xaf0] sm:$0xff]
      %v1594 = vld [vmem:[%s204 + $0xaf8] sm:$0xff]
      %v1595 = vld [vmem:[%s204 + $0xb00] sm:$0xff]
      %v1596 = vld [vmem:[%s204 + $0xb08] sm:$0xff]
      %v1597 = vld [vmem:[%s204 + $0xb10] sm:$0xff]
      %v1598 = vld [vmem:[%s204 + $0xb18] sm:$0xff]
      %v1599 = vld [vmem:[%s204 + $0xb20] sm:$0xff]
      %v1600 = vld [vmem:[%s204 + $0xb28] sm:$0xff]
      %v1601 = vld [vmem:[%s204 + $0xb30] sm:$0xff]
      %v1602 = vld [vmem:[%s204 + $0xb38] sm:$0xff]
      %v1603 = vld [vmem:[%s204 + $0xb40] sm:$0xff]
      %v1604 = vld [vmem:[%s204 + $0xb48] sm:$0xff]
      %v1605 = vld [vmem:[%s204 + $0xb50] sm:$0xff]
      %v1606 = vld [vmem:[%s204 + $0xb58] sm:$0xff]
      %v1607 = vld [vmem:[%s204 + $0xb60] sm:$0xff]
      %v1608 = vld [vmem:[%s204 + $0xb68] sm:$0xff]
      %v1609 = vld [vmem:[%s204 + $0xb70] sm:$0xff]
      %v1610 = vld [vmem:[%s204 + $0xb78] sm:$0xff]
      %v1611 = vld [vmem:[%s204 + $0xb80] sm:$0xff]
      %v1612 = vld [vmem:[%s204 + $0xb88] sm:$0xff]
      %v1613 = vld [vmem:[%s204 + $0xb90] sm:$0xff]
      %v1614 = vld [vmem:[%s204 + $0xb98] sm:$0xff]
      %v1615 = vld [vmem:[%s204 + $0xba0] sm:$0xff]
      %v1616 = vld [vmem:[%s204 + $0xba8] sm:$0xff]
      %v1617 = vld [vmem:[%s204 + $0xbb0] sm:$0xff]
      %v1618 = vld [vmem:[%s204 + $0xbb8] sm:$0xff]
      %v1619 = vld [vmem:[%s204 + $0xbc0] sm:$0xff]
      %v1620 = vld [vmem:[%s204 + $0xbc8] sm:$0xff]
      %v1621 = vld [vmem:[%s204 + $0xbd0] sm:$0xff]
      %v1622 = vld [vmem:[%s204 + $0xbd8] sm:$0xff]
      %v1623 = vld [vmem:[%s204 + $0xbe0] sm:$0xff]
      %v1624 = vld [vmem:[%s204 + $0xbe8] sm:$0xff]
      %v1625 = vld [vmem:[%s204 + $0xbf0] sm:$0xff]
      %v1626 = vld [vmem:[%s204 + $0xbf8] sm:$0xff]
      %v1627 = vld [vmem:[%s204 + $0xc00] sm:$0xff]
      %v1628 = vld [vmem:[%s204 + $0xc08] sm:$0xff]
      %v1629 = vld [vmem:[%s204 + $0xc10] sm:$0xff]
      %v1630 = vld [vmem:[%s204 + $0xc18] sm:$0xff]
      %v1631 = vld [vmem:[%s204 + $0xc20] sm:$0xff]
      %v1632 = vld [vmem:[%s204 + $0xc28] sm:$0xff]
      %v1633 = vld [vmem:[%s204 + $0xc30] sm:$0xff]
      %v1634 = vld [vmem:[%s204 + $0xc38] sm:$0xff]
      %v1635 = vld [vmem:[%s204 + $0xc40] sm:$0xff]
      %v1636 = vld [vmem:[%s204 + $0xc48] sm:$0xff]
      %v1637 = vld [vmem:[%s204 + $0xc50] sm:$0xff]
      %v1638 = vld [vmem:[%s204 + $0xc58] sm:$0xff]
      %v1639 = vld [vmem:[%s204 + $0xc60] sm:$0xff]
      %v1640 = vld [vmem:[%s204 + $0xc68] sm:$0xff]
      %v1641 = vld [vmem:[%s204 + $0xc70] sm:$0xff]
      %v1642 = vld [vmem:[%s204 + $0xc78] sm:$0xff]
      %v1643 = vld [vmem:[%s204 + $0xc80] sm:$0xff]
      %v1644 = vld [vmem:[%s204 + $0xc88] sm:$0xff]
      %v1645 = vld [vmem:[%s204 + $0xc90] sm:$0xff]
      %v1646 = vld [vmem:[%s204 + $0xc98] sm:$0xff]
      %v1647 = vld [vmem:[%s204 + $0xca0] sm:$0xff]
      %v1648 = vld [vmem:[%s204 + $0xca8] sm:$0xff]
      %v1649 = vld [vmem:[%s204 + $0xcb0] sm:$0xff]
      %v1650 = vld [vmem:[%s204 + $0xcb8] sm:$0xff]
      %v1651 = vld [vmem:[%s204 + $0xcc0] sm:$0xff]
      %v1652 = vld [vmem:[%s204 + $0xcc8] sm:$0xff]
      %v1653 = vld [vmem:[%s204 + $0xcd0] sm:$0xff]
      %v1654 = vld [vmem:[%s204 + $0xcd8] sm:$0xff]
      %v1655 = vld [vmem:[%s204 + $0xce0] sm:$0xff]
      %v1656 = vld [vmem:[%s204 + $0xce8] sm:$0xff]
      %v1657 = vld [vmem:[%s204 + $0xcf0] sm:$0xff]
      %v1658 = vld [vmem:[%s204 + $0xcf8] sm:$0xff]
      %v1659 = vld [vmem:[%s204 + $0xd00] sm:$0xff]
      %v1660 = vld [vmem:[%s204 + $0xd08] sm:$0xff]
      %v1661 = vld [vmem:[%s204 + $0xd10] sm:$0xff]
      %v1662 = vld [vmem:[%s204 + $0xd18] sm:$0xff]
      %v1663 = vld [vmem:[%s204 + $0xd20] sm:$0xff]
      %v1664 = vld [vmem:[%s204 + $0xd28] sm:$0xff]
      %v1665 = vld [vmem:[%s204 + $0xd30] sm:$0xff]
      %v1666 = vld [vmem:[%s204 + $0xd38] sm:$0xff]
      %v1667 = vld [vmem:[%s204 + $0xd40] sm:$0xff]
      %v1668 = vld [vmem:[%s204 + $0xd48] sm:$0xff]
      %v1669 = vld [vmem:[%s204 + $0xd50] sm:$0xff]
      %v1670 = vld [vmem:[%s204 + $0xd58] sm:$0xff]
      %v1671 = vld [vmem:[%s204 + $0xd60] sm:$0xff]
      %v1672 = vld [vmem:[%s204 + $0xd68] sm:$0xff]
      %v1673 = vld [vmem:[%s204 + $0xd70] sm:$0xff]
      %v1674 = vld [vmem:[%s204 + $0xd78] sm:$0xff]
      %v1675 = vld [vmem:[%s204 + $0xd80] sm:$0xff]
      %v1676 = vld [vmem:[%s204 + $0xd88] sm:$0xff]
      %v1677 = vld [vmem:[%s204 + $0xd90] sm:$0xff]
      %v1678 = vld [vmem:[%s204 + $0xd98] sm:$0xff]
      %v1679 = vld [vmem:[%s204 + $0xda0] sm:$0xff]
      %v1680 = vld [vmem:[%s204 + $0xda8] sm:$0xff]
      %v1681 = vld [vmem:[%s204 + $0xdb0] sm:$0xff]
      %v1682 = vld [vmem:[%s204 + $0xdb8] sm:$0xff]
      %v1683 = vld [vmem:[%s204 + $0xdc0] sm:$0xff]
      %v1684 = vld [vmem:[%s204 + $0xdc8] sm:$0xff]
      %v1685 = vld [vmem:[%s204 + $0xdd0] sm:$0xff]
      %v1686 = vld [vmem:[%s204 + $0xdd8] sm:$0xff]
      %v1687 = vld [vmem:[%s204 + $0xde0] sm:$0xff]
      %v1688 = vld [vmem:[%s204 + $0xde8] sm:$0xff]
      %v1689 = vld [vmem:[%s204 + $0xdf0] sm:$0xff]
      %v1690 = vld [vmem:[%s204 + $0xdf8] sm:$0xff]
      %v1691 = vld [vmem:[%s204 + $0xe00] sm:$0xff]
      %v1692 = vld [vmem:[%s204 + $0xe08] sm:$0xff]
      %v1693 = vld [vmem:[%s204 + $0xe10] sm:$0xff]
      %v1694 = vld [vmem:[%s204 + $0xe18] sm:$0xff]
      %v1695 = vld [vmem:[%s204 + $0xe20] sm:$0xff]
      %v1696 = vld [vmem:[%s204 + $0xe28] sm:$0xff]
      %v1697 = vld [vmem:[%s204 + $0xe30] sm:$0xff]
      %v1698 = vld [vmem:[%s204 + $0xe38] sm:$0xff]
      %v1699 = vld [vmem:[%s204 + $0xe40] sm:$0xff]
      %v1700 = vld [vmem:[%s204 + $0xe48] sm:$0xff]
      %v1701 = vld [vmem:[%s204 + $0xe50] sm:$0xff]
      %v1702 = vld [vmem:[%s204 + $0xe58] sm:$0xff]
      %v1703 = vld [vmem:[%s204 + $0xe60] sm:$0xff]
      %v1704 = vld [vmem:[%s204 + $0xe68] sm:$0xff]
      %v1705 = vld [vmem:[%s204 + $0xe70] sm:$0xff]
      %v1706 = vld [vmem:[%s204 + $0xe78] sm:$0xff]
      %v1707 = vld [vmem:[%s204 + $0xe80] sm:$0xff]
      %v1708 = vld [vmem:[%s204 + $0xe88] sm:$0xff]
      %v1709 = vld [vmem:[%s204 + $0xe90] sm:$0xff]
      %v1710 = vld [vmem:[%s204 + $0xe98] sm:$0xff]
      %v1711 = vld [vmem:[%s204 + $0xea0] sm:$0xff]
      %v1712 = vld [vmem:[%s204 + $0xea8] sm:$0xff]
      %v1713 = vld [vmem:[%s204 + $0xeb0] sm:$0xff]
      %v1714 = vld [vmem:[%s204 + $0xeb8] sm:$0xff]
      %v1715 = vld [vmem:[%s204 + $0xec0] sm:$0xff]
      %v1716 = vld [vmem:[%s204 + $0xec8] sm:$0xff]
      %v1717 = vld [vmem:[%s204 + $0xed0] sm:$0xff]
      %v1718 = vld [vmem:[%s204 + $0xed8] sm:$0xff]
      %v1719 = vld [vmem:[%s204 + $0xee0] sm:$0xff]
      %v1720 = vld [vmem:[%s204 + $0xee8] sm:$0xff]
      %v1721 = vld [vmem:[%s204 + $0xef0] sm:$0xff]
      %v1722 = vld [vmem:[%s204 + $0xef8] sm:$0xff]
      %v1723 = vld [vmem:[%s204 + $0xf00] sm:$0xff]
      %v1724 = vld [vmem:[%s204 + $0xf08] sm:$0xff]
      %v1725 = vld [vmem:[%s204 + $0xf10] sm:$0xff]
      %v1726 = vld [vmem:[%s204 + $0xf18] sm:$0xff]
      %v1727 = vld [vmem:[%s204 + $0xf20] sm:$0xff]
      %v1728 = vld [vmem:[%s204 + $0xf28] sm:$0xff]
      %v1729 = vld [vmem:[%s204 + $0xf30] sm:$0xff]
      %v1730 = vld [vmem:[%s204 + $0xf38] sm:$0xff]
      %v1731 = vld [vmem:[%s204 + $0xf40] sm:$0xff]
      %v1732 = vld [vmem:[%s204 + $0xf48] sm:$0xff]
      %v1733 = vld [vmem:[%s204 + $0xf50] sm:$0xff]
      %v1734 = vld [vmem:[%s204 + $0xf58] sm:$0xff]
      %v1735 = vld [vmem:[%s204 + $0xf60] sm:$0xff]
      %v1736 = vld [vmem:[%s204 + $0xf68] sm:$0xff]
      %v1737 = vld [vmem:[%s204 + $0xf70] sm:$0xff]
      %v1738 = vld [vmem:[%s204 + $0xf78] sm:$0xff]
      %v1739 = vld [vmem:[%s204 + $0xf80] sm:$0xff]
      %v1740 = vld [vmem:[%s204 + $0xf88] sm:$0xff]
      %v1741 = vld [vmem:[%s204 + $0xf90] sm:$0xff]
      %v1742 = vld [vmem:[%s204 + $0xf98] sm:$0xff]
      %v1743 = vld [vmem:[%s204 + $0xfa0] sm:$0xff]
      %v1744 = vld [vmem:[%s204 + $0xfa8] sm:$0xff]
      %v1745 = vld [vmem:[%s204 + $0xfb0] sm:$0xff]
      %v1746 = vld [vmem:[%s204 + $0xfb8] sm:$0xff]
      %v1747 = vld [vmem:[%s204 + $0xfc0] sm:$0xff]
      %v1748 = vld [vmem:[%s204 + $0xfc8] sm:$0xff]
      %v1749 = vld [vmem:[%s204 + $0xfd0] sm:$0xff]
      %v1750 = vld [vmem:[%s204 + $0xfd8] sm:$0xff]
      %v1751 = vld [vmem:[%s204 + $0xfe0] sm:$0xff]
      %v1752 = vld [vmem:[%s204 + $0xfe8] sm:$0xff]
      %v1753 = vld [vmem:[%s204 + $0xff0] sm:$0xff]
      %v1754 = vld [vmem:[%s204 + $0xff8] sm:$0xff]
      %2267 = vrot.lane.b32.xlu0 %v1243, 32
      %v2268 = vpop.permute.xlu0 %2267
      %2269 = vrot.lane.b32.xlu0 %v1244, 32
      %v2270 = vpop.permute.xlu0 %2269
      %2271 = vrot.lane.b32.xlu0 %v1245, 32
      %v2272 = vpop.permute.xlu0 %2271
      %2273 = vrot.lane.b32.xlu0 %v1246, 32
      %v2274 = vpop.permute.xlu0 %2273
      %2275 = vrot.lane.b32.xlu0 %v1247, 32
      %v2276 = vpop.permute.xlu0 %2275
      %2277 = vrot.lane.b32.xlu0 %v1248, 32
      %v2278 = vpop.permute.xlu0 %2277
      %2279 = vrot.lane.b32.xlu0 %v1249, 32
      %v2280 = vpop.permute.xlu0 %2279
      %2281 = vrot.lane.b32.xlu0 %v1250, 32
      %v2282 = vpop.permute.xlu0 %2281
      %2283 = vrot.lane.b32.xlu0 %v1251, 32
      %v2284 = vpop.permute.xlu0 %2283
      %2285 = vrot.lane.b32.xlu0 %v1252, 32
      %v2286 = vpop.permute.xlu0 %2285
      %2287 = vrot.lane.b32.xlu0 %v1253, 32
      %v2288 = vpop.permute.xlu0 %2287
      %2289 = vrot.lane.b32.xlu0 %v1254, 32
      %v2290 = vpop.permute.xlu0 %2289
      %2291 = vrot.lane.b32.xlu0 %v1255, 32
      %v2292 = vpop.permute.xlu0 %2291
      %2293 = vrot.lane.b32.xlu0 %v1256, 32
      %v2294 = vpop.permute.xlu0 %2293
      %2295 = vrot.lane.b32.xlu0 %v1257, 32
      %v2296 = vpop.permute.xlu0 %2295
      %2297 = vrot.lane.b32.xlu0 %v1258, 32
      %v2298 = vpop.permute.xlu0 %2297
      %2299 = vrot.lane.b32.xlu0 %v1259, 32
      %v2300 = vpop.permute.xlu0 %2299
      %2301 = vrot.lane.b32.xlu0 %v1260, 32
      %v2302 = vpop.permute.xlu0 %2301
      %2303 = vrot.lane.b32.xlu0 %v1261, 32
      %v2304 = vpop.permute.xlu0 %2303
      %2305 = vrot.lane.b32.xlu0 %v1262, 32
      %v2306 = vpop.permute.xlu0 %2305
      %2307 = vrot.lane.b32.xlu0 %v1263, 32
      %v2308 = vpop.permute.xlu0 %2307
      %2309 = vrot.lane.b32.xlu0 %v1264, 32
      %v2310 = vpop.permute.xlu0 %2309
      %2311 = vrot.lane.b32.xlu0 %v1265, 32
      %v2312 = vpop.permute.xlu0 %2311
      %2313 = vrot.lane.b32.xlu0 %v1266, 32
      %v2314 = vpop.permute.xlu0 %2313
      %2315 = vrot.lane.b32.xlu0 %v1267, 32
      %v2316 = vpop.permute.xlu0 %2315
      %2317 = vrot.lane.b32.xlu0 %v1268, 32
      %v2318 = vpop.permute.xlu0 %2317
      %2319 = vrot.lane.b32.xlu0 %v1269, 32
      %v2320 = vpop.permute.xlu0 %2319
      %2321 = vrot.lane.b32.xlu0 %v1270, 32
      %v2322 = vpop.permute.xlu0 %2321
      %2323 = vrot.lane.b32.xlu0 %v1271, 32
      %v2324 = vpop.permute.xlu0 %2323
      %2325 = vrot.lane.b32.xlu0 %v1272, 32
      %v2326 = vpop.permute.xlu0 %2325
      %2327 = vrot.lane.b32.xlu0 %v1273, 32
      %v2328 = vpop.permute.xlu0 %2327
      %2329 = vrot.lane.b32.xlu0 %v1274, 32
      %v2330 = vpop.permute.xlu0 %2329
      %2331 = vrot.lane.b32.xlu0 %v1275, 32
      %v2332 = vpop.permute.xlu0 %2331
      %2333 = vrot.lane.b32.xlu0 %v1276, 32
      %v2334 = vpop.permute.xlu0 %2333
      %2335 = vrot.lane.b32.xlu0 %v1277, 32
      %v2336 = vpop.permute.xlu0 %2335
      %2337 = vrot.lane.b32.xlu0 %v1278, 32
      %v2338 = vpop.permute.xlu0 %2337
      %2339 = vrot.lane.b32.xlu0 %v1279, 32
      %v2340 = vpop.permute.xlu0 %2339
      %2341 = vrot.lane.b32.xlu0 %v1280, 32
      %v2342 = vpop.permute.xlu0 %2341
      %2343 = vrot.lane.b32.xlu0 %v1281, 32
      %v2344 = vpop.permute.xlu0 %2343
      %2345 = vrot.lane.b32.xlu0 %v1282, 32
      %v2346 = vpop.permute.xlu0 %2345
      %2347 = vrot.lane.b32.xlu0 %v1283, 32
      %v2348 = vpop.permute.xlu0 %2347
      %2349 = vrot.lane.b32.xlu0 %v1284, 32
      %v2350 = vpop.permute.xlu0 %2349
      %2351 = vrot.lane.b32.xlu0 %v1285, 32
      %v2352 = vpop.permute.xlu0 %2351
      %2353 = vrot.lane.b32.xlu0 %v1286, 32
      %v2354 = vpop.permute.xlu0 %2353
      %2355 = vrot.lane.b32.xlu0 %v1287, 32
      %v2356 = vpop.permute.xlu0 %2355
      %2357 = vrot.lane.b32.xlu0 %v1288, 32
      %v2358 = vpop.permute.xlu0 %2357
      %2359 = vrot.lane.b32.xlu0 %v1289, 32
      %v2360 = vpop.permute.xlu0 %2359
      %2361 = vrot.lane.b32.xlu0 %v1290, 32
      %v2362 = vpop.permute.xlu0 %2361
      %2363 = vrot.lane.b32.xlu0 %v1291, 32
      %v2364 = vpop.permute.xlu0 %2363
      %2365 = vrot.lane.b32.xlu0 %v1292, 32
      %v2366 = vpop.permute.xlu0 %2365
      %2367 = vrot.lane.b32.xlu0 %v1293, 32
      %v2368 = vpop.permute.xlu0 %2367
      %2369 = vrot.lane.b32.xlu0 %v1294, 32
      %v2370 = vpop.permute.xlu0 %2369
      %2371 = vrot.lane.b32.xlu0 %v1295, 32
      %v2372 = vpop.permute.xlu0 %2371
      %2373 = vrot.lane.b32.xlu0 %v1296, 32
      %v2374 = vpop.permute.xlu0 %2373
      %2375 = vrot.lane.b32.xlu0 %v1297, 32
      %v2376 = vpop.permute.xlu0 %2375
      %2377 = vrot.lane.b32.xlu0 %v1298, 32
      %v2378 = vpop.permute.xlu0 %2377
      %2379 = vrot.lane.b32.xlu0 %v1299, 32
      %v2380 = vpop.permute.xlu0 %2379
      %2381 = vrot.lane.b32.xlu0 %v1300, 32
      %v2382 = vpop.permute.xlu0 %2381
      %2383 = vrot.lane.b32.xlu0 %v1301, 32
      %v2384 = vpop.permute.xlu0 %2383
      %2385 = vrot.lane.b32.xlu0 %v1302, 32
      %v2386 = vpop.permute.xlu0 %2385
      %2387 = vrot.lane.b32.xlu0 %v1303, 32
      %v2388 = vpop.permute.xlu0 %2387
      %2389 = vrot.lane.b32.xlu0 %v1304, 32
      %v2390 = vpop.permute.xlu0 %2389
      %2391 = vrot.lane.b32.xlu0 %v1305, 32
      %v2392 = vpop.permute.xlu0 %2391
      %2393 = vrot.lane.b32.xlu0 %v1306, 32
      %v2394 = vpop.permute.xlu0 %2393
      %2395 = vrot.lane.b32.xlu0 %v1307, 32
      %v2396 = vpop.permute.xlu0 %2395
      %2397 = vrot.lane.b32.xlu0 %v1308, 32
      %v2398 = vpop.permute.xlu0 %2397
      %2399 = vrot.lane.b32.xlu0 %v1309, 32
      %v2400 = vpop.permute.xlu0 %2399
      %2401 = vrot.lane.b32.xlu0 %v1310, 32
      %v2402 = vpop.permute.xlu0 %2401
      %2403 = vrot.lane.b32.xlu0 %v1311, 32
      %v2404 = vpop.permute.xlu0 %2403
      %2405 = vrot.lane.b32.xlu0 %v1312, 32
      %v2406 = vpop.permute.xlu0 %2405
      %2407 = vrot.lane.b32.xlu0 %v1313, 32
      %v2408 = vpop.permute.xlu0 %2407
      %2409 = vrot.lane.b32.xlu0 %v1314, 32
      %v2410 = vpop.permute.xlu0 %2409
      %2411 = vrot.lane.b32.xlu0 %v1315, 32
      %v2412 = vpop.permute.xlu0 %2411
      %2413 = vrot.lane.b32.xlu0 %v1316, 32
      %v2414 = vpop.permute.xlu0 %2413
      %2415 = vrot.lane.b32.xlu0 %v1317, 32
      %v2416 = vpop.permute.xlu0 %2415
      %2417 = vrot.lane.b32.xlu0 %v1318, 32
      %v2418 = vpop.permute.xlu0 %2417
      %2419 = vrot.lane.b32.xlu0 %v1319, 32
      %v2420 = vpop.permute.xlu0 %2419
      %2421 = vrot.lane.b32.xlu0 %v1320, 32
      %v2422 = vpop.permute.xlu0 %2421
      %2423 = vrot.lane.b32.xlu0 %v1321, 32
      %v2424 = vpop.permute.xlu0 %2423
      %2425 = vrot.lane.b32.xlu0 %v1322, 32
      %v2426 = vpop.permute.xlu0 %2425
      %2427 = vrot.lane.b32.xlu0 %v1323, 32
      %v2428 = vpop.permute.xlu0 %2427
      %2429 = vrot.lane.b32.xlu0 %v1324, 32
      %v2430 = vpop.permute.xlu0 %2429
      %2431 = vrot.lane.b32.xlu0 %v1325, 32
      %v2432 = vpop.permute.xlu0 %2431
      %2433 = vrot.lane.b32.xlu0 %v1326, 32
      %v2434 = vpop.permute.xlu0 %2433
      %2435 = vrot.lane.b32.xlu0 %v1327, 32
      %v2436 = vpop.permute.xlu0 %2435
      %2437 = vrot.lane.b32.xlu0 %v1328, 32
      %v2438 = vpop.permute.xlu0 %2437
      %2439 = vrot.lane.b32.xlu0 %v1329, 32
      %v2440 = vpop.permute.xlu0 %2439
      %2441 = vrot.lane.b32.xlu0 %v1330, 32
      %v2442 = vpop.permute.xlu0 %2441
      %2443 = vrot.lane.b32.xlu0 %v1331, 32
      %v2444 = vpop.permute.xlu0 %2443
      %2445 = vrot.lane.b32.xlu0 %v1332, 32
      %v2446 = vpop.permute.xlu0 %2445
      %2447 = vrot.lane.b32.xlu0 %v1333, 32
      %v2448 = vpop.permute.xlu0 %2447
      %2449 = vrot.lane.b32.xlu0 %v1334, 32
      %v2450 = vpop.permute.xlu0 %2449
      %2451 = vrot.lane.b32.xlu0 %v1335, 32
      %v2452 = vpop.permute.xlu0 %2451
      %2453 = vrot.lane.b32.xlu0 %v1336, 32
      %v2454 = vpop.permute.xlu0 %2453
      %2455 = vrot.lane.b32.xlu0 %v1337, 32
      %v2456 = vpop.permute.xlu0 %2455
      %2457 = vrot.lane.b32.xlu0 %v1338, 32
      %v2458 = vpop.permute.xlu0 %2457
      %2459 = vrot.lane.b32.xlu0 %v1339, 32
      %v2460 = vpop.permute.xlu0 %2459
      %2461 = vrot.lane.b32.xlu0 %v1340, 32
      %v2462 = vpop.permute.xlu0 %2461
      %2463 = vrot.lane.b32.xlu0 %v1341, 32
      %v2464 = vpop.permute.xlu0 %2463
      %2465 = vrot.lane.b32.xlu0 %v1342, 32
      %v2466 = vpop.permute.xlu0 %2465
      %2467 = vrot.lane.b32.xlu0 %v1343, 32
      %v2468 = vpop.permute.xlu0 %2467
      %2469 = vrot.lane.b32.xlu0 %v1344, 32
      %v2470 = vpop.permute.xlu0 %2469
      %2471 = vrot.lane.b32.xlu0 %v1345, 32
      %v2472 = vpop.permute.xlu0 %2471
      %2473 = vrot.lane.b32.xlu0 %v1346, 32
      %v2474 = vpop.permute.xlu0 %2473
      %2475 = vrot.lane.b32.xlu0 %v1347, 32
      %v2476 = vpop.permute.xlu0 %2475
      %2477 = vrot.lane.b32.xlu0 %v1348, 32
      %v2478 = vpop.permute.xlu0 %2477
      %2479 = vrot.lane.b32.xlu0 %v1349, 32
      %v2480 = vpop.permute.xlu0 %2479
      %2481 = vrot.lane.b32.xlu0 %v1350, 32
      %v2482 = vpop.permute.xlu0 %2481
      %2483 = vrot.lane.b32.xlu0 %v1351, 32
      %v2484 = vpop.permute.xlu0 %2483
      %2485 = vrot.lane.b32.xlu0 %v1352, 32
      %v2486 = vpop.permute.xlu0 %2485
      %2487 = vrot.lane.b32.xlu0 %v1353, 32
      %v2488 = vpop.permute.xlu0 %2487
      %2489 = vrot.lane.b32.xlu0 %v1354, 32
      %v2490 = vpop.permute.xlu0 %2489
      %2491 = vrot.lane.b32.xlu0 %v1355, 32
      %v2492 = vpop.permute.xlu0 %2491
      %2493 = vrot.lane.b32.xlu0 %v1356, 32
      %v2494 = vpop.permute.xlu0 %2493
      %2495 = vrot.lane.b32.xlu0 %v1357, 32
      %v2496 = vpop.permute.xlu0 %2495
      %2497 = vrot.lane.b32.xlu0 %v1358, 32
      %v2498 = vpop.permute.xlu0 %2497
      %2499 = vrot.lane.b32.xlu0 %v1359, 32
      %v2500 = vpop.permute.xlu0 %2499
      %2501 = vrot.lane.b32.xlu0 %v1360, 32
      %v2502 = vpop.permute.xlu0 %2501
      %2503 = vrot.lane.b32.xlu0 %v1361, 32
      %v2504 = vpop.permute.xlu0 %2503
      %2505 = vrot.lane.b32.xlu0 %v1362, 32
      %v2506 = vpop.permute.xlu0 %2505
      %2507 = vrot.lane.b32.xlu0 %v1363, 32
      %v2508 = vpop.permute.xlu0 %2507
      %2509 = vrot.lane.b32.xlu0 %v1364, 32
      %v2510 = vpop.permute.xlu0 %2509
      %2511 = vrot.lane.b32.xlu0 %v1365, 32
      %v2512 = vpop.permute.xlu0 %2511
      %2513 = vrot.lane.b32.xlu0 %v1366, 32
      %v2514 = vpop.permute.xlu0 %2513
      %2515 = vrot.lane.b32.xlu0 %v1367, 32
      %v2516 = vpop.permute.xlu0 %2515
      %2517 = vrot.lane.b32.xlu0 %v1368, 32
      %v2518 = vpop.permute.xlu0 %2517
      %2519 = vrot.lane.b32.xlu0 %v1369, 32
      %v2520 = vpop.permute.xlu0 %2519
      %2521 = vrot.lane.b32.xlu0 %v1370, 32
      %v2522 = vpop.permute.xlu0 %2521
      %2523 = vrot.lane.b32.xlu0 %v1371, 32
      %v2524 = vpop.permute.xlu0 %2523
      %2525 = vrot.lane.b32.xlu0 %v1372, 32
      %v2526 = vpop.permute.xlu0 %2525
      %2527 = vrot.lane.b32.xlu0 %v1373, 32
      %v2528 = vpop.permute.xlu0 %2527
      %2529 = vrot.lane.b32.xlu0 %v1374, 32
      %v2530 = vpop.permute.xlu0 %2529
      %2531 = vrot.lane.b32.xlu0 %v1375, 32
      %v2532 = vpop.permute.xlu0 %2531
      %2533 = vrot.lane.b32.xlu0 %v1376, 32
      %v2534 = vpop.permute.xlu0 %2533
      %2535 = vrot.lane.b32.xlu0 %v1377, 32
      %v2536 = vpop.permute.xlu0 %2535
      %2537 = vrot.lane.b32.xlu0 %v1378, 32
      %v2538 = vpop.permute.xlu0 %2537
      %2539 = vrot.lane.b32.xlu0 %v1379, 32
      %v2540 = vpop.permute.xlu0 %2539
      %2541 = vrot.lane.b32.xlu0 %v1380, 32
      %v2542 = vpop.permute.xlu0 %2541
      %2543 = vrot.lane.b32.xlu0 %v1381, 32
      %v2544 = vpop.permute.xlu0 %2543
      %2545 = vrot.lane.b32.xlu0 %v1382, 32
      %v2546 = vpop.permute.xlu0 %2545
      %2547 = vrot.lane.b32.xlu0 %v1383, 32
      %v2548 = vpop.permute.xlu0 %2547
      %2549 = vrot.lane.b32.xlu0 %v1384, 32
      %v2550 = vpop.permute.xlu0 %2549
      %2551 = vrot.lane.b32.xlu0 %v1385, 32
      %v2552 = vpop.permute.xlu0 %2551
      %2553 = vrot.lane.b32.xlu0 %v1386, 32
      %v2554 = vpop.permute.xlu0 %2553
      %2555 = vrot.lane.b32.xlu0 %v1387, 32
      %v2556 = vpop.permute.xlu0 %2555
      %2557 = vrot.lane.b32.xlu0 %v1388, 32
      %v2558 = vpop.permute.xlu0 %2557
      %2559 = vrot.lane.b32.xlu0 %v1389, 32
      %v2560 = vpop.permute.xlu0 %2559
      %2561 = vrot.lane.b32.xlu0 %v1390, 32
      %v2562 = vpop.permute.xlu0 %2561
      %2563 = vrot.lane.b32.xlu0 %v1391, 32
      %v2564 = vpop.permute.xlu0 %2563
      %2565 = vrot.lane.b32.xlu0 %v1392, 32
      %v2566 = vpop.permute.xlu0 %2565
      %2567 = vrot.lane.b32.xlu0 %v1393, 32
      %v2568 = vpop.permute.xlu0 %2567
      %2569 = vrot.lane.b32.xlu0 %v1394, 32
      %v2570 = vpop.permute.xlu0 %2569
      %2571 = vrot.lane.b32.xlu0 %v1395, 32
      %v2572 = vpop.permute.xlu0 %2571
      %2573 = vrot.lane.b32.xlu0 %v1396, 32
      %v2574 = vpop.permute.xlu0 %2573
      %2575 = vrot.lane.b32.xlu0 %v1397, 32
      %v2576 = vpop.permute.xlu0 %2575
      %2577 = vrot.lane.b32.xlu0 %v1398, 32
      %v2578 = vpop.permute.xlu0 %2577
      %2579 = vrot.lane.b32.xlu0 %v1399, 32
      %v2580 = vpop.permute.xlu0 %2579
      %2581 = vrot.lane.b32.xlu0 %v1400, 32
      %v2582 = vpop.permute.xlu0 %2581
      %2583 = vrot.lane.b32.xlu0 %v1401, 32
      %v2584 = vpop.permute.xlu0 %2583
      %2585 = vrot.lane.b32.xlu0 %v1402, 32
      %v2586 = vpop.permute.xlu0 %2585
      %2587 = vrot.lane.b32.xlu0 %v1403, 32
      %v2588 = vpop.permute.xlu0 %2587
      %2589 = vrot.lane.b32.xlu0 %v1404, 32
      %v2590 = vpop.permute.xlu0 %2589
      %2591 = vrot.lane.b32.xlu0 %v1405, 32
      %v2592 = vpop.permute.xlu0 %2591
      %2593 = vrot.lane.b32.xlu0 %v1406, 32
      %v2594 = vpop.permute.xlu0 %2593
      %2595 = vrot.lane.b32.xlu0 %v1407, 32
      %v2596 = vpop.permute.xlu0 %2595
      %2597 = vrot.lane.b32.xlu0 %v1408, 32
      %v2598 = vpop.permute.xlu0 %2597
      %2599 = vrot.lane.b32.xlu0 %v1409, 32
      %v2600 = vpop.permute.xlu0 %2599
      %2601 = vrot.lane.b32.xlu0 %v1410, 32
      %v2602 = vpop.permute.xlu0 %2601
      %2603 = vrot.lane.b32.xlu0 %v1411, 32
      %v2604 = vpop.permute.xlu0 %2603
      %2605 = vrot.lane.b32.xlu0 %v1412, 32
      %v2606 = vpop.permute.xlu0 %2605
      %2607 = vrot.lane.b32.xlu0 %v1413, 32
      %v2608 = vpop.permute.xlu0 %2607
      %2609 = vrot.lane.b32.xlu0 %v1414, 32
      %v2610 = vpop.permute.xlu0 %2609
      %2611 = vrot.lane.b32.xlu0 %v1415, 32
      %v2612 = vpop.permute.xlu0 %2611
      %2613 = vrot.lane.b32.xlu0 %v1416, 32
      %v2614 = vpop.permute.xlu0 %2613
      %2615 = vrot.lane.b32.xlu0 %v1417, 32
      %v2616 = vpop.permute.xlu0 %2615
      %2617 = vrot.lane.b32.xlu0 %v1418, 32
      %v2618 = vpop.permute.xlu0 %2617
      %2619 = vrot.lane.b32.xlu0 %v1419, 32
      %v2620 = vpop.permute.xlu0 %2619
      %2621 = vrot.lane.b32.xlu0 %v1420, 32
      %v2622 = vpop.permute.xlu0 %2621
      %2623 = vrot.lane.b32.xlu0 %v1421, 32
      %v2624 = vpop.permute.xlu0 %2623
      %2625 = vrot.lane.b32.xlu0 %v1422, 32
      %v2626 = vpop.permute.xlu0 %2625
      %2627 = vrot.lane.b32.xlu0 %v1423, 32
      %v2628 = vpop.permute.xlu0 %2627
      %2629 = vrot.lane.b32.xlu0 %v1424, 32
      %v2630 = vpop.permute.xlu0 %2629
      %2631 = vrot.lane.b32.xlu0 %v1425, 32
      %v2632 = vpop.permute.xlu0 %2631
      %2633 = vrot.lane.b32.xlu0 %v1426, 32
      %v2634 = vpop.permute.xlu0 %2633
      %2635 = vrot.lane.b32.xlu0 %v1427, 32
      %v2636 = vpop.permute.xlu0 %2635
      %2637 = vrot.lane.b32.xlu0 %v1428, 32
      %v2638 = vpop.permute.xlu0 %2637
      %2639 = vrot.lane.b32.xlu0 %v1429, 32
      %v2640 = vpop.permute.xlu0 %2639
      %2641 = vrot.lane.b32.xlu0 %v1430, 32
      %v2642 = vpop.permute.xlu0 %2641
      %2643 = vrot.lane.b32.xlu0 %v1431, 32
      %v2644 = vpop.permute.xlu0 %2643
      %2645 = vrot.lane.b32.xlu0 %v1432, 32
      %v2646 = vpop.permute.xlu0 %2645
      %2647 = vrot.lane.b32.xlu0 %v1433, 32
      %v2648 = vpop.permute.xlu0 %2647
      %2649 = vrot.lane.b32.xlu0 %v1434, 32
      %v2650 = vpop.permute.xlu0 %2649
      %2651 = vrot.lane.b32.xlu0 %v1435, 32
      %v2652 = vpop.permute.xlu0 %2651
      %2653 = vrot.lane.b32.xlu0 %v1436, 32
      %v2654 = vpop.permute.xlu0 %2653
      %2655 = vrot.lane.b32.xlu0 %v1437, 32
      %v2656 = vpop.permute.xlu0 %2655
      %2657 = vrot.lane.b32.xlu0 %v1438, 32
      %v2658 = vpop.permute.xlu0 %2657
      %2659 = vrot.lane.b32.xlu0 %v1439, 32
      %v2660 = vpop.permute.xlu0 %2659
      %2661 = vrot.lane.b32.xlu0 %v1440, 32
      %v2662 = vpop.permute.xlu0 %2661
      %2663 = vrot.lane.b32.xlu0 %v1441, 32
      %v2664 = vpop.permute.xlu0 %2663
      %2665 = vrot.lane.b32.xlu0 %v1442, 32
      %v2666 = vpop.permute.xlu0 %2665
      %2667 = vrot.lane.b32.xlu0 %v1443, 32
      %v2668 = vpop.permute.xlu0 %2667
      %2669 = vrot.lane.b32.xlu0 %v1444, 32
      %v2670 = vpop.permute.xlu0 %2669
      %2671 = vrot.lane.b32.xlu0 %v1445, 32
      %v2672 = vpop.permute.xlu0 %2671
      %2673 = vrot.lane.b32.xlu0 %v1446, 32
      %v2674 = vpop.permute.xlu0 %2673
      %2675 = vrot.lane.b32.xlu0 %v1447, 32
      %v2676 = vpop.permute.xlu0 %2675
      %2677 = vrot.lane.b32.xlu0 %v1448, 32
      %v2678 = vpop.permute.xlu0 %2677
      %2679 = vrot.lane.b32.xlu0 %v1449, 32
      %v2680 = vpop.permute.xlu0 %2679
      %2681 = vrot.lane.b32.xlu0 %v1450, 32
      %v2682 = vpop.permute.xlu0 %2681
      %2683 = vrot.lane.b32.xlu0 %v1451, 32
      %v2684 = vpop.permute.xlu0 %2683
      %2685 = vrot.lane.b32.xlu0 %v1452, 32
      %v2686 = vpop.permute.xlu0 %2685
      %2687 = vrot.lane.b32.xlu0 %v1453, 32
      %v2688 = vpop.permute.xlu0 %2687
      %2689 = vrot.lane.b32.xlu0 %v1454, 32
      %v2690 = vpop.permute.xlu0 %2689
      %2691 = vrot.lane.b32.xlu0 %v1455, 32
      %v2692 = vpop.permute.xlu0 %2691
      %2693 = vrot.lane.b32.xlu0 %v1456, 32
      %v2694 = vpop.permute.xlu0 %2693
      %2695 = vrot.lane.b32.xlu0 %v1457, 32
      %v2696 = vpop.permute.xlu0 %2695
      %2697 = vrot.lane.b32.xlu0 %v1458, 32
      %v2698 = vpop.permute.xlu0 %2697
      %2699 = vrot.lane.b32.xlu0 %v1459, 32
      %v2700 = vpop.permute.xlu0 %2699
      %2701 = vrot.lane.b32.xlu0 %v1460, 32
      %v2702 = vpop.permute.xlu0 %2701
      %2703 = vrot.lane.b32.xlu0 %v1461, 32
      %v2704 = vpop.permute.xlu0 %2703
      %2705 = vrot.lane.b32.xlu0 %v1462, 32
      %v2706 = vpop.permute.xlu0 %2705
      %2707 = vrot.lane.b32.xlu0 %v1463, 32
      %v2708 = vpop.permute.xlu0 %2707
      %2709 = vrot.lane.b32.xlu0 %v1464, 32
      %v2710 = vpop.permute.xlu0 %2709
      %2711 = vrot.lane.b32.xlu0 %v1465, 32
      %v2712 = vpop.permute.xlu0 %2711
      %2713 = vrot.lane.b32.xlu0 %v1466, 32
      %v2714 = vpop.permute.xlu0 %2713
      %2715 = vrot.lane.b32.xlu0 %v1467, 32
      %v2716 = vpop.permute.xlu0 %2715
      %2717 = vrot.lane.b32.xlu0 %v1468, 32
      %v2718 = vpop.permute.xlu0 %2717
      %2719 = vrot.lane.b32.xlu0 %v1469, 32
      %v2720 = vpop.permute.xlu0 %2719
      %2721 = vrot.lane.b32.xlu0 %v1470, 32
      %v2722 = vpop.permute.xlu0 %2721
      %2723 = vrot.lane.b32.xlu0 %v1471, 32
      %v2724 = vpop.permute.xlu0 %2723
      %2725 = vrot.lane.b32.xlu0 %v1472, 32
      %v2726 = vpop.permute.xlu0 %2725
      %2727 = vrot.lane.b32.xlu0 %v1473, 32
      %v2728 = vpop.permute.xlu0 %2727
      %2729 = vrot.lane.b32.xlu0 %v1474, 32
      %v2730 = vpop.permute.xlu0 %2729
      %2731 = vrot.lane.b32.xlu0 %v1475, 32
      %v2732 = vpop.permute.xlu0 %2731
      %2733 = vrot.lane.b32.xlu0 %v1476, 32
      %v2734 = vpop.permute.xlu0 %2733
      %2735 = vrot.lane.b32.xlu0 %v1477, 32
      %v2736 = vpop.permute.xlu0 %2735
      %2737 = vrot.lane.b32.xlu0 %v1478, 32
      %v2738 = vpop.permute.xlu0 %2737
      %2739 = vrot.lane.b32.xlu0 %v1479, 32
      %v2740 = vpop.permute.xlu0 %2739
      %2741 = vrot.lane.b32.xlu0 %v1480, 32
      %v2742 = vpop.permute.xlu0 %2741
      %2743 = vrot.lane.b32.xlu0 %v1481, 32
      %v2744 = vpop.permute.xlu0 %2743
      %2745 = vrot.lane.b32.xlu0 %v1482, 32
      %v2746 = vpop.permute.xlu0 %2745
      %2747 = vrot.lane.b32.xlu0 %v1483, 32
      %v2748 = vpop.permute.xlu0 %2747
      %2749 = vrot.lane.b32.xlu0 %v1484, 32
      %v2750 = vpop.permute.xlu0 %2749
      %2751 = vrot.lane.b32.xlu0 %v1485, 32
      %v2752 = vpop.permute.xlu0 %2751
      %2753 = vrot.lane.b32.xlu0 %v1486, 32
      %v2754 = vpop.permute.xlu0 %2753
      %2755 = vrot.lane.b32.xlu0 %v1487, 32
      %v2756 = vpop.permute.xlu0 %2755
      %2757 = vrot.lane.b32.xlu0 %v1488, 32
      %v2758 = vpop.permute.xlu0 %2757
      %2759 = vrot.lane.b32.xlu0 %v1489, 32
      %v2760 = vpop.permute.xlu0 %2759
      %2761 = vrot.lane.b32.xlu0 %v1490, 32
      %v2762 = vpop.permute.xlu0 %2761
      %2763 = vrot.lane.b32.xlu0 %v1491, 32
      %v2764 = vpop.permute.xlu0 %2763
      %2765 = vrot.lane.b32.xlu0 %v1492, 32
      %v2766 = vpop.permute.xlu0 %2765
      %2767 = vrot.lane.b32.xlu0 %v1493, 32
      %v2768 = vpop.permute.xlu0 %2767
      %2769 = vrot.lane.b32.xlu0 %v1494, 32
      %v2770 = vpop.permute.xlu0 %2769
      %2771 = vrot.lane.b32.xlu0 %v1495, 32
      %v2772 = vpop.permute.xlu0 %2771
      %2773 = vrot.lane.b32.xlu0 %v1496, 32
      %v2774 = vpop.permute.xlu0 %2773
      %2775 = vrot.lane.b32.xlu0 %v1497, 32
      %v2776 = vpop.permute.xlu0 %2775
      %2777 = vrot.lane.b32.xlu0 %v1498, 32
      %v2778 = vpop.permute.xlu0 %2777
      %2779 = vrot.lane.b32.xlu0 %v1499, 32
      %v2780 = vpop.permute.xlu0 %2779
      %2781 = vrot.lane.b32.xlu0 %v1500, 32
      %v2782 = vpop.permute.xlu0 %2781
      %2783 = vrot.lane.b32.xlu0 %v1501, 32
      %v2784 = vpop.permute.xlu0 %2783
      %2785 = vrot.lane.b32.xlu0 %v1502, 32
      %v2786 = vpop.permute.xlu0 %2785
      %2787 = vrot.lane.b32.xlu0 %v1503, 32
      %v2788 = vpop.permute.xlu0 %2787
      %2789 = vrot.lane.b32.xlu0 %v1504, 32
      %v2790 = vpop.permute.xlu0 %2789
      %2791 = vrot.lane.b32.xlu0 %v1505, 32
      %v2792 = vpop.permute.xlu0 %2791
      %2793 = vrot.lane.b32.xlu0 %v1506, 32
      %v2794 = vpop.permute.xlu0 %2793
      %2795 = vrot.lane.b32.xlu0 %v1507, 32
      %v2796 = vpop.permute.xlu0 %2795
      %2797 = vrot.lane.b32.xlu0 %v1508, 32
      %v2798 = vpop.permute.xlu0 %2797
      %2799 = vrot.lane.b32.xlu0 %v1509, 32
      %v2800 = vpop.permute.xlu0 %2799
      %2801 = vrot.lane.b32.xlu0 %v1510, 32
      %v2802 = vpop.permute.xlu0 %2801
      %2803 = vrot.lane.b32.xlu0 %v1511, 32
      %v2804 = vpop.permute.xlu0 %2803
      %2805 = vrot.lane.b32.xlu0 %v1512, 32
      %v2806 = vpop.permute.xlu0 %2805
      %2807 = vrot.lane.b32.xlu0 %v1513, 32
      %v2808 = vpop.permute.xlu0 %2807
      %2809 = vrot.lane.b32.xlu0 %v1514, 32
      %v2810 = vpop.permute.xlu0 %2809
      %2811 = vrot.lane.b32.xlu0 %v1515, 32
      %v2812 = vpop.permute.xlu0 %2811
      %2813 = vrot.lane.b32.xlu0 %v1516, 32
      %v2814 = vpop.permute.xlu0 %2813
      %2815 = vrot.lane.b32.xlu0 %v1517, 32
      %v2816 = vpop.permute.xlu0 %2815
      %2817 = vrot.lane.b32.xlu0 %v1518, 32
      %v2818 = vpop.permute.xlu0 %2817
      %2819 = vrot.lane.b32.xlu0 %v1519, 32
      %v2820 = vpop.permute.xlu0 %2819
      %2821 = vrot.lane.b32.xlu0 %v1520, 32
      %v2822 = vpop.permute.xlu0 %2821
      %2823 = vrot.lane.b32.xlu0 %v1521, 32
      %v2824 = vpop.permute.xlu0 %2823
      %2825 = vrot.lane.b32.xlu0 %v1522, 32
      %v2826 = vpop.permute.xlu0 %2825
      %2827 = vrot.lane.b32.xlu0 %v1523, 32
      %v2828 = vpop.permute.xlu0 %2827
      %2829 = vrot.lane.b32.xlu0 %v1524, 32
      %v2830 = vpop.permute.xlu0 %2829
      %2831 = vrot.lane.b32.xlu0 %v1525, 32
      %v2832 = vpop.permute.xlu0 %2831
      %2833 = vrot.lane.b32.xlu0 %v1526, 32
      %v2834 = vpop.permute.xlu0 %2833
      %2835 = vrot.lane.b32.xlu0 %v1527, 32
      %v2836 = vpop.permute.xlu0 %2835
      %2837 = vrot.lane.b32.xlu0 %v1528, 32
      %v2838 = vpop.permute.xlu0 %2837
      %2839 = vrot.lane.b32.xlu0 %v1529, 32
      %v2840 = vpop.permute.xlu0 %2839
      %2841 = vrot.lane.b32.xlu0 %v1530, 32
      %v2842 = vpop.permute.xlu0 %2841
      %2843 = vrot.lane.b32.xlu0 %v1531, 32
      %v2844 = vpop.permute.xlu0 %2843
      %2845 = vrot.lane.b32.xlu0 %v1532, 32
      %v2846 = vpop.permute.xlu0 %2845
      %2847 = vrot.lane.b32.xlu0 %v1533, 32
      %v2848 = vpop.permute.xlu0 %2847
      %2849 = vrot.lane.b32.xlu0 %v1534, 32
      %v2850 = vpop.permute.xlu0 %2849
      %2851 = vrot.lane.b32.xlu0 %v1535, 32
      %v2852 = vpop.permute.xlu0 %2851
      %2853 = vrot.lane.b32.xlu0 %v1536, 32
      %v2854 = vpop.permute.xlu0 %2853
      %2855 = vrot.lane.b32.xlu0 %v1537, 32
      %v2856 = vpop.permute.xlu0 %2855
      %2857 = vrot.lane.b32.xlu0 %v1538, 32
      %v2858 = vpop.permute.xlu0 %2857
      %2859 = vrot.lane.b32.xlu0 %v1539, 32
      %v2860 = vpop.permute.xlu0 %2859
      %2861 = vrot.lane.b32.xlu0 %v1540, 32
      %v2862 = vpop.permute.xlu0 %2861
      %2863 = vrot.lane.b32.xlu0 %v1541, 32
      %v2864 = vpop.permute.xlu0 %2863
      %2865 = vrot.lane.b32.xlu0 %v1542, 32
      %v2866 = vpop.permute.xlu0 %2865
      %2867 = vrot.lane.b32.xlu0 %v1543, 32
      %v2868 = vpop.permute.xlu0 %2867
      %2869 = vrot.lane.b32.xlu0 %v1544, 32
      %v2870 = vpop.permute.xlu0 %2869
      %2871 = vrot.lane.b32.xlu0 %v1545, 32
      %v2872 = vpop.permute.xlu0 %2871
      %2873 = vrot.lane.b32.xlu0 %v1546, 32
      %v2874 = vpop.permute.xlu0 %2873
      %2875 = vrot.lane.b32.xlu0 %v1547, 32
      %v2876 = vpop.permute.xlu0 %2875
      %2877 = vrot.lane.b32.xlu0 %v1548, 32
      %v2878 = vpop.permute.xlu0 %2877
      %2879 = vrot.lane.b32.xlu0 %v1549, 32
      %v2880 = vpop.permute.xlu0 %2879
      %2881 = vrot.lane.b32.xlu0 %v1550, 32
      %v2882 = vpop.permute.xlu0 %2881
      %2883 = vrot.lane.b32.xlu0 %v1551, 32
      %v2884 = vpop.permute.xlu0 %2883
      %2885 = vrot.lane.b32.xlu0 %v1552, 32
      %v2886 = vpop.permute.xlu0 %2885
      %2887 = vrot.lane.b32.xlu0 %v1553, 32
      %v2888 = vpop.permute.xlu0 %2887
      %2889 = vrot.lane.b32.xlu0 %v1554, 32
      %v2890 = vpop.permute.xlu0 %2889
      %2891 = vrot.lane.b32.xlu0 %v1555, 32
      %v2892 = vpop.permute.xlu0 %2891
      %2893 = vrot.lane.b32.xlu0 %v1556, 32
      %v2894 = vpop.permute.xlu0 %2893
      %2895 = vrot.lane.b32.xlu0 %v1557, 32
      %v2896 = vpop.permute.xlu0 %2895
      %2897 = vrot.lane.b32.xlu0 %v1558, 32
      %v2898 = vpop.permute.xlu0 %2897
      %2899 = vrot.lane.b32.xlu0 %v1559, 32
      %v2900 = vpop.permute.xlu0 %2899
      %2901 = vrot.lane.b32.xlu0 %v1560, 32
      %v2902 = vpop.permute.xlu0 %2901
      %2903 = vrot.lane.b32.xlu0 %v1561, 32
      %v2904 = vpop.permute.xlu0 %2903
      %2905 = vrot.lane.b32.xlu0 %v1562, 32
      %v2906 = vpop.permute.xlu0 %2905
      %2907 = vrot.lane.b32.xlu0 %v1563, 32
      %v2908 = vpop.permute.xlu0 %2907
      %2909 = vrot.lane.b32.xlu0 %v1564, 32
      %v2910 = vpop.permute.xlu0 %2909
      %2911 = vrot.lane.b32.xlu0 %v1565, 32
      %v2912 = vpop.permute.xlu0 %2911
      %2913 = vrot.lane.b32.xlu0 %v1566, 32
      %v2914 = vpop.permute.xlu0 %2913
      %2915 = vrot.lane.b32.xlu0 %v1567, 32
      %v2916 = vpop.permute.xlu0 %2915
      %2917 = vrot.lane.b32.xlu0 %v1568, 32
      %v2918 = vpop.permute.xlu0 %2917
      %2919 = vrot.lane.b32.xlu0 %v1569, 32
      %v2920 = vpop.permute.xlu0 %2919
      %2921 = vrot.lane.b32.xlu0 %v1570, 32
      %v2922 = vpop.permute.xlu0 %2921
      %2923 = vrot.lane.b32.xlu0 %v1571, 32
      %v2924 = vpop.permute.xlu0 %2923
      %2925 = vrot.lane.b32.xlu0 %v1572, 32
      %v2926 = vpop.permute.xlu0 %2925
      %2927 = vrot.lane.b32.xlu0 %v1573, 32
      %v2928 = vpop.permute.xlu0 %2927
      %2929 = vrot.lane.b32.xlu0 %v1574, 32
      %v2930 = vpop.permute.xlu0 %2929
      %2931 = vrot.lane.b32.xlu0 %v1575, 32
      %v2932 = vpop.permute.xlu0 %2931
      %2933 = vrot.lane.b32.xlu0 %v1576, 32
      %v2934 = vpop.permute.xlu0 %2933
      %2935 = vrot.lane.b32.xlu0 %v1577, 32
      %v2936 = vpop.permute.xlu0 %2935
      %2937 = vrot.lane.b32.xlu0 %v1578, 32
      %v2938 = vpop.permute.xlu0 %2937
      %2939 = vrot.lane.b32.xlu0 %v1579, 32
      %v2940 = vpop.permute.xlu0 %2939
      %2941 = vrot.lane.b32.xlu0 %v1580, 32
      %v2942 = vpop.permute.xlu0 %2941
      %2943 = vrot.lane.b32.xlu0 %v1581, 32
      %v2944 = vpop.permute.xlu0 %2943
      %2945 = vrot.lane.b32.xlu0 %v1582, 32
      %v2946 = vpop.permute.xlu0 %2945
      %2947 = vrot.lane.b32.xlu0 %v1583, 32
      %v2948 = vpop.permute.xlu0 %2947
      %2949 = vrot.lane.b32.xlu0 %v1584, 32
      %v2950 = vpop.permute.xlu0 %2949
      %2951 = vrot.lane.b32.xlu0 %v1585, 32
      %v2952 = vpop.permute.xlu0 %2951
      %2953 = vrot.lane.b32.xlu0 %v1586, 32
      %v2954 = vpop.permute.xlu0 %2953
      %2955 = vrot.lane.b32.xlu0 %v1587, 32
      %v2956 = vpop.permute.xlu0 %2955
      %2957 = vrot.lane.b32.xlu0 %v1588, 32
      %v2958 = vpop.permute.xlu0 %2957
      %2959 = vrot.lane.b32.xlu0 %v1589, 32
      %v2960 = vpop.permute.xlu0 %2959
      %2961 = vrot.lane.b32.xlu0 %v1590, 32
      %v2962 = vpop.permute.xlu0 %2961
      %2963 = vrot.lane.b32.xlu0 %v1591, 32
      %v2964 = vpop.permute.xlu0 %2963
      %2965 = vrot.lane.b32.xlu0 %v1592, 32
      %v2966 = vpop.permute.xlu0 %2965
      %2967 = vrot.lane.b32.xlu0 %v1593, 32
      %v2968 = vpop.permute.xlu0 %2967
      %2969 = vrot.lane.b32.xlu0 %v1594, 32
      %v2970 = vpop.permute.xlu0 %2969
      %2971 = vrot.lane.b32.xlu0 %v1595, 32
      %v2972 = vpop.permute.xlu0 %2971
      %2973 = vrot.lane.b32.xlu0 %v1596, 32
      %v2974 = vpop.permute.xlu0 %2973
      %2975 = vrot.lane.b32.xlu0 %v1597, 32
      %v2976 = vpop.permute.xlu0 %2975
      %2977 = vrot.lane.b32.xlu0 %v1598, 32
      %v2978 = vpop.permute.xlu0 %2977
      %2979 = vrot.lane.b32.xlu0 %v1599, 32
      %v2980 = vpop.permute.xlu0 %2979
      %2981 = vrot.lane.b32.xlu0 %v1600, 32
      %v2982 = vpop.permute.xlu0 %2981
      %2983 = vrot.lane.b32.xlu0 %v1601, 32
      %v2984 = vpop.permute.xlu0 %2983
      %2985 = vrot.lane.b32.xlu0 %v1602, 32
      %v2986 = vpop.permute.xlu0 %2985
      %2987 = vrot.lane.b32.xlu0 %v1603, 32
      %v2988 = vpop.permute.xlu0 %2987
      %2989 = vrot.lane.b32.xlu0 %v1604, 32
      %v2990 = vpop.permute.xlu0 %2989
      %2991 = vrot.lane.b32.xlu0 %v1605, 32
      %v2992 = vpop.permute.xlu0 %2991
      %2993 = vrot.lane.b32.xlu0 %v1606, 32
      %v2994 = vpop.permute.xlu0 %2993
      %2995 = vrot.lane.b32.xlu0 %v1607, 32
      %v2996 = vpop.permute.xlu0 %2995
      %2997 = vrot.lane.b32.xlu0 %v1608, 32
      %v2998 = vpop.permute.xlu0 %2997
      %2999 = vrot.lane.b32.xlu0 %v1609, 32
      %v3000 = vpop.permute.xlu0 %2999
      %3001 = vrot.lane.b32.xlu0 %v1610, 32
      %v3002 = vpop.permute.xlu0 %3001
      %3003 = vrot.lane.b32.xlu0 %v1611, 32
      %v3004 = vpop.permute.xlu0 %3003
      %3005 = vrot.lane.b32.xlu0 %v1612, 32
      %v3006 = vpop.permute.xlu0 %3005
      %3007 = vrot.lane.b32.xlu0 %v1613, 32
      %v3008 = vpop.permute.xlu0 %3007
      %3009 = vrot.lane.b32.xlu0 %v1614, 32
      %v3010 = vpop.permute.xlu0 %3009
      %3011 = vrot.lane.b32.xlu0 %v1615, 32
      %v3012 = vpop.permute.xlu0 %3011
      %3013 = vrot.lane.b32.xlu0 %v1616, 32
      %v3014 = vpop.permute.xlu0 %3013
      %3015 = vrot.lane.b32.xlu0 %v1617, 32
      %v3016 = vpop.permute.xlu0 %3015
      %3017 = vrot.lane.b32.xlu0 %v1618, 32
      %v3018 = vpop.permute.xlu0 %3017
      %3019 = vrot.lane.b32.xlu0 %v1619, 32
      %v3020 = vpop.permute.xlu0 %3019
      %3021 = vrot.lane.b32.xlu0 %v1620, 32
      %v3022 = vpop.permute.xlu0 %3021
      %3023 = vrot.lane.b32.xlu0 %v1621, 32
      %v3024 = vpop.permute.xlu0 %3023
      %3025 = vrot.lane.b32.xlu0 %v1622, 32
      %v3026 = vpop.permute.xlu0 %3025
      %3027 = vrot.lane.b32.xlu0 %v1623, 32
      %v3028 = vpop.permute.xlu0 %3027
      %3029 = vrot.lane.b32.xlu0 %v1624, 32
      %v3030 = vpop.permute.xlu0 %3029
      %3031 = vrot.lane.b32.xlu0 %v1625, 32
      %v3032 = vpop.permute.xlu0 %3031
      %3033 = vrot.lane.b32.xlu0 %v1626, 32
      %v3034 = vpop.permute.xlu0 %3033
      %3035 = vrot.lane.b32.xlu0 %v1627, 32
      %v3036 = vpop.permute.xlu0 %3035
      %3037 = vrot.lane.b32.xlu0 %v1628, 32
      %v3038 = vpop.permute.xlu0 %3037
      %3039 = vrot.lane.b32.xlu0 %v1629, 32
      %v3040 = vpop.permute.xlu0 %3039
      %3041 = vrot.lane.b32.xlu0 %v1630, 32
      %v3042 = vpop.permute.xlu0 %3041
      %3043 = vrot.lane.b32.xlu0 %v1631, 32
      %v3044 = vpop.permute.xlu0 %3043
      %3045 = vrot.lane.b32.xlu0 %v1632, 32
      %v3046 = vpop.permute.xlu0 %3045
      %3047 = vrot.lane.b32.xlu0 %v1633, 32
      %v3048 = vpop.permute.xlu0 %3047
      %3049 = vrot.lane.b32.xlu0 %v1634, 32
      %v3050 = vpop.permute.xlu0 %3049
      %3051 = vrot.lane.b32.xlu0 %v1635, 32
      %v3052 = vpop.permute.xlu0 %3051
      %3053 = vrot.lane.b32.xlu0 %v1636, 32
      %v3054 = vpop.permute.xlu0 %3053
      %3055 = vrot.lane.b32.xlu0 %v1637, 32
      %v3056 = vpop.permute.xlu0 %3055
      %3057 = vrot.lane.b32.xlu0 %v1638, 32
      %v3058 = vpop.permute.xlu0 %3057
      %3059 = vrot.lane.b32.xlu0 %v1639, 32
      %v3060 = vpop.permute.xlu0 %3059
      %3061 = vrot.lane.b32.xlu0 %v1640, 32
      %v3062 = vpop.permute.xlu0 %3061
      %3063 = vrot.lane.b32.xlu0 %v1641, 32
      %v3064 = vpop.permute.xlu0 %3063
      %3065 = vrot.lane.b32.xlu0 %v1642, 32
      %v3066 = vpop.permute.xlu0 %3065
      %3067 = vrot.lane.b32.xlu0 %v1643, 32
      %v3068 = vpop.permute.xlu0 %3067
      %3069 = vrot.lane.b32.xlu0 %v1644, 32
      %v3070 = vpop.permute.xlu0 %3069
      %3071 = vrot.lane.b32.xlu0 %v1645, 32
      %v3072 = vpop.permute.xlu0 %3071
      %3073 = vrot.lane.b32.xlu0 %v1646, 32
      %v3074 = vpop.permute.xlu0 %3073
      %3075 = vrot.lane.b32.xlu0 %v1647, 32
      %v3076 = vpop.permute.xlu0 %3075
      %3077 = vrot.lane.b32.xlu0 %v1648, 32
      %v3078 = vpop.permute.xlu0 %3077
      %3079 = vrot.lane.b32.xlu0 %v1649, 32
      %v3080 = vpop.permute.xlu0 %3079
      %3081 = vrot.lane.b32.xlu0 %v1650, 32
      %v3082 = vpop.permute.xlu0 %3081
      %3083 = vrot.lane.b32.xlu0 %v1651, 32
      %v3084 = vpop.permute.xlu0 %3083
      %3085 = vrot.lane.b32.xlu0 %v1652, 32
      %v3086 = vpop.permute.xlu0 %3085
      %3087 = vrot.lane.b32.xlu0 %v1653, 32
      %v3088 = vpop.permute.xlu0 %3087
      %3089 = vrot.lane.b32.xlu0 %v1654, 32
      %v3090 = vpop.permute.xlu0 %3089
      %3091 = vrot.lane.b32.xlu0 %v1655, 32
      %v3092 = vpop.permute.xlu0 %3091
      %3093 = vrot.lane.b32.xlu0 %v1656, 32
      %v3094 = vpop.permute.xlu0 %3093
      %3095 = vrot.lane.b32.xlu0 %v1657, 32
      %v3096 = vpop.permute.xlu0 %3095
      %3097 = vrot.lane.b32.xlu0 %v1658, 32
      %v3098 = vpop.permute.xlu0 %3097
      %3099 = vrot.lane.b32.xlu0 %v1659, 32
      %v3100 = vpop.permute.xlu0 %3099
      %3101 = vrot.lane.b32.xlu0 %v1660, 32
      %v3102 = vpop.permute.xlu0 %3101
      %3103 = vrot.lane.b32.xlu0 %v1661, 32
      %v3104 = vpop.permute.xlu0 %3103
      %3105 = vrot.lane.b32.xlu0 %v1662, 32
      %v3106 = vpop.permute.xlu0 %3105
      %3107 = vrot.lane.b32.xlu0 %v1663, 32
      %v3108 = vpop.permute.xlu0 %3107
      %3109 = vrot.lane.b32.xlu0 %v1664, 32
      %v3110 = vpop.permute.xlu0 %3109
      %3111 = vrot.lane.b32.xlu0 %v1665, 32
      %v3112 = vpop.permute.xlu0 %3111
      %3113 = vrot.lane.b32.xlu0 %v1666, 32
      %v3114 = vpop.permute.xlu0 %3113
      %3115 = vrot.lane.b32.xlu0 %v1667, 32
      %v3116 = vpop.permute.xlu0 %3115
      %3117 = vrot.lane.b32.xlu0 %v1668, 32
      %v3118 = vpop.permute.xlu0 %3117
      %3119 = vrot.lane.b32.xlu0 %v1669, 32
      %v3120 = vpop.permute.xlu0 %3119
      %3121 = vrot.lane.b32.xlu0 %v1670, 32
      %v3122 = vpop.permute.xlu0 %3121
      %3123 = vrot.lane.b32.xlu0 %v1671, 32
      %v3124 = vpop.permute.xlu0 %3123
      %3125 = vrot.lane.b32.xlu0 %v1672, 32
      %v3126 = vpop.permute.xlu0 %3125
      %3127 = vrot.lane.b32.xlu0 %v1673, 32
      %v3128 = vpop.permute.xlu0 %3127
      %3129 = vrot.lane.b32.xlu0 %v1674, 32
      %v3130 = vpop.permute.xlu0 %3129
      %3131 = vrot.lane.b32.xlu0 %v1675, 32
      %v3132 = vpop.permute.xlu0 %3131
      %3133 = vrot.lane.b32.xlu0 %v1676, 32
      %v3134 = vpop.permute.xlu0 %3133
      %3135 = vrot.lane.b32.xlu0 %v1677, 32
      %v3136 = vpop.permute.xlu0 %3135
      %3137 = vrot.lane.b32.xlu0 %v1678, 32
      %v3138 = vpop.permute.xlu0 %3137
      %3139 = vrot.lane.b32.xlu0 %v1679, 32
      %v3140 = vpop.permute.xlu0 %3139
      %3141 = vrot.lane.b32.xlu0 %v1680, 32
      %v3142 = vpop.permute.xlu0 %3141
      %3143 = vrot.lane.b32.xlu0 %v1681, 32
      %v3144 = vpop.permute.xlu0 %3143
      %3145 = vrot.lane.b32.xlu0 %v1682, 32
      %v3146 = vpop.permute.xlu0 %3145
      %3147 = vrot.lane.b32.xlu0 %v1683, 32
      %v3148 = vpop.permute.xlu0 %3147
      %3149 = vrot.lane.b32.xlu0 %v1684, 32
      %v3150 = vpop.permute.xlu0 %3149
      %3151 = vrot.lane.b32.xlu0 %v1685, 32
      %v3152 = vpop.permute.xlu0 %3151
      %3153 = vrot.lane.b32.xlu0 %v1686, 32
      %v3154 = vpop.permute.xlu0 %3153
      %3155 = vrot.lane.b32.xlu0 %v1687, 32
      %v3156 = vpop.permute.xlu0 %3155
      %3157 = vrot.lane.b32.xlu0 %v1688, 32
      %v3158 = vpop.permute.xlu0 %3157
      %3159 = vrot.lane.b32.xlu0 %v1689, 32
      %v3160 = vpop.permute.xlu0 %3159
      %3161 = vrot.lane.b32.xlu0 %v1690, 32
      %v3162 = vpop.permute.xlu0 %3161
      %3163 = vrot.lane.b32.xlu0 %v1691, 32
      %v3164 = vpop.permute.xlu0 %3163
      %3165 = vrot.lane.b32.xlu0 %v1692, 32
      %v3166 = vpop.permute.xlu0 %3165
      %3167 = vrot.lane.b32.xlu0 %v1693, 32
      %v3168 = vpop.permute.xlu0 %3167
      %3169 = vrot.lane.b32.xlu0 %v1694, 32
      %v3170 = vpop.permute.xlu0 %3169
      %3171 = vrot.lane.b32.xlu0 %v1695, 32
      %v3172 = vpop.permute.xlu0 %3171
      %3173 = vrot.lane.b32.xlu0 %v1696, 32
      %v3174 = vpop.permute.xlu0 %3173
      %3175 = vrot.lane.b32.xlu0 %v1697, 32
      %v3176 = vpop.permute.xlu0 %3175
      %3177 = vrot.lane.b32.xlu0 %v1698, 32
      %v3178 = vpop.permute.xlu0 %3177
      %3179 = vrot.lane.b32.xlu0 %v1699, 32
      %v3180 = vpop.permute.xlu0 %3179
      %3181 = vrot.lane.b32.xlu0 %v1700, 32
      %v3182 = vpop.permute.xlu0 %3181
      %3183 = vrot.lane.b32.xlu0 %v1701, 32
      %v3184 = vpop.permute.xlu0 %3183
      %3185 = vrot.lane.b32.xlu0 %v1702, 32
      %v3186 = vpop.permute.xlu0 %3185
      %3187 = vrot.lane.b32.xlu0 %v1703, 32
      %v3188 = vpop.permute.xlu0 %3187
      %3189 = vrot.lane.b32.xlu0 %v1704, 32
      %v3190 = vpop.permute.xlu0 %3189
      %3191 = vrot.lane.b32.xlu0 %v1705, 32
      %v3192 = vpop.permute.xlu0 %3191
      %3193 = vrot.lane.b32.xlu0 %v1706, 32
      %v3194 = vpop.permute.xlu0 %3193
      %3195 = vrot.lane.b32.xlu0 %v1707, 32
      %v3196 = vpop.permute.xlu0 %3195
      %3197 = vrot.lane.b32.xlu0 %v1708, 32
      %v3198 = vpop.permute.xlu0 %3197
      %3199 = vrot.lane.b32.xlu0 %v1709, 32
      %v3200 = vpop.permute.xlu0 %3199
      %3201 = vrot.lane.b32.xlu0 %v1710, 32
      %v3202 = vpop.permute.xlu0 %3201
      %3203 = vrot.lane.b32.xlu0 %v1711, 32
      %v3204 = vpop.permute.xlu0 %3203
      %3205 = vrot.lane.b32.xlu0 %v1712, 32
      %v3206 = vpop.permute.xlu0 %3205
      %3207 = vrot.lane.b32.xlu0 %v1713, 32
      %v3208 = vpop.permute.xlu0 %3207
      %3209 = vrot.lane.b32.xlu0 %v1714, 32
      %v3210 = vpop.permute.xlu0 %3209
      %3211 = vrot.lane.b32.xlu0 %v1715, 32
      %v3212 = vpop.permute.xlu0 %3211
      %3213 = vrot.lane.b32.xlu0 %v1716, 32
      %v3214 = vpop.permute.xlu0 %3213
      %3215 = vrot.lane.b32.xlu0 %v1717, 32
      %v3216 = vpop.permute.xlu0 %3215
      %3217 = vrot.lane.b32.xlu0 %v1718, 32
      %v3218 = vpop.permute.xlu0 %3217
      %3219 = vrot.lane.b32.xlu0 %v1719, 32
      %v3220 = vpop.permute.xlu0 %3219
      %3221 = vrot.lane.b32.xlu0 %v1720, 32
      %v3222 = vpop.permute.xlu0 %3221
      %3223 = vrot.lane.b32.xlu0 %v1721, 32
      %v3224 = vpop.permute.xlu0 %3223
      %3225 = vrot.lane.b32.xlu0 %v1722, 32
      %v3226 = vpop.permute.xlu0 %3225
      %3227 = vrot.lane.b32.xlu0 %v1723, 32
      %v3228 = vpop.permute.xlu0 %3227
      %3229 = vrot.lane.b32.xlu0 %v1724, 32
      %v3230 = vpop.permute.xlu0 %3229
      %3231 = vrot.lane.b32.xlu0 %v1725, 32
      %v3232 = vpop.permute.xlu0 %3231
      %3233 = vrot.lane.b32.xlu0 %v1726, 32
      %v3234 = vpop.permute.xlu0 %3233
      %3235 = vrot.lane.b32.xlu0 %v1727, 32
      %v3236 = vpop.permute.xlu0 %3235
      %3237 = vrot.lane.b32.xlu0 %v1728, 32
      %v3238 = vpop.permute.xlu0 %3237
      %3239 = vrot.lane.b32.xlu0 %v1729, 32
      %v3240 = vpop.permute.xlu0 %3239
      %3241 = vrot.lane.b32.xlu0 %v1730, 32
      %v3242 = vpop.permute.xlu0 %3241
      %3243 = vrot.lane.b32.xlu0 %v1731, 32
      %v3244 = vpop.permute.xlu0 %3243
      %3245 = vrot.lane.b32.xlu0 %v1732, 32
      %v3246 = vpop.permute.xlu0 %3245
      %3247 = vrot.lane.b32.xlu0 %v1733, 32
      %v3248 = vpop.permute.xlu0 %3247
      %3249 = vrot.lane.b32.xlu0 %v1734, 32
      %v3250 = vpop.permute.xlu0 %3249
      %3251 = vrot.lane.b32.xlu0 %v1735, 32
      %v3252 = vpop.permute.xlu0 %3251
      %3253 = vrot.lane.b32.xlu0 %v1736, 32
      %v3254 = vpop.permute.xlu0 %3253
      %3255 = vrot.lane.b32.xlu0 %v1737, 32
      %v3256 = vpop.permute.xlu0 %3255
      %3257 = vrot.lane.b32.xlu0 %v1738, 32
      %v3258 = vpop.permute.xlu0 %3257
      %3259 = vrot.lane.b32.xlu0 %v1739, 32
      %v3260 = vpop.permute.xlu0 %3259
      %3261 = vrot.lane.b32.xlu0 %v1740, 32
      %v3262 = vpop.permute.xlu0 %3261
      %3263 = vrot.lane.b32.xlu0 %v1741, 32
      %v3264 = vpop.permute.xlu0 %3263
      %3265 = vrot.lane.b32.xlu0 %v1742, 32
      %v3266 = vpop.permute.xlu0 %3265
      %3267 = vrot.lane.b32.xlu0 %v1743, 32
      %v3268 = vpop.permute.xlu0 %3267
      %3269 = vrot.lane.b32.xlu0 %v1744, 32
      %v3270 = vpop.permute.xlu0 %3269
      %3271 = vrot.lane.b32.xlu0 %v1745, 32
      %v3272 = vpop.permute.xlu0 %3271
      %3273 = vrot.lane.b32.xlu0 %v1746, 32
      %v3274 = vpop.permute.xlu0 %3273
      %3275 = vrot.lane.b32.xlu0 %v1747, 32
      %v3276 = vpop.permute.xlu0 %3275
      %3277 = vrot.lane.b32.xlu0 %v1748, 32
      %v3278 = vpop.permute.xlu0 %3277
      %3279 = vrot.lane.b32.xlu0 %v1749, 32
      %v3280 = vpop.permute.xlu0 %3279
      %3281 = vrot.lane.b32.xlu0 %v1750, 32
      %v3282 = vpop.permute.xlu0 %3281
      %3283 = vrot.lane.b32.xlu0 %v1751, 32
      %v3284 = vpop.permute.xlu0 %3283
      %3285 = vrot.lane.b32.xlu0 %v1752, 32
      %v3286 = vpop.permute.xlu0 %3285
      %3287 = vrot.lane.b32.xlu0 %v1753, 32
      %v3288 = vpop.permute.xlu0 %3287
      %3289 = vrot.lane.b32.xlu0 %v1754, 32
      %v3290 = vpop.permute.xlu0 %3289
      %vm3803 = vcmask 457984
      %3804 = vst.msk [vmem:[%s216] sm:$0xff] %vm3803, %v2268
      %3805 = vst.msk [vmem:[%s216 + $0x8] sm:$0xff] %vm3803, %v2270
      %3806 = vst.msk [vmem:[%s216 + $0x10] sm:$0xff] %vm3803, %v2272
      %3807 = vst.msk [vmem:[%s216 + $0x18] sm:$0xff] %vm3803, %v2274
      %3808 = vst.msk [vmem:[%s216 + $0x20] sm:$0xff] %vm3803, %v2276
      %3809 = vst.msk [vmem:[%s216 + $0x28] sm:$0xff] %vm3803, %v2278
      %3810 = vst.msk [vmem:[%s216 + $0x30] sm:$0xff] %vm3803, %v2280
      %3811 = vst.msk [vmem:[%s216 + $0x38] sm:$0xff] %vm3803, %v2282
      %3812 = vst.msk [vmem:[%s216 + $0x40] sm:$0xff] %vm3803, %v2284
      %3813 = vst.msk [vmem:[%s216 + $0x48] sm:$0xff] %vm3803, %v2286
      %3814 = vst.msk [vmem:[%s216 + $0x50] sm:$0xff] %vm3803, %v2288
      %3815 = vst.msk [vmem:[%s216 + $0x58] sm:$0xff] %vm3803, %v2290
      %3816 = vst.msk [vmem:[%s216 + $0x60] sm:$0xff] %vm3803, %v2292
      %3817 = vst.msk [vmem:[%s216 + $0x68] sm:$0xff] %vm3803, %v2294
      %3818 = vst.msk [vmem:[%s216 + $0x70] sm:$0xff] %vm3803, %v2296
      %3819 = vst.msk [vmem:[%s216 + $0x78] sm:$0xff] %vm3803, %v2298
      %3820 = vst.msk [vmem:[%s216 + $0x80] sm:$0xff] %vm3803, %v2300
      %3821 = vst.msk [vmem:[%s216 + $0x88] sm:$0xff] %vm3803, %v2302
      %3822 = vst.msk [vmem:[%s216 + $0x90] sm:$0xff] %vm3803, %v2304
      %3823 = vst.msk [vmem:[%s216 + $0x98] sm:$0xff] %vm3803, %v2306
      %3824 = vst.msk [vmem:[%s216 + $0xa0] sm:$0xff] %vm3803, %v2308
      %3825 = vst.msk [vmem:[%s216 + $0xa8] sm:$0xff] %vm3803, %v2310
      %3826 = vst.msk [vmem:[%s216 + $0xb0] sm:$0xff] %vm3803, %v2312
      %3827 = vst.msk [vmem:[%s216 + $0xb8] sm:$0xff] %vm3803, %v2314
      %3828 = vst.msk [vmem:[%s216 + $0xc0] sm:$0xff] %vm3803, %v2316
      %3829 = vst.msk [vmem:[%s216 + $0xc8] sm:$0xff] %vm3803, %v2318
      %3830 = vst.msk [vmem:[%s216 + $0xd0] sm:$0xff] %vm3803, %v2320
      %3831 = vst.msk [vmem:[%s216 + $0xd8] sm:$0xff] %vm3803, %v2322
      %3832 = vst.msk [vmem:[%s216 + $0xe0] sm:$0xff] %vm3803, %v2324
      %3833 = vst.msk [vmem:[%s216 + $0xe8] sm:$0xff] %vm3803, %v2326
      %3834 = vst.msk [vmem:[%s216 + $0xf0] sm:$0xff] %vm3803, %v2328
      %3835 = vst.msk [vmem:[%s216 + $0xf8] sm:$0xff] %vm3803, %v2330
      %3836 = vst.msk [vmem:[%s216 + $0x100] sm:$0xff] %vm3803, %v2332
      %3837 = vst.msk [vmem:[%s216 + $0x108] sm:$0xff] %vm3803, %v2334
      %3838 = vst.msk [vmem:[%s216 + $0x110] sm:$0xff] %vm3803, %v2336
      %3839 = vst.msk [vmem:[%s216 + $0x118] sm:$0xff] %vm3803, %v2338
      %3840 = vst.msk [vmem:[%s216 + $0x120] sm:$0xff] %vm3803, %v2340
      %3841 = vst.msk [vmem:[%s216 + $0x128] sm:$0xff] %vm3803, %v2342
      %3842 = vst.msk [vmem:[%s216 + $0x130] sm:$0xff] %vm3803, %v2344
      %3843 = vst.msk [vmem:[%s216 + $0x138] sm:$0xff] %vm3803, %v2346
      %3844 = vst.msk [vmem:[%s216 + $0x140] sm:$0xff] %vm3803, %v2348
      %3845 = vst.msk [vmem:[%s216 + $0x148] sm:$0xff] %vm3803, %v2350
      %3846 = vst.msk [vmem:[%s216 + $0x150] sm:$0xff] %vm3803, %v2352
      %3847 = vst.msk [vmem:[%s216 + $0x158] sm:$0xff] %vm3803, %v2354
      %3848 = vst.msk [vmem:[%s216 + $0x160] sm:$0xff] %vm3803, %v2356
      %3849 = vst.msk [vmem:[%s216 + $0x168] sm:$0xff] %vm3803, %v2358
      %3850 = vst.msk [vmem:[%s216 + $0x170] sm:$0xff] %vm3803, %v2360
      %3851 = vst.msk [vmem:[%s216 + $0x178] sm:$0xff] %vm3803, %v2362
      %3852 = vst.msk [vmem:[%s216 + $0x180] sm:$0xff] %vm3803, %v2364
      %3853 = vst.msk [vmem:[%s216 + $0x188] sm:$0xff] %vm3803, %v2366
      %3854 = vst.msk [vmem:[%s216 + $0x190] sm:$0xff] %vm3803, %v2368
      %3855 = vst.msk [vmem:[%s216 + $0x198] sm:$0xff] %vm3803, %v2370
      %3856 = vst.msk [vmem:[%s216 + $0x1a0] sm:$0xff] %vm3803, %v2372
      %3857 = vst.msk [vmem:[%s216 + $0x1a8] sm:$0xff] %vm3803, %v2374
      %3858 = vst.msk [vmem:[%s216 + $0x1b0] sm:$0xff] %vm3803, %v2376
      %3859 = vst.msk [vmem:[%s216 + $0x1b8] sm:$0xff] %vm3803, %v2378
      %3860 = vst.msk [vmem:[%s216 + $0x1c0] sm:$0xff] %vm3803, %v2380
      %3861 = vst.msk [vmem:[%s216 + $0x1c8] sm:$0xff] %vm3803, %v2382
      %3862 = vst.msk [vmem:[%s216 + $0x1d0] sm:$0xff] %vm3803, %v2384
      %3863 = vst.msk [vmem:[%s216 + $0x1d8] sm:$0xff] %vm3803, %v2386
      %3864 = vst.msk [vmem:[%s216 + $0x1e0] sm:$0xff] %vm3803, %v2388
      %3865 = vst.msk [vmem:[%s216 + $0x1e8] sm:$0xff] %vm3803, %v2390
      %3866 = vst.msk [vmem:[%s216 + $0x1f0] sm:$0xff] %vm3803, %v2392
      %3867 = vst.msk [vmem:[%s216 + $0x1f8] sm:$0xff] %vm3803, %v2394
      %3868 = vst.msk [vmem:[%s216 + $0x200] sm:$0xff] %vm3803, %v2396
      %3869 = vst.msk [vmem:[%s216 + $0x208] sm:$0xff] %vm3803, %v2398
      %3870 = vst.msk [vmem:[%s216 + $0x210] sm:$0xff] %vm3803, %v2400
      %3871 = vst.msk [vmem:[%s216 + $0x218] sm:$0xff] %vm3803, %v2402
      %3872 = vst.msk [vmem:[%s216 + $0x220] sm:$0xff] %vm3803, %v2404
      %3873 = vst.msk [vmem:[%s216 + $0x228] sm:$0xff] %vm3803, %v2406
      %3874 = vst.msk [vmem:[%s216 + $0x230] sm:$0xff] %vm3803, %v2408
      %3875 = vst.msk [vmem:[%s216 + $0x238] sm:$0xff] %vm3803, %v2410
      %3876 = vst.msk [vmem:[%s216 + $0x240] sm:$0xff] %vm3803, %v2412
      %3877 = vst.msk [vmem:[%s216 + $0x248] sm:$0xff] %vm3803, %v2414
      %3878 = vst.msk [vmem:[%s216 + $0x250] sm:$0xff] %vm3803, %v2416
      %3879 = vst.msk [vmem:[%s216 + $0x258] sm:$0xff] %vm3803, %v2418
      %3880 = vst.msk [vmem:[%s216 + $0x260] sm:$0xff] %vm3803, %v2420
      %3881 = vst.msk [vmem:[%s216 + $0x268] sm:$0xff] %vm3803, %v2422
      %3882 = vst.msk [vmem:[%s216 + $0x270] sm:$0xff] %vm3803, %v2424
      %3883 = vst.msk [vmem:[%s216 + $0x278] sm:$0xff] %vm3803, %v2426
      %3884 = vst.msk [vmem:[%s216 + $0x280] sm:$0xff] %vm3803, %v2428
      %3885 = vst.msk [vmem:[%s216 + $0x288] sm:$0xff] %vm3803, %v2430
      %3886 = vst.msk [vmem:[%s216 + $0x290] sm:$0xff] %vm3803, %v2432
      %3887 = vst.msk [vmem:[%s216 + $0x298] sm:$0xff] %vm3803, %v2434
      %3888 = vst.msk [vmem:[%s216 + $0x2a0] sm:$0xff] %vm3803, %v2436
      %3889 = vst.msk [vmem:[%s216 + $0x2a8] sm:$0xff] %vm3803, %v2438
      %3890 = vst.msk [vmem:[%s216 + $0x2b0] sm:$0xff] %vm3803, %v2440
      %3891 = vst.msk [vmem:[%s216 + $0x2b8] sm:$0xff] %vm3803, %v2442
      %3892 = vst.msk [vmem:[%s216 + $0x2c0] sm:$0xff] %vm3803, %v2444
      %3893 = vst.msk [vmem:[%s216 + $0x2c8] sm:$0xff] %vm3803, %v2446
      %3894 = vst.msk [vmem:[%s216 + $0x2d0] sm:$0xff] %vm3803, %v2448
      %3895 = vst.msk [vmem:[%s216 + $0x2d8] sm:$0xff] %vm3803, %v2450
      %3896 = vst.msk [vmem:[%s216 + $0x2e0] sm:$0xff] %vm3803, %v2452
      %3897 = vst.msk [vmem:[%s216 + $0x2e8] sm:$0xff] %vm3803, %v2454
      %3898 = vst.msk [vmem:[%s216 + $0x2f0] sm:$0xff] %vm3803, %v2456
      %3899 = vst.msk [vmem:[%s216 + $0x2f8] sm:$0xff] %vm3803, %v2458
      %3900 = vst.msk [vmem:[%s216 + $0x300] sm:$0xff] %vm3803, %v2460
      %3901 = vst.msk [vmem:[%s216 + $0x308] sm:$0xff] %vm3803, %v2462
      %3902 = vst.msk [vmem:[%s216 + $0x310] sm:$0xff] %vm3803, %v2464
      %3903 = vst.msk [vmem:[%s216 + $0x318] sm:$0xff] %vm3803, %v2466
      %3904 = vst.msk [vmem:[%s216 + $0x320] sm:$0xff] %vm3803, %v2468
      %3905 = vst.msk [vmem:[%s216 + $0x328] sm:$0xff] %vm3803, %v2470
      %3906 = vst.msk [vmem:[%s216 + $0x330] sm:$0xff] %vm3803, %v2472
      %3907 = vst.msk [vmem:[%s216 + $0x338] sm:$0xff] %vm3803, %v2474
      %3908 = vst.msk [vmem:[%s216 + $0x340] sm:$0xff] %vm3803, %v2476
      %3909 = vst.msk [vmem:[%s216 + $0x348] sm:$0xff] %vm3803, %v2478
      %3910 = vst.msk [vmem:[%s216 + $0x350] sm:$0xff] %vm3803, %v2480
      %3911 = vst.msk [vmem:[%s216 + $0x358] sm:$0xff] %vm3803, %v2482
      %3912 = vst.msk [vmem:[%s216 + $0x360] sm:$0xff] %vm3803, %v2484
      %3913 = vst.msk [vmem:[%s216 + $0x368] sm:$0xff] %vm3803, %v2486
      %3914 = vst.msk [vmem:[%s216 + $0x370] sm:$0xff] %vm3803, %v2488
      %3915 = vst.msk [vmem:[%s216 + $0x378] sm:$0xff] %vm3803, %v2490
      %3916 = vst.msk [vmem:[%s216 + $0x380] sm:$0xff] %vm3803, %v2492
      %3917 = vst.msk [vmem:[%s216 + $0x388] sm:$0xff] %vm3803, %v2494
      %3918 = vst.msk [vmem:[%s216 + $0x390] sm:$0xff] %vm3803, %v2496
      %3919 = vst.msk [vmem:[%s216 + $0x398] sm:$0xff] %vm3803, %v2498
      %3920 = vst.msk [vmem:[%s216 + $0x3a0] sm:$0xff] %vm3803, %v2500
      %3921 = vst.msk [vmem:[%s216 + $0x3a8] sm:$0xff] %vm3803, %v2502
      %3922 = vst.msk [vmem:[%s216 + $0x3b0] sm:$0xff] %vm3803, %v2504
      %3923 = vst.msk [vmem:[%s216 + $0x3b8] sm:$0xff] %vm3803, %v2506
      %3924 = vst.msk [vmem:[%s216 + $0x3c0] sm:$0xff] %vm3803, %v2508
      %3925 = vst.msk [vmem:[%s216 + $0x3c8] sm:$0xff] %vm3803, %v2510
      %3926 = vst.msk [vmem:[%s216 + $0x3d0] sm:$0xff] %vm3803, %v2512
      %3927 = vst.msk [vmem:[%s216 + $0x3d8] sm:$0xff] %vm3803, %v2514
      %3928 = vst.msk [vmem:[%s216 + $0x3e0] sm:$0xff] %vm3803, %v2516
      %3929 = vst.msk [vmem:[%s216 + $0x3e8] sm:$0xff] %vm3803, %v2518
      %3930 = vst.msk [vmem:[%s216 + $0x3f0] sm:$0xff] %vm3803, %v2520
      %3931 = vst.msk [vmem:[%s216 + $0x3f8] sm:$0xff] %vm3803, %v2522
      %3932 = vst.msk [vmem:[%s216 + $0x400] sm:$0xff] %vm3803, %v2524
      %3933 = vst.msk [vmem:[%s216 + $0x408] sm:$0xff] %vm3803, %v2526
      %3934 = vst.msk [vmem:[%s216 + $0x410] sm:$0xff] %vm3803, %v2528
      %3935 = vst.msk [vmem:[%s216 + $0x418] sm:$0xff] %vm3803, %v2530
      %3936 = vst.msk [vmem:[%s216 + $0x420] sm:$0xff] %vm3803, %v2532
      %3937 = vst.msk [vmem:[%s216 + $0x428] sm:$0xff] %vm3803, %v2534
      %3938 = vst.msk [vmem:[%s216 + $0x430] sm:$0xff] %vm3803, %v2536
      %3939 = vst.msk [vmem:[%s216 + $0x438] sm:$0xff] %vm3803, %v2538
      %3940 = vst.msk [vmem:[%s216 + $0x440] sm:$0xff] %vm3803, %v2540
      %3941 = vst.msk [vmem:[%s216 + $0x448] sm:$0xff] %vm3803, %v2542
      %3942 = vst.msk [vmem:[%s216 + $0x450] sm:$0xff] %vm3803, %v2544
      %3943 = vst.msk [vmem:[%s216 + $0x458] sm:$0xff] %vm3803, %v2546
      %3944 = vst.msk [vmem:[%s216 + $0x460] sm:$0xff] %vm3803, %v2548
      %3945 = vst.msk [vmem:[%s216 + $0x468] sm:$0xff] %vm3803, %v2550
      %3946 = vst.msk [vmem:[%s216 + $0x470] sm:$0xff] %vm3803, %v2552
      %3947 = vst.msk [vmem:[%s216 + $0x478] sm:$0xff] %vm3803, %v2554
      %3948 = vst.msk [vmem:[%s216 + $0x480] sm:$0xff] %vm3803, %v2556
      %3949 = vst.msk [vmem:[%s216 + $0x488] sm:$0xff] %vm3803, %v2558
      %3950 = vst.msk [vmem:[%s216 + $0x490] sm:$0xff] %vm3803, %v2560
      %3951 = vst.msk [vmem:[%s216 + $0x498] sm:$0xff] %vm3803, %v2562
      %3952 = vst.msk [vmem:[%s216 + $0x4a0] sm:$0xff] %vm3803, %v2564
      %3953 = vst.msk [vmem:[%s216 + $0x4a8] sm:$0xff] %vm3803, %v2566
      %3954 = vst.msk [vmem:[%s216 + $0x4b0] sm:$0xff] %vm3803, %v2568
      %3955 = vst.msk [vmem:[%s216 + $0x4b8] sm:$0xff] %vm3803, %v2570
      %3956 = vst.msk [vmem:[%s216 + $0x4c0] sm:$0xff] %vm3803, %v2572
      %3957 = vst.msk [vmem:[%s216 + $0x4c8] sm:$0xff] %vm3803, %v2574
      %3958 = vst.msk [vmem:[%s216 + $0x4d0] sm:$0xff] %vm3803, %v2576
      %3959 = vst.msk [vmem:[%s216 + $0x4d8] sm:$0xff] %vm3803, %v2578
      %3960 = vst.msk [vmem:[%s216 + $0x4e0] sm:$0xff] %vm3803, %v2580
      %3961 = vst.msk [vmem:[%s216 + $0x4e8] sm:$0xff] %vm3803, %v2582
      %3962 = vst.msk [vmem:[%s216 + $0x4f0] sm:$0xff] %vm3803, %v2584
      %3963 = vst.msk [vmem:[%s216 + $0x4f8] sm:$0xff] %vm3803, %v2586
      %3964 = vst.msk [vmem:[%s216 + $0x500] sm:$0xff] %vm3803, %v2588
      %3965 = vst.msk [vmem:[%s216 + $0x508] sm:$0xff] %vm3803, %v2590
      %3966 = vst.msk [vmem:[%s216 + $0x510] sm:$0xff] %vm3803, %v2592
      %3967 = vst.msk [vmem:[%s216 + $0x518] sm:$0xff] %vm3803, %v2594
      %3968 = vst.msk [vmem:[%s216 + $0x520] sm:$0xff] %vm3803, %v2596
      %3969 = vst.msk [vmem:[%s216 + $0x528] sm:$0xff] %vm3803, %v2598
      %3970 = vst.msk [vmem:[%s216 + $0x530] sm:$0xff] %vm3803, %v2600
      %3971 = vst.msk [vmem:[%s216 + $0x538] sm:$0xff] %vm3803, %v2602
      %3972 = vst.msk [vmem:[%s216 + $0x540] sm:$0xff] %vm3803, %v2604
      %3973 = vst.msk [vmem:[%s216 + $0x548] sm:$0xff] %vm3803, %v2606
      %3974 = vst.msk [vmem:[%s216 + $0x550] sm:$0xff] %vm3803, %v2608
      %3975 = vst.msk [vmem:[%s216 + $0x558] sm:$0xff] %vm3803, %v2610
      %3976 = vst.msk [vmem:[%s216 + $0x560] sm:$0xff] %vm3803, %v2612
      %3977 = vst.msk [vmem:[%s216 + $0x568] sm:$0xff] %vm3803, %v2614
      %3978 = vst.msk [vmem:[%s216 + $0x570] sm:$0xff] %vm3803, %v2616
      %3979 = vst.msk [vmem:[%s216 + $0x578] sm:$0xff] %vm3803, %v2618
      %3980 = vst.msk [vmem:[%s216 + $0x580] sm:$0xff] %vm3803, %v2620
      %3981 = vst.msk [vmem:[%s216 + $0x588] sm:$0xff] %vm3803, %v2622
      %3982 = vst.msk [vmem:[%s216 + $0x590] sm:$0xff] %vm3803, %v2624
      %3983 = vst.msk [vmem:[%s216 + $0x598] sm:$0xff] %vm3803, %v2626
      %3984 = vst.msk [vmem:[%s216 + $0x5a0] sm:$0xff] %vm3803, %v2628
      %3985 = vst.msk [vmem:[%s216 + $0x5a8] sm:$0xff] %vm3803, %v2630
      %3986 = vst.msk [vmem:[%s216 + $0x5b0] sm:$0xff] %vm3803, %v2632
      %3987 = vst.msk [vmem:[%s216 + $0x5b8] sm:$0xff] %vm3803, %v2634
      %3988 = vst.msk [vmem:[%s216 + $0x5c0] sm:$0xff] %vm3803, %v2636
      %3989 = vst.msk [vmem:[%s216 + $0x5c8] sm:$0xff] %vm3803, %v2638
      %3990 = vst.msk [vmem:[%s216 + $0x5d0] sm:$0xff] %vm3803, %v2640
      %3991 = vst.msk [vmem:[%s216 + $0x5d8] sm:$0xff] %vm3803, %v2642
      %3992 = vst.msk [vmem:[%s216 + $0x5e0] sm:$0xff] %vm3803, %v2644
      %3993 = vst.msk [vmem:[%s216 + $0x5e8] sm:$0xff] %vm3803, %v2646
      %3994 = vst.msk [vmem:[%s216 + $0x5f0] sm:$0xff] %vm3803, %v2648
      %3995 = vst.msk [vmem:[%s216 + $0x5f8] sm:$0xff] %vm3803, %v2650
      %3996 = vst.msk [vmem:[%s216 + $0x600] sm:$0xff] %vm3803, %v2652
      %3997 = vst.msk [vmem:[%s216 + $0x608] sm:$0xff] %vm3803, %v2654
      %3998 = vst.msk [vmem:[%s216 + $0x610] sm:$0xff] %vm3803, %v2656
      %3999 = vst.msk [vmem:[%s216 + $0x618] sm:$0xff] %vm3803, %v2658
      %4000 = vst.msk [vmem:[%s216 + $0x620] sm:$0xff] %vm3803, %v2660
      %4001 = vst.msk [vmem:[%s216 + $0x628] sm:$0xff] %vm3803, %v2662
      %4002 = vst.msk [vmem:[%s216 + $0x630] sm:$0xff] %vm3803, %v2664
      %4003 = vst.msk [vmem:[%s216 + $0x638] sm:$0xff] %vm3803, %v2666
      %4004 = vst.msk [vmem:[%s216 + $0x640] sm:$0xff] %vm3803, %v2668
      %4005 = vst.msk [vmem:[%s216 + $0x648] sm:$0xff] %vm3803, %v2670
      %4006 = vst.msk [vmem:[%s216 + $0x650] sm:$0xff] %vm3803, %v2672
      %4007 = vst.msk [vmem:[%s216 + $0x658] sm:$0xff] %vm3803, %v2674
      %4008 = vst.msk [vmem:[%s216 + $0x660] sm:$0xff] %vm3803, %v2676
      %4009 = vst.msk [vmem:[%s216 + $0x668] sm:$0xff] %vm3803, %v2678
      %4010 = vst.msk [vmem:[%s216 + $0x670] sm:$0xff] %vm3803, %v2680
      %4011 = vst.msk [vmem:[%s216 + $0x678] sm:$0xff] %vm3803, %v2682
      %4012 = vst.msk [vmem:[%s216 + $0x680] sm:$0xff] %vm3803, %v2684
      %4013 = vst.msk [vmem:[%s216 + $0x688] sm:$0xff] %vm3803, %v2686
      %4014 = vst.msk [vmem:[%s216 + $0x690] sm:$0xff] %vm3803, %v2688
      %4015 = vst.msk [vmem:[%s216 + $0x698] sm:$0xff] %vm3803, %v2690
      %4016 = vst.msk [vmem:[%s216 + $0x6a0] sm:$0xff] %vm3803, %v2692
      %4017 = vst.msk [vmem:[%s216 + $0x6a8] sm:$0xff] %vm3803, %v2694
      %4018 = vst.msk [vmem:[%s216 + $0x6b0] sm:$0xff] %vm3803, %v2696
      %4019 = vst.msk [vmem:[%s216 + $0x6b8] sm:$0xff] %vm3803, %v2698
      %4020 = vst.msk [vmem:[%s216 + $0x6c0] sm:$0xff] %vm3803, %v2700
      %4021 = vst.msk [vmem:[%s216 + $0x6c8] sm:$0xff] %vm3803, %v2702
      %4022 = vst.msk [vmem:[%s216 + $0x6d0] sm:$0xff] %vm3803, %v2704
      %4023 = vst.msk [vmem:[%s216 + $0x6d8] sm:$0xff] %vm3803, %v2706
      %4024 = vst.msk [vmem:[%s216 + $0x6e0] sm:$0xff] %vm3803, %v2708
      %4025 = vst.msk [vmem:[%s216 + $0x6e8] sm:$0xff] %vm3803, %v2710
      %4026 = vst.msk [vmem:[%s216 + $0x6f0] sm:$0xff] %vm3803, %v2712
      %4027 = vst.msk [vmem:[%s216 + $0x6f8] sm:$0xff] %vm3803, %v2714
      %4028 = vst.msk [vmem:[%s216 + $0x700] sm:$0xff] %vm3803, %v2716
      %4029 = vst.msk [vmem:[%s216 + $0x708] sm:$0xff] %vm3803, %v2718
      %4030 = vst.msk [vmem:[%s216 + $0x710] sm:$0xff] %vm3803, %v2720
      %4031 = vst.msk [vmem:[%s216 + $0x718] sm:$0xff] %vm3803, %v2722
      %4032 = vst.msk [vmem:[%s216 + $0x720] sm:$0xff] %vm3803, %v2724
      %4033 = vst.msk [vmem:[%s216 + $0x728] sm:$0xff] %vm3803, %v2726
      %4034 = vst.msk [vmem:[%s216 + $0x730] sm:$0xff] %vm3803, %v2728
      %4035 = vst.msk [vmem:[%s216 + $0x738] sm:$0xff] %vm3803, %v2730
      %4036 = vst.msk [vmem:[%s216 + $0x740] sm:$0xff] %vm3803, %v2732
      %4037 = vst.msk [vmem:[%s216 + $0x748] sm:$0xff] %vm3803, %v2734
      %4038 = vst.msk [vmem:[%s216 + $0x750] sm:$0xff] %vm3803, %v2736
      %4039 = vst.msk [vmem:[%s216 + $0x758] sm:$0xff] %vm3803, %v2738
      %4040 = vst.msk [vmem:[%s216 + $0x760] sm:$0xff] %vm3803, %v2740
      %4041 = vst.msk [vmem:[%s216 + $0x768] sm:$0xff] %vm3803, %v2742
      %4042 = vst.msk [vmem:[%s216 + $0x770] sm:$0xff] %vm3803, %v2744
      %4043 = vst.msk [vmem:[%s216 + $0x778] sm:$0xff] %vm3803, %v2746
      %4044 = vst.msk [vmem:[%s216 + $0x780] sm:$0xff] %vm3803, %v2748
      %4045 = vst.msk [vmem:[%s216 + $0x788] sm:$0xff] %vm3803, %v2750
      %4046 = vst.msk [vmem:[%s216 + $0x790] sm:$0xff] %vm3803, %v2752
      %4047 = vst.msk [vmem:[%s216 + $0x798] sm:$0xff] %vm3803, %v2754
      %4048 = vst.msk [vmem:[%s216 + $0x7a0] sm:$0xff] %vm3803, %v2756
      %4049 = vst.msk [vmem:[%s216 + $0x7a8] sm:$0xff] %vm3803, %v2758
      %4050 = vst.msk [vmem:[%s216 + $0x7b0] sm:$0xff] %vm3803, %v2760
      %4051 = vst.msk [vmem:[%s216 + $0x7b8] sm:$0xff] %vm3803, %v2762
      %4052 = vst.msk [vmem:[%s216 + $0x7c0] sm:$0xff] %vm3803, %v2764
      %4053 = vst.msk [vmem:[%s216 + $0x7c8] sm:$0xff] %vm3803, %v2766
      %4054 = vst.msk [vmem:[%s216 + $0x7d0] sm:$0xff] %vm3803, %v2768
      %4055 = vst.msk [vmem:[%s216 + $0x7d8] sm:$0xff] %vm3803, %v2770
      %4056 = vst.msk [vmem:[%s216 + $0x7e0] sm:$0xff] %vm3803, %v2772
      %4057 = vst.msk [vmem:[%s216 + $0x7e8] sm:$0xff] %vm3803, %v2774
      %4058 = vst.msk [vmem:[%s216 + $0x7f0] sm:$0xff] %vm3803, %v2776
      %4059 = vst.msk [vmem:[%s216 + $0x7f8] sm:$0xff] %vm3803, %v2778
      %4060 = vst.msk [vmem:[%s216 + $0x800] sm:$0xff] %vm3803, %v2780
      %4061 = vst.msk [vmem:[%s216 + $0x808] sm:$0xff] %vm3803, %v2782
      %4062 = vst.msk [vmem:[%s216 + $0x810] sm:$0xff] %vm3803, %v2784
      %4063 = vst.msk [vmem:[%s216 + $0x818] sm:$0xff] %vm3803, %v2786
      %4064 = vst.msk [vmem:[%s216 + $0x820] sm:$0xff] %vm3803, %v2788
      %4065 = vst.msk [vmem:[%s216 + $0x828] sm:$0xff] %vm3803, %v2790
      %4066 = vst.msk [vmem:[%s216 + $0x830] sm:$0xff] %vm3803, %v2792
      %4067 = vst.msk [vmem:[%s216 + $0x838] sm:$0xff] %vm3803, %v2794
      %4068 = vst.msk [vmem:[%s216 + $0x840] sm:$0xff] %vm3803, %v2796
      %4069 = vst.msk [vmem:[%s216 + $0x848] sm:$0xff] %vm3803, %v2798
      %4070 = vst.msk [vmem:[%s216 + $0x850] sm:$0xff] %vm3803, %v2800
      %4071 = vst.msk [vmem:[%s216 + $0x858] sm:$0xff] %vm3803, %v2802
      %4072 = vst.msk [vmem:[%s216 + $0x860] sm:$0xff] %vm3803, %v2804
      %4073 = vst.msk [vmem:[%s216 + $0x868] sm:$0xff] %vm3803, %v2806
      %4074 = vst.msk [vmem:[%s216 + $0x870] sm:$0xff] %vm3803, %v2808
      %4075 = vst.msk [vmem:[%s216 + $0x878] sm:$0xff] %vm3803, %v2810
      %4076 = vst.msk [vmem:[%s216 + $0x880] sm:$0xff] %vm3803, %v2812
      %4077 = vst.msk [vmem:[%s216 + $0x888] sm:$0xff] %vm3803, %v2814
      %4078 = vst.msk [vmem:[%s216 + $0x890] sm:$0xff] %vm3803, %v2816
      %4079 = vst.msk [vmem:[%s216 + $0x898] sm:$0xff] %vm3803, %v2818
      %4080 = vst.msk [vmem:[%s216 + $0x8a0] sm:$0xff] %vm3803, %v2820
      %4081 = vst.msk [vmem:[%s216 + $0x8a8] sm:$0xff] %vm3803, %v2822
      %4082 = vst.msk [vmem:[%s216 + $0x8b0] sm:$0xff] %vm3803, %v2824
      %4083 = vst.msk [vmem:[%s216 + $0x8b8] sm:$0xff] %vm3803, %v2826
      %4084 = vst.msk [vmem:[%s216 + $0x8c0] sm:$0xff] %vm3803, %v2828
      %4085 = vst.msk [vmem:[%s216 + $0x8c8] sm:$0xff] %vm3803, %v2830
      %4086 = vst.msk [vmem:[%s216 + $0x8d0] sm:$0xff] %vm3803, %v2832
      %4087 = vst.msk [vmem:[%s216 + $0x8d8] sm:$0xff] %vm3803, %v2834
      %4088 = vst.msk [vmem:[%s216 + $0x8e0] sm:$0xff] %vm3803, %v2836
      %4089 = vst.msk [vmem:[%s216 + $0x8e8] sm:$0xff] %vm3803, %v2838
      %4090 = vst.msk [vmem:[%s216 + $0x8f0] sm:$0xff] %vm3803, %v2840
      %4091 = vst.msk [vmem:[%s216 + $0x8f8] sm:$0xff] %vm3803, %v2842
      %4092 = vst.msk [vmem:[%s216 + $0x900] sm:$0xff] %vm3803, %v2844
      %4093 = vst.msk [vmem:[%s216 + $0x908] sm:$0xff] %vm3803, %v2846
      %4094 = vst.msk [vmem:[%s216 + $0x910] sm:$0xff] %vm3803, %v2848
      %4095 = vst.msk [vmem:[%s216 + $0x918] sm:$0xff] %vm3803, %v2850
      %4096 = vst.msk [vmem:[%s216 + $0x920] sm:$0xff] %vm3803, %v2852
      %4097 = vst.msk [vmem:[%s216 + $0x928] sm:$0xff] %vm3803, %v2854
      %4098 = vst.msk [vmem:[%s216 + $0x930] sm:$0xff] %vm3803, %v2856
      %4099 = vst.msk [vmem:[%s216 + $0x938] sm:$0xff] %vm3803, %v2858
      %4100 = vst.msk [vmem:[%s216 + $0x940] sm:$0xff] %vm3803, %v2860
      %4101 = vst.msk [vmem:[%s216 + $0x948] sm:$0xff] %vm3803, %v2862
      %4102 = vst.msk [vmem:[%s216 + $0x950] sm:$0xff] %vm3803, %v2864
      %4103 = vst.msk [vmem:[%s216 + $0x958] sm:$0xff] %vm3803, %v2866
      %4104 = vst.msk [vmem:[%s216 + $0x960] sm:$0xff] %vm3803, %v2868
      %4105 = vst.msk [vmem:[%s216 + $0x968] sm:$0xff] %vm3803, %v2870
      %4106 = vst.msk [vmem:[%s216 + $0x970] sm:$0xff] %vm3803, %v2872
      %4107 = vst.msk [vmem:[%s216 + $0x978] sm:$0xff] %vm3803, %v2874
      %4108 = vst.msk [vmem:[%s216 + $0x980] sm:$0xff] %vm3803, %v2876
      %4109 = vst.msk [vmem:[%s216 + $0x988] sm:$0xff] %vm3803, %v2878
      %4110 = vst.msk [vmem:[%s216 + $0x990] sm:$0xff] %vm3803, %v2880
      %4111 = vst.msk [vmem:[%s216 + $0x998] sm:$0xff] %vm3803, %v2882
      %4112 = vst.msk [vmem:[%s216 + $0x9a0] sm:$0xff] %vm3803, %v2884
      %4113 = vst.msk [vmem:[%s216 + $0x9a8] sm:$0xff] %vm3803, %v2886
      %4114 = vst.msk [vmem:[%s216 + $0x9b0] sm:$0xff] %vm3803, %v2888
      %4115 = vst.msk [vmem:[%s216 + $0x9b8] sm:$0xff] %vm3803, %v2890
      %4116 = vst.msk [vmem:[%s216 + $0x9c0] sm:$0xff] %vm3803, %v2892
      %4117 = vst.msk [vmem:[%s216 + $0x9c8] sm:$0xff] %vm3803, %v2894
      %4118 = vst.msk [vmem:[%s216 + $0x9d0] sm:$0xff] %vm3803, %v2896
      %4119 = vst.msk [vmem:[%s216 + $0x9d8] sm:$0xff] %vm3803, %v2898
      %4120 = vst.msk [vmem:[%s216 + $0x9e0] sm:$0xff] %vm3803, %v2900
      %4121 = vst.msk [vmem:[%s216 + $0x9e8] sm:$0xff] %vm3803, %v2902
      %4122 = vst.msk [vmem:[%s216 + $0x9f0] sm:$0xff] %vm3803, %v2904
      %4123 = vst.msk [vmem:[%s216 + $0x9f8] sm:$0xff] %vm3803, %v2906
      %4124 = vst.msk [vmem:[%s216 + $0xa00] sm:$0xff] %vm3803, %v2908
      %4125 = vst.msk [vmem:[%s216 + $0xa08] sm:$0xff] %vm3803, %v2910
      %4126 = vst.msk [vmem:[%s216 + $0xa10] sm:$0xff] %vm3803, %v2912
      %4127 = vst.msk [vmem:[%s216 + $0xa18] sm:$0xff] %vm3803, %v2914
      %4128 = vst.msk [vmem:[%s216 + $0xa20] sm:$0xff] %vm3803, %v2916
      %4129 = vst.msk [vmem:[%s216 + $0xa28] sm:$0xff] %vm3803, %v2918
      %4130 = vst.msk [vmem:[%s216 + $0xa30] sm:$0xff] %vm3803, %v2920
      %4131 = vst.msk [vmem:[%s216 + $0xa38] sm:$0xff] %vm3803, %v2922
      %4132 = vst.msk [vmem:[%s216 + $0xa40] sm:$0xff] %vm3803, %v2924
      %4133 = vst.msk [vmem:[%s216 + $0xa48] sm:$0xff] %vm3803, %v2926
      %4134 = vst.msk [vmem:[%s216 + $0xa50] sm:$0xff] %vm3803, %v2928
      %4135 = vst.msk [vmem:[%s216 + $0xa58] sm:$0xff] %vm3803, %v2930
      %4136 = vst.msk [vmem:[%s216 + $0xa60] sm:$0xff] %vm3803, %v2932
      %4137 = vst.msk [vmem:[%s216 + $0xa68] sm:$0xff] %vm3803, %v2934
      %4138 = vst.msk [vmem:[%s216 + $0xa70] sm:$0xff] %vm3803, %v2936
      %4139 = vst.msk [vmem:[%s216 + $0xa78] sm:$0xff] %vm3803, %v2938
      %4140 = vst.msk [vmem:[%s216 + $0xa80] sm:$0xff] %vm3803, %v2940
      %4141 = vst.msk [vmem:[%s216 + $0xa88] sm:$0xff] %vm3803, %v2942
      %4142 = vst.msk [vmem:[%s216 + $0xa90] sm:$0xff] %vm3803, %v2944
      %4143 = vst.msk [vmem:[%s216 + $0xa98] sm:$0xff] %vm3803, %v2946
      %4144 = vst.msk [vmem:[%s216 + $0xaa0] sm:$0xff] %vm3803, %v2948
      %4145 = vst.msk [vmem:[%s216 + $0xaa8] sm:$0xff] %vm3803, %v2950
      %4146 = vst.msk [vmem:[%s216 + $0xab0] sm:$0xff] %vm3803, %v2952
      %4147 = vst.msk [vmem:[%s216 + $0xab8] sm:$0xff] %vm3803, %v2954
      %4148 = vst.msk [vmem:[%s216 + $0xac0] sm:$0xff] %vm3803, %v2956
      %4149 = vst.msk [vmem:[%s216 + $0xac8] sm:$0xff] %vm3803, %v2958
      %4150 = vst.msk [vmem:[%s216 + $0xad0] sm:$0xff] %vm3803, %v2960
      %4151 = vst.msk [vmem:[%s216 + $0xad8] sm:$0xff] %vm3803, %v2962
      %4152 = vst.msk [vmem:[%s216 + $0xae0] sm:$0xff] %vm3803, %v2964
      %4153 = vst.msk [vmem:[%s216 + $0xae8] sm:$0xff] %vm3803, %v2966
      %4154 = vst.msk [vmem:[%s216 + $0xaf0] sm:$0xff] %vm3803, %v2968
      %4155 = vst.msk [vmem:[%s216 + $0xaf8] sm:$0xff] %vm3803, %v2970
      %4156 = vst.msk [vmem:[%s216 + $0xb00] sm:$0xff] %vm3803, %v2972
      %4157 = vst.msk [vmem:[%s216 + $0xb08] sm:$0xff] %vm3803, %v2974
      %4158 = vst.msk [vmem:[%s216 + $0xb10] sm:$0xff] %vm3803, %v2976
      %4159 = vst.msk [vmem:[%s216 + $0xb18] sm:$0xff] %vm3803, %v2978
      %4160 = vst.msk [vmem:[%s216 + $0xb20] sm:$0xff] %vm3803, %v2980
      %4161 = vst.msk [vmem:[%s216 + $0xb28] sm:$0xff] %vm3803, %v2982
      %4162 = vst.msk [vmem:[%s216 + $0xb30] sm:$0xff] %vm3803, %v2984
      %4163 = vst.msk [vmem:[%s216 + $0xb38] sm:$0xff] %vm3803, %v2986
      %4164 = vst.msk [vmem:[%s216 + $0xb40] sm:$0xff] %vm3803, %v2988
      %4165 = vst.msk [vmem:[%s216 + $0xb48] sm:$0xff] %vm3803, %v2990
      %4166 = vst.msk [vmem:[%s216 + $0xb50] sm:$0xff] %vm3803, %v2992
      %4167 = vst.msk [vmem:[%s216 + $0xb58] sm:$0xff] %vm3803, %v2994
      %4168 = vst.msk [vmem:[%s216 + $0xb60] sm:$0xff] %vm3803, %v2996
      %4169 = vst.msk [vmem:[%s216 + $0xb68] sm:$0xff] %vm3803, %v2998
      %4170 = vst.msk [vmem:[%s216 + $0xb70] sm:$0xff] %vm3803, %v3000
      %4171 = vst.msk [vmem:[%s216 + $0xb78] sm:$0xff] %vm3803, %v3002
      %4172 = vst.msk [vmem:[%s216 + $0xb80] sm:$0xff] %vm3803, %v3004
      %4173 = vst.msk [vmem:[%s216 + $0xb88] sm:$0xff] %vm3803, %v3006
      %4174 = vst.msk [vmem:[%s216 + $0xb90] sm:$0xff] %vm3803, %v3008
      %4175 = vst.msk [vmem:[%s216 + $0xb98] sm:$0xff] %vm3803, %v3010
      %4176 = vst.msk [vmem:[%s216 + $0xba0] sm:$0xff] %vm3803, %v3012
      %4177 = vst.msk [vmem:[%s216 + $0xba8] sm:$0xff] %vm3803, %v3014
      %4178 = vst.msk [vmem:[%s216 + $0xbb0] sm:$0xff] %vm3803, %v3016
      %4179 = vst.msk [vmem:[%s216 + $0xbb8] sm:$0xff] %vm3803, %v3018
      %4180 = vst.msk [vmem:[%s216 + $0xbc0] sm:$0xff] %vm3803, %v3020
      %4181 = vst.msk [vmem:[%s216 + $0xbc8] sm:$0xff] %vm3803, %v3022
      %4182 = vst.msk [vmem:[%s216 + $0xbd0] sm:$0xff] %vm3803, %v3024
      %4183 = vst.msk [vmem:[%s216 + $0xbd8] sm:$0xff] %vm3803, %v3026
      %4184 = vst.msk [vmem:[%s216 + $0xbe0] sm:$0xff] %vm3803, %v3028
      %4185 = vst.msk [vmem:[%s216 + $0xbe8] sm:$0xff] %vm3803, %v3030
      %4186 = vst.msk [vmem:[%s216 + $0xbf0] sm:$0xff] %vm3803, %v3032
      %4187 = vst.msk [vmem:[%s216 + $0xbf8] sm:$0xff] %vm3803, %v3034
      %4188 = vst.msk [vmem:[%s216 + $0xc00] sm:$0xff] %vm3803, %v3036
      %4189 = vst.msk [vmem:[%s216 + $0xc08] sm:$0xff] %vm3803, %v3038
      %4190 = vst.msk [vmem:[%s216 + $0xc10] sm:$0xff] %vm3803, %v3040
      %4191 = vst.msk [vmem:[%s216 + $0xc18] sm:$0xff] %vm3803, %v3042
      %4192 = vst.msk [vmem:[%s216 + $0xc20] sm:$0xff] %vm3803, %v3044
      %4193 = vst.msk [vmem:[%s216 + $0xc28] sm:$0xff] %vm3803, %v3046
      %4194 = vst.msk [vmem:[%s216 + $0xc30] sm:$0xff] %vm3803, %v3048
      %4195 = vst.msk [vmem:[%s216 + $0xc38] sm:$0xff] %vm3803, %v3050
      %4196 = vst.msk [vmem:[%s216 + $0xc40] sm:$0xff] %vm3803, %v3052
      %4197 = vst.msk [vmem:[%s216 + $0xc48] sm:$0xff] %vm3803, %v3054
      %4198 = vst.msk [vmem:[%s216 + $0xc50] sm:$0xff] %vm3803, %v3056
      %4199 = vst.msk [vmem:[%s216 + $0xc58] sm:$0xff] %vm3803, %v3058
      %4200 = vst.msk [vmem:[%s216 + $0xc60] sm:$0xff] %vm3803, %v3060
      %4201 = vst.msk [vmem:[%s216 + $0xc68] sm:$0xff] %vm3803, %v3062
      %4202 = vst.msk [vmem:[%s216 + $0xc70] sm:$0xff] %vm3803, %v3064
      %4203 = vst.msk [vmem:[%s216 + $0xc78] sm:$0xff] %vm3803, %v3066
      %4204 = vst.msk [vmem:[%s216 + $0xc80] sm:$0xff] %vm3803, %v3068
      %4205 = vst.msk [vmem:[%s216 + $0xc88] sm:$0xff] %vm3803, %v3070
      %4206 = vst.msk [vmem:[%s216 + $0xc90] sm:$0xff] %vm3803, %v3072
      %4207 = vst.msk [vmem:[%s216 + $0xc98] sm:$0xff] %vm3803, %v3074
      %4208 = vst.msk [vmem:[%s216 + $0xca0] sm:$0xff] %vm3803, %v3076
      %4209 = vst.msk [vmem:[%s216 + $0xca8] sm:$0xff] %vm3803, %v3078
      %4210 = vst.msk [vmem:[%s216 + $0xcb0] sm:$0xff] %vm3803, %v3080
      %4211 = vst.msk [vmem:[%s216 + $0xcb8] sm:$0xff] %vm3803, %v3082
      %4212 = vst.msk [vmem:[%s216 + $0xcc0] sm:$0xff] %vm3803, %v3084
      %4213 = vst.msk [vmem:[%s216 + $0xcc8] sm:$0xff] %vm3803, %v3086
      %4214 = vst.msk [vmem:[%s216 + $0xcd0] sm:$0xff] %vm3803, %v3088
      %4215 = vst.msk [vmem:[%s216 + $0xcd8] sm:$0xff] %vm3803, %v3090
      %4216 = vst.msk [vmem:[%s216 + $0xce0] sm:$0xff] %vm3803, %v3092
      %4217 = vst.msk [vmem:[%s216 + $0xce8] sm:$0xff] %vm3803, %v3094
      %4218 = vst.msk [vmem:[%s216 + $0xcf0] sm:$0xff] %vm3803, %v3096
      %4219 = vst.msk [vmem:[%s216 + $0xcf8] sm:$0xff] %vm3803, %v3098
      %4220 = vst.msk [vmem:[%s216 + $0xd00] sm:$0xff] %vm3803, %v3100
      %4221 = vst.msk [vmem:[%s216 + $0xd08] sm:$0xff] %vm3803, %v3102
      %4222 = vst.msk [vmem:[%s216 + $0xd10] sm:$0xff] %vm3803, %v3104
      %4223 = vst.msk [vmem:[%s216 + $0xd18] sm:$0xff] %vm3803, %v3106
      %4224 = vst.msk [vmem:[%s216 + $0xd20] sm:$0xff] %vm3803, %v3108
      %4225 = vst.msk [vmem:[%s216 + $0xd28] sm:$0xff] %vm3803, %v3110
      %4226 = vst.msk [vmem:[%s216 + $0xd30] sm:$0xff] %vm3803, %v3112
      %4227 = vst.msk [vmem:[%s216 + $0xd38] sm:$0xff] %vm3803, %v3114
      %4228 = vst.msk [vmem:[%s216 + $0xd40] sm:$0xff] %vm3803, %v3116
      %4229 = vst.msk [vmem:[%s216 + $0xd48] sm:$0xff] %vm3803, %v3118
      %4230 = vst.msk [vmem:[%s216 + $0xd50] sm:$0xff] %vm3803, %v3120
      %4231 = vst.msk [vmem:[%s216 + $0xd58] sm:$0xff] %vm3803, %v3122
      %4232 = vst.msk [vmem:[%s216 + $0xd60] sm:$0xff] %vm3803, %v3124
      %4233 = vst.msk [vmem:[%s216 + $0xd68] sm:$0xff] %vm3803, %v3126
      %4234 = vst.msk [vmem:[%s216 + $0xd70] sm:$0xff] %vm3803, %v3128
      %4235 = vst.msk [vmem:[%s216 + $0xd78] sm:$0xff] %vm3803, %v3130
      %4236 = vst.msk [vmem:[%s216 + $0xd80] sm:$0xff] %vm3803, %v3132
      %4237 = vst.msk [vmem:[%s216 + $0xd88] sm:$0xff] %vm3803, %v3134
      %4238 = vst.msk [vmem:[%s216 + $0xd90] sm:$0xff] %vm3803, %v3136
      %4239 = vst.msk [vmem:[%s216 + $0xd98] sm:$0xff] %vm3803, %v3138
      %4240 = vst.msk [vmem:[%s216 + $0xda0] sm:$0xff] %vm3803, %v3140
      %4241 = vst.msk [vmem:[%s216 + $0xda8] sm:$0xff] %vm3803, %v3142
      %4242 = vst.msk [vmem:[%s216 + $0xdb0] sm:$0xff] %vm3803, %v3144
      %4243 = vst.msk [vmem:[%s216 + $0xdb8] sm:$0xff] %vm3803, %v3146
      %4244 = vst.msk [vmem:[%s216 + $0xdc0] sm:$0xff] %vm3803, %v3148
      %4245 = vst.msk [vmem:[%s216 + $0xdc8] sm:$0xff] %vm3803, %v3150
      %4246 = vst.msk [vmem:[%s216 + $0xdd0] sm:$0xff] %vm3803, %v3152
      %4247 = vst.msk [vmem:[%s216 + $0xdd8] sm:$0xff] %vm3803, %v3154
      %4248 = vst.msk [vmem:[%s216 + $0xde0] sm:$0xff] %vm3803, %v3156
      %4249 = vst.msk [vmem:[%s216 + $0xde8] sm:$0xff] %vm3803, %v3158
      %4250 = vst.msk [vmem:[%s216 + $0xdf0] sm:$0xff] %vm3803, %v3160
      %4251 = vst.msk [vmem:[%s216 + $0xdf8] sm:$0xff] %vm3803, %v3162
      %4252 = vst.msk [vmem:[%s216 + $0xe00] sm:$0xff] %vm3803, %v3164
      %4253 = vst.msk [vmem:[%s216 + $0xe08] sm:$0xff] %vm3803, %v3166
      %4254 = vst.msk [vmem:[%s216 + $0xe10] sm:$0xff] %vm3803, %v3168
      %4255 = vst.msk [vmem:[%s216 + $0xe18] sm:$0xff] %vm3803, %v3170
      %4256 = vst.msk [vmem:[%s216 + $0xe20] sm:$0xff] %vm3803, %v3172
      %4257 = vst.msk [vmem:[%s216 + $0xe28] sm:$0xff] %vm3803, %v3174
      %4258 = vst.msk [vmem:[%s216 + $0xe30] sm:$0xff] %vm3803, %v3176
      %4259 = vst.msk [vmem:[%s216 + $0xe38] sm:$0xff] %vm3803, %v3178
      %4260 = vst.msk [vmem:[%s216 + $0xe40] sm:$0xff] %vm3803, %v3180
      %4261 = vst.msk [vmem:[%s216 + $0xe48] sm:$0xff] %vm3803, %v3182
      %4262 = vst.msk [vmem:[%s216 + $0xe50] sm:$0xff] %vm3803, %v3184
      %4263 = vst.msk [vmem:[%s216 + $0xe58] sm:$0xff] %vm3803, %v3186
      %4264 = vst.msk [vmem:[%s216 + $0xe60] sm:$0xff] %vm3803, %v3188
      %4265 = vst.msk [vmem:[%s216 + $0xe68] sm:$0xff] %vm3803, %v3190
      %4266 = vst.msk [vmem:[%s216 + $0xe70] sm:$0xff] %vm3803, %v3192
      %4267 = vst.msk [vmem:[%s216 + $0xe78] sm:$0xff] %vm3803, %v3194
      %4268 = vst.msk [vmem:[%s216 + $0xe80] sm:$0xff] %vm3803, %v3196
      %4269 = vst.msk [vmem:[%s216 + $0xe88] sm:$0xff] %vm3803, %v3198
      %4270 = vst.msk [vmem:[%s216 + $0xe90] sm:$0xff] %vm3803, %v3200
      %4271 = vst.msk [vmem:[%s216 + $0xe98] sm:$0xff] %vm3803, %v3202
      %4272 = vst.msk [vmem:[%s216 + $0xea0] sm:$0xff] %vm3803, %v3204
      %4273 = vst.msk [vmem:[%s216 + $0xea8] sm:$0xff] %vm3803, %v3206
      %4274 = vst.msk [vmem:[%s216 + $0xeb0] sm:$0xff] %vm3803, %v3208
      %4275 = vst.msk [vmem:[%s216 + $0xeb8] sm:$0xff] %vm3803, %v3210
      %4276 = vst.msk [vmem:[%s216 + $0xec0] sm:$0xff] %vm3803, %v3212
      %4277 = vst.msk [vmem:[%s216 + $0xec8] sm:$0xff] %vm3803, %v3214
      %4278 = vst.msk [vmem:[%s216 + $0xed0] sm:$0xff] %vm3803, %v3216
      %4279 = vst.msk [vmem:[%s216 + $0xed8] sm:$0xff] %vm3803, %v3218
      %4280 = vst.msk [vmem:[%s216 + $0xee0] sm:$0xff] %vm3803, %v3220
      %4281 = vst.msk [vmem:[%s216 + $0xee8] sm:$0xff] %vm3803, %v3222
      %4282 = vst.msk [vmem:[%s216 + $0xef0] sm:$0xff] %vm3803, %v3224
      %4283 = vst.msk [vmem:[%s216 + $0xef8] sm:$0xff] %vm3803, %v3226
      %4284 = vst.msk [vmem:[%s216 + $0xf00] sm:$0xff] %vm3803, %v3228
      %4285 = vst.msk [vmem:[%s216 + $0xf08] sm:$0xff] %vm3803, %v3230
      %4286 = vst.msk [vmem:[%s216 + $0xf10] sm:$0xff] %vm3803, %v3232
      %4287 = vst.msk [vmem:[%s216 + $0xf18] sm:$0xff] %vm3803, %v3234
      %4288 = vst.msk [vmem:[%s216 + $0xf20] sm:$0xff] %vm3803, %v3236
      %4289 = vst.msk [vmem:[%s216 + $0xf28] sm:$0xff] %vm3803, %v3238
      %4290 = vst.msk [vmem:[%s216 + $0xf30] sm:$0xff] %vm3803, %v3240
      %4291 = vst.msk [vmem:[%s216 + $0xf38] sm:$0xff] %vm3803, %v3242
      %4292 = vst.msk [vmem:[%s216 + $0xf40] sm:$0xff] %vm3803, %v3244
      %4293 = vst.msk [vmem:[%s216 + $0xf48] sm:$0xff] %vm3803, %v3246
      %4294 = vst.msk [vmem:[%s216 + $0xf50] sm:$0xff] %vm3803, %v3248
      %4295 = vst.msk [vmem:[%s216 + $0xf58] sm:$0xff] %vm3803, %v3250
      %4296 = vst.msk [vmem:[%s216 + $0xf60] sm:$0xff] %vm3803, %v3252
      %4297 = vst.msk [vmem:[%s216 + $0xf68] sm:$0xff] %vm3803, %v3254
      %4298 = vst.msk [vmem:[%s216 + $0xf70] sm:$0xff] %vm3803, %v3256
      %4299 = vst.msk [vmem:[%s216 + $0xf78] sm:$0xff] %vm3803, %v3258
      %4300 = vst.msk [vmem:[%s216 + $0xf80] sm:$0xff] %vm3803, %v3260
      %4301 = vst.msk [vmem:[%s216 + $0xf88] sm:$0xff] %vm3803, %v3262
      %4302 = vst.msk [vmem:[%s216 + $0xf90] sm:$0xff] %vm3803, %v3264
      %4303 = vst.msk [vmem:[%s216 + $0xf98] sm:$0xff] %vm3803, %v3266
      %4304 = vst.msk [vmem:[%s216 + $0xfa0] sm:$0xff] %vm3803, %v3268
      %4305 = vst.msk [vmem:[%s216 + $0xfa8] sm:$0xff] %vm3803, %v3270
      %4306 = vst.msk [vmem:[%s216 + $0xfb0] sm:$0xff] %vm3803, %v3272
      %4307 = vst.msk [vmem:[%s216 + $0xfb8] sm:$0xff] %vm3803, %v3274
      %4308 = vst.msk [vmem:[%s216 + $0xfc0] sm:$0xff] %vm3803, %v3276
      %4309 = vst.msk [vmem:[%s216 + $0xfc8] sm:$0xff] %vm3803, %v3278
      %4310 = vst.msk [vmem:[%s216 + $0xfd0] sm:$0xff] %vm3803, %v3280
      %4311 = vst.msk [vmem:[%s216 + $0xfd8] sm:$0xff] %vm3803, %v3282
      %4312 = vst.msk [vmem:[%s216 + $0xfe0] sm:$0xff] %vm3803, %v3284
      %4313 = vst.msk [vmem:[%s216 + $0xfe8] sm:$0xff] %vm3803, %v3286
      %4314 = vst.msk [vmem:[%s216 + $0xff0] sm:$0xff] %vm3803, %v3288
      %4315 = vst.msk [vmem:[%s216 + $0xff8] sm:$0xff] %vm3803, %v3290
      %v4316 = vld [vmem:[%s210] sm:$0xff]
      %v4317 = vld [vmem:[%s210 + $0x8] sm:$0xff]
      %v4318 = vld [vmem:[%s210 + $0x10] sm:$0xff]
      %v4319 = vld [vmem:[%s210 + $0x18] sm:$0xff]
      %v4320 = vld [vmem:[%s210 + $0x20] sm:$0xff]
      %v4321 = vld [vmem:[%s210 + $0x28] sm:$0xff]
      %v4322 = vld [vmem:[%s210 + $0x30] sm:$0xff]
      %v4323 = vld [vmem:[%s210 + $0x38] sm:$0xff]
      %v4324 = vld [vmem:[%s210 + $0x40] sm:$0xff]
      %v4325 = vld [vmem:[%s210 + $0x48] sm:$0xff]
      %v4326 = vld [vmem:[%s210 + $0x50] sm:$0xff]
      %v4327 = vld [vmem:[%s210 + $0x58] sm:$0xff]
      %v4328 = vld [vmem:[%s210 + $0x60] sm:$0xff]
      %v4329 = vld [vmem:[%s210 + $0x68] sm:$0xff]
      %v4330 = vld [vmem:[%s210 + $0x70] sm:$0xff]
      %v4331 = vld [vmem:[%s210 + $0x78] sm:$0xff]
      %v4332 = vld [vmem:[%s210 + $0x80] sm:$0xff]
      %v4333 = vld [vmem:[%s210 + $0x88] sm:$0xff]
      %v4334 = vld [vmem:[%s210 + $0x90] sm:$0xff]
      %v4335 = vld [vmem:[%s210 + $0x98] sm:$0xff]
      %v4336 = vld [vmem:[%s210 + $0xa0] sm:$0xff]
      %v4337 = vld [vmem:[%s210 + $0xa8] sm:$0xff]
      %v4338 = vld [vmem:[%s210 + $0xb0] sm:$0xff]
      %v4339 = vld [vmem:[%s210 + $0xb8] sm:$0xff]
      %v4340 = vld [vmem:[%s210 + $0xc0] sm:$0xff]
      %v4341 = vld [vmem:[%s210 + $0xc8] sm:$0xff]
      %v4342 = vld [vmem:[%s210 + $0xd0] sm:$0xff]
      %v4343 = vld [vmem:[%s210 + $0xd8] sm:$0xff]
      %v4344 = vld [vmem:[%s210 + $0xe0] sm:$0xff]
      %v4345 = vld [vmem:[%s210 + $0xe8] sm:$0xff]
      %v4346 = vld [vmem:[%s210 + $0xf0] sm:$0xff]
      %v4347 = vld [vmem:[%s210 + $0xf8] sm:$0xff]
      %v4348 = vld [vmem:[%s210 + $0x100] sm:$0xff]
      %v4349 = vld [vmem:[%s210 + $0x108] sm:$0xff]
      %v4350 = vld [vmem:[%s210 + $0x110] sm:$0xff]
      %v4351 = vld [vmem:[%s210 + $0x118] sm:$0xff]
      %v4352 = vld [vmem:[%s210 + $0x120] sm:$0xff]
      %v4353 = vld [vmem:[%s210 + $0x128] sm:$0xff]
      %v4354 = vld [vmem:[%s210 + $0x130] sm:$0xff]
      %v4355 = vld [vmem:[%s210 + $0x138] sm:$0xff]
      %v4356 = vld [vmem:[%s210 + $0x140] sm:$0xff]
      %v4357 = vld [vmem:[%s210 + $0x148] sm:$0xff]
      %v4358 = vld [vmem:[%s210 + $0x150] sm:$0xff]
      %v4359 = vld [vmem:[%s210 + $0x158] sm:$0xff]
      %v4360 = vld [vmem:[%s210 + $0x160] sm:$0xff]
      %v4361 = vld [vmem:[%s210 + $0x168] sm:$0xff]
      %v4362 = vld [vmem:[%s210 + $0x170] sm:$0xff]
      %v4363 = vld [vmem:[%s210 + $0x178] sm:$0xff]
      %v4364 = vld [vmem:[%s210 + $0x180] sm:$0xff]
      %v4365 = vld [vmem:[%s210 + $0x188] sm:$0xff]
      %v4366 = vld [vmem:[%s210 + $0x190] sm:$0xff]
      %v4367 = vld [vmem:[%s210 + $0x198] sm:$0xff]
      %v4368 = vld [vmem:[%s210 + $0x1a0] sm:$0xff]
      %v4369 = vld [vmem:[%s210 + $0x1a8] sm:$0xff]
      %v4370 = vld [vmem:[%s210 + $0x1b0] sm:$0xff]
      %v4371 = vld [vmem:[%s210 + $0x1b8] sm:$0xff]
      %v4372 = vld [vmem:[%s210 + $0x1c0] sm:$0xff]
      %v4373 = vld [vmem:[%s210 + $0x1c8] sm:$0xff]
      %v4374 = vld [vmem:[%s210 + $0x1d0] sm:$0xff]
      %v4375 = vld [vmem:[%s210 + $0x1d8] sm:$0xff]
      %v4376 = vld [vmem:[%s210 + $0x1e0] sm:$0xff]
      %v4377 = vld [vmem:[%s210 + $0x1e8] sm:$0xff]
      %v4378 = vld [vmem:[%s210 + $0x1f0] sm:$0xff]
      %v4379 = vld [vmem:[%s210 + $0x1f8] sm:$0xff]
      %v4380 = vld [vmem:[%s210 + $0x200] sm:$0xff]
      %v4381 = vld [vmem:[%s210 + $0x208] sm:$0xff]
      %v4382 = vld [vmem:[%s210 + $0x210] sm:$0xff]
      %v4383 = vld [vmem:[%s210 + $0x218] sm:$0xff]
      %v4384 = vld [vmem:[%s210 + $0x220] sm:$0xff]
      %v4385 = vld [vmem:[%s210 + $0x228] sm:$0xff]
      %v4386 = vld [vmem:[%s210 + $0x230] sm:$0xff]
      %v4387 = vld [vmem:[%s210 + $0x238] sm:$0xff]
      %v4388 = vld [vmem:[%s210 + $0x240] sm:$0xff]
      %v4389 = vld [vmem:[%s210 + $0x248] sm:$0xff]
      %v4390 = vld [vmem:[%s210 + $0x250] sm:$0xff]
      %v4391 = vld [vmem:[%s210 + $0x258] sm:$0xff]
      %v4392 = vld [vmem:[%s210 + $0x260] sm:$0xff]
      %v4393 = vld [vmem:[%s210 + $0x268] sm:$0xff]
      %v4394 = vld [vmem:[%s210 + $0x270] sm:$0xff]
      %v4395 = vld [vmem:[%s210 + $0x278] sm:$0xff]
      %v4396 = vld [vmem:[%s210 + $0x280] sm:$0xff]
      %v4397 = vld [vmem:[%s210 + $0x288] sm:$0xff]
      %v4398 = vld [vmem:[%s210 + $0x290] sm:$0xff]
      %v4399 = vld [vmem:[%s210 + $0x298] sm:$0xff]
      %v4400 = vld [vmem:[%s210 + $0x2a0] sm:$0xff]
      %v4401 = vld [vmem:[%s210 + $0x2a8] sm:$0xff]
      %v4402 = vld [vmem:[%s210 + $0x2b0] sm:$0xff]
      %v4403 = vld [vmem:[%s210 + $0x2b8] sm:$0xff]
      %v4404 = vld [vmem:[%s210 + $0x2c0] sm:$0xff]
      %v4405 = vld [vmem:[%s210 + $0x2c8] sm:$0xff]
      %v4406 = vld [vmem:[%s210 + $0x2d0] sm:$0xff]
      %v4407 = vld [vmem:[%s210 + $0x2d8] sm:$0xff]
      %v4408 = vld [vmem:[%s210 + $0x2e0] sm:$0xff]
      %v4409 = vld [vmem:[%s210 + $0x2e8] sm:$0xff]
      %v4410 = vld [vmem:[%s210 + $0x2f0] sm:$0xff]
      %v4411 = vld [vmem:[%s210 + $0x2f8] sm:$0xff]
      %v4412 = vld [vmem:[%s210 + $0x300] sm:$0xff]
      %v4413 = vld [vmem:[%s210 + $0x308] sm:$0xff]
      %v4414 = vld [vmem:[%s210 + $0x310] sm:$0xff]
      %v4415 = vld [vmem:[%s210 + $0x318] sm:$0xff]
      %v4416 = vld [vmem:[%s210 + $0x320] sm:$0xff]
      %v4417 = vld [vmem:[%s210 + $0x328] sm:$0xff]
      %v4418 = vld [vmem:[%s210 + $0x330] sm:$0xff]
      %v4419 = vld [vmem:[%s210 + $0x338] sm:$0xff]
      %v4420 = vld [vmem:[%s210 + $0x340] sm:$0xff]
      %v4421 = vld [vmem:[%s210 + $0x348] sm:$0xff]
      %v4422 = vld [vmem:[%s210 + $0x350] sm:$0xff]
      %v4423 = vld [vmem:[%s210 + $0x358] sm:$0xff]
      %v4424 = vld [vmem:[%s210 + $0x360] sm:$0xff]
      %v4425 = vld [vmem:[%s210 + $0x368] sm:$0xff]
      %v4426 = vld [vmem:[%s210 + $0x370] sm:$0xff]
      %v4427 = vld [vmem:[%s210 + $0x378] sm:$0xff]
      %v4428 = vld [vmem:[%s210 + $0x380] sm:$0xff]
      %v4429 = vld [vmem:[%s210 + $0x388] sm:$0xff]
      %v4430 = vld [vmem:[%s210 + $0x390] sm:$0xff]
      %v4431 = vld [vmem:[%s210 + $0x398] sm:$0xff]
      %v4432 = vld [vmem:[%s210 + $0x3a0] sm:$0xff]
      %v4433 = vld [vmem:[%s210 + $0x3a8] sm:$0xff]
      %v4434 = vld [vmem:[%s210 + $0x3b0] sm:$0xff]
      %v4435 = vld [vmem:[%s210 + $0x3b8] sm:$0xff]
      %v4436 = vld [vmem:[%s210 + $0x3c0] sm:$0xff]
      %v4437 = vld [vmem:[%s210 + $0x3c8] sm:$0xff]
      %v4438 = vld [vmem:[%s210 + $0x3d0] sm:$0xff]
      %v4439 = vld [vmem:[%s210 + $0x3d8] sm:$0xff]
      %v4440 = vld [vmem:[%s210 + $0x3e0] sm:$0xff]
      %v4441 = vld [vmem:[%s210 + $0x3e8] sm:$0xff]
      %v4442 = vld [vmem:[%s210 + $0x3f0] sm:$0xff]
      %v4443 = vld [vmem:[%s210 + $0x3f8] sm:$0xff]
      %v4444 = vld [vmem:[%s210 + $0x400] sm:$0xff]
      %v4445 = vld [vmem:[%s210 + $0x408] sm:$0xff]
      %v4446 = vld [vmem:[%s210 + $0x410] sm:$0xff]
      %v4447 = vld [vmem:[%s210 + $0x418] sm:$0xff]
      %v4448 = vld [vmem:[%s210 + $0x420] sm:$0xff]
      %v4449 = vld [vmem:[%s210 + $0x428] sm:$0xff]
      %v4450 = vld [vmem:[%s210 + $0x430] sm:$0xff]
      %v4451 = vld [vmem:[%s210 + $0x438] sm:$0xff]
      %v4452 = vld [vmem:[%s210 + $0x440] sm:$0xff]
      %v4453 = vld [vmem:[%s210 + $0x448] sm:$0xff]
      %v4454 = vld [vmem:[%s210 + $0x450] sm:$0xff]
      %v4455 = vld [vmem:[%s210 + $0x458] sm:$0xff]
      %v4456 = vld [vmem:[%s210 + $0x460] sm:$0xff]
      %v4457 = vld [vmem:[%s210 + $0x468] sm:$0xff]
      %v4458 = vld [vmem:[%s210 + $0x470] sm:$0xff]
      %v4459 = vld [vmem:[%s210 + $0x478] sm:$0xff]
      %v4460 = vld [vmem:[%s210 + $0x480] sm:$0xff]
      %v4461 = vld [vmem:[%s210 + $0x488] sm:$0xff]
      %v4462 = vld [vmem:[%s210 + $0x490] sm:$0xff]
      %v4463 = vld [vmem:[%s210 + $0x498] sm:$0xff]
      %v4464 = vld [vmem:[%s210 + $0x4a0] sm:$0xff]
      %v4465 = vld [vmem:[%s210 + $0x4a8] sm:$0xff]
      %v4466 = vld [vmem:[%s210 + $0x4b0] sm:$0xff]
      %v4467 = vld [vmem:[%s210 + $0x4b8] sm:$0xff]
      %v4468 = vld [vmem:[%s210 + $0x4c0] sm:$0xff]
      %v4469 = vld [vmem:[%s210 + $0x4c8] sm:$0xff]
      %v4470 = vld [vmem:[%s210 + $0x4d0] sm:$0xff]
      %v4471 = vld [vmem:[%s210 + $0x4d8] sm:$0xff]
      %v4472 = vld [vmem:[%s210 + $0x4e0] sm:$0xff]
      %v4473 = vld [vmem:[%s210 + $0x4e8] sm:$0xff]
      %v4474 = vld [vmem:[%s210 + $0x4f0] sm:$0xff]
      %v4475 = vld [vmem:[%s210 + $0x4f8] sm:$0xff]
      %v4476 = vld [vmem:[%s210 + $0x500] sm:$0xff]
      %v4477 = vld [vmem:[%s210 + $0x508] sm:$0xff]
      %v4478 = vld [vmem:[%s210 + $0x510] sm:$0xff]
      %v4479 = vld [vmem:[%s210 + $0x518] sm:$0xff]
      %v4480 = vld [vmem:[%s210 + $0x520] sm:$0xff]
      %v4481 = vld [vmem:[%s210 + $0x528] sm:$0xff]
      %v4482 = vld [vmem:[%s210 + $0x530] sm:$0xff]
      %v4483 = vld [vmem:[%s210 + $0x538] sm:$0xff]
      %v4484 = vld [vmem:[%s210 + $0x540] sm:$0xff]
      %v4485 = vld [vmem:[%s210 + $0x548] sm:$0xff]
      %v4486 = vld [vmem:[%s210 + $0x550] sm:$0xff]
      %v4487 = vld [vmem:[%s210 + $0x558] sm:$0xff]
      %v4488 = vld [vmem:[%s210 + $0x560] sm:$0xff]
      %v4489 = vld [vmem:[%s210 + $0x568] sm:$0xff]
      %v4490 = vld [vmem:[%s210 + $0x570] sm:$0xff]
      %v4491 = vld [vmem:[%s210 + $0x578] sm:$0xff]
      %v4492 = vld [vmem:[%s210 + $0x580] sm:$0xff]
      %v4493 = vld [vmem:[%s210 + $0x588] sm:$0xff]
      %v4494 = vld [vmem:[%s210 + $0x590] sm:$0xff]
      %v4495 = vld [vmem:[%s210 + $0x598] sm:$0xff]
      %v4496 = vld [vmem:[%s210 + $0x5a0] sm:$0xff]
      %v4497 = vld [vmem:[%s210 + $0x5a8] sm:$0xff]
      %v4498 = vld [vmem:[%s210 + $0x5b0] sm:$0xff]
      %v4499 = vld [vmem:[%s210 + $0x5b8] sm:$0xff]
      %v4500 = vld [vmem:[%s210 + $0x5c0] sm:$0xff]
      %v4501 = vld [vmem:[%s210 + $0x5c8] sm:$0xff]
      %v4502 = vld [vmem:[%s210 + $0x5d0] sm:$0xff]
      %v4503 = vld [vmem:[%s210 + $0x5d8] sm:$0xff]
      %v4504 = vld [vmem:[%s210 + $0x5e0] sm:$0xff]
      %v4505 = vld [vmem:[%s210 + $0x5e8] sm:$0xff]
      %v4506 = vld [vmem:[%s210 + $0x5f0] sm:$0xff]
      %v4507 = vld [vmem:[%s210 + $0x5f8] sm:$0xff]
      %v4508 = vld [vmem:[%s210 + $0x600] sm:$0xff]
      %v4509 = vld [vmem:[%s210 + $0x608] sm:$0xff]
      %v4510 = vld [vmem:[%s210 + $0x610] sm:$0xff]
      %v4511 = vld [vmem:[%s210 + $0x618] sm:$0xff]
      %v4512 = vld [vmem:[%s210 + $0x620] sm:$0xff]
      %v4513 = vld [vmem:[%s210 + $0x628] sm:$0xff]
      %v4514 = vld [vmem:[%s210 + $0x630] sm:$0xff]
      %v4515 = vld [vmem:[%s210 + $0x638] sm:$0xff]
      %v4516 = vld [vmem:[%s210 + $0x640] sm:$0xff]
      %v4517 = vld [vmem:[%s210 + $0x648] sm:$0xff]
      %v4518 = vld [vmem:[%s210 + $0x650] sm:$0xff]
      %v4519 = vld [vmem:[%s210 + $0x658] sm:$0xff]
      %v4520 = vld [vmem:[%s210 + $0x660] sm:$0xff]
      %v4521 = vld [vmem:[%s210 + $0x668] sm:$0xff]
      %v4522 = vld [vmem:[%s210 + $0x670] sm:$0xff]
      %v4523 = vld [vmem:[%s210 + $0x678] sm:$0xff]
      %v4524 = vld [vmem:[%s210 + $0x680] sm:$0xff]
      %v4525 = vld [vmem:[%s210 + $0x688] sm:$0xff]
      %v4526 = vld [vmem:[%s210 + $0x690] sm:$0xff]
      %v4527 = vld [vmem:[%s210 + $0x698] sm:$0xff]
      %v4528 = vld [vmem:[%s210 + $0x6a0] sm:$0xff]
      %v4529 = vld [vmem:[%s210 + $0x6a8] sm:$0xff]
      %v4530 = vld [vmem:[%s210 + $0x6b0] sm:$0xff]
      %v4531 = vld [vmem:[%s210 + $0x6b8] sm:$0xff]
      %v4532 = vld [vmem:[%s210 + $0x6c0] sm:$0xff]
      %v4533 = vld [vmem:[%s210 + $0x6c8] sm:$0xff]
      %v4534 = vld [vmem:[%s210 + $0x6d0] sm:$0xff]
      %v4535 = vld [vmem:[%s210 + $0x6d8] sm:$0xff]
      %v4536 = vld [vmem:[%s210 + $0x6e0] sm:$0xff]
      %v4537 = vld [vmem:[%s210 + $0x6e8] sm:$0xff]
      %v4538 = vld [vmem:[%s210 + $0x6f0] sm:$0xff]
      %v4539 = vld [vmem:[%s210 + $0x6f8] sm:$0xff]
      %v4540 = vld [vmem:[%s210 + $0x700] sm:$0xff]
      %v4541 = vld [vmem:[%s210 + $0x708] sm:$0xff]
      %v4542 = vld [vmem:[%s210 + $0x710] sm:$0xff]
      %v4543 = vld [vmem:[%s210 + $0x718] sm:$0xff]
      %v4544 = vld [vmem:[%s210 + $0x720] sm:$0xff]
      %v4545 = vld [vmem:[%s210 + $0x728] sm:$0xff]
      %v4546 = vld [vmem:[%s210 + $0x730] sm:$0xff]
      %v4547 = vld [vmem:[%s210 + $0x738] sm:$0xff]
      %v4548 = vld [vmem:[%s210 + $0x740] sm:$0xff]
      %v4549 = vld [vmem:[%s210 + $0x748] sm:$0xff]
      %v4550 = vld [vmem:[%s210 + $0x750] sm:$0xff]
      %v4551 = vld [vmem:[%s210 + $0x758] sm:$0xff]
      %v4552 = vld [vmem:[%s210 + $0x760] sm:$0xff]
      %v4553 = vld [vmem:[%s210 + $0x768] sm:$0xff]
      %v4554 = vld [vmem:[%s210 + $0x770] sm:$0xff]
      %v4555 = vld [vmem:[%s210 + $0x778] sm:$0xff]
      %v4556 = vld [vmem:[%s210 + $0x780] sm:$0xff]
      %v4557 = vld [vmem:[%s210 + $0x788] sm:$0xff]
      %v4558 = vld [vmem:[%s210 + $0x790] sm:$0xff]
      %v4559 = vld [vmem:[%s210 + $0x798] sm:$0xff]
      %v4560 = vld [vmem:[%s210 + $0x7a0] sm:$0xff]
      %v4561 = vld [vmem:[%s210 + $0x7a8] sm:$0xff]
      %v4562 = vld [vmem:[%s210 + $0x7b0] sm:$0xff]
      %v4563 = vld [vmem:[%s210 + $0x7b8] sm:$0xff]
      %v4564 = vld [vmem:[%s210 + $0x7c0] sm:$0xff]
      %v4565 = vld [vmem:[%s210 + $0x7c8] sm:$0xff]
      %v4566 = vld [vmem:[%s210 + $0x7d0] sm:$0xff]
      %v4567 = vld [vmem:[%s210 + $0x7d8] sm:$0xff]
      %v4568 = vld [vmem:[%s210 + $0x7e0] sm:$0xff]
      %v4569 = vld [vmem:[%s210 + $0x7e8] sm:$0xff]
      %v4570 = vld [vmem:[%s210 + $0x7f0] sm:$0xff]
      %v4571 = vld [vmem:[%s210 + $0x7f8] sm:$0xff]
      %v4572 = vld [vmem:[%s210 + $0x800] sm:$0xff]
      %v4573 = vld [vmem:[%s210 + $0x808] sm:$0xff]
      %v4574 = vld [vmem:[%s210 + $0x810] sm:$0xff]
      %v4575 = vld [vmem:[%s210 + $0x818] sm:$0xff]
      %v4576 = vld [vmem:[%s210 + $0x820] sm:$0xff]
      %v4577 = vld [vmem:[%s210 + $0x828] sm:$0xff]
      %v4578 = vld [vmem:[%s210 + $0x830] sm:$0xff]
      %v4579 = vld [vmem:[%s210 + $0x838] sm:$0xff]
      %v4580 = vld [vmem:[%s210 + $0x840] sm:$0xff]
      %v4581 = vld [vmem:[%s210 + $0x848] sm:$0xff]
      %v4582 = vld [vmem:[%s210 + $0x850] sm:$0xff]
      %v4583 = vld [vmem:[%s210 + $0x858] sm:$0xff]
      %v4584 = vld [vmem:[%s210 + $0x860] sm:$0xff]
      %v4585 = vld [vmem:[%s210 + $0x868] sm:$0xff]
      %v4586 = vld [vmem:[%s210 + $0x870] sm:$0xff]
      %v4587 = vld [vmem:[%s210 + $0x878] sm:$0xff]
      %v4588 = vld [vmem:[%s210 + $0x880] sm:$0xff]
      %v4589 = vld [vmem:[%s210 + $0x888] sm:$0xff]
      %v4590 = vld [vmem:[%s210 + $0x890] sm:$0xff]
      %v4591 = vld [vmem:[%s210 + $0x898] sm:$0xff]
      %v4592 = vld [vmem:[%s210 + $0x8a0] sm:$0xff]
      %v4593 = vld [vmem:[%s210 + $0x8a8] sm:$0xff]
      %v4594 = vld [vmem:[%s210 + $0x8b0] sm:$0xff]
      %v4595 = vld [vmem:[%s210 + $0x8b8] sm:$0xff]
      %v4596 = vld [vmem:[%s210 + $0x8c0] sm:$0xff]
      %v4597 = vld [vmem:[%s210 + $0x8c8] sm:$0xff]
      %v4598 = vld [vmem:[%s210 + $0x8d0] sm:$0xff]
      %v4599 = vld [vmem:[%s210 + $0x8d8] sm:$0xff]
      %v4600 = vld [vmem:[%s210 + $0x8e0] sm:$0xff]
      %v4601 = vld [vmem:[%s210 + $0x8e8] sm:$0xff]
      %v4602 = vld [vmem:[%s210 + $0x8f0] sm:$0xff]
      %v4603 = vld [vmem:[%s210 + $0x8f8] sm:$0xff]
      %v4604 = vld [vmem:[%s210 + $0x900] sm:$0xff]
      %v4605 = vld [vmem:[%s210 + $0x908] sm:$0xff]
      %v4606 = vld [vmem:[%s210 + $0x910] sm:$0xff]
      %v4607 = vld [vmem:[%s210 + $0x918] sm:$0xff]
      %v4608 = vld [vmem:[%s210 + $0x920] sm:$0xff]
      %v4609 = vld [vmem:[%s210 + $0x928] sm:$0xff]
      %v4610 = vld [vmem:[%s210 + $0x930] sm:$0xff]
      %v4611 = vld [vmem:[%s210 + $0x938] sm:$0xff]
      %v4612 = vld [vmem:[%s210 + $0x940] sm:$0xff]
      %v4613 = vld [vmem:[%s210 + $0x948] sm:$0xff]
      %v4614 = vld [vmem:[%s210 + $0x950] sm:$0xff]
      %v4615 = vld [vmem:[%s210 + $0x958] sm:$0xff]
      %v4616 = vld [vmem:[%s210 + $0x960] sm:$0xff]
      %v4617 = vld [vmem:[%s210 + $0x968] sm:$0xff]
      %v4618 = vld [vmem:[%s210 + $0x970] sm:$0xff]
      %v4619 = vld [vmem:[%s210 + $0x978] sm:$0xff]
      %v4620 = vld [vmem:[%s210 + $0x980] sm:$0xff]
      %v4621 = vld [vmem:[%s210 + $0x988] sm:$0xff]
      %v4622 = vld [vmem:[%s210 + $0x990] sm:$0xff]
      %v4623 = vld [vmem:[%s210 + $0x998] sm:$0xff]
      %v4624 = vld [vmem:[%s210 + $0x9a0] sm:$0xff]
      %v4625 = vld [vmem:[%s210 + $0x9a8] sm:$0xff]
      %v4626 = vld [vmem:[%s210 + $0x9b0] sm:$0xff]
      %v4627 = vld [vmem:[%s210 + $0x9b8] sm:$0xff]
      %v4628 = vld [vmem:[%s210 + $0x9c0] sm:$0xff]
      %v4629 = vld [vmem:[%s210 + $0x9c8] sm:$0xff]
      %v4630 = vld [vmem:[%s210 + $0x9d0] sm:$0xff]
      %v4631 = vld [vmem:[%s210 + $0x9d8] sm:$0xff]
      %v4632 = vld [vmem:[%s210 + $0x9e0] sm:$0xff]
      %v4633 = vld [vmem:[%s210 + $0x9e8] sm:$0xff]
      %v4634 = vld [vmem:[%s210 + $0x9f0] sm:$0xff]
      %v4635 = vld [vmem:[%s210 + $0x9f8] sm:$0xff]
      %v4636 = vld [vmem:[%s210 + $0xa00] sm:$0xff]
      %v4637 = vld [vmem:[%s210 + $0xa08] sm:$0xff]
      %v4638 = vld [vmem:[%s210 + $0xa10] sm:$0xff]
      %v4639 = vld [vmem:[%s210 + $0xa18] sm:$0xff]
      %v4640 = vld [vmem:[%s210 + $0xa20] sm:$0xff]
      %v4641 = vld [vmem:[%s210 + $0xa28] sm:$0xff]
      %v4642 = vld [vmem:[%s210 + $0xa30] sm:$0xff]
      %v4643 = vld [vmem:[%s210 + $0xa38] sm:$0xff]
      %v4644 = vld [vmem:[%s210 + $0xa40] sm:$0xff]
      %v4645 = vld [vmem:[%s210 + $0xa48] sm:$0xff]
      %v4646 = vld [vmem:[%s210 + $0xa50] sm:$0xff]
      %v4647 = vld [vmem:[%s210 + $0xa58] sm:$0xff]
      %v4648 = vld [vmem:[%s210 + $0xa60] sm:$0xff]
      %v4649 = vld [vmem:[%s210 + $0xa68] sm:$0xff]
      %v4650 = vld [vmem:[%s210 + $0xa70] sm:$0xff]
      %v4651 = vld [vmem:[%s210 + $0xa78] sm:$0xff]
      %v4652 = vld [vmem:[%s210 + $0xa80] sm:$0xff]
      %v4653 = vld [vmem:[%s210 + $0xa88] sm:$0xff]
      %v4654 = vld [vmem:[%s210 + $0xa90] sm:$0xff]
      %v4655 = vld [vmem:[%s210 + $0xa98] sm:$0xff]
      %v4656 = vld [vmem:[%s210 + $0xaa0] sm:$0xff]
      %v4657 = vld [vmem:[%s210 + $0xaa8] sm:$0xff]
      %v4658 = vld [vmem:[%s210 + $0xab0] sm:$0xff]
      %v4659 = vld [vmem:[%s210 + $0xab8] sm:$0xff]
      %v4660 = vld [vmem:[%s210 + $0xac0] sm:$0xff]
      %v4661 = vld [vmem:[%s210 + $0xac8] sm:$0xff]
      %v4662 = vld [vmem:[%s210 + $0xad0] sm:$0xff]
      %v4663 = vld [vmem:[%s210 + $0xad8] sm:$0xff]
      %v4664 = vld [vmem:[%s210 + $0xae0] sm:$0xff]
      %v4665 = vld [vmem:[%s210 + $0xae8] sm:$0xff]
      %v4666 = vld [vmem:[%s210 + $0xaf0] sm:$0xff]
      %v4667 = vld [vmem:[%s210 + $0xaf8] sm:$0xff]
      %v4668 = vld [vmem:[%s210 + $0xb00] sm:$0xff]
      %v4669 = vld [vmem:[%s210 + $0xb08] sm:$0xff]
      %v4670 = vld [vmem:[%s210 + $0xb10] sm:$0xff]
      %v4671 = vld [vmem:[%s210 + $0xb18] sm:$0xff]
      %v4672 = vld [vmem:[%s210 + $0xb20] sm:$0xff]
      %v4673 = vld [vmem:[%s210 + $0xb28] sm:$0xff]
      %v4674 = vld [vmem:[%s210 + $0xb30] sm:$0xff]
      %v4675 = vld [vmem:[%s210 + $0xb38] sm:$0xff]
      %v4676 = vld [vmem:[%s210 + $0xb40] sm:$0xff]
      %v4677 = vld [vmem:[%s210 + $0xb48] sm:$0xff]
      %v4678 = vld [vmem:[%s210 + $0xb50] sm:$0xff]
      %v4679 = vld [vmem:[%s210 + $0xb58] sm:$0xff]
      %v4680 = vld [vmem:[%s210 + $0xb60] sm:$0xff]
      %v4681 = vld [vmem:[%s210 + $0xb68] sm:$0xff]
      %v4682 = vld [vmem:[%s210 + $0xb70] sm:$0xff]
      %v4683 = vld [vmem:[%s210 + $0xb78] sm:$0xff]
      %v4684 = vld [vmem:[%s210 + $0xb80] sm:$0xff]
      %v4685 = vld [vmem:[%s210 + $0xb88] sm:$0xff]
      %v4686 = vld [vmem:[%s210 + $0xb90] sm:$0xff]
      %v4687 = vld [vmem:[%s210 + $0xb98] sm:$0xff]
      %v4688 = vld [vmem:[%s210 + $0xba0] sm:$0xff]
      %v4689 = vld [vmem:[%s210 + $0xba8] sm:$0xff]
      %v4690 = vld [vmem:[%s210 + $0xbb0] sm:$0xff]
      %v4691 = vld [vmem:[%s210 + $0xbb8] sm:$0xff]
      %v4692 = vld [vmem:[%s210 + $0xbc0] sm:$0xff]
      %v4693 = vld [vmem:[%s210 + $0xbc8] sm:$0xff]
      %v4694 = vld [vmem:[%s210 + $0xbd0] sm:$0xff]
      %v4695 = vld [vmem:[%s210 + $0xbd8] sm:$0xff]
      %v4696 = vld [vmem:[%s210 + $0xbe0] sm:$0xff]
      %v4697 = vld [vmem:[%s210 + $0xbe8] sm:$0xff]
      %v4698 = vld [vmem:[%s210 + $0xbf0] sm:$0xff]
      %v4699 = vld [vmem:[%s210 + $0xbf8] sm:$0xff]
      %v4700 = vld [vmem:[%s210 + $0xc00] sm:$0xff]
      %v4701 = vld [vmem:[%s210 + $0xc08] sm:$0xff]
      %v4702 = vld [vmem:[%s210 + $0xc10] sm:$0xff]
      %v4703 = vld [vmem:[%s210 + $0xc18] sm:$0xff]
      %v4704 = vld [vmem:[%s210 + $0xc20] sm:$0xff]
      %v4705 = vld [vmem:[%s210 + $0xc28] sm:$0xff]
      %v4706 = vld [vmem:[%s210 + $0xc30] sm:$0xff]
      %v4707 = vld [vmem:[%s210 + $0xc38] sm:$0xff]
      %v4708 = vld [vmem:[%s210 + $0xc40] sm:$0xff]
      %v4709 = vld [vmem:[%s210 + $0xc48] sm:$0xff]
      %v4710 = vld [vmem:[%s210 + $0xc50] sm:$0xff]
      %v4711 = vld [vmem:[%s210 + $0xc58] sm:$0xff]
      %v4712 = vld [vmem:[%s210 + $0xc60] sm:$0xff]
      %v4713 = vld [vmem:[%s210 + $0xc68] sm:$0xff]
      %v4714 = vld [vmem:[%s210 + $0xc70] sm:$0xff]
      %v4715 = vld [vmem:[%s210 + $0xc78] sm:$0xff]
      %v4716 = vld [vmem:[%s210 + $0xc80] sm:$0xff]
      %v4717 = vld [vmem:[%s210 + $0xc88] sm:$0xff]
      %v4718 = vld [vmem:[%s210 + $0xc90] sm:$0xff]
      %v4719 = vld [vmem:[%s210 + $0xc98] sm:$0xff]
      %v4720 = vld [vmem:[%s210 + $0xca0] sm:$0xff]
      %v4721 = vld [vmem:[%s210 + $0xca8] sm:$0xff]
      %v4722 = vld [vmem:[%s210 + $0xcb0] sm:$0xff]
      %v4723 = vld [vmem:[%s210 + $0xcb8] sm:$0xff]
      %v4724 = vld [vmem:[%s210 + $0xcc0] sm:$0xff]
      %v4725 = vld [vmem:[%s210 + $0xcc8] sm:$0xff]
      %v4726 = vld [vmem:[%s210 + $0xcd0] sm:$0xff]
      %v4727 = vld [vmem:[%s210 + $0xcd8] sm:$0xff]
      %v4728 = vld [vmem:[%s210 + $0xce0] sm:$0xff]
      %v4729 = vld [vmem:[%s210 + $0xce8] sm:$0xff]
      %v4730 = vld [vmem:[%s210 + $0xcf0] sm:$0xff]
      %v4731 = vld [vmem:[%s210 + $0xcf8] sm:$0xff]
      %v4732 = vld [vmem:[%s210 + $0xd00] sm:$0xff]
      %v4733 = vld [vmem:[%s210 + $0xd08] sm:$0xff]
      %v4734 = vld [vmem:[%s210 + $0xd10] sm:$0xff]
      %v4735 = vld [vmem:[%s210 + $0xd18] sm:$0xff]
      %v4736 = vld [vmem:[%s210 + $0xd20] sm:$0xff]
      %v4737 = vld [vmem:[%s210 + $0xd28] sm:$0xff]
      %v4738 = vld [vmem:[%s210 + $0xd30] sm:$0xff]
      %v4739 = vld [vmem:[%s210 + $0xd38] sm:$0xff]
      %v4740 = vld [vmem:[%s210 + $0xd40] sm:$0xff]
      %v4741 = vld [vmem:[%s210 + $0xd48] sm:$0xff]
      %v4742 = vld [vmem:[%s210 + $0xd50] sm:$0xff]
      %v4743 = vld [vmem:[%s210 + $0xd58] sm:$0xff]
      %v4744 = vld [vmem:[%s210 + $0xd60] sm:$0xff]
      %v4745 = vld [vmem:[%s210 + $0xd68] sm:$0xff]
      %v4746 = vld [vmem:[%s210 + $0xd70] sm:$0xff]
      %v4747 = vld [vmem:[%s210 + $0xd78] sm:$0xff]
      %v4748 = vld [vmem:[%s210 + $0xd80] sm:$0xff]
      %v4749 = vld [vmem:[%s210 + $0xd88] sm:$0xff]
      %v4750 = vld [vmem:[%s210 + $0xd90] sm:$0xff]
      %v4751 = vld [vmem:[%s210 + $0xd98] sm:$0xff]
      %v4752 = vld [vmem:[%s210 + $0xda0] sm:$0xff]
      %v4753 = vld [vmem:[%s210 + $0xda8] sm:$0xff]
      %v4754 = vld [vmem:[%s210 + $0xdb0] sm:$0xff]
      %v4755 = vld [vmem:[%s210 + $0xdb8] sm:$0xff]
      %v4756 = vld [vmem:[%s210 + $0xdc0] sm:$0xff]
      %v4757 = vld [vmem:[%s210 + $0xdc8] sm:$0xff]
      %v4758 = vld [vmem:[%s210 + $0xdd0] sm:$0xff]
      %v4759 = vld [vmem:[%s210 + $0xdd8] sm:$0xff]
      %v4760 = vld [vmem:[%s210 + $0xde0] sm:$0xff]
      %v4761 = vld [vmem:[%s210 + $0xde8] sm:$0xff]
      %v4762 = vld [vmem:[%s210 + $0xdf0] sm:$0xff]
      %v4763 = vld [vmem:[%s210 + $0xdf8] sm:$0xff]
      %v4764 = vld [vmem:[%s210 + $0xe00] sm:$0xff]
      %v4765 = vld [vmem:[%s210 + $0xe08] sm:$0xff]
      %v4766 = vld [vmem:[%s210 + $0xe10] sm:$0xff]
      %v4767 = vld [vmem:[%s210 + $0xe18] sm:$0xff]
      %v4768 = vld [vmem:[%s210 + $0xe20] sm:$0xff]
      %v4769 = vld [vmem:[%s210 + $0xe28] sm:$0xff]
      %v4770 = vld [vmem:[%s210 + $0xe30] sm:$0xff]
      %v4771 = vld [vmem:[%s210 + $0xe38] sm:$0xff]
      %v4772 = vld [vmem:[%s210 + $0xe40] sm:$0xff]
      %v4773 = vld [vmem:[%s210 + $0xe48] sm:$0xff]
      %v4774 = vld [vmem:[%s210 + $0xe50] sm:$0xff]
      %v4775 = vld [vmem:[%s210 + $0xe58] sm:$0xff]
      %v4776 = vld [vmem:[%s210 + $0xe60] sm:$0xff]
      %v4777 = vld [vmem:[%s210 + $0xe68] sm:$0xff]
      %v4778 = vld [vmem:[%s210 + $0xe70] sm:$0xff]
      %v4779 = vld [vmem:[%s210 + $0xe78] sm:$0xff]
      %v4780 = vld [vmem:[%s210 + $0xe80] sm:$0xff]
      %v4781 = vld [vmem:[%s210 + $0xe88] sm:$0xff]
      %v4782 = vld [vmem:[%s210 + $0xe90] sm:$0xff]
      %v4783 = vld [vmem:[%s210 + $0xe98] sm:$0xff]
      %v4784 = vld [vmem:[%s210 + $0xea0] sm:$0xff]
      %v4785 = vld [vmem:[%s210 + $0xea8] sm:$0xff]
      %v4786 = vld [vmem:[%s210 + $0xeb0] sm:$0xff]
      %v4787 = vld [vmem:[%s210 + $0xeb8] sm:$0xff]
      %v4788 = vld [vmem:[%s210 + $0xec0] sm:$0xff]
      %v4789 = vld [vmem:[%s210 + $0xec8] sm:$0xff]
      %v4790 = vld [vmem:[%s210 + $0xed0] sm:$0xff]
      %v4791 = vld [vmem:[%s210 + $0xed8] sm:$0xff]
      %v4792 = vld [vmem:[%s210 + $0xee0] sm:$0xff]
      %v4793 = vld [vmem:[%s210 + $0xee8] sm:$0xff]
      %v4794 = vld [vmem:[%s210 + $0xef0] sm:$0xff]
      %v4795 = vld [vmem:[%s210 + $0xef8] sm:$0xff]
      %v4796 = vld [vmem:[%s210 + $0xf00] sm:$0xff]
      %v4797 = vld [vmem:[%s210 + $0xf08] sm:$0xff]
      %v4798 = vld [vmem:[%s210 + $0xf10] sm:$0xff]
      %v4799 = vld [vmem:[%s210 + $0xf18] sm:$0xff]
      %v4800 = vld [vmem:[%s210 + $0xf20] sm:$0xff]
      %v4801 = vld [vmem:[%s210 + $0xf28] sm:$0xff]
      %v4802 = vld [vmem:[%s210 + $0xf30] sm:$0xff]
      %v4803 = vld [vmem:[%s210 + $0xf38] sm:$0xff]
      %v4804 = vld [vmem:[%s210 + $0xf40] sm:$0xff]
      %v4805 = vld [vmem:[%s210 + $0xf48] sm:$0xff]
      %v4806 = vld [vmem:[%s210 + $0xf50] sm:$0xff]
      %v4807 = vld [vmem:[%s210 + $0xf58] sm:$0xff]
      %v4808 = vld [vmem:[%s210 + $0xf60] sm:$0xff]
      %v4809 = vld [vmem:[%s210 + $0xf68] sm:$0xff]
      %v4810 = vld [vmem:[%s210 + $0xf70] sm:$0xff]
      %v4811 = vld [vmem:[%s210 + $0xf78] sm:$0xff]
      %v4812 = vld [vmem:[%s210 + $0xf80] sm:$0xff]
      %v4813 = vld [vmem:[%s210 + $0xf88] sm:$0xff]
      %v4814 = vld [vmem:[%s210 + $0xf90] sm:$0xff]
      %v4815 = vld [vmem:[%s210 + $0xf98] sm:$0xff]
      %v4816 = vld [vmem:[%s210 + $0xfa0] sm:$0xff]
      %v4817 = vld [vmem:[%s210 + $0xfa8] sm:$0xff]
      %v4818 = vld [vmem:[%s210 + $0xfb0] sm:$0xff]
      %v4819 = vld [vmem:[%s210 + $0xfb8] sm:$0xff]
      %v4820 = vld [vmem:[%s210 + $0xfc0] sm:$0xff]
      %v4821 = vld [vmem:[%s210 + $0xfc8] sm:$0xff]
      %v4822 = vld [vmem:[%s210 + $0xfd0] sm:$0xff]
      %v4823 = vld [vmem:[%s210 + $0xfd8] sm:$0xff]
      %v4824 = vld [vmem:[%s210 + $0xfe0] sm:$0xff]
      %v4825 = vld [vmem:[%s210 + $0xfe8] sm:$0xff]
      %v4826 = vld [vmem:[%s210 + $0xff0] sm:$0xff]
      %v4827 = vld [vmem:[%s210 + $0xff8] sm:$0xff]
      %5340 = vrot.lane.b32.xlu0 %v4316, 56
      %v5341 = vpop.permute.xlu0 %5340
      %5342 = vrot.lane.b32.xlu0 %v4317, 56
      %v5343 = vpop.permute.xlu0 %5342
      %5344 = vrot.lane.b32.xlu0 %v4318, 56
      %v5345 = vpop.permute.xlu0 %5344
      %5346 = vrot.lane.b32.xlu0 %v4319, 56
      %v5347 = vpop.permute.xlu0 %5346
      %5348 = vrot.lane.b32.xlu0 %v4320, 56
      %v5349 = vpop.permute.xlu0 %5348
      %5350 = vrot.lane.b32.xlu0 %v4321, 56
      %v5351 = vpop.permute.xlu0 %5350
      %5352 = vrot.lane.b32.xlu0 %v4322, 56
      %v5353 = vpop.permute.xlu0 %5352
      %5354 = vrot.lane.b32.xlu0 %v4323, 56
      %v5355 = vpop.permute.xlu0 %5354
      %5356 = vrot.lane.b32.xlu0 %v4324, 56
      %v5357 = vpop.permute.xlu0 %5356
      %5358 = vrot.lane.b32.xlu0 %v4325, 56
      %v5359 = vpop.permute.xlu0 %5358
      %5360 = vrot.lane.b32.xlu0 %v4326, 56
      %v5361 = vpop.permute.xlu0 %5360
      %5362 = vrot.lane.b32.xlu0 %v4327, 56
      %v5363 = vpop.permute.xlu0 %5362
      %5364 = vrot.lane.b32.xlu0 %v4328, 56
      %v5365 = vpop.permute.xlu0 %5364
      %5366 = vrot.lane.b32.xlu0 %v4329, 56
      %v5367 = vpop.permute.xlu0 %5366
      %5368 = vrot.lane.b32.xlu0 %v4330, 56
      %v5369 = vpop.permute.xlu0 %5368
      %5370 = vrot.lane.b32.xlu0 %v4331, 56
      %v5371 = vpop.permute.xlu0 %5370
      %5372 = vrot.lane.b32.xlu0 %v4332, 56
      %v5373 = vpop.permute.xlu0 %5372
      %5374 = vrot.lane.b32.xlu0 %v4333, 56
      %v5375 = vpop.permute.xlu0 %5374
      %5376 = vrot.lane.b32.xlu0 %v4334, 56
      %v5377 = vpop.permute.xlu0 %5376
      %5378 = vrot.lane.b32.xlu0 %v4335, 56
      %v5379 = vpop.permute.xlu0 %5378
      %5380 = vrot.lane.b32.xlu0 %v4336, 56
      %v5381 = vpop.permute.xlu0 %5380
      %5382 = vrot.lane.b32.xlu0 %v4337, 56
      %v5383 = vpop.permute.xlu0 %5382
      %5384 = vrot.lane.b32.xlu0 %v4338, 56
      %v5385 = vpop.permute.xlu0 %5384
      %5386 = vrot.lane.b32.xlu0 %v4339, 56
      %v5387 = vpop.permute.xlu0 %5386
      %5388 = vrot.lane.b32.xlu0 %v4340, 56
      %v5389 = vpop.permute.xlu0 %5388
      %5390 = vrot.lane.b32.xlu0 %v4341, 56
      %v5391 = vpop.permute.xlu0 %5390
      %5392 = vrot.lane.b32.xlu0 %v4342, 56
      %v5393 = vpop.permute.xlu0 %5392
      %5394 = vrot.lane.b32.xlu0 %v4343, 56
      %v5395 = vpop.permute.xlu0 %5394
      %5396 = vrot.lane.b32.xlu0 %v4344, 56
      %v5397 = vpop.permute.xlu0 %5396
      %5398 = vrot.lane.b32.xlu0 %v4345, 56
      %v5399 = vpop.permute.xlu0 %5398
      %5400 = vrot.lane.b32.xlu0 %v4346, 56
      %v5401 = vpop.permute.xlu0 %5400
      %5402 = vrot.lane.b32.xlu0 %v4347, 56
      %v5403 = vpop.permute.xlu0 %5402
      %5404 = vrot.lane.b32.xlu0 %v4348, 56
      %v5405 = vpop.permute.xlu0 %5404
      %5406 = vrot.lane.b32.xlu0 %v4349, 56
      %v5407 = vpop.permute.xlu0 %5406
      %5408 = vrot.lane.b32.xlu0 %v4350, 56
      %v5409 = vpop.permute.xlu0 %5408
      %5410 = vrot.lane.b32.xlu0 %v4351, 56
      %v5411 = vpop.permute.xlu0 %5410
      %5412 = vrot.lane.b32.xlu0 %v4352, 56
      %v5413 = vpop.permute.xlu0 %5412
      %5414 = vrot.lane.b32.xlu0 %v4353, 56
      %v5415 = vpop.permute.xlu0 %5414
      %5416 = vrot.lane.b32.xlu0 %v4354, 56
      %v5417 = vpop.permute.xlu0 %5416
      %5418 = vrot.lane.b32.xlu0 %v4355, 56
      %v5419 = vpop.permute.xlu0 %5418
      %5420 = vrot.lane.b32.xlu0 %v4356, 56
      %v5421 = vpop.permute.xlu0 %5420
      %5422 = vrot.lane.b32.xlu0 %v4357, 56
      %v5423 = vpop.permute.xlu0 %5422
      %5424 = vrot.lane.b32.xlu0 %v4358, 56
      %v5425 = vpop.permute.xlu0 %5424
      %5426 = vrot.lane.b32.xlu0 %v4359, 56
      %v5427 = vpop.permute.xlu0 %5426
      %5428 = vrot.lane.b32.xlu0 %v4360, 56
      %v5429 = vpop.permute.xlu0 %5428
      %5430 = vrot.lane.b32.xlu0 %v4361, 56
      %v5431 = vpop.permute.xlu0 %5430
      %5432 = vrot.lane.b32.xlu0 %v4362, 56
      %v5433 = vpop.permute.xlu0 %5432
      %5434 = vrot.lane.b32.xlu0 %v4363, 56
      %v5435 = vpop.permute.xlu0 %5434
      %5436 = vrot.lane.b32.xlu0 %v4364, 56
      %v5437 = vpop.permute.xlu0 %5436
      %5438 = vrot.lane.b32.xlu0 %v4365, 56
      %v5439 = vpop.permute.xlu0 %5438
      %5440 = vrot.lane.b32.xlu0 %v4366, 56
      %v5441 = vpop.permute.xlu0 %5440
      %5442 = vrot.lane.b32.xlu0 %v4367, 56
      %v5443 = vpop.permute.xlu0 %5442
      %5444 = vrot.lane.b32.xlu0 %v4368, 56
      %v5445 = vpop.permute.xlu0 %5444
      %5446 = vrot.lane.b32.xlu0 %v4369, 56
      %v5447 = vpop.permute.xlu0 %5446
      %5448 = vrot.lane.b32.xlu0 %v4370, 56
      %v5449 = vpop.permute.xlu0 %5448
      %5450 = vrot.lane.b32.xlu0 %v4371, 56
      %v5451 = vpop.permute.xlu0 %5450
      %5452 = vrot.lane.b32.xlu0 %v4372, 56
      %v5453 = vpop.permute.xlu0 %5452
      %5454 = vrot.lane.b32.xlu0 %v4373, 56
      %v5455 = vpop.permute.xlu0 %5454
      %5456 = vrot.lane.b32.xlu0 %v4374, 56
      %v5457 = vpop.permute.xlu0 %5456
      %5458 = vrot.lane.b32.xlu0 %v4375, 56
      %v5459 = vpop.permute.xlu0 %5458
      %5460 = vrot.lane.b32.xlu0 %v4376, 56
      %v5461 = vpop.permute.xlu0 %5460
      %5462 = vrot.lane.b32.xlu0 %v4377, 56
      %v5463 = vpop.permute.xlu0 %5462
      %5464 = vrot.lane.b32.xlu0 %v4378, 56
      %v5465 = vpop.permute.xlu0 %5464
      %5466 = vrot.lane.b32.xlu0 %v4379, 56
      %v5467 = vpop.permute.xlu0 %5466
      %5468 = vrot.lane.b32.xlu0 %v4380, 56
      %v5469 = vpop.permute.xlu0 %5468
      %5470 = vrot.lane.b32.xlu0 %v4381, 56
      %v5471 = vpop.permute.xlu0 %5470
      %5472 = vrot.lane.b32.xlu0 %v4382, 56
      %v5473 = vpop.permute.xlu0 %5472
      %5474 = vrot.lane.b32.xlu0 %v4383, 56
      %v5475 = vpop.permute.xlu0 %5474
      %5476 = vrot.lane.b32.xlu0 %v4384, 56
      %v5477 = vpop.permute.xlu0 %5476
      %5478 = vrot.lane.b32.xlu0 %v4385, 56
      %v5479 = vpop.permute.xlu0 %5478
      %5480 = vrot.lane.b32.xlu0 %v4386, 56
      %v5481 = vpop.permute.xlu0 %5480
      %5482 = vrot.lane.b32.xlu0 %v4387, 56
      %v5483 = vpop.permute.xlu0 %5482
      %5484 = vrot.lane.b32.xlu0 %v4388, 56
      %v5485 = vpop.permute.xlu0 %5484
      %5486 = vrot.lane.b32.xlu0 %v4389, 56
      %v5487 = vpop.permute.xlu0 %5486
      %5488 = vrot.lane.b32.xlu0 %v4390, 56
      %v5489 = vpop.permute.xlu0 %5488
      %5490 = vrot.lane.b32.xlu0 %v4391, 56
      %v5491 = vpop.permute.xlu0 %5490
      %5492 = vrot.lane.b32.xlu0 %v4392, 56
      %v5493 = vpop.permute.xlu0 %5492
      %5494 = vrot.lane.b32.xlu0 %v4393, 56
      %v5495 = vpop.permute.xlu0 %5494
      %5496 = vrot.lane.b32.xlu0 %v4394, 56
      %v5497 = vpop.permute.xlu0 %5496
      %5498 = vrot.lane.b32.xlu0 %v4395, 56
      %v5499 = vpop.permute.xlu0 %5498
      %5500 = vrot.lane.b32.xlu0 %v4396, 56
      %v5501 = vpop.permute.xlu0 %5500
      %5502 = vrot.lane.b32.xlu0 %v4397, 56
      %v5503 = vpop.permute.xlu0 %5502
      %5504 = vrot.lane.b32.xlu0 %v4398, 56
      %v5505 = vpop.permute.xlu0 %5504
      %5506 = vrot.lane.b32.xlu0 %v4399, 56
      %v5507 = vpop.permute.xlu0 %5506
      %5508 = vrot.lane.b32.xlu0 %v4400, 56
      %v5509 = vpop.permute.xlu0 %5508
      %5510 = vrot.lane.b32.xlu0 %v4401, 56
      %v5511 = vpop.permute.xlu0 %5510
      %5512 = vrot.lane.b32.xlu0 %v4402, 56
      %v5513 = vpop.permute.xlu0 %5512
      %5514 = vrot.lane.b32.xlu0 %v4403, 56
      %v5515 = vpop.permute.xlu0 %5514
      %5516 = vrot.lane.b32.xlu0 %v4404, 56
      %v5517 = vpop.permute.xlu0 %5516
      %5518 = vrot.lane.b32.xlu0 %v4405, 56
      %v5519 = vpop.permute.xlu0 %5518
      %5520 = vrot.lane.b32.xlu0 %v4406, 56
      %v5521 = vpop.permute.xlu0 %5520
      %5522 = vrot.lane.b32.xlu0 %v4407, 56
      %v5523 = vpop.permute.xlu0 %5522
      %5524 = vrot.lane.b32.xlu0 %v4408, 56
      %v5525 = vpop.permute.xlu0 %5524
      %5526 = vrot.lane.b32.xlu0 %v4409, 56
      %v5527 = vpop.permute.xlu0 %5526
      %5528 = vrot.lane.b32.xlu0 %v4410, 56
      %v5529 = vpop.permute.xlu0 %5528
      %5530 = vrot.lane.b32.xlu0 %v4411, 56
      %v5531 = vpop.permute.xlu0 %5530
      %5532 = vrot.lane.b32.xlu0 %v4412, 56
      %v5533 = vpop.permute.xlu0 %5532
      %5534 = vrot.lane.b32.xlu0 %v4413, 56
      %v5535 = vpop.permute.xlu0 %5534
      %5536 = vrot.lane.b32.xlu0 %v4414, 56
      %v5537 = vpop.permute.xlu0 %5536
      %5538 = vrot.lane.b32.xlu0 %v4415, 56
      %v5539 = vpop.permute.xlu0 %5538
      %5540 = vrot.lane.b32.xlu0 %v4416, 56
      %v5541 = vpop.permute.xlu0 %5540
      %5542 = vrot.lane.b32.xlu0 %v4417, 56
      %v5543 = vpop.permute.xlu0 %5542
      %5544 = vrot.lane.b32.xlu0 %v4418, 56
      %v5545 = vpop.permute.xlu0 %5544
      %5546 = vrot.lane.b32.xlu0 %v4419, 56
      %v5547 = vpop.permute.xlu0 %5546
      %5548 = vrot.lane.b32.xlu0 %v4420, 56
      %v5549 = vpop.permute.xlu0 %5548
      %5550 = vrot.lane.b32.xlu0 %v4421, 56
      %v5551 = vpop.permute.xlu0 %5550
      %5552 = vrot.lane.b32.xlu0 %v4422, 56
      %v5553 = vpop.permute.xlu0 %5552
      %5554 = vrot.lane.b32.xlu0 %v4423, 56
      %v5555 = vpop.permute.xlu0 %5554
      %5556 = vrot.lane.b32.xlu0 %v4424, 56
      %v5557 = vpop.permute.xlu0 %5556
      %5558 = vrot.lane.b32.xlu0 %v4425, 56
      %v5559 = vpop.permute.xlu0 %5558
      %5560 = vrot.lane.b32.xlu0 %v4426, 56
      %v5561 = vpop.permute.xlu0 %5560
      %5562 = vrot.lane.b32.xlu0 %v4427, 56
      %v5563 = vpop.permute.xlu0 %5562
      %5564 = vrot.lane.b32.xlu0 %v4428, 56
      %v5565 = vpop.permute.xlu0 %5564
      %5566 = vrot.lane.b32.xlu0 %v4429, 56
      %v5567 = vpop.permute.xlu0 %5566
      %5568 = vrot.lane.b32.xlu0 %v4430, 56
      %v5569 = vpop.permute.xlu0 %5568
      %5570 = vrot.lane.b32.xlu0 %v4431, 56
      %v5571 = vpop.permute.xlu0 %5570
      %5572 = vrot.lane.b32.xlu0 %v4432, 56
      %v5573 = vpop.permute.xlu0 %5572
      %5574 = vrot.lane.b32.xlu0 %v4433, 56
      %v5575 = vpop.permute.xlu0 %5574
      %5576 = vrot.lane.b32.xlu0 %v4434, 56
      %v5577 = vpop.permute.xlu0 %5576
      %5578 = vrot.lane.b32.xlu0 %v4435, 56
      %v5579 = vpop.permute.xlu0 %5578
      %5580 = vrot.lane.b32.xlu0 %v4436, 56
      %v5581 = vpop.permute.xlu0 %5580
      %5582 = vrot.lane.b32.xlu0 %v4437, 56
      %v5583 = vpop.permute.xlu0 %5582
      %5584 = vrot.lane.b32.xlu0 %v4438, 56
      %v5585 = vpop.permute.xlu0 %5584
      %5586 = vrot.lane.b32.xlu0 %v4439, 56
      %v5587 = vpop.permute.xlu0 %5586
      %5588 = vrot.lane.b32.xlu0 %v4440, 56
      %v5589 = vpop.permute.xlu0 %5588
      %5590 = vrot.lane.b32.xlu0 %v4441, 56
      %v5591 = vpop.permute.xlu0 %5590
      %5592 = vrot.lane.b32.xlu0 %v4442, 56
      %v5593 = vpop.permute.xlu0 %5592
      %5594 = vrot.lane.b32.xlu0 %v4443, 56
      %v5595 = vpop.permute.xlu0 %5594
      %5596 = vrot.lane.b32.xlu0 %v4444, 56
      %v5597 = vpop.permute.xlu0 %5596
      %5598 = vrot.lane.b32.xlu0 %v4445, 56
      %v5599 = vpop.permute.xlu0 %5598
      %5600 = vrot.lane.b32.xlu0 %v4446, 56
      %v5601 = vpop.permute.xlu0 %5600
      %5602 = vrot.lane.b32.xlu0 %v4447, 56
      %v5603 = vpop.permute.xlu0 %5602
      %5604 = vrot.lane.b32.xlu0 %v4448, 56
      %v5605 = vpop.permute.xlu0 %5604
      %5606 = vrot.lane.b32.xlu0 %v4449, 56
      %v5607 = vpop.permute.xlu0 %5606
      %5608 = vrot.lane.b32.xlu0 %v4450, 56
      %v5609 = vpop.permute.xlu0 %5608
      %5610 = vrot.lane.b32.xlu0 %v4451, 56
      %v5611 = vpop.permute.xlu0 %5610
      %5612 = vrot.lane.b32.xlu0 %v4452, 56
      %v5613 = vpop.permute.xlu0 %5612
      %5614 = vrot.lane.b32.xlu0 %v4453, 56
      %v5615 = vpop.permute.xlu0 %5614
      %5616 = vrot.lane.b32.xlu0 %v4454, 56
      %v5617 = vpop.permute.xlu0 %5616
      %5618 = vrot.lane.b32.xlu0 %v4455, 56
      %v5619 = vpop.permute.xlu0 %5618
      %5620 = vrot.lane.b32.xlu0 %v4456, 56
      %v5621 = vpop.permute.xlu0 %5620
      %5622 = vrot.lane.b32.xlu0 %v4457, 56
      %v5623 = vpop.permute.xlu0 %5622
      %5624 = vrot.lane.b32.xlu0 %v4458, 56
      %v5625 = vpop.permute.xlu0 %5624
      %5626 = vrot.lane.b32.xlu0 %v4459, 56
      %v5627 = vpop.permute.xlu0 %5626
      %5628 = vrot.lane.b32.xlu0 %v4460, 56
      %v5629 = vpop.permute.xlu0 %5628
      %5630 = vrot.lane.b32.xlu0 %v4461, 56
      %v5631 = vpop.permute.xlu0 %5630
      %5632 = vrot.lane.b32.xlu0 %v4462, 56
      %v5633 = vpop.permute.xlu0 %5632
      %5634 = vrot.lane.b32.xlu0 %v4463, 56
      %v5635 = vpop.permute.xlu0 %5634
      %5636 = vrot.lane.b32.xlu0 %v4464, 56
      %v5637 = vpop.permute.xlu0 %5636
      %5638 = vrot.lane.b32.xlu0 %v4465, 56
      %v5639 = vpop.permute.xlu0 %5638
      %5640 = vrot.lane.b32.xlu0 %v4466, 56
      %v5641 = vpop.permute.xlu0 %5640
      %5642 = vrot.lane.b32.xlu0 %v4467, 56
      %v5643 = vpop.permute.xlu0 %5642
      %5644 = vrot.lane.b32.xlu0 %v4468, 56
      %v5645 = vpop.permute.xlu0 %5644
      %5646 = vrot.lane.b32.xlu0 %v4469, 56
      %v5647 = vpop.permute.xlu0 %5646
      %5648 = vrot.lane.b32.xlu0 %v4470, 56
      %v5649 = vpop.permute.xlu0 %5648
      %5650 = vrot.lane.b32.xlu0 %v4471, 56
      %v5651 = vpop.permute.xlu0 %5650
      %5652 = vrot.lane.b32.xlu0 %v4472, 56
      %v5653 = vpop.permute.xlu0 %5652
      %5654 = vrot.lane.b32.xlu0 %v4473, 56
      %v5655 = vpop.permute.xlu0 %5654
      %5656 = vrot.lane.b32.xlu0 %v4474, 56
      %v5657 = vpop.permute.xlu0 %5656
      %5658 = vrot.lane.b32.xlu0 %v4475, 56
      %v5659 = vpop.permute.xlu0 %5658
      %5660 = vrot.lane.b32.xlu0 %v4476, 56
      %v5661 = vpop.permute.xlu0 %5660
      %5662 = vrot.lane.b32.xlu0 %v4477, 56
      %v5663 = vpop.permute.xlu0 %5662
      %5664 = vrot.lane.b32.xlu0 %v4478, 56
      %v5665 = vpop.permute.xlu0 %5664
      %5666 = vrot.lane.b32.xlu0 %v4479, 56
      %v5667 = vpop.permute.xlu0 %5666
      %5668 = vrot.lane.b32.xlu0 %v4480, 56
      %v5669 = vpop.permute.xlu0 %5668
      %5670 = vrot.lane.b32.xlu0 %v4481, 56
      %v5671 = vpop.permute.xlu0 %5670
      %5672 = vrot.lane.b32.xlu0 %v4482, 56
      %v5673 = vpop.permute.xlu0 %5672
      %5674 = vrot.lane.b32.xlu0 %v4483, 56
      %v5675 = vpop.permute.xlu0 %5674
      %5676 = vrot.lane.b32.xlu0 %v4484, 56
      %v5677 = vpop.permute.xlu0 %5676
      %5678 = vrot.lane.b32.xlu0 %v4485, 56
      %v5679 = vpop.permute.xlu0 %5678
      %5680 = vrot.lane.b32.xlu0 %v4486, 56
      %v5681 = vpop.permute.xlu0 %5680
      %5682 = vrot.lane.b32.xlu0 %v4487, 56
      %v5683 = vpop.permute.xlu0 %5682
      %5684 = vrot.lane.b32.xlu0 %v4488, 56
      %v5685 = vpop.permute.xlu0 %5684
      %5686 = vrot.lane.b32.xlu0 %v4489, 56
      %v5687 = vpop.permute.xlu0 %5686
      %5688 = vrot.lane.b32.xlu0 %v4490, 56
      %v5689 = vpop.permute.xlu0 %5688
      %5690 = vrot.lane.b32.xlu0 %v4491, 56
      %v5691 = vpop.permute.xlu0 %5690
      %5692 = vrot.lane.b32.xlu0 %v4492, 56
      %v5693 = vpop.permute.xlu0 %5692
      %5694 = vrot.lane.b32.xlu0 %v4493, 56
      %v5695 = vpop.permute.xlu0 %5694
      %5696 = vrot.lane.b32.xlu0 %v4494, 56
      %v5697 = vpop.permute.xlu0 %5696
      %5698 = vrot.lane.b32.xlu0 %v4495, 56
      %v5699 = vpop.permute.xlu0 %5698
      %5700 = vrot.lane.b32.xlu0 %v4496, 56
      %v5701 = vpop.permute.xlu0 %5700
      %5702 = vrot.lane.b32.xlu0 %v4497, 56
      %v5703 = vpop.permute.xlu0 %5702
      %5704 = vrot.lane.b32.xlu0 %v4498, 56
      %v5705 = vpop.permute.xlu0 %5704
      %5706 = vrot.lane.b32.xlu0 %v4499, 56
      %v5707 = vpop.permute.xlu0 %5706
      %5708 = vrot.lane.b32.xlu0 %v4500, 56
      %v5709 = vpop.permute.xlu0 %5708
      %5710 = vrot.lane.b32.xlu0 %v4501, 56
      %v5711 = vpop.permute.xlu0 %5710
      %5712 = vrot.lane.b32.xlu0 %v4502, 56
      %v5713 = vpop.permute.xlu0 %5712
      %5714 = vrot.lane.b32.xlu0 %v4503, 56
      %v5715 = vpop.permute.xlu0 %5714
      %5716 = vrot.lane.b32.xlu0 %v4504, 56
      %v5717 = vpop.permute.xlu0 %5716
      %5718 = vrot.lane.b32.xlu0 %v4505, 56
      %v5719 = vpop.permute.xlu0 %5718
      %5720 = vrot.lane.b32.xlu0 %v4506, 56
      %v5721 = vpop.permute.xlu0 %5720
      %5722 = vrot.lane.b32.xlu0 %v4507, 56
      %v5723 = vpop.permute.xlu0 %5722
      %5724 = vrot.lane.b32.xlu0 %v4508, 56
      %v5725 = vpop.permute.xlu0 %5724
      %5726 = vrot.lane.b32.xlu0 %v4509, 56
      %v5727 = vpop.permute.xlu0 %5726
      %5728 = vrot.lane.b32.xlu0 %v4510, 56
      %v5729 = vpop.permute.xlu0 %5728
      %5730 = vrot.lane.b32.xlu0 %v4511, 56
      %v5731 = vpop.permute.xlu0 %5730
      %5732 = vrot.lane.b32.xlu0 %v4512, 56
      %v5733 = vpop.permute.xlu0 %5732
      %5734 = vrot.lane.b32.xlu0 %v4513, 56
      %v5735 = vpop.permute.xlu0 %5734
      %5736 = vrot.lane.b32.xlu0 %v4514, 56
      %v5737 = vpop.permute.xlu0 %5736
      %5738 = vrot.lane.b32.xlu0 %v4515, 56
      %v5739 = vpop.permute.xlu0 %5738
      %5740 = vrot.lane.b32.xlu0 %v4516, 56
      %v5741 = vpop.permute.xlu0 %5740
      %5742 = vrot.lane.b32.xlu0 %v4517, 56
      %v5743 = vpop.permute.xlu0 %5742
      %5744 = vrot.lane.b32.xlu0 %v4518, 56
      %v5745 = vpop.permute.xlu0 %5744
      %5746 = vrot.lane.b32.xlu0 %v4519, 56
      %v5747 = vpop.permute.xlu0 %5746
      %5748 = vrot.lane.b32.xlu0 %v4520, 56
      %v5749 = vpop.permute.xlu0 %5748
      %5750 = vrot.lane.b32.xlu0 %v4521, 56
      %v5751 = vpop.permute.xlu0 %5750
      %5752 = vrot.lane.b32.xlu0 %v4522, 56
      %v5753 = vpop.permute.xlu0 %5752
      %5754 = vrot.lane.b32.xlu0 %v4523, 56
      %v5755 = vpop.permute.xlu0 %5754
      %5756 = vrot.lane.b32.xlu0 %v4524, 56
      %v5757 = vpop.permute.xlu0 %5756
      %5758 = vrot.lane.b32.xlu0 %v4525, 56
      %v5759 = vpop.permute.xlu0 %5758
      %5760 = vrot.lane.b32.xlu0 %v4526, 56
      %v5761 = vpop.permute.xlu0 %5760
      %5762 = vrot.lane.b32.xlu0 %v4527, 56
      %v5763 = vpop.permute.xlu0 %5762
      %5764 = vrot.lane.b32.xlu0 %v4528, 56
      %v5765 = vpop.permute.xlu0 %5764
      %5766 = vrot.lane.b32.xlu0 %v4529, 56
      %v5767 = vpop.permute.xlu0 %5766
      %5768 = vrot.lane.b32.xlu0 %v4530, 56
      %v5769 = vpop.permute.xlu0 %5768
      %5770 = vrot.lane.b32.xlu0 %v4531, 56
      %v5771 = vpop.permute.xlu0 %5770
      %5772 = vrot.lane.b32.xlu0 %v4532, 56
      %v5773 = vpop.permute.xlu0 %5772
      %5774 = vrot.lane.b32.xlu0 %v4533, 56
      %v5775 = vpop.permute.xlu0 %5774
      %5776 = vrot.lane.b32.xlu0 %v4534, 56
      %v5777 = vpop.permute.xlu0 %5776
      %5778 = vrot.lane.b32.xlu0 %v4535, 56
      %v5779 = vpop.permute.xlu0 %5778
      %5780 = vrot.lane.b32.xlu0 %v4536, 56
      %v5781 = vpop.permute.xlu0 %5780
      %5782 = vrot.lane.b32.xlu0 %v4537, 56
      %v5783 = vpop.permute.xlu0 %5782
      %5784 = vrot.lane.b32.xlu0 %v4538, 56
      %v5785 = vpop.permute.xlu0 %5784
      %5786 = vrot.lane.b32.xlu0 %v4539, 56
      %v5787 = vpop.permute.xlu0 %5786
      %5788 = vrot.lane.b32.xlu0 %v4540, 56
      %v5789 = vpop.permute.xlu0 %5788
      %5790 = vrot.lane.b32.xlu0 %v4541, 56
      %v5791 = vpop.permute.xlu0 %5790
      %5792 = vrot.lane.b32.xlu0 %v4542, 56
      %v5793 = vpop.permute.xlu0 %5792
      %5794 = vrot.lane.b32.xlu0 %v4543, 56
      %v5795 = vpop.permute.xlu0 %5794
      %5796 = vrot.lane.b32.xlu0 %v4544, 56
      %v5797 = vpop.permute.xlu0 %5796
      %5798 = vrot.lane.b32.xlu0 %v4545, 56
      %v5799 = vpop.permute.xlu0 %5798
      %5800 = vrot.lane.b32.xlu0 %v4546, 56
      %v5801 = vpop.permute.xlu0 %5800
      %5802 = vrot.lane.b32.xlu0 %v4547, 56
      %v5803 = vpop.permute.xlu0 %5802
      %5804 = vrot.lane.b32.xlu0 %v4548, 56
      %v5805 = vpop.permute.xlu0 %5804
      %5806 = vrot.lane.b32.xlu0 %v4549, 56
      %v5807 = vpop.permute.xlu0 %5806
      %5808 = vrot.lane.b32.xlu0 %v4550, 56
      %v5809 = vpop.permute.xlu0 %5808
      %5810 = vrot.lane.b32.xlu0 %v4551, 56
      %v5811 = vpop.permute.xlu0 %5810
      %5812 = vrot.lane.b32.xlu0 %v4552, 56
      %v5813 = vpop.permute.xlu0 %5812
      %5814 = vrot.lane.b32.xlu0 %v4553, 56
      %v5815 = vpop.permute.xlu0 %5814
      %5816 = vrot.lane.b32.xlu0 %v4554, 56
      %v5817 = vpop.permute.xlu0 %5816
      %5818 = vrot.lane.b32.xlu0 %v4555, 56
      %v5819 = vpop.permute.xlu0 %5818
      %5820 = vrot.lane.b32.xlu0 %v4556, 56
      %v5821 = vpop.permute.xlu0 %5820
      %5822 = vrot.lane.b32.xlu0 %v4557, 56
      %v5823 = vpop.permute.xlu0 %5822
      %5824 = vrot.lane.b32.xlu0 %v4558, 56
      %v5825 = vpop.permute.xlu0 %5824
      %5826 = vrot.lane.b32.xlu0 %v4559, 56
      %v5827 = vpop.permute.xlu0 %5826
      %5828 = vrot.lane.b32.xlu0 %v4560, 56
      %v5829 = vpop.permute.xlu0 %5828
      %5830 = vrot.lane.b32.xlu0 %v4561, 56
      %v5831 = vpop.permute.xlu0 %5830
      %5832 = vrot.lane.b32.xlu0 %v4562, 56
      %v5833 = vpop.permute.xlu0 %5832
      %5834 = vrot.lane.b32.xlu0 %v4563, 56
      %v5835 = vpop.permute.xlu0 %5834
      %5836 = vrot.lane.b32.xlu0 %v4564, 56
      %v5837 = vpop.permute.xlu0 %5836
      %5838 = vrot.lane.b32.xlu0 %v4565, 56
      %v5839 = vpop.permute.xlu0 %5838
      %5840 = vrot.lane.b32.xlu0 %v4566, 56
      %v5841 = vpop.permute.xlu0 %5840
      %5842 = vrot.lane.b32.xlu0 %v4567, 56
      %v5843 = vpop.permute.xlu0 %5842
      %5844 = vrot.lane.b32.xlu0 %v4568, 56
      %v5845 = vpop.permute.xlu0 %5844
      %5846 = vrot.lane.b32.xlu0 %v4569, 56
      %v5847 = vpop.permute.xlu0 %5846
      %5848 = vrot.lane.b32.xlu0 %v4570, 56
      %v5849 = vpop.permute.xlu0 %5848
      %5850 = vrot.lane.b32.xlu0 %v4571, 56
      %v5851 = vpop.permute.xlu0 %5850
      %5852 = vrot.lane.b32.xlu0 %v4572, 56
      %v5853 = vpop.permute.xlu0 %5852
      %5854 = vrot.lane.b32.xlu0 %v4573, 56
      %v5855 = vpop.permute.xlu0 %5854
      %5856 = vrot.lane.b32.xlu0 %v4574, 56
      %v5857 = vpop.permute.xlu0 %5856
      %5858 = vrot.lane.b32.xlu0 %v4575, 56
      %v5859 = vpop.permute.xlu0 %5858
      %5860 = vrot.lane.b32.xlu0 %v4576, 56
      %v5861 = vpop.permute.xlu0 %5860
      %5862 = vrot.lane.b32.xlu0 %v4577, 56
      %v5863 = vpop.permute.xlu0 %5862
      %5864 = vrot.lane.b32.xlu0 %v4578, 56
      %v5865 = vpop.permute.xlu0 %5864
      %5866 = vrot.lane.b32.xlu0 %v4579, 56
      %v5867 = vpop.permute.xlu0 %5866
      %5868 = vrot.lane.b32.xlu0 %v4580, 56
      %v5869 = vpop.permute.xlu0 %5868
      %5870 = vrot.lane.b32.xlu0 %v4581, 56
      %v5871 = vpop.permute.xlu0 %5870
      %5872 = vrot.lane.b32.xlu0 %v4582, 56
      %v5873 = vpop.permute.xlu0 %5872
      %5874 = vrot.lane.b32.xlu0 %v4583, 56
      %v5875 = vpop.permute.xlu0 %5874
      %5876 = vrot.lane.b32.xlu0 %v4584, 56
      %v5877 = vpop.permute.xlu0 %5876
      %5878 = vrot.lane.b32.xlu0 %v4585, 56
      %v5879 = vpop.permute.xlu0 %5878
      %5880 = vrot.lane.b32.xlu0 %v4586, 56
      %v5881 = vpop.permute.xlu0 %5880
      %5882 = vrot.lane.b32.xlu0 %v4587, 56
      %v5883 = vpop.permute.xlu0 %5882
      %5884 = vrot.lane.b32.xlu0 %v4588, 56
      %v5885 = vpop.permute.xlu0 %5884
      %5886 = vrot.lane.b32.xlu0 %v4589, 56
      %v5887 = vpop.permute.xlu0 %5886
      %5888 = vrot.lane.b32.xlu0 %v4590, 56
      %v5889 = vpop.permute.xlu0 %5888
      %5890 = vrot.lane.b32.xlu0 %v4591, 56
      %v5891 = vpop.permute.xlu0 %5890
      %5892 = vrot.lane.b32.xlu0 %v4592, 56
      %v5893 = vpop.permute.xlu0 %5892
      %5894 = vrot.lane.b32.xlu0 %v4593, 56
      %v5895 = vpop.permute.xlu0 %5894
      %5896 = vrot.lane.b32.xlu0 %v4594, 56
      %v5897 = vpop.permute.xlu0 %5896
      %5898 = vrot.lane.b32.xlu0 %v4595, 56
      %v5899 = vpop.permute.xlu0 %5898
      %5900 = vrot.lane.b32.xlu0 %v4596, 56
      %v5901 = vpop.permute.xlu0 %5900
      %5902 = vrot.lane.b32.xlu0 %v4597, 56
      %v5903 = vpop.permute.xlu0 %5902
      %5904 = vrot.lane.b32.xlu0 %v4598, 56
      %v5905 = vpop.permute.xlu0 %5904
      %5906 = vrot.lane.b32.xlu0 %v4599, 56
      %v5907 = vpop.permute.xlu0 %5906
      %5908 = vrot.lane.b32.xlu0 %v4600, 56
      %v5909 = vpop.permute.xlu0 %5908
      %5910 = vrot.lane.b32.xlu0 %v4601, 56
      %v5911 = vpop.permute.xlu0 %5910
      %5912 = vrot.lane.b32.xlu0 %v4602, 56
      %v5913 = vpop.permute.xlu0 %5912
      %5914 = vrot.lane.b32.xlu0 %v4603, 56
      %v5915 = vpop.permute.xlu0 %5914
      %5916 = vrot.lane.b32.xlu0 %v4604, 56
      %v5917 = vpop.permute.xlu0 %5916
      %5918 = vrot.lane.b32.xlu0 %v4605, 56
      %v5919 = vpop.permute.xlu0 %5918
      %5920 = vrot.lane.b32.xlu0 %v4606, 56
      %v5921 = vpop.permute.xlu0 %5920
      %5922 = vrot.lane.b32.xlu0 %v4607, 56
      %v5923 = vpop.permute.xlu0 %5922
      %5924 = vrot.lane.b32.xlu0 %v4608, 56
      %v5925 = vpop.permute.xlu0 %5924
      %5926 = vrot.lane.b32.xlu0 %v4609, 56
      %v5927 = vpop.permute.xlu0 %5926
      %5928 = vrot.lane.b32.xlu0 %v4610, 56
      %v5929 = vpop.permute.xlu0 %5928
      %5930 = vrot.lane.b32.xlu0 %v4611, 56
      %v5931 = vpop.permute.xlu0 %5930
      %5932 = vrot.lane.b32.xlu0 %v4612, 56
      %v5933 = vpop.permute.xlu0 %5932
      %5934 = vrot.lane.b32.xlu0 %v4613, 56
      %v5935 = vpop.permute.xlu0 %5934
      %5936 = vrot.lane.b32.xlu0 %v4614, 56
      %v5937 = vpop.permute.xlu0 %5936
      %5938 = vrot.lane.b32.xlu0 %v4615, 56
      %v5939 = vpop.permute.xlu0 %5938
      %5940 = vrot.lane.b32.xlu0 %v4616, 56
      %v5941 = vpop.permute.xlu0 %5940
      %5942 = vrot.lane.b32.xlu0 %v4617, 56
      %v5943 = vpop.permute.xlu0 %5942
      %5944 = vrot.lane.b32.xlu0 %v4618, 56
      %v5945 = vpop.permute.xlu0 %5944
      %5946 = vrot.lane.b32.xlu0 %v4619, 56
      %v5947 = vpop.permute.xlu0 %5946
      %5948 = vrot.lane.b32.xlu0 %v4620, 56
      %v5949 = vpop.permute.xlu0 %5948
      %5950 = vrot.lane.b32.xlu0 %v4621, 56
      %v5951 = vpop.permute.xlu0 %5950
      %5952 = vrot.lane.b32.xlu0 %v4622, 56
      %v5953 = vpop.permute.xlu0 %5952
      %5954 = vrot.lane.b32.xlu0 %v4623, 56
      %v5955 = vpop.permute.xlu0 %5954
      %5956 = vrot.lane.b32.xlu0 %v4624, 56
      %v5957 = vpop.permute.xlu0 %5956
      %5958 = vrot.lane.b32.xlu0 %v4625, 56
      %v5959 = vpop.permute.xlu0 %5958
      %5960 = vrot.lane.b32.xlu0 %v4626, 56
      %v5961 = vpop.permute.xlu0 %5960
      %5962 = vrot.lane.b32.xlu0 %v4627, 56
      %v5963 = vpop.permute.xlu0 %5962
      %5964 = vrot.lane.b32.xlu0 %v4628, 56
      %v5965 = vpop.permute.xlu0 %5964
      %5966 = vrot.lane.b32.xlu0 %v4629, 56
      %v5967 = vpop.permute.xlu0 %5966
      %5968 = vrot.lane.b32.xlu0 %v4630, 56
      %v5969 = vpop.permute.xlu0 %5968
      %5970 = vrot.lane.b32.xlu0 %v4631, 56
      %v5971 = vpop.permute.xlu0 %5970
      %5972 = vrot.lane.b32.xlu0 %v4632, 56
      %v5973 = vpop.permute.xlu0 %5972
      %5974 = vrot.lane.b32.xlu0 %v4633, 56
      %v5975 = vpop.permute.xlu0 %5974
      %5976 = vrot.lane.b32.xlu0 %v4634, 56
      %v5977 = vpop.permute.xlu0 %5976
      %5978 = vrot.lane.b32.xlu0 %v4635, 56
      %v5979 = vpop.permute.xlu0 %5978
      %5980 = vrot.lane.b32.xlu0 %v4636, 56
      %v5981 = vpop.permute.xlu0 %5980
      %5982 = vrot.lane.b32.xlu0 %v4637, 56
      %v5983 = vpop.permute.xlu0 %5982
      %5984 = vrot.lane.b32.xlu0 %v4638, 56
      %v5985 = vpop.permute.xlu0 %5984
      %5986 = vrot.lane.b32.xlu0 %v4639, 56
      %v5987 = vpop.permute.xlu0 %5986
      %5988 = vrot.lane.b32.xlu0 %v4640, 56
      %v5989 = vpop.permute.xlu0 %5988
      %5990 = vrot.lane.b32.xlu0 %v4641, 56
      %v5991 = vpop.permute.xlu0 %5990
      %5992 = vrot.lane.b32.xlu0 %v4642, 56
      %v5993 = vpop.permute.xlu0 %5992
      %5994 = vrot.lane.b32.xlu0 %v4643, 56
      %v5995 = vpop.permute.xlu0 %5994
      %5996 = vrot.lane.b32.xlu0 %v4644, 56
      %v5997 = vpop.permute.xlu0 %5996
      %5998 = vrot.lane.b32.xlu0 %v4645, 56
      %v5999 = vpop.permute.xlu0 %5998
      %6000 = vrot.lane.b32.xlu0 %v4646, 56
      %v6001 = vpop.permute.xlu0 %6000
      %6002 = vrot.lane.b32.xlu0 %v4647, 56
      %v6003 = vpop.permute.xlu0 %6002
      %6004 = vrot.lane.b32.xlu0 %v4648, 56
      %v6005 = vpop.permute.xlu0 %6004
      %6006 = vrot.lane.b32.xlu0 %v4649, 56
      %v6007 = vpop.permute.xlu0 %6006
      %6008 = vrot.lane.b32.xlu0 %v4650, 56
      %v6009 = vpop.permute.xlu0 %6008
      %6010 = vrot.lane.b32.xlu0 %v4651, 56
      %v6011 = vpop.permute.xlu0 %6010
      %6012 = vrot.lane.b32.xlu0 %v4652, 56
      %v6013 = vpop.permute.xlu0 %6012
      %6014 = vrot.lane.b32.xlu0 %v4653, 56
      %v6015 = vpop.permute.xlu0 %6014
      %6016 = vrot.lane.b32.xlu0 %v4654, 56
      %v6017 = vpop.permute.xlu0 %6016
      %6018 = vrot.lane.b32.xlu0 %v4655, 56
      %v6019 = vpop.permute.xlu0 %6018
      %6020 = vrot.lane.b32.xlu0 %v4656, 56
      %v6021 = vpop.permute.xlu0 %6020
      %6022 = vrot.lane.b32.xlu0 %v4657, 56
      %v6023 = vpop.permute.xlu0 %6022
      %6024 = vrot.lane.b32.xlu0 %v4658, 56
      %v6025 = vpop.permute.xlu0 %6024
      %6026 = vrot.lane.b32.xlu0 %v4659, 56
      %v6027 = vpop.permute.xlu0 %6026
      %6028 = vrot.lane.b32.xlu0 %v4660, 56
      %v6029 = vpop.permute.xlu0 %6028
      %6030 = vrot.lane.b32.xlu0 %v4661, 56
      %v6031 = vpop.permute.xlu0 %6030
      %6032 = vrot.lane.b32.xlu0 %v4662, 56
      %v6033 = vpop.permute.xlu0 %6032
      %6034 = vrot.lane.b32.xlu0 %v4663, 56
      %v6035 = vpop.permute.xlu0 %6034
      %6036 = vrot.lane.b32.xlu0 %v4664, 56
      %v6037 = vpop.permute.xlu0 %6036
      %6038 = vrot.lane.b32.xlu0 %v4665, 56
      %v6039 = vpop.permute.xlu0 %6038
      %6040 = vrot.lane.b32.xlu0 %v4666, 56
      %v6041 = vpop.permute.xlu0 %6040
      %6042 = vrot.lane.b32.xlu0 %v4667, 56
      %v6043 = vpop.permute.xlu0 %6042
      %6044 = vrot.lane.b32.xlu0 %v4668, 56
      %v6045 = vpop.permute.xlu0 %6044
      %6046 = vrot.lane.b32.xlu0 %v4669, 56
      %v6047 = vpop.permute.xlu0 %6046
      %6048 = vrot.lane.b32.xlu0 %v4670, 56
      %v6049 = vpop.permute.xlu0 %6048
      %6050 = vrot.lane.b32.xlu0 %v4671, 56
      %v6051 = vpop.permute.xlu0 %6050
      %6052 = vrot.lane.b32.xlu0 %v4672, 56
      %v6053 = vpop.permute.xlu0 %6052
      %6054 = vrot.lane.b32.xlu0 %v4673, 56
      %v6055 = vpop.permute.xlu0 %6054
      %6056 = vrot.lane.b32.xlu0 %v4674, 56
      %v6057 = vpop.permute.xlu0 %6056
      %6058 = vrot.lane.b32.xlu0 %v4675, 56
      %v6059 = vpop.permute.xlu0 %6058
      %6060 = vrot.lane.b32.xlu0 %v4676, 56
      %v6061 = vpop.permute.xlu0 %6060
      %6062 = vrot.lane.b32.xlu0 %v4677, 56
      %v6063 = vpop.permute.xlu0 %6062
      %6064 = vrot.lane.b32.xlu0 %v4678, 56
      %v6065 = vpop.permute.xlu0 %6064
      %6066 = vrot.lane.b32.xlu0 %v4679, 56
      %v6067 = vpop.permute.xlu0 %6066
      %6068 = vrot.lane.b32.xlu0 %v4680, 56
      %v6069 = vpop.permute.xlu0 %6068
      %6070 = vrot.lane.b32.xlu0 %v4681, 56
      %v6071 = vpop.permute.xlu0 %6070
      %6072 = vrot.lane.b32.xlu0 %v4682, 56
      %v6073 = vpop.permute.xlu0 %6072
      %6074 = vrot.lane.b32.xlu0 %v4683, 56
      %v6075 = vpop.permute.xlu0 %6074
      %6076 = vrot.lane.b32.xlu0 %v4684, 56
      %v6077 = vpop.permute.xlu0 %6076
      %6078 = vrot.lane.b32.xlu0 %v4685, 56
      %v6079 = vpop.permute.xlu0 %6078
      %6080 = vrot.lane.b32.xlu0 %v4686, 56
      %v6081 = vpop.permute.xlu0 %6080
      %6082 = vrot.lane.b32.xlu0 %v4687, 56
      %v6083 = vpop.permute.xlu0 %6082
      %6084 = vrot.lane.b32.xlu0 %v4688, 56
      %v6085 = vpop.permute.xlu0 %6084
      %6086 = vrot.lane.b32.xlu0 %v4689, 56
      %v6087 = vpop.permute.xlu0 %6086
      %6088 = vrot.lane.b32.xlu0 %v4690, 56
      %v6089 = vpop.permute.xlu0 %6088
      %6090 = vrot.lane.b32.xlu0 %v4691, 56
      %v6091 = vpop.permute.xlu0 %6090
      %6092 = vrot.lane.b32.xlu0 %v4692, 56
      %v6093 = vpop.permute.xlu0 %6092
      %6094 = vrot.lane.b32.xlu0 %v4693, 56
      %v6095 = vpop.permute.xlu0 %6094
      %6096 = vrot.lane.b32.xlu0 %v4694, 56
      %v6097 = vpop.permute.xlu0 %6096
      %6098 = vrot.lane.b32.xlu0 %v4695, 56
      %v6099 = vpop.permute.xlu0 %6098
      %6100 = vrot.lane.b32.xlu0 %v4696, 56
      %v6101 = vpop.permute.xlu0 %6100
      %6102 = vrot.lane.b32.xlu0 %v4697, 56
      %v6103 = vpop.permute.xlu0 %6102
      %6104 = vrot.lane.b32.xlu0 %v4698, 56
      %v6105 = vpop.permute.xlu0 %6104
      %6106 = vrot.lane.b32.xlu0 %v4699, 56
      %v6107 = vpop.permute.xlu0 %6106
      %6108 = vrot.lane.b32.xlu0 %v4700, 56
      %v6109 = vpop.permute.xlu0 %6108
      %6110 = vrot.lane.b32.xlu0 %v4701, 56
      %v6111 = vpop.permute.xlu0 %6110
      %6112 = vrot.lane.b32.xlu0 %v4702, 56
      %v6113 = vpop.permute.xlu0 %6112
      %6114 = vrot.lane.b32.xlu0 %v4703, 56
      %v6115 = vpop.permute.xlu0 %6114
      %6116 = vrot.lane.b32.xlu0 %v4704, 56
      %v6117 = vpop.permute.xlu0 %6116
      %6118 = vrot.lane.b32.xlu0 %v4705, 56
      %v6119 = vpop.permute.xlu0 %6118
      %6120 = vrot.lane.b32.xlu0 %v4706, 56
      %v6121 = vpop.permute.xlu0 %6120
      %6122 = vrot.lane.b32.xlu0 %v4707, 56
      %v6123 = vpop.permute.xlu0 %6122
      %6124 = vrot.lane.b32.xlu0 %v4708, 56
      %v6125 = vpop.permute.xlu0 %6124
      %6126 = vrot.lane.b32.xlu0 %v4709, 56
      %v6127 = vpop.permute.xlu0 %6126
      %6128 = vrot.lane.b32.xlu0 %v4710, 56
      %v6129 = vpop.permute.xlu0 %6128
      %6130 = vrot.lane.b32.xlu0 %v4711, 56
      %v6131 = vpop.permute.xlu0 %6130
      %6132 = vrot.lane.b32.xlu0 %v4712, 56
      %v6133 = vpop.permute.xlu0 %6132
      %6134 = vrot.lane.b32.xlu0 %v4713, 56
      %v6135 = vpop.permute.xlu0 %6134
      %6136 = vrot.lane.b32.xlu0 %v4714, 56
      %v6137 = vpop.permute.xlu0 %6136
      %6138 = vrot.lane.b32.xlu0 %v4715, 56
      %v6139 = vpop.permute.xlu0 %6138
      %6140 = vrot.lane.b32.xlu0 %v4716, 56
      %v6141 = vpop.permute.xlu0 %6140
      %6142 = vrot.lane.b32.xlu0 %v4717, 56
      %v6143 = vpop.permute.xlu0 %6142
      %6144 = vrot.lane.b32.xlu0 %v4718, 56
      %v6145 = vpop.permute.xlu0 %6144
      %6146 = vrot.lane.b32.xlu0 %v4719, 56
      %v6147 = vpop.permute.xlu0 %6146
      %6148 = vrot.lane.b32.xlu0 %v4720, 56
      %v6149 = vpop.permute.xlu0 %6148
      %6150 = vrot.lane.b32.xlu0 %v4721, 56
      %v6151 = vpop.permute.xlu0 %6150
      %6152 = vrot.lane.b32.xlu0 %v4722, 56
      %v6153 = vpop.permute.xlu0 %6152
      %6154 = vrot.lane.b32.xlu0 %v4723, 56
      %v6155 = vpop.permute.xlu0 %6154
      %6156 = vrot.lane.b32.xlu0 %v4724, 56
      %v6157 = vpop.permute.xlu0 %6156
      %6158 = vrot.lane.b32.xlu0 %v4725, 56
      %v6159 = vpop.permute.xlu0 %6158
      %6160 = vrot.lane.b32.xlu0 %v4726, 56
      %v6161 = vpop.permute.xlu0 %6160
      %6162 = vrot.lane.b32.xlu0 %v4727, 56
      %v6163 = vpop.permute.xlu0 %6162
      %6164 = vrot.lane.b32.xlu0 %v4728, 56
      %v6165 = vpop.permute.xlu0 %6164
      %6166 = vrot.lane.b32.xlu0 %v4729, 56
      %v6167 = vpop.permute.xlu0 %6166
      %6168 = vrot.lane.b32.xlu0 %v4730, 56
      %v6169 = vpop.permute.xlu0 %6168
      %6170 = vrot.lane.b32.xlu0 %v4731, 56
      %v6171 = vpop.permute.xlu0 %6170
      %6172 = vrot.lane.b32.xlu0 %v4732, 56
      %v6173 = vpop.permute.xlu0 %6172
      %6174 = vrot.lane.b32.xlu0 %v4733, 56
      %v6175 = vpop.permute.xlu0 %6174
      %6176 = vrot.lane.b32.xlu0 %v4734, 56
      %v6177 = vpop.permute.xlu0 %6176
      %6178 = vrot.lane.b32.xlu0 %v4735, 56
      %v6179 = vpop.permute.xlu0 %6178
      %6180 = vrot.lane.b32.xlu0 %v4736, 56
      %v6181 = vpop.permute.xlu0 %6180
      %6182 = vrot.lane.b32.xlu0 %v4737, 56
      %v6183 = vpop.permute.xlu0 %6182
      %6184 = vrot.lane.b32.xlu0 %v4738, 56
      %v6185 = vpop.permute.xlu0 %6184
      %6186 = vrot.lane.b32.xlu0 %v4739, 56
      %v6187 = vpop.permute.xlu0 %6186
      %6188 = vrot.lane.b32.xlu0 %v4740, 56
      %v6189 = vpop.permute.xlu0 %6188
      %6190 = vrot.lane.b32.xlu0 %v4741, 56
      %v6191 = vpop.permute.xlu0 %6190
      %6192 = vrot.lane.b32.xlu0 %v4742, 56
      %v6193 = vpop.permute.xlu0 %6192
      %6194 = vrot.lane.b32.xlu0 %v4743, 56
      %v6195 = vpop.permute.xlu0 %6194
      %6196 = vrot.lane.b32.xlu0 %v4744, 56
      %v6197 = vpop.permute.xlu0 %6196
      %6198 = vrot.lane.b32.xlu0 %v4745, 56
      %v6199 = vpop.permute.xlu0 %6198
      %6200 = vrot.lane.b32.xlu0 %v4746, 56
      %v6201 = vpop.permute.xlu0 %6200
      %6202 = vrot.lane.b32.xlu0 %v4747, 56
      %v6203 = vpop.permute.xlu0 %6202
      %6204 = vrot.lane.b32.xlu0 %v4748, 56
      %v6205 = vpop.permute.xlu0 %6204
      %6206 = vrot.lane.b32.xlu0 %v4749, 56
      %v6207 = vpop.permute.xlu0 %6206
      %6208 = vrot.lane.b32.xlu0 %v4750, 56
      %v6209 = vpop.permute.xlu0 %6208
      %6210 = vrot.lane.b32.xlu0 %v4751, 56
      %v6211 = vpop.permute.xlu0 %6210
      %6212 = vrot.lane.b32.xlu0 %v4752, 56
      %v6213 = vpop.permute.xlu0 %6212
      %6214 = vrot.lane.b32.xlu0 %v4753, 56
      %v6215 = vpop.permute.xlu0 %6214
      %6216 = vrot.lane.b32.xlu0 %v4754, 56
      %v6217 = vpop.permute.xlu0 %6216
      %6218 = vrot.lane.b32.xlu0 %v4755, 56
      %v6219 = vpop.permute.xlu0 %6218
      %6220 = vrot.lane.b32.xlu0 %v4756, 56
      %v6221 = vpop.permute.xlu0 %6220
      %6222 = vrot.lane.b32.xlu0 %v4757, 56
      %v6223 = vpop.permute.xlu0 %6222
      %6224 = vrot.lane.b32.xlu0 %v4758, 56
      %v6225 = vpop.permute.xlu0 %6224
      %6226 = vrot.lane.b32.xlu0 %v4759, 56
      %v6227 = vpop.permute.xlu0 %6226
      %6228 = vrot.lane.b32.xlu0 %v4760, 56
      %v6229 = vpop.permute.xlu0 %6228
      %6230 = vrot.lane.b32.xlu0 %v4761, 56
      %v6231 = vpop.permute.xlu0 %6230
      %6232 = vrot.lane.b32.xlu0 %v4762, 56
      %v6233 = vpop.permute.xlu0 %6232
      %6234 = vrot.lane.b32.xlu0 %v4763, 56
      %v6235 = vpop.permute.xlu0 %6234
      %6236 = vrot.lane.b32.xlu0 %v4764, 56
      %v6237 = vpop.permute.xlu0 %6236
      %6238 = vrot.lane.b32.xlu0 %v4765, 56
      %v6239 = vpop.permute.xlu0 %6238
      %6240 = vrot.lane.b32.xlu0 %v4766, 56
      %v6241 = vpop.permute.xlu0 %6240
      %6242 = vrot.lane.b32.xlu0 %v4767, 56
      %v6243 = vpop.permute.xlu0 %6242
      %6244 = vrot.lane.b32.xlu0 %v4768, 56
      %v6245 = vpop.permute.xlu0 %6244
      %6246 = vrot.lane.b32.xlu0 %v4769, 56
      %v6247 = vpop.permute.xlu0 %6246
      %6248 = vrot.lane.b32.xlu0 %v4770, 56
      %v6249 = vpop.permute.xlu0 %6248
      %6250 = vrot.lane.b32.xlu0 %v4771, 56
      %v6251 = vpop.permute.xlu0 %6250
      %6252 = vrot.lane.b32.xlu0 %v4772, 56
      %v6253 = vpop.permute.xlu0 %6252
      %6254 = vrot.lane.b32.xlu0 %v4773, 56
      %v6255 = vpop.permute.xlu0 %6254
      %6256 = vrot.lane.b32.xlu0 %v4774, 56
      %v6257 = vpop.permute.xlu0 %6256
      %6258 = vrot.lane.b32.xlu0 %v4775, 56
      %v6259 = vpop.permute.xlu0 %6258
      %6260 = vrot.lane.b32.xlu0 %v4776, 56
      %v6261 = vpop.permute.xlu0 %6260
      %6262 = vrot.lane.b32.xlu0 %v4777, 56
      %v6263 = vpop.permute.xlu0 %6262
      %6264 = vrot.lane.b32.xlu0 %v4778, 56
      %v6265 = vpop.permute.xlu0 %6264
      %6266 = vrot.lane.b32.xlu0 %v4779, 56
      %v6267 = vpop.permute.xlu0 %6266
      %6268 = vrot.lane.b32.xlu0 %v4780, 56
      %v6269 = vpop.permute.xlu0 %6268
      %6270 = vrot.lane.b32.xlu0 %v4781, 56
      %v6271 = vpop.permute.xlu0 %6270
      %6272 = vrot.lane.b32.xlu0 %v4782, 56
      %v6273 = vpop.permute.xlu0 %6272
      %6274 = vrot.lane.b32.xlu0 %v4783, 56
      %v6275 = vpop.permute.xlu0 %6274
      %6276 = vrot.lane.b32.xlu0 %v4784, 56
      %v6277 = vpop.permute.xlu0 %6276
      %6278 = vrot.lane.b32.xlu0 %v4785, 56
      %v6279 = vpop.permute.xlu0 %6278
      %6280 = vrot.lane.b32.xlu0 %v4786, 56
      %v6281 = vpop.permute.xlu0 %6280
      %6282 = vrot.lane.b32.xlu0 %v4787, 56
      %v6283 = vpop.permute.xlu0 %6282
      %6284 = vrot.lane.b32.xlu0 %v4788, 56
      %v6285 = vpop.permute.xlu0 %6284
      %6286 = vrot.lane.b32.xlu0 %v4789, 56
      %v6287 = vpop.permute.xlu0 %6286
      %6288 = vrot.lane.b32.xlu0 %v4790, 56
      %v6289 = vpop.permute.xlu0 %6288
      %6290 = vrot.lane.b32.xlu0 %v4791, 56
      %v6291 = vpop.permute.xlu0 %6290
      %6292 = vrot.lane.b32.xlu0 %v4792, 56
      %v6293 = vpop.permute.xlu0 %6292
      %6294 = vrot.lane.b32.xlu0 %v4793, 56
      %v6295 = vpop.permute.xlu0 %6294
      %6296 = vrot.lane.b32.xlu0 %v4794, 56
      %v6297 = vpop.permute.xlu0 %6296
      %6298 = vrot.lane.b32.xlu0 %v4795, 56
      %v6299 = vpop.permute.xlu0 %6298
      %6300 = vrot.lane.b32.xlu0 %v4796, 56
      %v6301 = vpop.permute.xlu0 %6300
      %6302 = vrot.lane.b32.xlu0 %v4797, 56
      %v6303 = vpop.permute.xlu0 %6302
      %6304 = vrot.lane.b32.xlu0 %v4798, 56
      %v6305 = vpop.permute.xlu0 %6304
      %6306 = vrot.lane.b32.xlu0 %v4799, 56
      %v6307 = vpop.permute.xlu0 %6306
      %6308 = vrot.lane.b32.xlu0 %v4800, 56
      %v6309 = vpop.permute.xlu0 %6308
      %6310 = vrot.lane.b32.xlu0 %v4801, 56
      %v6311 = vpop.permute.xlu0 %6310
      %6312 = vrot.lane.b32.xlu0 %v4802, 56
      %v6313 = vpop.permute.xlu0 %6312
      %6314 = vrot.lane.b32.xlu0 %v4803, 56
      %v6315 = vpop.permute.xlu0 %6314
      %6316 = vrot.lane.b32.xlu0 %v4804, 56
      %v6317 = vpop.permute.xlu0 %6316
      %6318 = vrot.lane.b32.xlu0 %v4805, 56
      %v6319 = vpop.permute.xlu0 %6318
      %6320 = vrot.lane.b32.xlu0 %v4806, 56
      %v6321 = vpop.permute.xlu0 %6320
      %6322 = vrot.lane.b32.xlu0 %v4807, 56
      %v6323 = vpop.permute.xlu0 %6322
      %6324 = vrot.lane.b32.xlu0 %v4808, 56
      %v6325 = vpop.permute.xlu0 %6324
      %6326 = vrot.lane.b32.xlu0 %v4809, 56
      %v6327 = vpop.permute.xlu0 %6326
      %6328 = vrot.lane.b32.xlu0 %v4810, 56
      %v6329 = vpop.permute.xlu0 %6328
      %6330 = vrot.lane.b32.xlu0 %v4811, 56
      %v6331 = vpop.permute.xlu0 %6330
      %6332 = vrot.lane.b32.xlu0 %v4812, 56
      %v6333 = vpop.permute.xlu0 %6332
      %6334 = vrot.lane.b32.xlu0 %v4813, 56
      %v6335 = vpop.permute.xlu0 %6334
      %6336 = vrot.lane.b32.xlu0 %v4814, 56
      %v6337 = vpop.permute.xlu0 %6336
      %6338 = vrot.lane.b32.xlu0 %v4815, 56
      %v6339 = vpop.permute.xlu0 %6338
      %6340 = vrot.lane.b32.xlu0 %v4816, 56
      %v6341 = vpop.permute.xlu0 %6340
      %6342 = vrot.lane.b32.xlu0 %v4817, 56
      %v6343 = vpop.permute.xlu0 %6342
      %6344 = vrot.lane.b32.xlu0 %v4818, 56
      %v6345 = vpop.permute.xlu0 %6344
      %6346 = vrot.lane.b32.xlu0 %v4819, 56
      %v6347 = vpop.permute.xlu0 %6346
      %6348 = vrot.lane.b32.xlu0 %v4820, 56
      %v6349 = vpop.permute.xlu0 %6348
      %6350 = vrot.lane.b32.xlu0 %v4821, 56
      %v6351 = vpop.permute.xlu0 %6350
      %6352 = vrot.lane.b32.xlu0 %v4822, 56
      %v6353 = vpop.permute.xlu0 %6352
      %6354 = vrot.lane.b32.xlu0 %v4823, 56
      %v6355 = vpop.permute.xlu0 %6354
      %6356 = vrot.lane.b32.xlu0 %v4824, 56
      %v6357 = vpop.permute.xlu0 %6356
      %6358 = vrot.lane.b32.xlu0 %v4825, 56
      %v6359 = vpop.permute.xlu0 %6358
      %6360 = vrot.lane.b32.xlu0 %v4826, 56
      %v6361 = vpop.permute.xlu0 %6360
      %6362 = vrot.lane.b32.xlu0 %v4827, 56
      %v6363 = vpop.permute.xlu0 %6362
      %vm6876 = vcmask 589248
      %6877 = vst.msk [vmem:[%s216] sm:$0xff] %vm6876, %v5341
      %6878 = vst.msk [vmem:[%s216 + $0x8] sm:$0xff] %vm6876, %v5343
      %6879 = vst.msk [vmem:[%s216 + $0x10] sm:$0xff] %vm6876, %v5345
      %6880 = vst.msk [vmem:[%s216 + $0x18] sm:$0xff] %vm6876, %v5347
      %6881 = vst.msk [vmem:[%s216 + $0x20] sm:$0xff] %vm6876, %v5349
      %6882 = vst.msk [vmem:[%s216 + $0x28] sm:$0xff] %vm6876, %v5351
      %6883 = vst.msk [vmem:[%s216 + $0x30] sm:$0xff] %vm6876, %v5353
      %6884 = vst.msk [vmem:[%s216 + $0x38] sm:$0xff] %vm6876, %v5355
      %6885 = vst.msk [vmem:[%s216 + $0x40] sm:$0xff] %vm6876, %v5357
      %6886 = vst.msk [vmem:[%s216 + $0x48] sm:$0xff] %vm6876, %v5359
      %6887 = vst.msk [vmem:[%s216 + $0x50] sm:$0xff] %vm6876, %v5361
      %6888 = vst.msk [vmem:[%s216 + $0x58] sm:$0xff] %vm6876, %v5363
      %6889 = vst.msk [vmem:[%s216 + $0x60] sm:$0xff] %vm6876, %v5365
      %6890 = vst.msk [vmem:[%s216 + $0x68] sm:$0xff] %vm6876, %v5367
      %6891 = vst.msk [vmem:[%s216 + $0x70] sm:$0xff] %vm6876, %v5369
      %6892 = vst.msk [vmem:[%s216 + $0x78] sm:$0xff] %vm6876, %v5371
      %6893 = vst.msk [vmem:[%s216 + $0x80] sm:$0xff] %vm6876, %v5373
      %6894 = vst.msk [vmem:[%s216 + $0x88] sm:$0xff] %vm6876, %v5375
      %6895 = vst.msk [vmem:[%s216 + $0x90] sm:$0xff] %vm6876, %v5377
      %6896 = vst.msk [vmem:[%s216 + $0x98] sm:$0xff] %vm6876, %v5379
      %6897 = vst.msk [vmem:[%s216 + $0xa0] sm:$0xff] %vm6876, %v5381
      %6898 = vst.msk [vmem:[%s216 + $0xa8] sm:$0xff] %vm6876, %v5383
      %6899 = vst.msk [vmem:[%s216 + $0xb0] sm:$0xff] %vm6876, %v5385
      %6900 = vst.msk [vmem:[%s216 + $0xb8] sm:$0xff] %vm6876, %v5387
      %6901 = vst.msk [vmem:[%s216 + $0xc0] sm:$0xff] %vm6876, %v5389
      %6902 = vst.msk [vmem:[%s216 + $0xc8] sm:$0xff] %vm6876, %v5391
      %6903 = vst.msk [vmem:[%s216 + $0xd0] sm:$0xff] %vm6876, %v5393
      %6904 = vst.msk [vmem:[%s216 + $0xd8] sm:$0xff] %vm6876, %v5395
      %6905 = vst.msk [vmem:[%s216 + $0xe0] sm:$0xff] %vm6876, %v5397
      %6906 = vst.msk [vmem:[%s216 + $0xe8] sm:$0xff] %vm6876, %v5399
      %6907 = vst.msk [vmem:[%s216 + $0xf0] sm:$0xff] %vm6876, %v5401
      %6908 = vst.msk [vmem:[%s216 + $0xf8] sm:$0xff] %vm6876, %v5403
      %6909 = vst.msk [vmem:[%s216 + $0x100] sm:$0xff] %vm6876, %v5405
      %6910 = vst.msk [vmem:[%s216 + $0x108] sm:$0xff] %vm6876, %v5407
      %6911 = vst.msk [vmem:[%s216 + $0x110] sm:$0xff] %vm6876, %v5409
      %6912 = vst.msk [vmem:[%s216 + $0x118] sm:$0xff] %vm6876, %v5411
      %6913 = vst.msk [vmem:[%s216 + $0x120] sm:$0xff] %vm6876, %v5413
      %6914 = vst.msk [vmem:[%s216 + $0x128] sm:$0xff] %vm6876, %v5415
      %6915 = vst.msk [vmem:[%s216 + $0x130] sm:$0xff] %vm6876, %v5417
      %6916 = vst.msk [vmem:[%s216 + $0x138] sm:$0xff] %vm6876, %v5419
      %6917 = vst.msk [vmem:[%s216 + $0x140] sm:$0xff] %vm6876, %v5421
      %6918 = vst.msk [vmem:[%s216 + $0x148] sm:$0xff] %vm6876, %v5423
      %6919 = vst.msk [vmem:[%s216 + $0x150] sm:$0xff] %vm6876, %v5425
      %6920 = vst.msk [vmem:[%s216 + $0x158] sm:$0xff] %vm6876, %v5427
      %6921 = vst.msk [vmem:[%s216 + $0x160] sm:$0xff] %vm6876, %v5429
      %6922 = vst.msk [vmem:[%s216 + $0x168] sm:$0xff] %vm6876, %v5431
      %6923 = vst.msk [vmem:[%s216 + $0x170] sm:$0xff] %vm6876, %v5433
      %6924 = vst.msk [vmem:[%s216 + $0x178] sm:$0xff] %vm6876, %v5435
      %6925 = vst.msk [vmem:[%s216 + $0x180] sm:$0xff] %vm6876, %v5437
      %6926 = vst.msk [vmem:[%s216 + $0x188] sm:$0xff] %vm6876, %v5439
      %6927 = vst.msk [vmem:[%s216 + $0x190] sm:$0xff] %vm6876, %v5441
      %6928 = vst.msk [vmem:[%s216 + $0x198] sm:$0xff] %vm6876, %v5443
      %6929 = vst.msk [vmem:[%s216 + $0x1a0] sm:$0xff] %vm6876, %v5445
      %6930 = vst.msk [vmem:[%s216 + $0x1a8] sm:$0xff] %vm6876, %v5447
      %6931 = vst.msk [vmem:[%s216 + $0x1b0] sm:$0xff] %vm6876, %v5449
      %6932 = vst.msk [vmem:[%s216 + $0x1b8] sm:$0xff] %vm6876, %v5451
      %6933 = vst.msk [vmem:[%s216 + $0x1c0] sm:$0xff] %vm6876, %v5453
      %6934 = vst.msk [vmem:[%s216 + $0x1c8] sm:$0xff] %vm6876, %v5455
      %6935 = vst.msk [vmem:[%s216 + $0x1d0] sm:$0xff] %vm6876, %v5457
      %6936 = vst.msk [vmem:[%s216 + $0x1d8] sm:$0xff] %vm6876, %v5459
      %6937 = vst.msk [vmem:[%s216 + $0x1e0] sm:$0xff] %vm6876, %v5461
      %6938 = vst.msk [vmem:[%s216 + $0x1e8] sm:$0xff] %vm6876, %v5463
      %6939 = vst.msk [vmem:[%s216 + $0x1f0] sm:$0xff] %vm6876, %v5465
      %6940 = vst.msk [vmem:[%s216 + $0x1f8] sm:$0xff] %vm6876, %v5467
      %6941 = vst.msk [vmem:[%s216 + $0x200] sm:$0xff] %vm6876, %v5469
      %6942 = vst.msk [vmem:[%s216 + $0x208] sm:$0xff] %vm6876, %v5471
      %6943 = vst.msk [vmem:[%s216 + $0x210] sm:$0xff] %vm6876, %v5473
      %6944 = vst.msk [vmem:[%s216 + $0x218] sm:$0xff] %vm6876, %v5475
      %6945 = vst.msk [vmem:[%s216 + $0x220] sm:$0xff] %vm6876, %v5477
      %6946 = vst.msk [vmem:[%s216 + $0x228] sm:$0xff] %vm6876, %v5479
      %6947 = vst.msk [vmem:[%s216 + $0x230] sm:$0xff] %vm6876, %v5481
      %6948 = vst.msk [vmem:[%s216 + $0x238] sm:$0xff] %vm6876, %v5483
      %6949 = vst.msk [vmem:[%s216 + $0x240] sm:$0xff] %vm6876, %v5485
      %6950 = vst.msk [vmem:[%s216 + $0x248] sm:$0xff] %vm6876, %v5487
      %6951 = vst.msk [vmem:[%s216 + $0x250] sm:$0xff] %vm6876, %v5489
      %6952 = vst.msk [vmem:[%s216 + $0x258] sm:$0xff] %vm6876, %v5491
      %6953 = vst.msk [vmem:[%s216 + $0x260] sm:$0xff] %vm6876, %v5493
      %6954 = vst.msk [vmem:[%s216 + $0x268] sm:$0xff] %vm6876, %v5495
      %6955 = vst.msk [vmem:[%s216 + $0x270] sm:$0xff] %vm6876, %v5497
      %6956 = vst.msk [vmem:[%s216 + $0x278] sm:$0xff] %vm6876, %v5499
      %6957 = vst.msk [vmem:[%s216 + $0x280] sm:$0xff] %vm6876, %v5501
      %6958 = vst.msk [vmem:[%s216 + $0x288] sm:$0xff] %vm6876, %v5503
      %6959 = vst.msk [vmem:[%s216 + $0x290] sm:$0xff] %vm6876, %v5505
      %6960 = vst.msk [vmem:[%s216 + $0x298] sm:$0xff] %vm6876, %v5507
      %6961 = vst.msk [vmem:[%s216 + $0x2a0] sm:$0xff] %vm6876, %v5509
      %6962 = vst.msk [vmem:[%s216 + $0x2a8] sm:$0xff] %vm6876, %v5511
      %6963 = vst.msk [vmem:[%s216 + $0x2b0] sm:$0xff] %vm6876, %v5513
      %6964 = vst.msk [vmem:[%s216 + $0x2b8] sm:$0xff] %vm6876, %v5515
      %6965 = vst.msk [vmem:[%s216 + $0x2c0] sm:$0xff] %vm6876, %v5517
      %6966 = vst.msk [vmem:[%s216 + $0x2c8] sm:$0xff] %vm6876, %v5519
      %6967 = vst.msk [vmem:[%s216 + $0x2d0] sm:$0xff] %vm6876, %v5521
      %6968 = vst.msk [vmem:[%s216 + $0x2d8] sm:$0xff] %vm6876, %v5523
      %6969 = vst.msk [vmem:[%s216 + $0x2e0] sm:$0xff] %vm6876, %v5525
      %6970 = vst.msk [vmem:[%s216 + $0x2e8] sm:$0xff] %vm6876, %v5527
      %6971 = vst.msk [vmem:[%s216 + $0x2f0] sm:$0xff] %vm6876, %v5529
      %6972 = vst.msk [vmem:[%s216 + $0x2f8] sm:$0xff] %vm6876, %v5531
      %6973 = vst.msk [vmem:[%s216 + $0x300] sm:$0xff] %vm6876, %v5533
      %6974 = vst.msk [vmem:[%s216 + $0x308] sm:$0xff] %vm6876, %v5535
      %6975 = vst.msk [vmem:[%s216 + $0x310] sm:$0xff] %vm6876, %v5537
      %6976 = vst.msk [vmem:[%s216 + $0x318] sm:$0xff] %vm6876, %v5539
      %6977 = vst.msk [vmem:[%s216 + $0x320] sm:$0xff] %vm6876, %v5541
      %6978 = vst.msk [vmem:[%s216 + $0x328] sm:$0xff] %vm6876, %v5543
      %6979 = vst.msk [vmem:[%s216 + $0x330] sm:$0xff] %vm6876, %v5545
      %6980 = vst.msk [vmem:[%s216 + $0x338] sm:$0xff] %vm6876, %v5547
      %6981 = vst.msk [vmem:[%s216 + $0x340] sm:$0xff] %vm6876, %v5549
      %6982 = vst.msk [vmem:[%s216 + $0x348] sm:$0xff] %vm6876, %v5551
      %6983 = vst.msk [vmem:[%s216 + $0x350] sm:$0xff] %vm6876, %v5553
      %6984 = vst.msk [vmem:[%s216 + $0x358] sm:$0xff] %vm6876, %v5555
      %6985 = vst.msk [vmem:[%s216 + $0x360] sm:$0xff] %vm6876, %v5557
      %6986 = vst.msk [vmem:[%s216 + $0x368] sm:$0xff] %vm6876, %v5559
      %6987 = vst.msk [vmem:[%s216 + $0x370] sm:$0xff] %vm6876, %v5561
      %6988 = vst.msk [vmem:[%s216 + $0x378] sm:$0xff] %vm6876, %v5563
      %6989 = vst.msk [vmem:[%s216 + $0x380] sm:$0xff] %vm6876, %v5565
      %6990 = vst.msk [vmem:[%s216 + $0x388] sm:$0xff] %vm6876, %v5567
      %6991 = vst.msk [vmem:[%s216 + $0x390] sm:$0xff] %vm6876, %v5569
      %6992 = vst.msk [vmem:[%s216 + $0x398] sm:$0xff] %vm6876, %v5571
      %6993 = vst.msk [vmem:[%s216 + $0x3a0] sm:$0xff] %vm6876, %v5573
      %6994 = vst.msk [vmem:[%s216 + $0x3a8] sm:$0xff] %vm6876, %v5575
      %6995 = vst.msk [vmem:[%s216 + $0x3b0] sm:$0xff] %vm6876, %v5577
      %6996 = vst.msk [vmem:[%s216 + $0x3b8] sm:$0xff] %vm6876, %v5579
      %6997 = vst.msk [vmem:[%s216 + $0x3c0] sm:$0xff] %vm6876, %v5581
      %6998 = vst.msk [vmem:[%s216 + $0x3c8] sm:$0xff] %vm6876, %v5583
      %6999 = vst.msk [vmem:[%s216 + $0x3d0] sm:$0xff] %vm6876, %v5585
      %7000 = vst.msk [vmem:[%s216 + $0x3d8] sm:$0xff] %vm6876, %v5587
      %7001 = vst.msk [vmem:[%s216 + $0x3e0] sm:$0xff] %vm6876, %v5589
      %7002 = vst.msk [vmem:[%s216 + $0x3e8] sm:$0xff] %vm6876, %v5591
      %7003 = vst.msk [vmem:[%s216 + $0x3f0] sm:$0xff] %vm6876, %v5593
      %7004 = vst.msk [vmem:[%s216 + $0x3f8] sm:$0xff] %vm6876, %v5595
      %7005 = vst.msk [vmem:[%s216 + $0x400] sm:$0xff] %vm6876, %v5597
      %7006 = vst.msk [vmem:[%s216 + $0x408] sm:$0xff] %vm6876, %v5599
      %7007 = vst.msk [vmem:[%s216 + $0x410] sm:$0xff] %vm6876, %v5601
      %7008 = vst.msk [vmem:[%s216 + $0x418] sm:$0xff] %vm6876, %v5603
      %7009 = vst.msk [vmem:[%s216 + $0x420] sm:$0xff] %vm6876, %v5605
      %7010 = vst.msk [vmem:[%s216 + $0x428] sm:$0xff] %vm6876, %v5607
      %7011 = vst.msk [vmem:[%s216 + $0x430] sm:$0xff] %vm6876, %v5609
      %7012 = vst.msk [vmem:[%s216 + $0x438] sm:$0xff] %vm6876, %v5611
      %7013 = vst.msk [vmem:[%s216 + $0x440] sm:$0xff] %vm6876, %v5613
      %7014 = vst.msk [vmem:[%s216 + $0x448] sm:$0xff] %vm6876, %v5615
      %7015 = vst.msk [vmem:[%s216 + $0x450] sm:$0xff] %vm6876, %v5617
      %7016 = vst.msk [vmem:[%s216 + $0x458] sm:$0xff] %vm6876, %v5619
      %7017 = vst.msk [vmem:[%s216 + $0x460] sm:$0xff] %vm6876, %v5621
      %7018 = vst.msk [vmem:[%s216 + $0x468] sm:$0xff] %vm6876, %v5623
      %7019 = vst.msk [vmem:[%s216 + $0x470] sm:$0xff] %vm6876, %v5625
      %7020 = vst.msk [vmem:[%s216 + $0x478] sm:$0xff] %vm6876, %v5627
      %7021 = vst.msk [vmem:[%s216 + $0x480] sm:$0xff] %vm6876, %v5629
      %7022 = vst.msk [vmem:[%s216 + $0x488] sm:$0xff] %vm6876, %v5631
      %7023 = vst.msk [vmem:[%s216 + $0x490] sm:$0xff] %vm6876, %v5633
      %7024 = vst.msk [vmem:[%s216 + $0x498] sm:$0xff] %vm6876, %v5635
      %7025 = vst.msk [vmem:[%s216 + $0x4a0] sm:$0xff] %vm6876, %v5637
      %7026 = vst.msk [vmem:[%s216 + $0x4a8] sm:$0xff] %vm6876, %v5639
      %7027 = vst.msk [vmem:[%s216 + $0x4b0] sm:$0xff] %vm6876, %v5641
      %7028 = vst.msk [vmem:[%s216 + $0x4b8] sm:$0xff] %vm6876, %v5643
      %7029 = vst.msk [vmem:[%s216 + $0x4c0] sm:$0xff] %vm6876, %v5645
      %7030 = vst.msk [vmem:[%s216 + $0x4c8] sm:$0xff] %vm6876, %v5647
      %7031 = vst.msk [vmem:[%s216 + $0x4d0] sm:$0xff] %vm6876, %v5649
      %7032 = vst.msk [vmem:[%s216 + $0x4d8] sm:$0xff] %vm6876, %v5651
      %7033 = vst.msk [vmem:[%s216 + $0x4e0] sm:$0xff] %vm6876, %v5653
      %7034 = vst.msk [vmem:[%s216 + $0x4e8] sm:$0xff] %vm6876, %v5655
      %7035 = vst.msk [vmem:[%s216 + $0x4f0] sm:$0xff] %vm6876, %v5657
      %7036 = vst.msk [vmem:[%s216 + $0x4f8] sm:$0xff] %vm6876, %v5659
      %7037 = vst.msk [vmem:[%s216 + $0x500] sm:$0xff] %vm6876, %v5661
      %7038 = vst.msk [vmem:[%s216 + $0x508] sm:$0xff] %vm6876, %v5663
      %7039 = vst.msk [vmem:[%s216 + $0x510] sm:$0xff] %vm6876, %v5665
      %7040 = vst.msk [vmem:[%s216 + $0x518] sm:$0xff] %vm6876, %v5667
      %7041 = vst.msk [vmem:[%s216 + $0x520] sm:$0xff] %vm6876, %v5669
      %7042 = vst.msk [vmem:[%s216 + $0x528] sm:$0xff] %vm6876, %v5671
      %7043 = vst.msk [vmem:[%s216 + $0x530] sm:$0xff] %vm6876, %v5673
      %7044 = vst.msk [vmem:[%s216 + $0x538] sm:$0xff] %vm6876, %v5675
      %7045 = vst.msk [vmem:[%s216 + $0x540] sm:$0xff] %vm6876, %v5677
      %7046 = vst.msk [vmem:[%s216 + $0x548] sm:$0xff] %vm6876, %v5679
      %7047 = vst.msk [vmem:[%s216 + $0x550] sm:$0xff] %vm6876, %v5681
      %7048 = vst.msk [vmem:[%s216 + $0x558] sm:$0xff] %vm6876, %v5683
      %7049 = vst.msk [vmem:[%s216 + $0x560] sm:$0xff] %vm6876, %v5685
      %7050 = vst.msk [vmem:[%s216 + $0x568] sm:$0xff] %vm6876, %v5687
      %7051 = vst.msk [vmem:[%s216 + $0x570] sm:$0xff] %vm6876, %v5689
      %7052 = vst.msk [vmem:[%s216 + $0x578] sm:$0xff] %vm6876, %v5691
      %7053 = vst.msk [vmem:[%s216 + $0x580] sm:$0xff] %vm6876, %v5693
      %7054 = vst.msk [vmem:[%s216 + $0x588] sm:$0xff] %vm6876, %v5695
      %7055 = vst.msk [vmem:[%s216 + $0x590] sm:$0xff] %vm6876, %v5697
      %7056 = vst.msk [vmem:[%s216 + $0x598] sm:$0xff] %vm6876, %v5699
      %7057 = vst.msk [vmem:[%s216 + $0x5a0] sm:$0xff] %vm6876, %v5701
      %7058 = vst.msk [vmem:[%s216 + $0x5a8] sm:$0xff] %vm6876, %v5703
      %7059 = vst.msk [vmem:[%s216 + $0x5b0] sm:$0xff] %vm6876, %v5705
      %7060 = vst.msk [vmem:[%s216 + $0x5b8] sm:$0xff] %vm6876, %v5707
      %7061 = vst.msk [vmem:[%s216 + $0x5c0] sm:$0xff] %vm6876, %v5709
      %7062 = vst.msk [vmem:[%s216 + $0x5c8] sm:$0xff] %vm6876, %v5711
      %7063 = vst.msk [vmem:[%s216 + $0x5d0] sm:$0xff] %vm6876, %v5713
      %7064 = vst.msk [vmem:[%s216 + $0x5d8] sm:$0xff] %vm6876, %v5715
      %7065 = vst.msk [vmem:[%s216 + $0x5e0] sm:$0xff] %vm6876, %v5717
      %7066 = vst.msk [vmem:[%s216 + $0x5e8] sm:$0xff] %vm6876, %v5719
      %7067 = vst.msk [vmem:[%s216 + $0x5f0] sm:$0xff] %vm6876, %v5721
      %7068 = vst.msk [vmem:[%s216 + $0x5f8] sm:$0xff] %vm6876, %v5723
      %7069 = vst.msk [vmem:[%s216 + $0x600] sm:$0xff] %vm6876, %v5725
      %7070 = vst.msk [vmem:[%s216 + $0x608] sm:$0xff] %vm6876, %v5727
      %7071 = vst.msk [vmem:[%s216 + $0x610] sm:$0xff] %vm6876, %v5729
      %7072 = vst.msk [vmem:[%s216 + $0x618] sm:$0xff] %vm6876, %v5731
      %7073 = vst.msk [vmem:[%s216 + $0x620] sm:$0xff] %vm6876, %v5733
      %7074 = vst.msk [vmem:[%s216 + $0x628] sm:$0xff] %vm6876, %v5735
      %7075 = vst.msk [vmem:[%s216 + $0x630] sm:$0xff] %vm6876, %v5737
      %7076 = vst.msk [vmem:[%s216 + $0x638] sm:$0xff] %vm6876, %v5739
      %7077 = vst.msk [vmem:[%s216 + $0x640] sm:$0xff] %vm6876, %v5741
      %7078 = vst.msk [vmem:[%s216 + $0x648] sm:$0xff] %vm6876, %v5743
      %7079 = vst.msk [vmem:[%s216 + $0x650] sm:$0xff] %vm6876, %v5745
      %7080 = vst.msk [vmem:[%s216 + $0x658] sm:$0xff] %vm6876, %v5747
      %7081 = vst.msk [vmem:[%s216 + $0x660] sm:$0xff] %vm6876, %v5749
      %7082 = vst.msk [vmem:[%s216 + $0x668] sm:$0xff] %vm6876, %v5751
      %7083 = vst.msk [vmem:[%s216 + $0x670] sm:$0xff] %vm6876, %v5753
      %7084 = vst.msk [vmem:[%s216 + $0x678] sm:$0xff] %vm6876, %v5755
      %7085 = vst.msk [vmem:[%s216 + $0x680] sm:$0xff] %vm6876, %v5757
      %7086 = vst.msk [vmem:[%s216 + $0x688] sm:$0xff] %vm6876, %v5759
      %7087 = vst.msk [vmem:[%s216 + $0x690] sm:$0xff] %vm6876, %v5761
      %7088 = vst.msk [vmem:[%s216 + $0x698] sm:$0xff] %vm6876, %v5763
      %7089 = vst.msk [vmem:[%s216 + $0x6a0] sm:$0xff] %vm6876, %v5765
      %7090 = vst.msk [vmem:[%s216 + $0x6a8] sm:$0xff] %vm6876, %v5767
      %7091 = vst.msk [vmem:[%s216 + $0x6b0] sm:$0xff] %vm6876, %v5769
      %7092 = vst.msk [vmem:[%s216 + $0x6b8] sm:$0xff] %vm6876, %v5771
      %7093 = vst.msk [vmem:[%s216 + $0x6c0] sm:$0xff] %vm6876, %v5773
      %7094 = vst.msk [vmem:[%s216 + $0x6c8] sm:$0xff] %vm6876, %v5775
      %7095 = vst.msk [vmem:[%s216 + $0x6d0] sm:$0xff] %vm6876, %v5777
      %7096 = vst.msk [vmem:[%s216 + $0x6d8] sm:$0xff] %vm6876, %v5779
      %7097 = vst.msk [vmem:[%s216 + $0x6e0] sm:$0xff] %vm6876, %v5781
      %7098 = vst.msk [vmem:[%s216 + $0x6e8] sm:$0xff] %vm6876, %v5783
      %7099 = vst.msk [vmem:[%s216 + $0x6f0] sm:$0xff] %vm6876, %v5785
      %7100 = vst.msk [vmem:[%s216 + $0x6f8] sm:$0xff] %vm6876, %v5787
      %7101 = vst.msk [vmem:[%s216 + $0x700] sm:$0xff] %vm6876, %v5789
      %7102 = vst.msk [vmem:[%s216 + $0x708] sm:$0xff] %vm6876, %v5791
      %7103 = vst.msk [vmem:[%s216 + $0x710] sm:$0xff] %vm6876, %v5793
      %7104 = vst.msk [vmem:[%s216 + $0x718] sm:$0xff] %vm6876, %v5795
      %7105 = vst.msk [vmem:[%s216 + $0x720] sm:$0xff] %vm6876, %v5797
      %7106 = vst.msk [vmem:[%s216 + $0x728] sm:$0xff] %vm6876, %v5799
      %7107 = vst.msk [vmem:[%s216 + $0x730] sm:$0xff] %vm6876, %v5801
      %7108 = vst.msk [vmem:[%s216 + $0x738] sm:$0xff] %vm6876, %v5803
      %7109 = vst.msk [vmem:[%s216 + $0x740] sm:$0xff] %vm6876, %v5805
      %7110 = vst.msk [vmem:[%s216 + $0x748] sm:$0xff] %vm6876, %v5807
      %7111 = vst.msk [vmem:[%s216 + $0x750] sm:$0xff] %vm6876, %v5809
      %7112 = vst.msk [vmem:[%s216 + $0x758] sm:$0xff] %vm6876, %v5811
      %7113 = vst.msk [vmem:[%s216 + $0x760] sm:$0xff] %vm6876, %v5813
      %7114 = vst.msk [vmem:[%s216 + $0x768] sm:$0xff] %vm6876, %v5815
      %7115 = vst.msk [vmem:[%s216 + $0x770] sm:$0xff] %vm6876, %v5817
      %7116 = vst.msk [vmem:[%s216 + $0x778] sm:$0xff] %vm6876, %v5819
      %7117 = vst.msk [vmem:[%s216 + $0x780] sm:$0xff] %vm6876, %v5821
      %7118 = vst.msk [vmem:[%s216 + $0x788] sm:$0xff] %vm6876, %v5823
      %7119 = vst.msk [vmem:[%s216 + $0x790] sm:$0xff] %vm6876, %v5825
      %7120 = vst.msk [vmem:[%s216 + $0x798] sm:$0xff] %vm6876, %v5827
      %7121 = vst.msk [vmem:[%s216 + $0x7a0] sm:$0xff] %vm6876, %v5829
      %7122 = vst.msk [vmem:[%s216 + $0x7a8] sm:$0xff] %vm6876, %v5831
      %7123 = vst.msk [vmem:[%s216 + $0x7b0] sm:$0xff] %vm6876, %v5833
      %7124 = vst.msk [vmem:[%s216 + $0x7b8] sm:$0xff] %vm6876, %v5835
      %7125 = vst.msk [vmem:[%s216 + $0x7c0] sm:$0xff] %vm6876, %v5837
      %7126 = vst.msk [vmem:[%s216 + $0x7c8] sm:$0xff] %vm6876, %v5839
      %7127 = vst.msk [vmem:[%s216 + $0x7d0] sm:$0xff] %vm6876, %v5841
      %7128 = vst.msk [vmem:[%s216 + $0x7d8] sm:$0xff] %vm6876, %v5843
      %7129 = vst.msk [vmem:[%s216 + $0x7e0] sm:$0xff] %vm6876, %v5845
      %7130 = vst.msk [vmem:[%s216 + $0x7e8] sm:$0xff] %vm6876, %v5847
      %7131 = vst.msk [vmem:[%s216 + $0x7f0] sm:$0xff] %vm6876, %v5849
      %7132 = vst.msk [vmem:[%s216 + $0x7f8] sm:$0xff] %vm6876, %v5851
      %7133 = vst.msk [vmem:[%s216 + $0x800] sm:$0xff] %vm6876, %v5853
      %7134 = vst.msk [vmem:[%s216 + $0x808] sm:$0xff] %vm6876, %v5855
      %7135 = vst.msk [vmem:[%s216 + $0x810] sm:$0xff] %vm6876, %v5857
      %7136 = vst.msk [vmem:[%s216 + $0x818] sm:$0xff] %vm6876, %v5859
      %7137 = vst.msk [vmem:[%s216 + $0x820] sm:$0xff] %vm6876, %v5861
      %7138 = vst.msk [vmem:[%s216 + $0x828] sm:$0xff] %vm6876, %v5863
      %7139 = vst.msk [vmem:[%s216 + $0x830] sm:$0xff] %vm6876, %v5865
      %7140 = vst.msk [vmem:[%s216 + $0x838] sm:$0xff] %vm6876, %v5867
      %7141 = vst.msk [vmem:[%s216 + $0x840] sm:$0xff] %vm6876, %v5869
      %7142 = vst.msk [vmem:[%s216 + $0x848] sm:$0xff] %vm6876, %v5871
      %7143 = vst.msk [vmem:[%s216 + $0x850] sm:$0xff] %vm6876, %v5873
      %7144 = vst.msk [vmem:[%s216 + $0x858] sm:$0xff] %vm6876, %v5875
      %7145 = vst.msk [vmem:[%s216 + $0x860] sm:$0xff] %vm6876, %v5877
      %7146 = vst.msk [vmem:[%s216 + $0x868] sm:$0xff] %vm6876, %v5879
      %7147 = vst.msk [vmem:[%s216 + $0x870] sm:$0xff] %vm6876, %v5881
      %7148 = vst.msk [vmem:[%s216 + $0x878] sm:$0xff] %vm6876, %v5883
      %7149 = vst.msk [vmem:[%s216 + $0x880] sm:$0xff] %vm6876, %v5885
      %7150 = vst.msk [vmem:[%s216 + $0x888] sm:$0xff] %vm6876, %v5887
      %7151 = vst.msk [vmem:[%s216 + $0x890] sm:$0xff] %vm6876, %v5889
      %7152 = vst.msk [vmem:[%s216 + $0x898] sm:$0xff] %vm6876, %v5891
      %7153 = vst.msk [vmem:[%s216 + $0x8a0] sm:$0xff] %vm6876, %v5893
      %7154 = vst.msk [vmem:[%s216 + $0x8a8] sm:$0xff] %vm6876, %v5895
      %7155 = vst.msk [vmem:[%s216 + $0x8b0] sm:$0xff] %vm6876, %v5897
      %7156 = vst.msk [vmem:[%s216 + $0x8b8] sm:$0xff] %vm6876, %v5899
      %7157 = vst.msk [vmem:[%s216 + $0x8c0] sm:$0xff] %vm6876, %v5901
      %7158 = vst.msk [vmem:[%s216 + $0x8c8] sm:$0xff] %vm6876, %v5903
      %7159 = vst.msk [vmem:[%s216 + $0x8d0] sm:$0xff] %vm6876, %v5905
      %7160 = vst.msk [vmem:[%s216 + $0x8d8] sm:$0xff] %vm6876, %v5907
      %7161 = vst.msk [vmem:[%s216 + $0x8e0] sm:$0xff] %vm6876, %v5909
      %7162 = vst.msk [vmem:[%s216 + $0x8e8] sm:$0xff] %vm6876, %v5911
      %7163 = vst.msk [vmem:[%s216 + $0x8f0] sm:$0xff] %vm6876, %v5913
      %7164 = vst.msk [vmem:[%s216 + $0x8f8] sm:$0xff] %vm6876, %v5915
      %7165 = vst.msk [vmem:[%s216 + $0x900] sm:$0xff] %vm6876, %v5917
      %7166 = vst.msk [vmem:[%s216 + $0x908] sm:$0xff] %vm6876, %v5919
      %7167 = vst.msk [vmem:[%s216 + $0x910] sm:$0xff] %vm6876, %v5921
      %7168 = vst.msk [vmem:[%s216 + $0x918] sm:$0xff] %vm6876, %v5923
      %7169 = vst.msk [vmem:[%s216 + $0x920] sm:$0xff] %vm6876, %v5925
      %7170 = vst.msk [vmem:[%s216 + $0x928] sm:$0xff] %vm6876, %v5927
      %7171 = vst.msk [vmem:[%s216 + $0x930] sm:$0xff] %vm6876, %v5929
      %7172 = vst.msk [vmem:[%s216 + $0x938] sm:$0xff] %vm6876, %v5931
      %7173 = vst.msk [vmem:[%s216 + $0x940] sm:$0xff] %vm6876, %v5933
      %7174 = vst.msk [vmem:[%s216 + $0x948] sm:$0xff] %vm6876, %v5935
      %7175 = vst.msk [vmem:[%s216 + $0x950] sm:$0xff] %vm6876, %v5937
      %7176 = vst.msk [vmem:[%s216 + $0x958] sm:$0xff] %vm6876, %v5939
      %7177 = vst.msk [vmem:[%s216 + $0x960] sm:$0xff] %vm6876, %v5941
      %7178 = vst.msk [vmem:[%s216 + $0x968] sm:$0xff] %vm6876, %v5943
      %7179 = vst.msk [vmem:[%s216 + $0x970] sm:$0xff] %vm6876, %v5945
      %7180 = vst.msk [vmem:[%s216 + $0x978] sm:$0xff] %vm6876, %v5947
      %7181 = vst.msk [vmem:[%s216 + $0x980] sm:$0xff] %vm6876, %v5949
      %7182 = vst.msk [vmem:[%s216 + $0x988] sm:$0xff] %vm6876, %v5951
      %7183 = vst.msk [vmem:[%s216 + $0x990] sm:$0xff] %vm6876, %v5953
      %7184 = vst.msk [vmem:[%s216 + $0x998] sm:$0xff] %vm6876, %v5955
      %7185 = vst.msk [vmem:[%s216 + $0x9a0] sm:$0xff] %vm6876, %v5957
      %7186 = vst.msk [vmem:[%s216 + $0x9a8] sm:$0xff] %vm6876, %v5959
      %7187 = vst.msk [vmem:[%s216 + $0x9b0] sm:$0xff] %vm6876, %v5961
      %7188 = vst.msk [vmem:[%s216 + $0x9b8] sm:$0xff] %vm6876, %v5963
      %7189 = vst.msk [vmem:[%s216 + $0x9c0] sm:$0xff] %vm6876, %v5965
      %7190 = vst.msk [vmem:[%s216 + $0x9c8] sm:$0xff] %vm6876, %v5967
      %7191 = vst.msk [vmem:[%s216 + $0x9d0] sm:$0xff] %vm6876, %v5969
      %7192 = vst.msk [vmem:[%s216 + $0x9d8] sm:$0xff] %vm6876, %v5971
      %7193 = vst.msk [vmem:[%s216 + $0x9e0] sm:$0xff] %vm6876, %v5973
      %7194 = vst.msk [vmem:[%s216 + $0x9e8] sm:$0xff] %vm6876, %v5975
      %7195 = vst.msk [vmem:[%s216 + $0x9f0] sm:$0xff] %vm6876, %v5977
      %7196 = vst.msk [vmem:[%s216 + $0x9f8] sm:$0xff] %vm6876, %v5979
      %7197 = vst.msk [vmem:[%s216 + $0xa00] sm:$0xff] %vm6876, %v5981
      %7198 = vst.msk [vmem:[%s216 + $0xa08] sm:$0xff] %vm6876, %v5983
      %7199 = vst.msk [vmem:[%s216 + $0xa10] sm:$0xff] %vm6876, %v5985
      %7200 = vst.msk [vmem:[%s216 + $0xa18] sm:$0xff] %vm6876, %v5987
      %7201 = vst.msk [vmem:[%s216 + $0xa20] sm:$0xff] %vm6876, %v5989
      %7202 = vst.msk [vmem:[%s216 + $0xa28] sm:$0xff] %vm6876, %v5991
      %7203 = vst.msk [vmem:[%s216 + $0xa30] sm:$0xff] %vm6876, %v5993
      %7204 = vst.msk [vmem:[%s216 + $0xa38] sm:$0xff] %vm6876, %v5995
      %7205 = vst.msk [vmem:[%s216 + $0xa40] sm:$0xff] %vm6876, %v5997
      %7206 = vst.msk [vmem:[%s216 + $0xa48] sm:$0xff] %vm6876, %v5999
      %7207 = vst.msk [vmem:[%s216 + $0xa50] sm:$0xff] %vm6876, %v6001
      %7208 = vst.msk [vmem:[%s216 + $0xa58] sm:$0xff] %vm6876, %v6003
      %7209 = vst.msk [vmem:[%s216 + $0xa60] sm:$0xff] %vm6876, %v6005
      %7210 = vst.msk [vmem:[%s216 + $0xa68] sm:$0xff] %vm6876, %v6007
      %7211 = vst.msk [vmem:[%s216 + $0xa70] sm:$0xff] %vm6876, %v6009
      %7212 = vst.msk [vmem:[%s216 + $0xa78] sm:$0xff] %vm6876, %v6011
      %7213 = vst.msk [vmem:[%s216 + $0xa80] sm:$0xff] %vm6876, %v6013
      %7214 = vst.msk [vmem:[%s216 + $0xa88] sm:$0xff] %vm6876, %v6015
      %7215 = vst.msk [vmem:[%s216 + $0xa90] sm:$0xff] %vm6876, %v6017
      %7216 = vst.msk [vmem:[%s216 + $0xa98] sm:$0xff] %vm6876, %v6019
      %7217 = vst.msk [vmem:[%s216 + $0xaa0] sm:$0xff] %vm6876, %v6021
      %7218 = vst.msk [vmem:[%s216 + $0xaa8] sm:$0xff] %vm6876, %v6023
      %7219 = vst.msk [vmem:[%s216 + $0xab0] sm:$0xff] %vm6876, %v6025
      %7220 = vst.msk [vmem:[%s216 + $0xab8] sm:$0xff] %vm6876, %v6027
      %7221 = vst.msk [vmem:[%s216 + $0xac0] sm:$0xff] %vm6876, %v6029
      %7222 = vst.msk [vmem:[%s216 + $0xac8] sm:$0xff] %vm6876, %v6031
      %7223 = vst.msk [vmem:[%s216 + $0xad0] sm:$0xff] %vm6876, %v6033
      %7224 = vst.msk [vmem:[%s216 + $0xad8] sm:$0xff] %vm6876, %v6035
      %7225 = vst.msk [vmem:[%s216 + $0xae0] sm:$0xff] %vm6876, %v6037
      %7226 = vst.msk [vmem:[%s216 + $0xae8] sm:$0xff] %vm6876, %v6039
      %7227 = vst.msk [vmem:[%s216 + $0xaf0] sm:$0xff] %vm6876, %v6041
      %7228 = vst.msk [vmem:[%s216 + $0xaf8] sm:$0xff] %vm6876, %v6043
      %7229 = vst.msk [vmem:[%s216 + $0xb00] sm:$0xff] %vm6876, %v6045
      %7230 = vst.msk [vmem:[%s216 + $0xb08] sm:$0xff] %vm6876, %v6047
      %7231 = vst.msk [vmem:[%s216 + $0xb10] sm:$0xff] %vm6876, %v6049
      %7232 = vst.msk [vmem:[%s216 + $0xb18] sm:$0xff] %vm6876, %v6051
      %7233 = vst.msk [vmem:[%s216 + $0xb20] sm:$0xff] %vm6876, %v6053
      %7234 = vst.msk [vmem:[%s216 + $0xb28] sm:$0xff] %vm6876, %v6055
      %7235 = vst.msk [vmem:[%s216 + $0xb30] sm:$0xff] %vm6876, %v6057
      %7236 = vst.msk [vmem:[%s216 + $0xb38] sm:$0xff] %vm6876, %v6059
      %7237 = vst.msk [vmem:[%s216 + $0xb40] sm:$0xff] %vm6876, %v6061
      %7238 = vst.msk [vmem:[%s216 + $0xb48] sm:$0xff] %vm6876, %v6063
      %7239 = vst.msk [vmem:[%s216 + $0xb50] sm:$0xff] %vm6876, %v6065
      %7240 = vst.msk [vmem:[%s216 + $0xb58] sm:$0xff] %vm6876, %v6067
      %7241 = vst.msk [vmem:[%s216 + $0xb60] sm:$0xff] %vm6876, %v6069
      %7242 = vst.msk [vmem:[%s216 + $0xb68] sm:$0xff] %vm6876, %v6071
      %7243 = vst.msk [vmem:[%s216 + $0xb70] sm:$0xff] %vm6876, %v6073
      %7244 = vst.msk [vmem:[%s216 + $0xb78] sm:$0xff] %vm6876, %v6075
      %7245 = vst.msk [vmem:[%s216 + $0xb80] sm:$0xff] %vm6876, %v6077
      %7246 = vst.msk [vmem:[%s216 + $0xb88] sm:$0xff] %vm6876, %v6079
      %7247 = vst.msk [vmem:[%s216 + $0xb90] sm:$0xff] %vm6876, %v6081
      %7248 = vst.msk [vmem:[%s216 + $0xb98] sm:$0xff] %vm6876, %v6083
      %7249 = vst.msk [vmem:[%s216 + $0xba0] sm:$0xff] %vm6876, %v6085
      %7250 = vst.msk [vmem:[%s216 + $0xba8] sm:$0xff] %vm6876, %v6087
      %7251 = vst.msk [vmem:[%s216 + $0xbb0] sm:$0xff] %vm6876, %v6089
      %7252 = vst.msk [vmem:[%s216 + $0xbb8] sm:$0xff] %vm6876, %v6091
      %7253 = vst.msk [vmem:[%s216 + $0xbc0] sm:$0xff] %vm6876, %v6093
      %7254 = vst.msk [vmem:[%s216 + $0xbc8] sm:$0xff] %vm6876, %v6095
      %7255 = vst.msk [vmem:[%s216 + $0xbd0] sm:$0xff] %vm6876, %v6097
      %7256 = vst.msk [vmem:[%s216 + $0xbd8] sm:$0xff] %vm6876, %v6099
      %7257 = vst.msk [vmem:[%s216 + $0xbe0] sm:$0xff] %vm6876, %v6101
      %7258 = vst.msk [vmem:[%s216 + $0xbe8] sm:$0xff] %vm6876, %v6103
      %7259 = vst.msk [vmem:[%s216 + $0xbf0] sm:$0xff] %vm6876, %v6105
      %7260 = vst.msk [vmem:[%s216 + $0xbf8] sm:$0xff] %vm6876, %v6107
      %7261 = vst.msk [vmem:[%s216 + $0xc00] sm:$0xff] %vm6876, %v6109
      %7262 = vst.msk [vmem:[%s216 + $0xc08] sm:$0xff] %vm6876, %v6111
      %7263 = vst.msk [vmem:[%s216 + $0xc10] sm:$0xff] %vm6876, %v6113
      %7264 = vst.msk [vmem:[%s216 + $0xc18] sm:$0xff] %vm6876, %v6115
      %7265 = vst.msk [vmem:[%s216 + $0xc20] sm:$0xff] %vm6876, %v6117
      %7266 = vst.msk [vmem:[%s216 + $0xc28] sm:$0xff] %vm6876, %v6119
      %7267 = vst.msk [vmem:[%s216 + $0xc30] sm:$0xff] %vm6876, %v6121
      %7268 = vst.msk [vmem:[%s216 + $0xc38] sm:$0xff] %vm6876, %v6123
      %7269 = vst.msk [vmem:[%s216 + $0xc40] sm:$0xff] %vm6876, %v6125
      %7270 = vst.msk [vmem:[%s216 + $0xc48] sm:$0xff] %vm6876, %v6127
      %7271 = vst.msk [vmem:[%s216 + $0xc50] sm:$0xff] %vm6876, %v6129
      %7272 = vst.msk [vmem:[%s216 + $0xc58] sm:$0xff] %vm6876, %v6131
      %7273 = vst.msk [vmem:[%s216 + $0xc60] sm:$0xff] %vm6876, %v6133
      %7274 = vst.msk [vmem:[%s216 + $0xc68] sm:$0xff] %vm6876, %v6135
      %7275 = vst.msk [vmem:[%s216 + $0xc70] sm:$0xff] %vm6876, %v6137
      %7276 = vst.msk [vmem:[%s216 + $0xc78] sm:$0xff] %vm6876, %v6139
      %7277 = vst.msk [vmem:[%s216 + $0xc80] sm:$0xff] %vm6876, %v6141
      %7278 = vst.msk [vmem:[%s216 + $0xc88] sm:$0xff] %vm6876, %v6143
      %7279 = vst.msk [vmem:[%s216 + $0xc90] sm:$0xff] %vm6876, %v6145
      %7280 = vst.msk [vmem:[%s216 + $0xc98] sm:$0xff] %vm6876, %v6147
      %7281 = vst.msk [vmem:[%s216 + $0xca0] sm:$0xff] %vm6876, %v6149
      %7282 = vst.msk [vmem:[%s216 + $0xca8] sm:$0xff] %vm6876, %v6151
      %7283 = vst.msk [vmem:[%s216 + $0xcb0] sm:$0xff] %vm6876, %v6153
      %7284 = vst.msk [vmem:[%s216 + $0xcb8] sm:$0xff] %vm6876, %v6155
      %7285 = vst.msk [vmem:[%s216 + $0xcc0] sm:$0xff] %vm6876, %v6157
      %7286 = vst.msk [vmem:[%s216 + $0xcc8] sm:$0xff] %vm6876, %v6159
      %7287 = vst.msk [vmem:[%s216 + $0xcd0] sm:$0xff] %vm6876, %v6161
      %7288 = vst.msk [vmem:[%s216 + $0xcd8] sm:$0xff] %vm6876, %v6163
      %7289 = vst.msk [vmem:[%s216 + $0xce0] sm:$0xff] %vm6876, %v6165
      %7290 = vst.msk [vmem:[%s216 + $0xce8] sm:$0xff] %vm6876, %v6167
      %7291 = vst.msk [vmem:[%s216 + $0xcf0] sm:$0xff] %vm6876, %v6169
      %7292 = vst.msk [vmem:[%s216 + $0xcf8] sm:$0xff] %vm6876, %v6171
      %7293 = vst.msk [vmem:[%s216 + $0xd00] sm:$0xff] %vm6876, %v6173
      %7294 = vst.msk [vmem:[%s216 + $0xd08] sm:$0xff] %vm6876, %v6175
      %7295 = vst.msk [vmem:[%s216 + $0xd10] sm:$0xff] %vm6876, %v6177
      %7296 = vst.msk [vmem:[%s216 + $0xd18] sm:$0xff] %vm6876, %v6179
      %7297 = vst.msk [vmem:[%s216 + $0xd20] sm:$0xff] %vm6876, %v6181
      %7298 = vst.msk [vmem:[%s216 + $0xd28] sm:$0xff] %vm6876, %v6183
      %7299 = vst.msk [vmem:[%s216 + $0xd30] sm:$0xff] %vm6876, %v6185
      %7300 = vst.msk [vmem:[%s216 + $0xd38] sm:$0xff] %vm6876, %v6187
      %7301 = vst.msk [vmem:[%s216 + $0xd40] sm:$0xff] %vm6876, %v6189
      %7302 = vst.msk [vmem:[%s216 + $0xd48] sm:$0xff] %vm6876, %v6191
      %7303 = vst.msk [vmem:[%s216 + $0xd50] sm:$0xff] %vm6876, %v6193
      %7304 = vst.msk [vmem:[%s216 + $0xd58] sm:$0xff] %vm6876, %v6195
      %7305 = vst.msk [vmem:[%s216 + $0xd60] sm:$0xff] %vm6876, %v6197
      %7306 = vst.msk [vmem:[%s216 + $0xd68] sm:$0xff] %vm6876, %v6199
      %7307 = vst.msk [vmem:[%s216 + $0xd70] sm:$0xff] %vm6876, %v6201
      %7308 = vst.msk [vmem:[%s216 + $0xd78] sm:$0xff] %vm6876, %v6203
      %7309 = vst.msk [vmem:[%s216 + $0xd80] sm:$0xff] %vm6876, %v6205
      %7310 = vst.msk [vmem:[%s216 + $0xd88] sm:$0xff] %vm6876, %v6207
      %7311 = vst.msk [vmem:[%s216 + $0xd90] sm:$0xff] %vm6876, %v6209
      %7312 = vst.msk [vmem:[%s216 + $0xd98] sm:$0xff] %vm6876, %v6211
      %7313 = vst.msk [vmem:[%s216 + $0xda0] sm:$0xff] %vm6876, %v6213
      %7314 = vst.msk [vmem:[%s216 + $0xda8] sm:$0xff] %vm6876, %v6215
      %7315 = vst.msk [vmem:[%s216 + $0xdb0] sm:$0xff] %vm6876, %v6217
      %7316 = vst.msk [vmem:[%s216 + $0xdb8] sm:$0xff] %vm6876, %v6219
      %7317 = vst.msk [vmem:[%s216 + $0xdc0] sm:$0xff] %vm6876, %v6221
      %7318 = vst.msk [vmem:[%s216 + $0xdc8] sm:$0xff] %vm6876, %v6223
      %7319 = vst.msk [vmem:[%s216 + $0xdd0] sm:$0xff] %vm6876, %v6225
      %7320 = vst.msk [vmem:[%s216 + $0xdd8] sm:$0xff] %vm6876, %v6227
      %7321 = vst.msk [vmem:[%s216 + $0xde0] sm:$0xff] %vm6876, %v6229
      %7322 = vst.msk [vmem:[%s216 + $0xde8] sm:$0xff] %vm6876, %v6231
      %7323 = vst.msk [vmem:[%s216 + $0xdf0] sm:$0xff] %vm6876, %v6233
      %7324 = vst.msk [vmem:[%s216 + $0xdf8] sm:$0xff] %vm6876, %v6235
      %7325 = vst.msk [vmem:[%s216 + $0xe00] sm:$0xff] %vm6876, %v6237
      %7326 = vst.msk [vmem:[%s216 + $0xe08] sm:$0xff] %vm6876, %v6239
      %7327 = vst.msk [vmem:[%s216 + $0xe10] sm:$0xff] %vm6876, %v6241
      %7328 = vst.msk [vmem:[%s216 + $0xe18] sm:$0xff] %vm6876, %v6243
      %7329 = vst.msk [vmem:[%s216 + $0xe20] sm:$0xff] %vm6876, %v6245
      %7330 = vst.msk [vmem:[%s216 + $0xe28] sm:$0xff] %vm6876, %v6247
      %7331 = vst.msk [vmem:[%s216 + $0xe30] sm:$0xff] %vm6876, %v6249
      %7332 = vst.msk [vmem:[%s216 + $0xe38] sm:$0xff] %vm6876, %v6251
      %7333 = vst.msk [vmem:[%s216 + $0xe40] sm:$0xff] %vm6876, %v6253
      %7334 = vst.msk [vmem:[%s216 + $0xe48] sm:$0xff] %vm6876, %v6255
      %7335 = vst.msk [vmem:[%s216 + $0xe50] sm:$0xff] %vm6876, %v6257
      %7336 = vst.msk [vmem:[%s216 + $0xe58] sm:$0xff] %vm6876, %v6259
      %7337 = vst.msk [vmem:[%s216 + $0xe60] sm:$0xff] %vm6876, %v6261
      %7338 = vst.msk [vmem:[%s216 + $0xe68] sm:$0xff] %vm6876, %v6263
      %7339 = vst.msk [vmem:[%s216 + $0xe70] sm:$0xff] %vm6876, %v6265
      %7340 = vst.msk [vmem:[%s216 + $0xe78] sm:$0xff] %vm6876, %v6267
      %7341 = vst.msk [vmem:[%s216 + $0xe80] sm:$0xff] %vm6876, %v6269
      %7342 = vst.msk [vmem:[%s216 + $0xe88] sm:$0xff] %vm6876, %v6271
      %7343 = vst.msk [vmem:[%s216 + $0xe90] sm:$0xff] %vm6876, %v6273
      %7344 = vst.msk [vmem:[%s216 + $0xe98] sm:$0xff] %vm6876, %v6275
      %7345 = vst.msk [vmem:[%s216 + $0xea0] sm:$0xff] %vm6876, %v6277
      %7346 = vst.msk [vmem:[%s216 + $0xea8] sm:$0xff] %vm6876, %v6279
      %7347 = vst.msk [vmem:[%s216 + $0xeb0] sm:$0xff] %vm6876, %v6281
      %7348 = vst.msk [vmem:[%s216 + $0xeb8] sm:$0xff] %vm6876, %v6283
      %7349 = vst.msk [vmem:[%s216 + $0xec0] sm:$0xff] %vm6876, %v6285
      %7350 = vst.msk [vmem:[%s216 + $0xec8] sm:$0xff] %vm6876, %v6287
      %7351 = vst.msk [vmem:[%s216 + $0xed0] sm:$0xff] %vm6876, %v6289
      %7352 = vst.msk [vmem:[%s216 + $0xed8] sm:$0xff] %vm6876, %v6291
      %7353 = vst.msk [vmem:[%s216 + $0xee0] sm:$0xff] %vm6876, %v6293
      %7354 = vst.msk [vmem:[%s216 + $0xee8] sm:$0xff] %vm6876, %v6295
      %7355 = vst.msk [vmem:[%s216 + $0xef0] sm:$0xff] %vm6876, %v6297
      %7356 = vst.msk [vmem:[%s216 + $0xef8] sm:$0xff] %vm6876, %v6299
      %7357 = vst.msk [vmem:[%s216 + $0xf00] sm:$0xff] %vm6876, %v6301
      %7358 = vst.msk [vmem:[%s216 + $0xf08] sm:$0xff] %vm6876, %v6303
      %7359 = vst.msk [vmem:[%s216 + $0xf10] sm:$0xff] %vm6876, %v6305
      %7360 = vst.msk [vmem:[%s216 + $0xf18] sm:$0xff] %vm6876, %v6307
      %7361 = vst.msk [vmem:[%s216 + $0xf20] sm:$0xff] %vm6876, %v6309
      %7362 = vst.msk [vmem:[%s216 + $0xf28] sm:$0xff] %vm6876, %v6311
      %7363 = vst.msk [vmem:[%s216 + $0xf30] sm:$0xff] %vm6876, %v6313
      %7364 = vst.msk [vmem:[%s216 + $0xf38] sm:$0xff] %vm6876, %v6315
      %7365 = vst.msk [vmem:[%s216 + $0xf40] sm:$0xff] %vm6876, %v6317
      %7366 = vst.msk [vmem:[%s216 + $0xf48] sm:$0xff] %vm6876, %v6319
      %7367 = vst.msk [vmem:[%s216 + $0xf50] sm:$0xff] %vm6876, %v6321
      %7368 = vst.msk [vmem:[%s216 + $0xf58] sm:$0xff] %vm6876, %v6323
      %7369 = vst.msk [vmem:[%s216 + $0xf60] sm:$0xff] %vm6876, %v6325
      %7370 = vst.msk [vmem:[%s216 + $0xf68] sm:$0xff] %vm6876, %v6327
      %7371 = vst.msk [vmem:[%s216 + $0xf70] sm:$0xff] %vm6876, %v6329
      %7372 = vst.msk [vmem:[%s216 + $0xf78] sm:$0xff] %vm6876, %v6331
      %7373 = vst.msk [vmem:[%s216 + $0xf80] sm:$0xff] %vm6876, %v6333
      %7374 = vst.msk [vmem:[%s216 + $0xf88] sm:$0xff] %vm6876, %v6335
      %7375 = vst.msk [vmem:[%s216 + $0xf90] sm:$0xff] %vm6876, %v6337
      %7376 = vst.msk [vmem:[%s216 + $0xf98] sm:$0xff] %vm6876, %v6339
      %7377 = vst.msk [vmem:[%s216 + $0xfa0] sm:$0xff] %vm6876, %v6341
      %7378 = vst.msk [vmem:[%s216 + $0xfa8] sm:$0xff] %vm6876, %v6343
      %7379 = vst.msk [vmem:[%s216 + $0xfb0] sm:$0xff] %vm6876, %v6345
      %7380 = vst.msk [vmem:[%s216 + $0xfb8] sm:$0xff] %vm6876, %v6347
      %7381 = vst.msk [vmem:[%s216 + $0xfc0] sm:$0xff] %vm6876, %v6349
      %7382 = vst.msk [vmem:[%s216 + $0xfc8] sm:$0xff] %vm6876, %v6351
      %7383 = vst.msk [vmem:[%s216 + $0xfd0] sm:$0xff] %vm6876, %v6353
      %7384 = vst.msk [vmem:[%s216 + $0xfd8] sm:$0xff] %vm6876, %v6355
      %7385 = vst.msk [vmem:[%s216 + $0xfe0] sm:$0xff] %vm6876, %v6357
      %7386 = vst.msk [vmem:[%s216 + $0xfe8] sm:$0xff] %vm6876, %v6359
      %7387 = vst.msk [vmem:[%s216 + $0xff0] sm:$0xff] %vm6876, %v6361
      %7388 = vst.msk [vmem:[%s216 + $0xff8] sm:$0xff] %vm6876, %v6363
      %s7389 = smul.u32 512, %s14
      %p7390 = scmp.lt.s32.totalorder %s7389, 1023
      %s7391 = scalar_select %p7390, %s7389, 1023
      %s7392 = smul.addr %s7391, 8
      %s7393 = scalar_lea.vmem %s3, %s7392
      // Predicated region
      $region33: #{tpu_custom_call.1} parent=31 // pred_check
        %p7394 = pneg %p110
      $region34: #{tpu_custom_call.1} parent=31 // pred_check_branch
        %7396 = sbr.rel (%p7394) target = $region36
      $region35: #{tpu_custom_call.1} parent=31 // pred_region
        %s7397 = smul.u32 512, %s14
      $region36: #{tpu_custom_call.1} parent=31 // pred_fallthru
        _
    $region32: #{tpu_custom_call.1} parent=5 // pred_fallthru
      _
    %p7398 = scmp.le.s32.totalorder 2, %s9
    // Predicated region
    $region37: #{tpu_custom_call.1} parent=5 // pred_check
      %p7399 = pneg %p7398
    $region38: #{tpu_custom_call.1} parent=5 // pred_check_branch
      %7401 = sbr.rel (%p7399) target = $region40
    $region39: #{tpu_custom_call.1} parent=5 // pred_region
      %s7402 = ssub.s32 %s9, 2
      // Predicated region
      $region41: #{tpu_custom_call.1} parent=39 // pred_check
        %p7403 = pneg %p116
      $region42: #{tpu_custom_call.1} parent=39 // pred_check_branch
        %7405 = sbr.rel (%p7403) target = $region44
      $region43: #{tpu_custom_call.1} parent=39 // pred_region
        %s7406 = smul.u32 512, %s15
        %p7407 = scmp.lt.s32.totalorder %s7406, 1023
        %s7408 = scalar_select %p7407, %s7406, 1023
        %s7409 = smul.addr %s7408, 8
        %s7410 = scalar_lea.vmem %s3, %s7409
      $region44: #{tpu_custom_call.1} parent=39 // pred_fallthru
        _
    $region40: #{tpu_custom_call.1} parent=5 // pred_fallthru
      _
  $region6: #{tpu_custom_call.1} parent=0 // loop_footer
    %s13 = sadd.s32 1, %s9
  $region7: #{tpu_custom_call.1} parent=0 // loop_footer_branch
    %8 = sbr.rel target = $region3
  $region8: #{tpu_custom_call.1} parent=0 // loop_exit
    _

</llo_original>
